<compile_context>
chip_gen: v7x
topology: tpu7x:2x2x1
jax: 0.10.0
libtpu: 0.0.40
codegen_flags: <defaults>
</compile_context>

<pallas_src>
import functools

import jax
import jax.numpy as jnp
from jax.experimental import pallas as pl
from jax.experimental.pallas import tpu as pltpu

IN_DIM = 257
HID = 1024
OUT_DIM = 257

# Lane-dense padded feature dims (multiples of 128): avoids masked vst partial
# stores on the output and a nearly-empty third K pass on the first matmul.
IN_PAD = 384
OUT_PAD = 384


def _round_up(n: int, m: int) -> int:
    return ((n + m - 1) // m) * m


def _cdiv(a: int, b: int) -> int:
    return -(-a // b)


def mlp_kernel(x_ref,
               w1_ref, b1_ref,
               w2_ref, b2_ref,
               w3_ref, b3_ref,
               w4_ref, b4_ref,
               o_ref):
    # All matmuls hit the MXU with f32 accumulation; bias-add + ReLU stay f32
    # on the VPU (so v5e's lack of bf16 VALU is irrelevant).
    cd = w1_ref.dtype  # matmul operand dtype (bf16 by default, f32 optional)

    h = jnp.dot(x_ref[...], w1_ref[...], preferred_element_type=jnp.float32)
    h = jnp.maximum(h + b1_ref[...], 0.0)

    h = jnp.dot(h.astype(cd), w2_ref[...], preferred_element_type=jnp.float32)
    h = jnp.maximum(h + b2_ref[...], 0.0)

    h = jnp.dot(h.astype(cd), w3_ref[...], preferred_element_type=jnp.float32)
    h = jnp.maximum(h + b3_ref[...], 0.0)

    h = jnp.dot(h.astype(cd), w4_ref[...], preferred_element_type=jnp.float32)
    o_ref[...] = (h + b4_ref[...]).astype(o_ref.dtype)


def prepare_params(params, compute_dtype=jnp.bfloat16):
    """One-time (per model) pad + cast of weights so the hot forward path does
    zero weight-side HBM traffic beyond the kernel's own DMA.

    Weights -> compute_dtype, padded to lane-dense shapes.
    Biases stay f32 (added to the f32 accumulator on the VPU)."""
    cd = compute_dtype
    return {
        "w1": jnp.pad(params["w1"], ((0, IN_PAD - IN_DIM), (0, 0))).astype(cd),
        "b1": params["b1"].astype(jnp.float32),
        "w2": params["w2"].astype(cd),
        "b2": params["b2"].astype(jnp.float32),
        "w3": params["w3"].astype(cd),
        "b3": params["b3"].astype(jnp.float32),
        "w4": jnp.pad(params["w4"], ((0, 0), (0, OUT_PAD - OUT_DIM))).astype(cd),
        "b4": jnp.pad(params["b4"], ((0, 0), (0, OUT_PAD - OUT_DIM))).astype(jnp.float32),
    }


def _const_spec(shape):
    """Constant-index (weights/biases) BlockSpec, single-buffered: the block
    index never changes, so the second pipeline buffer is pure VMEM waste."""
    try:
        return pl.BlockSpec(shape, lambda i: (0, 0), pipeline_mode=pl.Buffered(1))
    except (TypeError, AttributeError):
        # Older JAX without pipeline_mode/Buffered: fall back to default (2x).
        return pl.BlockSpec(shape, lambda i: (0, 0))


@functools.partial(jax.jit, static_argnames=("tb",))
def net_forward(x, prepared, *, tb=256):
    """x: (B, 257).  prepared: output of prepare_params() (padded/cast once).

    Matmul-operand dtype is inferred from prepared['w1'].dtype (bf16 default);
    accumulation is always f32."""
    B, in_dim = x.shape
    assert in_dim == IN_DIM, x.shape
    out_dtype = x.dtype
    cd = prepared["w1"].dtype

    # Batch tiling: balance tiles to minimize padded rows (<16 per tile), and
    # use >=2 grid steps when the batch is big enough so the "parallel" grid
    # axis actually feeds both TensorCores on v7x.
    n_tiles = max(_cdiv(B, tb), 1)
    if n_tiles == 1 and B >= 32:
        n_tiles = 2
    tb_eff = _round_up(_cdiv(B, n_tiles), 16)   # 16-row sublane quantum (f32 & bf16)
    B_pad = n_tiles * tb_eff
    grid = (n_tiles,)

    # Per-call layout plumbing is limited to the (small) activation tensor.
    x_p = jnp.pad(x, ((0, B_pad - B), (0, IN_PAD - IN_DIM))).astype(cd)

    w1, b1 = prepared["w1"], prepared["b1"]
    w2, b2 = prepared["w2"], prepared["b2"]
    w3, b3 = prepared["w3"], prepared["b3"]
    w4, b4 = prepared["w4"], prepared["b4"]

    out = pl.pallas_call(
        mlp_kernel,
        out_shape=jax.ShapeDtypeStruct((B_pad, OUT_PAD), out_dtype),
        grid=grid,
        in_specs=[
            pl.BlockSpec((tb_eff, IN_PAD), lambda i: (i, 0)),   # x batch tile
            _const_spec(w1.shape), _const_spec(b1.shape),
            _const_spec(w2.shape), _const_spec(b2.shape),
            _const_spec(w3.shape), _const_spec(b3.shape),
            _const_spec(w4.shape), _const_spec(b4.shape),
        ],
        out_specs=pl.BlockSpec((tb_eff, OUT_PAD), lambda i: (i, 0)),
        compiler_params=pltpu.CompilerParams(
            dimension_semantics=("parallel",),     # megacore-shard batch tiles
            vmem_limit_bytes=48 * 1024 * 1024,     # safe on v7x (64 MiB physical)
        ),
    )(x_p, w1, b1, w2, b2, w3, b3, w4, b4)

    # The padded lane-dense store inside the kernel is the win; this slice is
    # the residual copy — callers that tolerate padding can take `out` as-is.
    return out[:B, :OUT_DIM]


def init_params(key):
    """Deterministic init mimicking PyTorch nn.Linear default:
    U(-1/sqrt(fan_in), 1/sqrt(fan_in)) for both weight and bias.
    Weights stored as (in_features, out_features)."""
    dims = [(IN_DIM, HID), (HID, HID), (HID, HID), (HID, OUT_DIM)]
    params = {}
    for idx, (fan_in, fan_out) in enumerate(dims, start=1):
        key, kw, kb = jax.random.split(key, 3)
        bound = 1.0 / jnp.sqrt(float(fan_in))
        params[f"w{idx}"] = jax.random.uniform(
            kw, (fan_in, fan_out), jnp.float32, -bound, bound)
        params[f"b{idx}"] = jax.random.uniform(
            kb, (1, fan_out), jnp.float32, -bound, bound)
    return params


def reference_forward(x, params, compute_dtype=jnp.float32):
    cd = compute_dtype
    dot = lambda a, w: jnp.dot(a.astype(cd), w.astype(cd),
                               preferred_element_type=jnp.float32)
    h = jnp.maximum(dot(x, params["w1"]) + params["b1"], 0.0)
    h = jnp.maximum(dot(h, params["w2"]) + params["b2"], 0.0)
    h = jnp.maximum(dot(h, params["w3"]) + params["b3"], 0.0)
    return dot(h, params["w4"]) + params["b4"]


if __name__ == "__main__":
    key = jax.random.PRNGKey(0)
    key, kx = jax.random.split(key)

    B = 8  # small example batch; the wrapper pads it to the batch tile internally
    x = jax.random.normal(kx, (B, IN_DIM), jnp.float32)
    params = init_params(key)

    # Exact f32 path (tight tolerance).
    prep_f32 = prepare_params(params, jnp.float32)
    out = jax.block_until_ready(net_forward(x, prep_f32))
    ref = reference_forward(x, params, jnp.float32)
    assert out.shape == (B, OUT_DIM), out.shape
    assert jnp.allclose(out, ref, atol=1e-4, rtol=1e-4), "f32 mismatch vs JAX reference"

    # Default bf16-operand path (f32 accumulation) — looser tolerance by design.
    prep_bf16 = prepare_params(params)  # bfloat16 default
    out_bf = jax.block_until_ready(net_forward(x, prep_bf16))
    ref_bf = reference_forward(x, params, jnp.bfloat16)
    assert out_bf.shape == (B, OUT_DIM), out_bf.shape
    assert jnp.allclose(out_bf, ref_bf, atol=2e-2, rtol=2e-2), "bf16 mismatch vs JAX reference"

    print("KERNEL_OK")
</pallas_src>

<mosaic_0001>
module attributes {stable_mosaic.version = 11 : i64} {
  func.func @mlp_kernel(%arg0: i32, %arg1: memref<16x384xf32, #tpu.memory_space<vmem>>, %arg2: memref<384x1024xf32, #tpu.memory_space<vmem>>, %arg3: memref<1x1024xf32, #tpu.memory_space<vmem>>, %arg4: memref<1024x1024xf32, #tpu.memory_space<vmem>>, %arg5: memref<1x1024xf32, #tpu.memory_space<vmem>>, %arg6: memref<1024x1024xf32, #tpu.memory_space<vmem>>, %arg7: memref<1x1024xf32, #tpu.memory_space<vmem>>, %arg8: memref<1024x384xf32, #tpu.memory_space<vmem>>, %arg9: memref<1x384xf32, #tpu.memory_space<vmem>>, %arg10: memref<16x384xf32, #tpu.memory_space<vmem>>) attributes {dimension_semantics = [#tpu.dimension_semantics<parallel>], iteration_bounds = array<i64: 1>, scalar_prefetch = 0 : i64, scratch_operands = 0 : i64, tpu.core_type = #tpu.core_type<tc>, window_params = [{transform_indices = @transform_0, window_bounds = array<i64: 16, 384>}, {pipeline_mode = #tpu.pipeline_mode<synchronous>, transform_indices = @transform_1, window_bounds = array<i64: 384, 1024>}, {pipeline_mode = #tpu.pipeline_mode<synchronous>, transform_indices = @transform_2, window_bounds = array<i64: 1, 1024>}, {pipeline_mode = #tpu.pipeline_mode<synchronous>, transform_indices = @transform_3, window_bounds = array<i64: 1024, 1024>}, {pipeline_mode = #tpu.pipeline_mode<synchronous>, transform_indices = @transform_4, window_bounds = array<i64: 1, 1024>}, {pipeline_mode = #tpu.pipeline_mode<synchronous>, transform_indices = @transform_5, window_bounds = array<i64: 1024, 1024>}, {pipeline_mode = #tpu.pipeline_mode<synchronous>, transform_indices = @transform_6, window_bounds = array<i64: 1, 1024>}, {pipeline_mode = #tpu.pipeline_mode<synchronous>, transform_indices = @transform_7, window_bounds = array<i64: 1024, 384>}, {pipeline_mode = #tpu.pipeline_mode<synchronous>, transform_indices = @transform_8, window_bounds = array<i64: 1, 384>}, {transform_indices = @transform_9, window_bounds = array<i64: 16, 384>}]} {
    %c0 = arith.constant 0 : index
    %c0_0 = arith.constant 0 : index
    %0 = vector.load %arg1[%c0, %c0_0] : memref<16x384xf32, #tpu.memory_space<vmem>>, vector<16x384xf32>
    %c0_1 = arith.constant 0 : index
    %c0_2 = arith.constant 0 : index
    %1 = vector.load %arg2[%c0_1, %c0_2] : memref<384x1024xf32, #tpu.memory_space<vmem>>, vector<384x1024xf32>
    %cst = arith.constant dense<0.000000e+00> : vector<16x1024xf32>
    %2 = tpu.matmul %0, %1, %cst {dimension_numbers = #tpu.dot_dimension_numbers<[1], [0], [0], [1], [0, 0, 1, 1], [], []>} : vector<16x384xf32>, vector<384x1024xf32>, vector<16x1024xf32> -> vector<16x1024xf32>
    %c0_3 = arith.constant 0 : index
    %c0_4 = arith.constant 0 : index
    %3 = vector.load %arg3[%c0_3, %c0_4] : memref<1x1024xf32, #tpu.memory_space<vmem>>, vector<1x1024xf32>
    %4 = vector.broadcast %3 : vector<1x1024xf32> to vector<16x1024xf32>
    %5 = arith.addf %2, %4 : vector<16x1024xf32>
    %cst_5 = arith.constant 0.000000e+00 : f32
    %6 = vector.broadcast %cst_5 : f32 to vector<16x1024xf32>
    %7 = arith.maximumf %5, %6 : vector<16x1024xf32>
    %c0_6 = arith.constant 0 : index
    %c0_7 = arith.constant 0 : index
    %8 = vector.load %arg4[%c0_6, %c0_7] : memref<1024x1024xf32, #tpu.memory_space<vmem>>, vector<1024x1024xf32>
    %cst_8 = arith.constant dense<0.000000e+00> : vector<16x1024xf32>
    %9 = tpu.matmul %7, %8, %cst_8 {dimension_numbers = #tpu.dot_dimension_numbers<[1], [0], [0], [1], [0, 0, 1, 1], [], []>} : vector<16x1024xf32>, vector<1024x1024xf32>, vector<16x1024xf32> -> vector<16x1024xf32>
    %c0_9 = arith.constant 0 : index
    %c0_10 = arith.constant 0 : index
    %10 = vector.load %arg5[%c0_9, %c0_10] : memref<1x1024xf32, #tpu.memory_space<vmem>>, vector<1x1024xf32>
    %11 = vector.broadcast %10 : vector<1x1024xf32> to vector<16x1024xf32>
    %12 = arith.addf %9, %11 : vector<16x1024xf32>
    %cst_11 = arith.constant 0.000000e+00 : f32
    %13 = vector.broadcast %cst_11 : f32 to vector<16x1024xf32>
    %14 = arith.maximumf %12, %13 : vector<16x1024xf32>
    %c0_12 = arith.constant 0 : index
    %c0_13 = arith.constant 0 : index
    %15 = vector.load %arg6[%c0_12, %c0_13] : memref<1024x1024xf32, #tpu.memory_space<vmem>>, vector<1024x1024xf32>
    %cst_14 = arith.constant dense<0.000000e+00> : vector<16x1024xf32>
    %16 = tpu.matmul %14, %15, %cst_14 {dimension_numbers = #tpu.dot_dimension_numbers<[1], [0], [0], [1], [0, 0, 1, 1], [], []>} : vector<16x1024xf32>, vector<1024x1024xf32>, vector<16x1024xf32> -> vector<16x1024xf32>
    %c0_15 = arith.constant 0 : index
    %c0_16 = arith.constant 0 : index
    %17 = vector.load %arg7[%c0_15, %c0_16] : memref<1x1024xf32, #tpu.memory_space<vmem>>, vector<1x1024xf32>
    %18 = vector.broadcast %17 : vector<1x1024xf32> to vector<16x1024xf32>
    %19 = arith.addf %16, %18 : vector<16x1024xf32>
    %cst_17 = arith.constant 0.000000e+00 : f32
    %20 = vector.broadcast %cst_17 : f32 to vector<16x1024xf32>
    %21 = arith.maximumf %19, %20 : vector<16x1024xf32>
    %c0_18 = arith.constant 0 : index
    %c0_19 = arith.constant 0 : index
    %22 = vector.load %arg8[%c0_18, %c0_19] : memref<1024x384xf32, #tpu.memory_space<vmem>>, vector<1024x384xf32>
    %cst_20 = arith.constant dense<0.000000e+00> : vector<16x384xf32>
    %23 = tpu.matmul %21, %22, %cst_20 {dimension_numbers = #tpu.dot_dimension_numbers<[1], [0], [0], [1], [0, 0, 1, 1], [], []>} : vector<16x1024xf32>, vector<1024x384xf32>, vector<16x384xf32> -> vector<16x384xf32>
    %c0_21 = arith.constant 0 : index
    %c0_22 = arith.constant 0 : index
    %24 = vector.load %arg9[%c0_21, %c0_22] : memref<1x384xf32, #tpu.memory_space<vmem>>, vector<1x384xf32>
    %25 = vector.broadcast %24 : vector<1x384xf32> to vector<16x384xf32>
    %26 = arith.addf %23, %25 : vector<16x384xf32>
    %c0_23 = arith.constant 0 : index
    %c0_24 = arith.constant 0 : index
    %27 = vector.load %arg10[%c0_23, %c0_24] : memref<16x384xf32, #tpu.memory_space<vmem>>, vector<16x384xf32>
    tpu.vector_store %arg10[%c0_23, %c0_24], %26 {strides = array<i32>} : memref<16x384xf32, #tpu.memory_space<vmem>>, vector<16x384xf32>,
    return
  }
  func.func @transform_0(%arg0: i32) -> (i32, i32) {
    %c0_i32 = arith.constant 0 : i32
    %c0_i32_0 = arith.constant 0 : i32
    return %arg0, %c0_i32 : i32, i32
  }
  func.func @transform_1(%arg0: i32) -> (i32, i32) {
    %c0_i32 = arith.constant 0 : i32
    %c0_i32_0 = arith.constant 0 : i32
    %c0_i32_1 = arith.constant 0 : i32
    return %c0_i32, %c0_i32_0 : i32, i32
  }
  func.func @transform_2(%arg0: i32) -> (i32, i32) {
    %c0_i32 = arith.constant 0 : i32
    %c0_i32_0 = arith.constant 0 : i32
    %c0_i32_1 = arith.constant 0 : i32
    return %c0_i32, %c0_i32_0 : i32, i32
  }
  func.func @transform_3(%arg0: i32) -> (i32, i32) {
    %c0_i32 = arith.constant 0 : i32
    %c0_i32_0 = arith.constant 0 : i32
    %c0_i32_1 = arith.constant 0 : i32
    return %c0_i32, %c0_i32_0 : i32, i32
  }
  func.func @transform_4(%arg0: i32) -> (i32, i32) {
    %c0_i32 = arith.constant 0 : i32
    %c0_i32_0 = arith.constant 0 : i32
    %c0_i32_1 = arith.constant 0 : i32
    return %c0_i32, %c0_i32_0 : i32, i32
  }
  func.func @transform_5(%arg0: i32) -> (i32, i32) {
    %c0_i32 = arith.constant 0 : i32
    %c0_i32_0 = arith.constant 0 : i32
    %c0_i32_1 = arith.constant 0 : i32
    return %c0_i32, %c0_i32_0 : i32, i32
  }
  func.func @transform_6(%arg0: i32) -> (i32, i32) {
    %c0_i32 = arith.constant 0 : i32
    %c0_i32_0 = arith.constant 0 : i32
    %c0_i32_1 = arith.constant 0 : i32
    return %c0_i32, %c0_i32_0 : i32, i32
  }
  func.func @transform_7(%arg0: i32) -> (i32, i32) {
    %c0_i32 = arith.constant 0 : i32
    %c0_i32_0 = arith.constant 0 : i32
    %c0_i32_1 = arith.constant 0 : i32
    return %c0_i32, %c0_i32_0 : i32, i32
  }
  func.func @transform_8(%arg0: i32) -> (i32, i32) {
    %c0_i32 = arith.constant 0 : i32
    %c0_i32_0 = arith.constant 0 : i32
    %c0_i32_1 = arith.constant 0 : i32
    return %c0_i32, %c0_i32_0 : i32, i32
  }
  func.func @transform_9(%arg0: i32) -> (i32, i32) {
    %c0_i32 = arith.constant 0 : i32
    %c0_i32_0 = arith.constant 0 : i32
    return %arg0, %c0_i32 : i32, i32
  }
}

</mosaic_0001>

<llo_original>
// kernel: net_forward.1
$region0: #{net_forward.1}
  #allocation0 [shape = 'u32[]', space=smem, size = 0x4, offset = 0x4, fixed_abs, tag = 'smem constant byte address 0x4 - core index']
  #allocation1 [shape = 'u32[144,128]{1,0:T(1,128)}', space=vmem, size = 0x12000, scoped, tag = 'internal scratch']
  %s0 = inlined_call_operand.vmem [shape: f32[16,384], index: 0, kind: input, shape index: {}]
  %s1 = inlined_call_operand.hbm [shape: f32[384,1024], index: 1, kind: input, shape index: {}]
  %s2 = inlined_call_operand.hbm [shape: f32[1,1024], index: 2, kind: input, shape index: {}]
  %s3 = inlined_call_operand.hbm [shape: f32[1024,1024], index: 3, kind: input, shape index: {}]
  %s4 = inlined_call_operand.hbm [shape: f32[1,1024], index: 4, kind: input, shape index: {}]
  %s5 = inlined_call_operand.hbm [shape: f32[1024,1024], index: 5, kind: input, shape index: {}]
  %s6 = inlined_call_operand.hbm [shape: f32[1,1024], index: 6, kind: input, shape index: {}]
  %s7 = inlined_call_operand.hbm [shape: f32[1024,384], index: 7, kind: input, shape index: {}]
  %s8 = inlined_call_operand.hbm [shape: f32[1,384], index: 8, kind: input, shape index: {}]
  %s9 = inlined_call_operand.vmem [shape: f32[16,384], index: 9, kind: output, shape index: {}]
  %s10 = sld [smem:[#allocation0]]
  $region78: #{net_forward.1} parent=0
    _
  %s12 = ssub.s32 1, %s10
  %s13 = scalar_select 0, %s12, %s10
  $region1: #{net_forward.1} parent=0
    #allocation2 [shape = 'u8[1572864]{0}', space=vmem, size = 0x180000, scoped, tag = 'input window, operand 1, single buffered']
    #allocation3 [shape = 's32[1]{0}', space=sflag, size = 0x4, scoped, tag = 'scoped memory for net_forward.1']
    #allocation4 [shape = 'u8[4096]{0}', space=vmem, size = 0x1000, scoped, tag = 'input window, operand 2, single buffered']
    #allocation5 [shape = 's32[1]{0}', space=sflag, size = 0x4, scoped, tag = 'scoped memory for net_forward.1']
    #allocation6 [shape = 'u8[4194304]{0}', space=vmem, size = 0x400000, scoped, tag = 'input window, operand 3, single buffered']
    #allocation7 [shape = 'u8[4096]{0}', space=vmem, size = 0x1000, scoped, tag = 'input window, operand 4, single buffered']
    #allocation8 [shape = 's32[1]{0}', space=sflag, size = 0x4, scoped, tag = 'scoped memory for net_forward.1']
    #allocation9 [shape = 'u8[4194304]{0}', space=vmem, size = 0x400000, scoped, tag = 'input window, operand 5, single buffered']
    #allocation10 [shape = 'u8[4096]{0}', space=vmem, size = 0x1000, scoped, tag = 'input window, operand 6, single buffered']
    #allocation11 [shape = 's32[1]{0}', space=sflag, size = 0x4, scoped, tag = 'scoped memory for net_forward.1']
    #allocation12 [shape = 'u8[1572864]{0}', space=vmem, size = 0x180000, scoped, tag = 'input window, operand 7, single buffered']
    #allocation13 [shape = 'u8[1536]{0}', space=vmem, size = 0x800, scoped, tag = 'input window, operand 8, single buffered']
    #allocation14 [shape = 's32[1]{0}', space=sflag, size = 0x4, scoped, tag = 'scoped memory for net_forward.1']
    %14 = vsyncpa [#allocation3], 0
    %15 = vsyncpa [#allocation5], 0
    %16 = vsyncpa [#allocation8], 0
    %17 = vsyncpa [#allocation11], 0
    %18 = vsyncpa [#allocation14], 0
    // Predicated region
    $region2: #{net_forward.1} parent=1 // pred_check
      _
    $region3: #{net_forward.1} parent=1 // pred_check_branch
      %20 = sbr.rel (0) target = $region5
    $region4: #{net_forward.1} parent=1 // pred_region
      _
    $region5: #{net_forward.1} parent=1 // pred_fallthru
      _
    // Predicated region
    $region6: #{net_forward.1} parent=1 // pred_check
      _
    $region7: #{net_forward.1} parent=1 // pred_check_branch
      %22 = sbr.rel (0) target = $region9
    $region8: #{net_forward.1} parent=1 // pred_region
      %s24 = ssub.s32 49152, 49152
      %25 = vsyncadd [#allocation3], %s24
      %s26 = sshll.u32 [#allocation2], 4
      %s27 = int_to_ptr.vmem [resolvable:$true] %s26
      %32 = dma.hbm_to_vmem [thread:$0]  %s1, 49152, %s27, [#allocation3], 1024, 1024, 64
    $region9: #{net_forward.1} parent=1 // pred_fallthru
      _
    // Predicated region
    $region10: #{net_forward.1} parent=1 // pred_check
      _
    $region11: #{net_forward.1} parent=1 // pred_check_branch
      %34 = sbr.rel (0) target = $region13
    $region12: #{net_forward.1} parent=1 // pred_region
      %s36 = ssub.s32 128, 128
      %37 = vsyncadd [#allocation5], %s36
      %s39 = sshll.u32 [#allocation4], 4
      %s40 = int_to_ptr.vmem [resolvable:$true] %s39
      %42 = dma.hbm_to_vmem [thread:$0]  %s2, 128, %s40, [#allocation5]
    $region13: #{net_forward.1} parent=1 // pred_fallthru
      _
    // Predicated region
    $region14: #{net_forward.1} parent=1 // pred_check
      _
    $region15: #{net_forward.1} parent=1 // pred_check_branch
      %44 = sbr.rel (0) target = $region17
    $region16: #{net_forward.1} parent=1 // pred_region
      %s46 = ssub.s32 131072, 131072
      %47 = vsyncadd [#allocation5], %s46
      %s48 = sshll.u32 [#allocation6], 4
      %s49 = int_to_ptr.vmem [resolvable:$true] %s48
      %54 = dma.hbm_to_vmem [thread:$0]  %s3, 131072, %s49, [#allocation5], 1024, 1024, 64
    $region17: #{net_forward.1} parent=1 // pred_fallthru
      _
    // Predicated region
    $region18: #{net_forward.1} parent=1 // pred_check
      _
    $region19: #{net_forward.1} parent=1 // pred_check_branch
      %56 = sbr.rel (0) target = $region21
    $region20: #{net_forward.1} parent=1 // pred_region
      %s58 = ssub.s32 128, 128
      %59 = vsyncadd [#allocation8], %s58
      %s61 = sshll.u32 [#allocation7], 4
      %s62 = int_to_ptr.vmem [resolvable:$true] %s61
      %64 = dma.hbm_to_vmem [thread:$0]  %s4, 128, %s62, [#allocation8]
    $region21: #{net_forward.1} parent=1 // pred_fallthru
      _
    // Predicated region
    $region22: #{net_forward.1} parent=1 // pred_check
      _
    $region23: #{net_forward.1} parent=1 // pred_check_branch
      %66 = sbr.rel (0) target = $region25
    $region24: #{net_forward.1} parent=1 // pred_region
      %s68 = ssub.s32 131072, 131072
      %69 = vsyncadd [#allocation8], %s68
      %s70 = sshll.u32 [#allocation9], 4
      %s71 = int_to_ptr.vmem [resolvable:$true] %s70
      %76 = dma.hbm_to_vmem [thread:$0]  %s5, 131072, %s71, [#allocation8], 1024, 1024, 64
    $region25: #{net_forward.1} parent=1 // pred_fallthru
      _
    // Predicated region
    $region26: #{net_forward.1} parent=1 // pred_check
      _
    $region27: #{net_forward.1} parent=1 // pred_check_branch
      %78 = sbr.rel (0) target = $region29
    $region28: #{net_forward.1} parent=1 // pred_region
      %s80 = ssub.s32 128, 128
      %81 = vsyncadd [#allocation11], %s80
      %s83 = sshll.u32 [#allocation10], 4
      %s84 = int_to_ptr.vmem [resolvable:$true] %s83
      %86 = dma.hbm_to_vmem [thread:$0]  %s6, 128, %s84, [#allocation11]
    $region29: #{net_forward.1} parent=1 // pred_fallthru
      _
    // Predicated region
    $region30: #{net_forward.1} parent=1 // pred_check
      _
    $region31: #{net_forward.1} parent=1 // pred_check_branch
      %88 = sbr.rel (0) target = $region33
    $region32: #{net_forward.1} parent=1 // pred_region
      %s90 = ssub.s32 49152, 49152
      %91 = vsyncadd [#allocation11], %s90
      %s92 = sshll.u32 [#allocation12], 4
      %s93 = int_to_ptr.vmem [resolvable:$true] %s92
      %98 = dma.hbm_to_vmem [thread:$0]  %s7, 49152, %s93, [#allocation11], 384, 384, 24
    $region33: #{net_forward.1} parent=1 // pred_fallthru
      _
    // Predicated region
    $region34: #{net_forward.1} parent=1 // pred_check
      _
    $region35: #{net_forward.1} parent=1 // pred_check_branch
      %100 = sbr.rel (0) target = $region37
    $region36: #{net_forward.1} parent=1 // pred_region
      %s102 = ssub.s32 48, 48
      %103 = vsyncadd [#allocation14], %s102
      %s105 = sshll.u32 [#allocation13], 4
      %s106 = int_to_ptr.vmem [resolvable:$true] %s105
      %108 = dma.hbm_to_vmem [thread:$0]  %s8, 48, %s106, [#allocation14]
    $region37: #{net_forward.1} parent=1 // pred_fallthru
      _
    // Predicated region
    $region38: #{net_forward.1} parent=1 // pred_check
      _
    $region39: #{net_forward.1} parent=1 // pred_check_branch
      %110 = sbr.rel (0) target = $region41
    $region40: #{net_forward.1} parent=1 // pred_region
      %111 = dma.done [#allocation3], 49152
    $region41: #{net_forward.1} parent=1 // pred_fallthru
      _
    // Predicated region
    $region42: #{net_forward.1} parent=1 // pred_check
      _
    $region43: #{net_forward.1} parent=1 // pred_check_branch
      %113 = sbr.rel (0) target = $region45
    $region44: #{net_forward.1} parent=1 // pred_region
      %114 = dma.done [#allocation5], 128
    $region45: #{net_forward.1} parent=1 // pred_fallthru
      _
    // Predicated region
    $region46: #{net_forward.1} parent=1 // pred_check
      _
    $region47: #{net_forward.1} parent=1 // pred_check_branch
      %116 = sbr.rel (0) target = $region49
    $region48: #{net_forward.1} parent=1 // pred_region
      %117 = dma.done [#allocation5], 131072
    $region49: #{net_forward.1} parent=1 // pred_fallthru
      _
    // Predicated region
    $region50: #{net_forward.1} parent=1 // pred_check
      _
    $region51: #{net_forward.1} parent=1 // pred_check_branch
      %119 = sbr.rel (0) target = $region53
    $region52: #{net_forward.1} parent=1 // pred_region
      %120 = dma.done [#allocation8], 128
    $region53: #{net_forward.1} parent=1 // pred_fallthru
      _
    // Predicated region
    $region54: #{net_forward.1} parent=1 // pred_check
      _
    $region55: #{net_forward.1} parent=1 // pred_check_branch
      %122 = sbr.rel (0) target = $region57
    $region56: #{net_forward.1} parent=1 // pred_region
      %123 = dma.done [#allocation8], 131072
    $region57: #{net_forward.1} parent=1 // pred_fallthru
      _
    // Predicated region
    $region58: #{net_forward.1} parent=1 // pred_check
      _
    $region59: #{net_forward.1} parent=1 // pred_check_branch
      %125 = sbr.rel (0) target = $region61
    $region60: #{net_forward.1} parent=1 // pred_region
      %126 = dma.done [#allocation11], 128
    $region61: #{net_forward.1} parent=1 // pred_fallthru
      _
    // Predicated region
    $region62: #{net_forward.1} parent=1 // pred_check
      _
    $region63: #{net_forward.1} parent=1 // pred_check_branch
      %128 = sbr.rel (0) target = $region65
    $region64: #{net_forward.1} parent=1 // pred_region
      %129 = dma.done [#allocation11], 49152
    $region65: #{net_forward.1} parent=1 // pred_fallthru
      _
    // Predicated region
    $region66: #{net_forward.1} parent=1 // pred_check
      _
    $region67: #{net_forward.1} parent=1 // pred_check_branch
      %131 = sbr.rel (0) target = $region69
    $region68: #{net_forward.1} parent=1 // pred_region
      %132 = dma.done [#allocation14], 48
    $region69: #{net_forward.1} parent=1 // pred_fallthru
      _
    %v133 = vld [vmem:[%s0] sm:$0xff]
    %v134 = vld [vmem:[%s0 + $0x8] sm:$0xff]
    %v135 = vld [vmem:[%s0 + $0x10] sm:$0xff]
    %v136 = vld [vmem:[%s0 + $0x18] sm:$0xff]
    %v137 = vld [vmem:[%s0 + $0x20] sm:$0xff]
    %v138 = vld [vmem:[%s0 + $0x28] sm:$0xff]
    %v139 = vld [vmem:[#allocation2] sm:$0xff]
    %v140 = vld [vmem:[#allocation2 + $0x8] sm:$0xff]
    %v141 = vld [vmem:[#allocation2 + $0x10] sm:$0xff]
    %v142 = vld [vmem:[#allocation2 + $0x18] sm:$0xff]
    %v143 = vld [vmem:[#allocation2 + $0x20] sm:$0xff]
    %v144 = vld [vmem:[#allocation2 + $0x28] sm:$0xff]
    %v145 = vld [vmem:[#allocation2 + $0x30] sm:$0xff]
    %v146 = vld [vmem:[#allocation2 + $0x38] sm:$0xff]
    %v147 = vld [vmem:[#allocation2 + $0x40] sm:$0xff]
    %v148 = vld [vmem:[#allocation2 + $0x48] sm:$0xff]
    %v149 = vld [vmem:[#allocation2 + $0x50] sm:$0xff]
    %v150 = vld [vmem:[#allocation2 + $0x58] sm:$0xff]
    %v151 = vld [vmem:[#allocation2 + $0x60] sm:$0xff]
    %v152 = vld [vmem:[#allocation2 + $0x68] sm:$0xff]
    %v153 = vld [vmem:[#allocation2 + $0x70] sm:$0xff]
    %v154 = vld [vmem:[#allocation2 + $0x78] sm:$0xff]
    %v155 = vld [vmem:[#allocation2 + $0x80] sm:$0xff]
    %v156 = vld [vmem:[#allocation2 + $0x88] sm:$0xff]
    %v157 = vld [vmem:[#allocation2 + $0x90] sm:$0xff]
    %v158 = vld [vmem:[#allocation2 + $0x98] sm:$0xff]
    %v159 = vld [vmem:[#allocation2 + $0xa0] sm:$0xff]
    %v160 = vld [vmem:[#allocation2 + $0xa8] sm:$0xff]
    %v161 = vld [vmem:[#allocation2 + $0xb0] sm:$0xff]
    %v162 = vld [vmem:[#allocation2 + $0xb8] sm:$0xff]
    %v163 = vld [vmem:[#allocation2 + $0xc0] sm:$0xff]
    %v164 = vld [vmem:[#allocation2 + $0xc8] sm:$0xff]
    %v165 = vld [vmem:[#allocation2 + $0xd0] sm:$0xff]
    %v166 = vld [vmem:[#allocation2 + $0xd8] sm:$0xff]
    %v167 = vld [vmem:[#allocation2 + $0xe0] sm:$0xff]
    %v168 = vld [vmem:[#allocation2 + $0xe8] sm:$0xff]
    %v169 = vld [vmem:[#allocation2 + $0xf0] sm:$0xff]
    %v170 = vld [vmem:[#allocation2 + $0xf8] sm:$0xff]
    %v171 = vld [vmem:[#allocation2 + $0x100] sm:$0xff]
    %v172 = vld [vmem:[#allocation2 + $0x108] sm:$0xff]
    %v173 = vld [vmem:[#allocation2 + $0x110] sm:$0xff]
    %v174 = vld [vmem:[#allocation2 + $0x118] sm:$0xff]
    %v175 = vld [vmem:[#allocation2 + $0x120] sm:$0xff]
    %v176 = vld [vmem:[#allocation2 + $0x128] sm:$0xff]
    %v177 = vld [vmem:[#allocation2 + $0x130] sm:$0xff]
    %v178 = vld [vmem:[#allocation2 + $0x138] sm:$0xff]
    %v179 = vld [vmem:[#allocation2 + $0x140] sm:$0xff]
    %v180 = vld [vmem:[#allocation2 + $0x148] sm:$0xff]
    %v181 = vld [vmem:[#allocation2 + $0x150] sm:$0xff]
    %v182 = vld [vmem:[#allocation2 + $0x158] sm:$0xff]
    %v183 = vld [vmem:[#allocation2 + $0x160] sm:$0xff]
    %v184 = vld [vmem:[#allocation2 + $0x168] sm:$0xff]
    %v185 = vld [vmem:[#allocation2 + $0x170] sm:$0xff]
    %v186 = vld [vmem:[#allocation2 + $0x178] sm:$0xff]
    %v187 = vld [vmem:[#allocation2 + $0x180] sm:$0xff]
    %v188 = vld [vmem:[#allocation2 + $0x188] sm:$0xff]
    %v189 = vld [vmem:[#allocation2 + $0x190] sm:$0xff]
    %v190 = vld [vmem:[#allocation2 + $0x198] sm:$0xff]
    %v191 = vld [vmem:[#allocation2 + $0x1a0] sm:$0xff]
    %v192 = vld [vmem:[#allocation2 + $0x1a8] sm:$0xff]
    %v193 = vld [vmem:[#allocation2 + $0x1b0] sm:$0xff]
    %v194 = vld [vmem:[#allocation2 + $0x1b8] sm:$0xff]
    %v195 = vld [vmem:[#allocation2 + $0x1c0] sm:$0xff]
    %v196 = vld [vmem:[#allocation2 + $0x1c8] sm:$0xff]
    %v197 = vld [vmem:[#allocation2 + $0x1d0] sm:$0xff]
    %v198 = vld [vmem:[#allocation2 + $0x1d8] sm:$0xff]
    %v199 = vld [vmem:[#allocation2 + $0x1e0] sm:$0xff]
    %v200 = vld [vmem:[#allocation2 + $0x1e8] sm:$0xff]
    %v201 = vld [vmem:[#allocation2 + $0x1f0] sm:$0xff]
    %v202 = vld [vmem:[#allocation2 + $0x1f8] sm:$0xff]
    %v203 = vld [vmem:[#allocation2 + $0x200] sm:$0xff]
    %v204 = vld [vmem:[#allocation2 + $0x208] sm:$0xff]
    %v205 = vld [vmem:[#allocation2 + $0x210] sm:$0xff]
    %v206 = vld [vmem:[#allocation2 + $0x218] sm:$0xff]
    %v207 = vld [vmem:[#allocation2 + $0x220] sm:$0xff]
    %v208 = vld [vmem:[#allocation2 + $0x228] sm:$0xff]
    %v209 = vld [vmem:[#allocation2 + $0x230] sm:$0xff]
    %v210 = vld [vmem:[#allocation2 + $0x238] sm:$0xff]
    %v211 = vld [vmem:[#allocation2 + $0x240] sm:$0xff]
    %v212 = vld [vmem:[#allocation2 + $0x248] sm:$0xff]
    %v213 = vld [vmem:[#allocation2 + $0x250] sm:$0xff]
    %v214 = vld [vmem:[#allocation2 + $0x258] sm:$0xff]
    %v215 = vld [vmem:[#allocation2 + $0x260] sm:$0xff]
    %v216 = vld [vmem:[#allocation2 + $0x268] sm:$0xff]
    %v217 = vld [vmem:[#allocation2 + $0x270] sm:$0xff]
    %v218 = vld [vmem:[#allocation2 + $0x278] sm:$0xff]
    %v219 = vld [vmem:[#allocation2 + $0x280] sm:$0xff]
    %v220 = vld [vmem:[#allocation2 + $0x288] sm:$0xff]
    %v221 = vld [vmem:[#allocation2 + $0x290] sm:$0xff]
    %v222 = vld [vmem:[#allocation2 + $0x298] sm:$0xff]
    %v223 = vld [vmem:[#allocation2 + $0x2a0] sm:$0xff]
    %v224 = vld [vmem:[#allocation2 + $0x2a8] sm:$0xff]
    %v225 = vld [vmem:[#allocation2 + $0x2b0] sm:$0xff]
    %v226 = vld [vmem:[#allocation2 + $0x2b8] sm:$0xff]
    %v227 = vld [vmem:[#allocation2 + $0x2c0] sm:$0xff]
    %v228 = vld [vmem:[#allocation2 + $0x2c8] sm:$0xff]
    %v229 = vld [vmem:[#allocation2 + $0x2d0] sm:$0xff]
    %v230 = vld [vmem:[#allocation2 + $0x2d8] sm:$0xff]
    %v231 = vld [vmem:[#allocation2 + $0x2e0] sm:$0xff]
    %v232 = vld [vmem:[#allocation2 + $0x2e8] sm:$0xff]
    %v233 = vld [vmem:[#allocation2 + $0x2f0] sm:$0xff]
    %v234 = vld [vmem:[#allocation2 + $0x2f8] sm:$0xff]
    %v235 = vld [vmem:[#allocation2 + $0x300] sm:$0xff]
    %v236 = vld [vmem:[#allocation2 + $0x308] sm:$0xff]
    %v237 = vld [vmem:[#allocation2 + $0x310] sm:$0xff]
    %v238 = vld [vmem:[#allocation2 + $0x318] sm:$0xff]
    %v239 = vld [vmem:[#allocation2 + $0x320] sm:$0xff]
    %v240 = vld [vmem:[#allocation2 + $0x328] sm:$0xff]
    %v241 = vld [vmem:[#allocation2 + $0x330] sm:$0xff]
    %v242 = vld [vmem:[#allocation2 + $0x338] sm:$0xff]
    %v243 = vld [vmem:[#allocation2 + $0x340] sm:$0xff]
    %v244 = vld [vmem:[#allocation2 + $0x348] sm:$0xff]
    %v245 = vld [vmem:[#allocation2 + $0x350] sm:$0xff]
    %v246 = vld [vmem:[#allocation2 + $0x358] sm:$0xff]
    %v247 = vld [vmem:[#allocation2 + $0x360] sm:$0xff]
    %v248 = vld [vmem:[#allocation2 + $0x368] sm:$0xff]
    %v249 = vld [vmem:[#allocation2 + $0x370] sm:$0xff]
    %v250 = vld [vmem:[#allocation2 + $0x378] sm:$0xff]
    %v251 = vld [vmem:[#allocation2 + $0x380] sm:$0xff]
    %v252 = vld [vmem:[#allocation2 + $0x388] sm:$0xff]
    %v253 = vld [vmem:[#allocation2 + $0x390] sm:$0xff]
    %v254 = vld [vmem:[#allocation2 + $0x398] sm:$0xff]
    %v255 = vld [vmem:[#allocation2 + $0x3a0] sm:$0xff]
    %v256 = vld [vmem:[#allocation2 + $0x3a8] sm:$0xff]
    %v257 = vld [vmem:[#allocation2 + $0x3b0] sm:$0xff]
    %v258 = vld [vmem:[#allocation2 + $0x3b8] sm:$0xff]
    %v259 = vld [vmem:[#allocation2 + $0x3c0] sm:$0xff]
    %v260 = vld [vmem:[#allocation2 + $0x3c8] sm:$0xff]
    %v261 = vld [vmem:[#allocation2 + $0x3d0] sm:$0xff]
    %v262 = vld [vmem:[#allocation2 + $0x3d8] sm:$0xff]
    %v263 = vld [vmem:[#allocation2 + $0x3e0] sm:$0xff]
    %v264 = vld [vmem:[#allocation2 + $0x3e8] sm:$0xff]
    %v265 = vld [vmem:[#allocation2 + $0x3f0] sm:$0xff]
    %v266 = vld [vmem:[#allocation2 + $0x3f8] sm:$0xff]
    %v267 = vld [vmem:[#allocation2 + $0x400] sm:$0xff]
    %v268 = vld [vmem:[#allocation2 + $0x408] sm:$0xff]
    %v269 = vld [vmem:[#allocation2 + $0x410] sm:$0xff]
    %v270 = vld [vmem:[#allocation2 + $0x418] sm:$0xff]
    %v271 = vld [vmem:[#allocation2 + $0x420] sm:$0xff]
    %v272 = vld [vmem:[#allocation2 + $0x428] sm:$0xff]
    %v273 = vld [vmem:[#allocation2 + $0x430] sm:$0xff]
    %v274 = vld [vmem:[#allocation2 + $0x438] sm:$0xff]
    %v275 = vld [vmem:[#allocation2 + $0x440] sm:$0xff]
    %v276 = vld [vmem:[#allocation2 + $0x448] sm:$0xff]
    %v277 = vld [vmem:[#allocation2 + $0x450] sm:$0xff]
    %v278 = vld [vmem:[#allocation2 + $0x458] sm:$0xff]
    %v279 = vld [vmem:[#allocation2 + $0x460] sm:$0xff]
    %v280 = vld [vmem:[#allocation2 + $0x468] sm:$0xff]
    %v281 = vld [vmem:[#allocation2 + $0x470] sm:$0xff]
    %v282 = vld [vmem:[#allocation2 + $0x478] sm:$0xff]
    %v283 = vld [vmem:[#allocation2 + $0x480] sm:$0xff]
    %v284 = vld [vmem:[#allocation2 + $0x488] sm:$0xff]
    %v285 = vld [vmem:[#allocation2 + $0x490] sm:$0xff]
    %v286 = vld [vmem:[#allocation2 + $0x498] sm:$0xff]
    %v287 = vld [vmem:[#allocation2 + $0x4a0] sm:$0xff]
    %v288 = vld [vmem:[#allocation2 + $0x4a8] sm:$0xff]
    %v289 = vld [vmem:[#allocation2 + $0x4b0] sm:$0xff]
    %v290 = vld [vmem:[#allocation2 + $0x4b8] sm:$0xff]
    %v291 = vld [vmem:[#allocation2 + $0x4c0] sm:$0xff]
    %v292 = vld [vmem:[#allocation2 + $0x4c8] sm:$0xff]
    %v293 = vld [vmem:[#allocation2 + $0x4d0] sm:$0xff]
    %v294 = vld [vmem:[#allocation2 + $0x4d8] sm:$0xff]
    %v295 = vld [vmem:[#allocation2 + $0x4e0] sm:$0xff]
    %v296 = vld [vmem:[#allocation2 + $0x4e8] sm:$0xff]
    %v297 = vld [vmem:[#allocation2 + $0x4f0] sm:$0xff]
    %v298 = vld [vmem:[#allocation2 + $0x4f8] sm:$0xff]
    %v299 = vld [vmem:[#allocation2 + $0x500] sm:$0xff]
    %v300 = vld [vmem:[#allocation2 + $0x508] sm:$0xff]
    %v301 = vld [vmem:[#allocation2 + $0x510] sm:$0xff]
    %v302 = vld [vmem:[#allocation2 + $0x518] sm:$0xff]
    %v303 = vld [vmem:[#allocation2 + $0x520] sm:$0xff]
    %v304 = vld [vmem:[#allocation2 + $0x528] sm:$0xff]
    %v305 = vld [vmem:[#allocation2 + $0x530] sm:$0xff]
    %v306 = vld [vmem:[#allocation2 + $0x538] sm:$0xff]
    %v307 = vld [vmem:[#allocation2 + $0x540] sm:$0xff]
    %v308 = vld [vmem:[#allocation2 + $0x548] sm:$0xff]
    %v309 = vld [vmem:[#allocation2 + $0x550] sm:$0xff]
    %v310 = vld [vmem:[#allocation2 + $0x558] sm:$0xff]
    %v311 = vld [vmem:[#allocation2 + $0x560] sm:$0xff]
    %v312 = vld [vmem:[#allocation2 + $0x568] sm:$0xff]
    %v313 = vld [vmem:[#allocation2 + $0x570] sm:$0xff]
    %v314 = vld [vmem:[#allocation2 + $0x578] sm:$0xff]
    %v315 = vld [vmem:[#allocation2 + $0x580] sm:$0xff]
    %v316 = vld [vmem:[#allocation2 + $0x588] sm:$0xff]
    %v317 = vld [vmem:[#allocation2 + $0x590] sm:$0xff]
    %v318 = vld [vmem:[#allocation2 + $0x598] sm:$0xff]
    %v319 = vld [vmem:[#allocation2 + $0x5a0] sm:$0xff]
    %v320 = vld [vmem:[#allocation2 + $0x5a8] sm:$0xff]
    %v321 = vld [vmem:[#allocation2 + $0x5b0] sm:$0xff]
    %v322 = vld [vmem:[#allocation2 + $0x5b8] sm:$0xff]
    %v323 = vld [vmem:[#allocation2 + $0x5c0] sm:$0xff]
    %v324 = vld [vmem:[#allocation2 + $0x5c8] sm:$0xff]
    %v325 = vld [vmem:[#allocation2 + $0x5d0] sm:$0xff]
    %v326 = vld [vmem:[#allocation2 + $0x5d8] sm:$0xff]
    %v327 = vld [vmem:[#allocation2 + $0x5e0] sm:$0xff]
    %v328 = vld [vmem:[#allocation2 + $0x5e8] sm:$0xff]
    %v329 = vld [vmem:[#allocation2 + $0x5f0] sm:$0xff]
    %v330 = vld [vmem:[#allocation2 + $0x5f8] sm:$0xff]
    %v331 = vld [vmem:[#allocation2 + $0x600] sm:$0xff]
    %v332 = vld [vmem:[#allocation2 + $0x608] sm:$0xff]
    %v333 = vld [vmem:[#allocation2 + $0x610] sm:$0xff]
    %v334 = vld [vmem:[#allocation2 + $0x618] sm:$0xff]
    %v335 = vld [vmem:[#allocation2 + $0x620] sm:$0xff]
    %v336 = vld [vmem:[#allocation2 + $0x628] sm:$0xff]
    %v337 = vld [vmem:[#allocation2 + $0x630] sm:$0xff]
    %v338 = vld [vmem:[#allocation2 + $0x638] sm:$0xff]
    %v339 = vld [vmem:[#allocation2 + $0x640] sm:$0xff]
    %v340 = vld [vmem:[#allocation2 + $0x648] sm:$0xff]
    %v341 = vld [vmem:[#allocation2 + $0x650] sm:$0xff]
    %v342 = vld [vmem:[#allocation2 + $0x658] sm:$0xff]
    %v343 = vld [vmem:[#allocation2 + $0x660] sm:$0xff]
    %v344 = vld [vmem:[#allocation2 + $0x668] sm:$0xff]
    %v345 = vld [vmem:[#allocation2 + $0x670] sm:$0xff]
    %v346 = vld [vmem:[#allocation2 + $0x678] sm:$0xff]
    %v347 = vld [vmem:[#allocation2 + $0x680] sm:$0xff]
    %v348 = vld [vmem:[#allocation2 + $0x688] sm:$0xff]
    %v349 = vld [vmem:[#allocation2 + $0x690] sm:$0xff]
    %v350 = vld [vmem:[#allocation2 + $0x698] sm:$0xff]
    %v351 = vld [vmem:[#allocation2 + $0x6a0] sm:$0xff]
    %v352 = vld [vmem:[#allocation2 + $0x6a8] sm:$0xff]
    %v353 = vld [vmem:[#allocation2 + $0x6b0] sm:$0xff]
    %v354 = vld [vmem:[#allocation2 + $0x6b8] sm:$0xff]
    %v355 = vld [vmem:[#allocation2 + $0x6c0] sm:$0xff]
    %v356 = vld [vmem:[#allocation2 + $0x6c8] sm:$0xff]
    %v357 = vld [vmem:[#allocation2 + $0x6d0] sm:$0xff]
    %v358 = vld [vmem:[#allocation2 + $0x6d8] sm:$0xff]
    %v359 = vld [vmem:[#allocation2 + $0x6e0] sm:$0xff]
    %v360 = vld [vmem:[#allocation2 + $0x6e8] sm:$0xff]
    %v361 = vld [vmem:[#allocation2 + $0x6f0] sm:$0xff]
    %v362 = vld [vmem:[#allocation2 + $0x6f8] sm:$0xff]
    %v363 = vld [vmem:[#allocation2 + $0x700] sm:$0xff]
    %v364 = vld [vmem:[#allocation2 + $0x708] sm:$0xff]
    %v365 = vld [vmem:[#allocation2 + $0x710] sm:$0xff]
    %v366 = vld [vmem:[#allocation2 + $0x718] sm:$0xff]
    %v367 = vld [vmem:[#allocation2 + $0x720] sm:$0xff]
    %v368 = vld [vmem:[#allocation2 + $0x728] sm:$0xff]
    %v369 = vld [vmem:[#allocation2 + $0x730] sm:$0xff]
    %v370 = vld [vmem:[#allocation2 + $0x738] sm:$0xff]
    %v371 = vld [vmem:[#allocation2 + $0x740] sm:$0xff]
    %v372 = vld [vmem:[#allocation2 + $0x748] sm:$0xff]
    %v373 = vld [vmem:[#allocation2 + $0x750] sm:$0xff]
    %v374 = vld [vmem:[#allocation2 + $0x758] sm:$0xff]
    %v375 = vld [vmem:[#allocation2 + $0x760] sm:$0xff]
    %v376 = vld [vmem:[#allocation2 + $0x768] sm:$0xff]
    %v377 = vld [vmem:[#allocation2 + $0x770] sm:$0xff]
    %v378 = vld [vmem:[#allocation2 + $0x778] sm:$0xff]
    %v379 = vld [vmem:[#allocation2 + $0x780] sm:$0xff]
    %v380 = vld [vmem:[#allocation2 + $0x788] sm:$0xff]
    %v381 = vld [vmem:[#allocation2 + $0x790] sm:$0xff]
    %v382 = vld [vmem:[#allocation2 + $0x798] sm:$0xff]
    %v383 = vld [vmem:[#allocation2 + $0x7a0] sm:$0xff]
    %v384 = vld [vmem:[#allocation2 + $0x7a8] sm:$0xff]
    %v385 = vld [vmem:[#allocation2 + $0x7b0] sm:$0xff]
    %v386 = vld [vmem:[#allocation2 + $0x7b8] sm:$0xff]
    %v387 = vld [vmem:[#allocation2 + $0x7c0] sm:$0xff]
    %v388 = vld [vmem:[#allocation2 + $0x7c8] sm:$0xff]
    %v389 = vld [vmem:[#allocation2 + $0x7d0] sm:$0xff]
    %v390 = vld [vmem:[#allocation2 + $0x7d8] sm:$0xff]
    %v391 = vld [vmem:[#allocation2 + $0x7e0] sm:$0xff]
    %v392 = vld [vmem:[#allocation2 + $0x7e8] sm:$0xff]
    %v393 = vld [vmem:[#allocation2 + $0x7f0] sm:$0xff]
    %v394 = vld [vmem:[#allocation2 + $0x7f8] sm:$0xff]
    %v395 = vld [vmem:[#allocation2 + $0x800] sm:$0xff]
    %v396 = vld [vmem:[#allocation2 + $0x808] sm:$0xff]
    %v397 = vld [vmem:[#allocation2 + $0x810] sm:$0xff]
    %v398 = vld [vmem:[#allocation2 + $0x818] sm:$0xff]
    %v399 = vld [vmem:[#allocation2 + $0x820] sm:$0xff]
    %v400 = vld [vmem:[#allocation2 + $0x828] sm:$0xff]
    %v401 = vld [vmem:[#allocation2 + $0x830] sm:$0xff]
    %v402 = vld [vmem:[#allocation2 + $0x838] sm:$0xff]
    %v403 = vld [vmem:[#allocation2 + $0x840] sm:$0xff]
    %v404 = vld [vmem:[#allocation2 + $0x848] sm:$0xff]
    %v405 = vld [vmem:[#allocation2 + $0x850] sm:$0xff]
    %v406 = vld [vmem:[#allocation2 + $0x858] sm:$0xff]
    %v407 = vld [vmem:[#allocation2 + $0x860] sm:$0xff]
    %v408 = vld [vmem:[#allocation2 + $0x868] sm:$0xff]
    %v409 = vld [vmem:[#allocation2 + $0x870] sm:$0xff]
    %v410 = vld [vmem:[#allocation2 + $0x878] sm:$0xff]
    %v411 = vld [vmem:[#allocation2 + $0x880] sm:$0xff]
    %v412 = vld [vmem:[#allocation2 + $0x888] sm:$0xff]
    %v413 = vld [vmem:[#allocation2 + $0x890] sm:$0xff]
    %v414 = vld [vmem:[#allocation2 + $0x898] sm:$0xff]
    %v415 = vld [vmem:[#allocation2 + $0x8a0] sm:$0xff]
    %v416 = vld [vmem:[#allocation2 + $0x8a8] sm:$0xff]
    %v417 = vld [vmem:[#allocation2 + $0x8b0] sm:$0xff]
    %v418 = vld [vmem:[#allocation2 + $0x8b8] sm:$0xff]
    %v419 = vld [vmem:[#allocation2 + $0x8c0] sm:$0xff]
    %v420 = vld [vmem:[#allocation2 + $0x8c8] sm:$0xff]
    %v421 = vld [vmem:[#allocation2 + $0x8d0] sm:$0xff]
    %v422 = vld [vmem:[#allocation2 + $0x8d8] sm:$0xff]
    %v423 = vld [vmem:[#allocation2 + $0x8e0] sm:$0xff]
    %v424 = vld [vmem:[#allocation2 + $0x8e8] sm:$0xff]
    %v425 = vld [vmem:[#allocation2 + $0x8f0] sm:$0xff]
    %v426 = vld [vmem:[#allocation2 + $0x8f8] sm:$0xff]
    %v427 = vld [vmem:[#allocation2 + $0x900] sm:$0xff]
    %v428 = vld [vmem:[#allocation2 + $0x908] sm:$0xff]
    %v429 = vld [vmem:[#allocation2 + $0x910] sm:$0xff]
    %v430 = vld [vmem:[#allocation2 + $0x918] sm:$0xff]
    %v431 = vld [vmem:[#allocation2 + $0x920] sm:$0xff]
    %v432 = vld [vmem:[#allocation2 + $0x928] sm:$0xff]
    %v433 = vld [vmem:[#allocation2 + $0x930] sm:$0xff]
    %v434 = vld [vmem:[#allocation2 + $0x938] sm:$0xff]
    %v435 = vld [vmem:[#allocation2 + $0x940] sm:$0xff]
    %v436 = vld [vmem:[#allocation2 + $0x948] sm:$0xff]
    %v437 = vld [vmem:[#allocation2 + $0x950] sm:$0xff]
    %v438 = vld [vmem:[#allocation2 + $0x958] sm:$0xff]
    %v439 = vld [vmem:[#allocation2 + $0x960] sm:$0xff]
    %v440 = vld [vmem:[#allocation2 + $0x968] sm:$0xff]
    %v441 = vld [vmem:[#allocation2 + $0x970] sm:$0xff]
    %v442 = vld [vmem:[#allocation2 + $0x978] sm:$0xff]
    %v443 = vld [vmem:[#allocation2 + $0x980] sm:$0xff]
    %v444 = vld [vmem:[#allocation2 + $0x988] sm:$0xff]
    %v445 = vld [vmem:[#allocation2 + $0x990] sm:$0xff]
    %v446 = vld [vmem:[#allocation2 + $0x998] sm:$0xff]
    %v447 = vld [vmem:[#allocation2 + $0x9a0] sm:$0xff]
    %v448 = vld [vmem:[#allocation2 + $0x9a8] sm:$0xff]
    %v449 = vld [vmem:[#allocation2 + $0x9b0] sm:$0xff]
    %v450 = vld [vmem:[#allocation2 + $0x9b8] sm:$0xff]
    %v451 = vld [vmem:[#allocation2 + $0x9c0] sm:$0xff]
    %v452 = vld [vmem:[#allocation2 + $0x9c8] sm:$0xff]
    %v453 = vld [vmem:[#allocation2 + $0x9d0] sm:$0xff]
    %v454 = vld [vmem:[#allocation2 + $0x9d8] sm:$0xff]
    %v455 = vld [vmem:[#allocation2 + $0x9e0] sm:$0xff]
    %v456 = vld [vmem:[#allocation2 + $0x9e8] sm:$0xff]
    %v457 = vld [vmem:[#allocation2 + $0x9f0] sm:$0xff]
    %v458 = vld [vmem:[#allocation2 + $0x9f8] sm:$0xff]
    %v459 = vld [vmem:[#allocation2 + $0xa00] sm:$0xff]
    %v460 = vld [vmem:[#allocation2 + $0xa08] sm:$0xff]
    %v461 = vld [vmem:[#allocation2 + $0xa10] sm:$0xff]
    %v462 = vld [vmem:[#allocation2 + $0xa18] sm:$0xff]
    %v463 = vld [vmem:[#allocation2 + $0xa20] sm:$0xff]
    %v464 = vld [vmem:[#allocation2 + $0xa28] sm:$0xff]
    %v465 = vld [vmem:[#allocation2 + $0xa30] sm:$0xff]
    %v466 = vld [vmem:[#allocation2 + $0xa38] sm:$0xff]
    %v467 = vld [vmem:[#allocation2 + $0xa40] sm:$0xff]
    %v468 = vld [vmem:[#allocation2 + $0xa48] sm:$0xff]
    %v469 = vld [vmem:[#allocation2 + $0xa50] sm:$0xff]
    %v470 = vld [vmem:[#allocation2 + $0xa58] sm:$0xff]
    %v471 = vld [vmem:[#allocation2 + $0xa60] sm:$0xff]
    %v472 = vld [vmem:[#allocation2 + $0xa68] sm:$0xff]
    %v473 = vld [vmem:[#allocation2 + $0xa70] sm:$0xff]
    %v474 = vld [vmem:[#allocation2 + $0xa78] sm:$0xff]
    %v475 = vld [vmem:[#allocation2 + $0xa80] sm:$0xff]
    %v476 = vld [vmem:[#allocation2 + $0xa88] sm:$0xff]
    %v477 = vld [vmem:[#allocation2 + $0xa90] sm:$0xff]
    %v478 = vld [vmem:[#allocation2 + $0xa98] sm:$0xff]
    %v479 = vld [vmem:[#allocation2 + $0xaa0] sm:$0xff]
    %v480 = vld [vmem:[#allocation2 + $0xaa8] sm:$0xff]
    %v481 = vld [vmem:[#allocation2 + $0xab0] sm:$0xff]
    %v482 = vld [vmem:[#allocation2 + $0xab8] sm:$0xff]
    %v483 = vld [vmem:[#allocation2 + $0xac0] sm:$0xff]
    %v484 = vld [vmem:[#allocation2 + $0xac8] sm:$0xff]
    %v485 = vld [vmem:[#allocation2 + $0xad0] sm:$0xff]
    %v486 = vld [vmem:[#allocation2 + $0xad8] sm:$0xff]
    %v487 = vld [vmem:[#allocation2 + $0xae0] sm:$0xff]
    %v488 = vld [vmem:[#allocation2 + $0xae8] sm:$0xff]
    %v489 = vld [vmem:[#allocation2 + $0xaf0] sm:$0xff]
    %v490 = vld [vmem:[#allocation2 + $0xaf8] sm:$0xff]
    %v491 = vld [vmem:[#allocation2 + $0xb00] sm:$0xff]
    %v492 = vld [vmem:[#allocation2 + $0xb08] sm:$0xff]
    %v493 = vld [vmem:[#allocation2 + $0xb10] sm:$0xff]
    %v494 = vld [vmem:[#allocation2 + $0xb18] sm:$0xff]
    %v495 = vld [vmem:[#allocation2 + $0xb20] sm:$0xff]
    %v496 = vld [vmem:[#allocation2 + $0xb28] sm:$0xff]
    %v497 = vld [vmem:[#allocation2 + $0xb30] sm:$0xff]
    %v498 = vld [vmem:[#allocation2 + $0xb38] sm:$0xff]
    %v499 = vld [vmem:[#allocation2 + $0xb40] sm:$0xff]
    %v500 = vld [vmem:[#allocation2 + $0xb48] sm:$0xff]
    %v501 = vld [vmem:[#allocation2 + $0xb50] sm:$0xff]
    %v502 = vld [vmem:[#allocation2 + $0xb58] sm:$0xff]
    %v503 = vld [vmem:[#allocation2 + $0xb60] sm:$0xff]
    %v504 = vld [vmem:[#allocation2 + $0xb68] sm:$0xff]
    %v505 = vld [vmem:[#allocation2 + $0xb70] sm:$0xff]
    %v506 = vld [vmem:[#allocation2 + $0xb78] sm:$0xff]
    %v507 = vld [vmem:[#allocation2 + $0xb80] sm:$0xff]
    %v508 = vld [vmem:[#allocation2 + $0xb88] sm:$0xff]
    %v509 = vld [vmem:[#allocation2 + $0xb90] sm:$0xff]
    %v510 = vld [vmem:[#allocation2 + $0xb98] sm:$0xff]
    %v511 = vld [vmem:[#allocation2 + $0xba0] sm:$0xff]
    %v512 = vld [vmem:[#allocation2 + $0xba8] sm:$0xff]
    %v513 = vld [vmem:[#allocation2 + $0xbb0] sm:$0xff]
    %v514 = vld [vmem:[#allocation2 + $0xbb8] sm:$0xff]
    %v515 = vld [vmem:[#allocation2 + $0xbc0] sm:$0xff]
    %v516 = vld [vmem:[#allocation2 + $0xbc8] sm:$0xff]
    %v517 = vld [vmem:[#allocation2 + $0xbd0] sm:$0xff]
    %v518 = vld [vmem:[#allocation2 + $0xbd8] sm:$0xff]
    %v519 = vld [vmem:[#allocation2 + $0xbe0] sm:$0xff]
    %v520 = vld [vmem:[#allocation2 + $0xbe8] sm:$0xff]
    %v521 = vld [vmem:[#allocation2 + $0xbf0] sm:$0xff]
    %v522 = vld [vmem:[#allocation2 + $0xbf8] sm:$0xff]
    %v523 = vld [vmem:[#allocation4] sm:$0xff]
    %v525 = vlaneseq
    %v526 = vshrl.u32 %v525, 7
    %v527 = vsub.s32 0, %v526
    %v528 = vrot.slane %v523, %v527
    %v529 = vlaneseq
    %v530 = vshrl.u32 %v529, 7
    %v531 = vsub.s32 1, %v530
    %v532 = vrot.slane %v523, %v531
    %v533 = vlaneseq
    %v534 = vshrl.u32 %v533, 7
    %v535 = vsub.s32 2, %v534
    %v536 = vrot.slane %v523, %v535
    %v537 = vlaneseq
    %v538 = vshrl.u32 %v537, 7
    %v539 = vsub.s32 3, %v538
    %v540 = vrot.slane %v523, %v539
    %v541 = vlaneseq
    %v542 = vshrl.u32 %v541, 7
    %v543 = vsub.s32 4, %v542
    %v544 = vrot.slane %v523, %v543
    %v545 = vlaneseq
    %v546 = vshrl.u32 %v545, 7
    %v547 = vsub.s32 5, %v546
    %v548 = vrot.slane %v523, %v547
    %v549 = vlaneseq
    %v550 = vshrl.u32 %v549, 7
    %v551 = vsub.s32 6, %v550
    %v552 = vrot.slane %v523, %v551
    %v553 = vlaneseq
    %v554 = vshrl.u32 %v553, 7
    %v555 = vsub.s32 7, %v554
    %v556 = vrot.slane %v523, %v555
    %565 = vmatprep.subr.mxu0 %v140
    %566 = vmatpush1.msra.mxu0 %v139
    %567 = vmatprep.subr.mxu0 %v148
    %568 = vmatpush1.msra.mxu0 %v147
    %569 = vmatprep.subr.mxu0 %v156
    %570 = vmatpush1.msra.mxu0 %v155
    %571 = vmatprep.subr.mxu0 %v164
    %572 = vmatpush1.msra.mxu0 %v163
    %573 = vmatprep.subr.mxu0 %v172
    %574 = vmatpush1.msra.mxu0 %v171
    %575 = vmatprep.subr.mxu0 %v180
    %576 = vmatpush1.msra.mxu0 %v179
    %577 = vmatprep.subr.mxu0 %v188
    %578 = vmatpush1.msra.mxu0 %v187
    %579 = vmatprep.subr.mxu0 %v196
    %580 = vmatpush1.msra.mxu0 %v195
    %581 = vmatprep.subr.mxu0 %v204
    %582 = vmatpush1.msra.mxu0 %v203
    %583 = vmatprep.subr.mxu0 %v212
    %584 = vmatpush1.msra.mxu0 %v211
    %585 = vmatprep.subr.mxu0 %v220
    %586 = vmatpush1.msra.mxu0 %v219
    %587 = vmatprep.subr.mxu0 %v228
    %588 = vmatpush1.msra.mxu0 %v227
    %589 = vmatprep.subr.mxu0 %v236
    %590 = vmatpush1.msra.mxu0 %v235
    %591 = vmatprep.subr.mxu0 %v244
    %592 = vmatpush1.msra.mxu0 %v243
    %593 = vmatprep.subr.mxu0 %v252
    %594 = vmatpush1.msra.mxu0 %v251
    %595 = vmatprep.subr.mxu0 %v260
    %596 = vmatpush1.msra.mxu0 %v259
    %597 = vmatprep.subr.mxu0 %v268
    %598 = vmatpush1.msra.mxu0 %v267
    %599 = vmatprep.subr.mxu0 %v276
    %600 = vmatpush1.msra.mxu0 %v275
    %601 = vmatprep.subr.mxu0 %v284
    %602 = vmatpush1.msra.mxu0 %v283
    %603 = vmatprep.subr.mxu0 %v292
    %604 = vmatpush1.msra.mxu0 %v291
    %605 = vmatprep.subr.mxu0 %v300
    %606 = vmatpush1.msra.mxu0 %v299
    %607 = vmatprep.subr.mxu0 %v308
    %608 = vmatpush1.msra.mxu0 %v307
    %609 = vmatprep.subr.mxu0 %v316
    %610 = vmatpush1.msra.mxu0 %v315
    %611 = vmatprep.subr.mxu0 %v324
    %612 = vmatpush1.msra.mxu0 %v323
    %613 = vmatprep.subr.mxu0 %v332
    %614 = vmatpush1.msra.mxu0 %v331
    %615 = vmatprep.subr.mxu0 %v340
    %616 = vmatpush1.msra.mxu0 %v339
    %617 = vmatprep.subr.mxu0 %v348
    %618 = vmatpush1.msra.mxu0 %v347
    %619 = vmatprep.subr.mxu0 %v356
    %620 = vmatpush1.msra.mxu0 %v355
    %621 = vmatprep.subr.mxu0 %v364
    %622 = vmatpush1.msra.mxu0 %v363
    %623 = vmatprep.subr.mxu0 %v372
    %624 = vmatpush1.msra.mxu0 %v371
    %625 = vmatprep.subr.mxu0 %v380
    %626 = vmatpush1.msra.mxu0 %v379
    %627 = vmatprep.subr.mxu0 %v388
    %628 = vmatpush1.msra.mxu0 %v387
    %629 = vmatprep.mubr.f32.mxu0 %v134
    %630 = vmatmul.mubr.f32.gmra.mrb[0].mxu0 %v133
    %v631 = vpop.f32.mrb[0].mxu0
    %v632 = vadd.f32 %v528, %v631
    %v633 = vpop.f32.mrb[0].mxu0
    %v634 = vadd.f32 %v532, %v633
    %635 = vmatprep.mubr.f32.mxu0 %v137
    %636 = vmatmul.mubr.f32.gmra.mrb[0].mxu0 %v136
    %v637 = vpop.f32.mrb[0].mxu0
    %v638 = vadd.f32 %v528, %v637
    %v639 = vpop.f32.mrb[0].mxu0
    %v640 = vadd.f32 %v532, %v639
    %641 = vdwg.mxu0
    %642 = vmatprep.subr.mxu0 %v396
    %643 = vmatpush1.msra.mxu0 %v395
    %644 = vmatprep.subr.mxu0 %v404
    %645 = vmatpush1.msra.mxu0 %v403
    %646 = vmatprep.subr.mxu0 %v412
    %647 = vmatpush1.msra.mxu0 %v411
    %648 = vmatprep.subr.mxu0 %v420
    %649 = vmatpush1.msra.mxu0 %v419
    %650 = vmatprep.subr.mxu0 %v428
    %651 = vmatpush1.msra.mxu0 %v427
    %652 = vmatprep.subr.mxu0 %v436
    %653 = vmatpush1.msra.mxu0 %v435
    %654 = vmatprep.subr.mxu0 %v444
    %655 = vmatpush1.msra.mxu0 %v443
    %656 = vmatprep.subr.mxu0 %v452
    %657 = vmatpush1.msra.mxu0 %v451
    %658 = vmatprep.subr.mxu0 %v460
    %659 = vmatpush1.msra.mxu0 %v459
    %660 = vmatprep.subr.mxu0 %v468
    %661 = vmatpush1.msra.mxu0 %v467
    %662 = vmatprep.subr.mxu0 %v476
    %663 = vmatpush1.msra.mxu0 %v475
    %664 = vmatprep.subr.mxu0 %v484
    %665 = vmatpush1.msra.mxu0 %v483
    %666 = vmatprep.subr.mxu0 %v492
    %667 = vmatpush1.msra.mxu0 %v491
    %668 = vmatprep.subr.mxu0 %v500
    %669 = vmatpush1.msra.mxu0 %v499
    %670 = vmatprep.subr.mxu0 %v508
    %671 = vmatpush1.msra.mxu0 %v507
    %672 = vmatprep.subr.mxu0 %v516
    %673 = vmatpush1.msra.mxu0 %v515
    %674 = vmatprep.subr.mxu0 0.0
    %675 = vmatpush1.msra.mxu0 0.0
    %676 = vmatprep.subr.mxu0 0.0
    %677 = vmatpush1.msra.mxu0 0.0
    %678 = vmatprep.subr.mxu0 0.0
    %679 = vmatpush1.msra.mxu0 0.0
    %680 = vmatprep.subr.mxu0 0.0
    %681 = vmatpush1.msra.mxu0 0.0
    %682 = vmatprep.subr.mxu0 0.0
    %683 = vmatpush1.msra.mxu0 0.0
    %684 = vmatprep.subr.mxu0 0.0
    %685 = vmatpush1.msra.mxu0 0.0
    %686 = vmatprep.subr.mxu0 0.0
    %687 = vmatpush1.msra.mxu0 0.0
    %688 = vmatprep.subr.mxu0 0.0
    %689 = vmatpush1.msra.mxu0 0.0
    %690 = vmatprep.subr.mxu0 0.0
    %691 = vmatpush1.msra.mxu0 0.0
    %692 = vmatprep.subr.mxu0 0.0
    %693 = vmatpush1.msra.mxu0 0.0
    %694 = vmatprep.subr.mxu0 0.0
    %695 = vmatpush1.msra.mxu0 0.0
    %696 = vmatprep.subr.mxu0 0.0
    %697 = vmatpush1.msra.mxu0 0.0
    %698 = vmatprep.subr.mxu0 0.0
    %699 = vmatpush1.msra.mxu0 0.0
    %700 = vmatprep.subr.mxu0 0.0
    %701 = vmatpush1.msra.mxu0 0.0
    %702 = vmatprep.subr.mxu0 0.0
    %703 = vmatpush1.msra.mxu0 0.0
    %704 = vmatprep.subr.mxu0 0.0
    %705 = vmatpush1.msra.mxu0 0.0
    %706 = vmatprep.mubr.f32.mxu0 0.0
    %707 = vmatmul.mubr.f32.gmra.mrb[0].mxu0 %v135
    %v708 = vpop.f32.mrb[0].mxu0
    %v709 = vadd.f32 %v632, %v708
    %v710 = vpop.f32.mrb[0].mxu0
    %v711 = vadd.f32 %v634, %v710
    %712 = vmatprep.mubr.f32.mxu0 0.0
    %713 = vmatmul.mubr.f32.gmra.mrb[0].mxu0 %v138
    %v714 = vpop.f32.mrb[0].mxu0
    %v715 = vadd.f32 %v638, %v714
    %v716 = vpop.f32.mrb[0].mxu0
    %v717 = vadd.f32 %v640, %v716
    %718 = vdwg.mxu0
    %719 = vmatprep.subr.mxu0 %v142
    %720 = vmatpush1.msra.mxu0 %v141
    %721 = vmatprep.subr.mxu0 %v150
    %722 = vmatpush1.msra.mxu0 %v149
    %723 = vmatprep.subr.mxu0 %v158
    %724 = vmatpush1.msra.mxu0 %v157
    %725 = vmatprep.subr.mxu0 %v166
    %726 = vmatpush1.msra.mxu0 %v165
    %727 = vmatprep.subr.mxu0 %v174
    %728 = vmatpush1.msra.mxu0 %v173
    %729 = vmatprep.subr.mxu0 %v182
    %730 = vmatpush1.msra.mxu0 %v181
    %731 = vmatprep.subr.mxu0 %v190
    %732 = vmatpush1.msra.mxu0 %v189
    %733 = vmatprep.subr.mxu0 %v198
    %734 = vmatpush1.msra.mxu0 %v197
    %735 = vmatprep.subr.mxu0 %v206
    %736 = vmatpush1.msra.mxu0 %v205
    %737 = vmatprep.subr.mxu0 %v214
    %738 = vmatpush1.msra.mxu0 %v213
    %739 = vmatprep.subr.mxu0 %v222
    %740 = vmatpush1.msra.mxu0 %v221
    %741 = vmatprep.subr.mxu0 %v230
    %742 = vmatpush1.msra.mxu0 %v229
    %743 = vmatprep.subr.mxu0 %v238
    %744 = vmatpush1.msra.mxu0 %v237
    %745 = vmatprep.subr.mxu0 %v246
    %746 = vmatpush1.msra.mxu0 %v245
    %747 = vmatprep.subr.mxu0 %v254
    %748 = vmatpush1.msra.mxu0 %v253
    %749 = vmatprep.subr.mxu0 %v262
    %750 = vmatpush1.msra.mxu0 %v261
    %751 = vmatprep.subr.mxu0 %v270
    %752 = vmatpush1.msra.mxu0 %v269
    %753 = vmatprep.subr.mxu0 %v278
    %754 = vmatpush1.msra.mxu0 %v277
    %755 = vmatprep.subr.mxu0 %v286
    %756 = vmatpush1.msra.mxu0 %v285
    %757 = vmatprep.subr.mxu0 %v294
    %758 = vmatpush1.msra.mxu0 %v293
    %759 = vmatprep.subr.mxu0 %v302
    %760 = vmatpush1.msra.mxu0 %v301
    %761 = vmatprep.subr.mxu0 %v310
    %762 = vmatpush1.msra.mxu0 %v309
    %763 = vmatprep.subr.mxu0 %v318
    %764 = vmatpush1.msra.mxu0 %v317
    %765 = vmatprep.subr.mxu0 %v326
    %766 = vmatpush1.msra.mxu0 %v325
    %767 = vmatprep.subr.mxu0 %v334
    %768 = vmatpush1.msra.mxu0 %v333
    %769 = vmatprep.subr.mxu0 %v342
    %770 = vmatpush1.msra.mxu0 %v341
    %771 = vmatprep.subr.mxu0 %v350
    %772 = vmatpush1.msra.mxu0 %v349
    %773 = vmatprep.subr.mxu0 %v358
    %774 = vmatpush1.msra.mxu0 %v357
    %775 = vmatprep.subr.mxu0 %v366
    %776 = vmatpush1.msra.mxu0 %v365
    %777 = vmatprep.subr.mxu0 %v374
    %778 = vmatpush1.msra.mxu0 %v373
    %779 = vmatprep.subr.mxu0 %v382
    %780 = vmatpush1.msra.mxu0 %v381
    %781 = vmatprep.subr.mxu0 %v390
    %782 = vmatpush1.msra.mxu0 %v389
    %783 = vmatprep.mubr.f32.mxu0 %v134
    %784 = vmatmul.mubr.f32.gmra.mrb[0].mxu0 %v133
    %v785 = vpop.f32.mrb[0].mxu0
    %v786 = vadd.f32 %v536, %v785
    %v787 = vpop.f32.mrb[0].mxu0
    %v788 = vadd.f32 %v540, %v787
    %789 = vmatprep.mubr.f32.mxu0 %v137
    %790 = vmatmul.mubr.f32.gmra.mrb[0].mxu0 %v136
    %v791 = vpop.f32.mrb[0].mxu0
    %v792 = vadd.f32 %v536, %v791
    %v793 = vpop.f32.mrb[0].mxu0
    %v794 = vadd.f32 %v540, %v793
    %795 = vdwg.mxu0
    %796 = vmatprep.subr.mxu0 %v398
    %797 = vmatpush1.msra.mxu0 %v397
    %798 = vmatprep.subr.mxu0 %v406
    %799 = vmatpush1.msra.mxu0 %v405
    %800 = vmatprep.subr.mxu0 %v414
    %801 = vmatpush1.msra.mxu0 %v413
    %802 = vmatprep.subr.mxu0 %v422
    %803 = vmatpush1.msra.mxu0 %v421
    %804 = vmatprep.subr.mxu0 %v430
    %805 = vmatpush1.msra.mxu0 %v429
    %806 = vmatprep.subr.mxu0 %v438
    %807 = vmatpush1.msra.mxu0 %v437
    %808 = vmatprep.subr.mxu0 %v446
    %809 = vmatpush1.msra.mxu0 %v445
    %810 = vmatprep.subr.mxu0 %v454
    %811 = vmatpush1.msra.mxu0 %v453
    %812 = vmatprep.subr.mxu0 %v462
    %813 = vmatpush1.msra.mxu0 %v461
    %814 = vmatprep.subr.mxu0 %v470
    %815 = vmatpush1.msra.mxu0 %v469
    %816 = vmatprep.subr.mxu0 %v478
    %817 = vmatpush1.msra.mxu0 %v477
    %818 = vmatprep.subr.mxu0 %v486
    %819 = vmatpush1.msra.mxu0 %v485
    %820 = vmatprep.subr.mxu0 %v494
    %821 = vmatpush1.msra.mxu0 %v493
    %822 = vmatprep.subr.mxu0 %v502
    %823 = vmatpush1.msra.mxu0 %v501
    %824 = vmatprep.subr.mxu0 %v510
    %825 = vmatpush1.msra.mxu0 %v509
    %826 = vmatprep.subr.mxu0 %v518
    %827 = vmatpush1.msra.mxu0 %v517
    %828 = vmatprep.subr.mxu0 0.0
    %829 = vmatpush1.msra.mxu0 0.0
    %830 = vmatprep.subr.mxu0 0.0
    %831 = vmatpush1.msra.mxu0 0.0
    %832 = vmatprep.subr.mxu0 0.0
    %833 = vmatpush1.msra.mxu0 0.0
    %834 = vmatprep.subr.mxu0 0.0
    %835 = vmatpush1.msra.mxu0 0.0
    %836 = vmatprep.subr.mxu0 0.0
    %837 = vmatpush1.msra.mxu0 0.0
    %838 = vmatprep.subr.mxu0 0.0
    %839 = vmatpush1.msra.mxu0 0.0
    %840 = vmatprep.subr.mxu0 0.0
    %841 = vmatpush1.msra.mxu0 0.0
    %842 = vmatprep.subr.mxu0 0.0
    %843 = vmatpush1.msra.mxu0 0.0
    %844 = vmatprep.subr.mxu0 0.0
    %845 = vmatpush1.msra.mxu0 0.0
    %846 = vmatprep.subr.mxu0 0.0
    %847 = vmatpush1.msra.mxu0 0.0
    %848 = vmatprep.subr.mxu0 0.0
    %849 = vmatpush1.msra.mxu0 0.0
    %850 = vmatprep.subr.mxu0 0.0
    %851 = vmatpush1.msra.mxu0 0.0
    %852 = vmatprep.subr.mxu0 0.0
    %853 = vmatpush1.msra.mxu0 0.0
    %854 = vmatprep.subr.mxu0 0.0
    %855 = vmatpush1.msra.mxu0 0.0
    %856 = vmatprep.subr.mxu0 0.0
    %857 = vmatpush1.msra.mxu0 0.0
    %858 = vmatprep.subr.mxu0 0.0
    %859 = vmatpush1.msra.mxu0 0.0
    %860 = vmatprep.mubr.f32.mxu0 0.0
    %861 = vmatmul.mubr.f32.gmra.mrb[0].mxu0 %v135
    %v862 = vpop.f32.mrb[0].mxu0
    %v863 = vadd.f32 %v786, %v862
    %v864 = vpop.f32.mrb[0].mxu0
    %v865 = vadd.f32 %v788, %v864
    %866 = vmatprep.mubr.f32.mxu0 0.0
    %867 = vmatmul.mubr.f32.gmra.mrb[0].mxu0 %v138
    %v868 = vpop.f32.mrb[0].mxu0
    %v869 = vadd.f32 %v792, %v868
    %v870 = vpop.f32.mrb[0].mxu0
    %v871 = vadd.f32 %v794, %v870
    %872 = vdwg.mxu0
    %873 = vmatprep.subr.mxu0 %v144
    %874 = vmatpush1.msra.mxu0 %v143
    %875 = vmatprep.subr.mxu0 %v152
    %876 = vmatpush1.msra.mxu0 %v151
    %877 = vmatprep.subr.mxu0 %v160
    %878 = vmatpush1.msra.mxu0 %v159
    %879 = vmatprep.subr.mxu0 %v168
    %880 = vmatpush1.msra.mxu0 %v167
    %881 = vmatprep.subr.mxu0 %v176
    %882 = vmatpush1.msra.mxu0 %v175
    %883 = vmatprep.subr.mxu0 %v184
    %884 = vmatpush1.msra.mxu0 %v183
    %885 = vmatprep.subr.mxu0 %v192
    %886 = vmatpush1.msra.mxu0 %v191
    %887 = vmatprep.subr.mxu0 %v200
    %888 = vmatpush1.msra.mxu0 %v199
    %889 = vmatprep.subr.mxu0 %v208
    %890 = vmatpush1.msra.mxu0 %v207
    %891 = vmatprep.subr.mxu0 %v216
    %892 = vmatpush1.msra.mxu0 %v215
    %893 = vmatprep.subr.mxu0 %v224
    %894 = vmatpush1.msra.mxu0 %v223
    %895 = vmatprep.subr.mxu0 %v232
    %896 = vmatpush1.msra.mxu0 %v231
    %897 = vmatprep.subr.mxu0 %v240
    %898 = vmatpush1.msra.mxu0 %v239
    %899 = vmatprep.subr.mxu0 %v248
    %900 = vmatpush1.msra.mxu0 %v247
    %901 = vmatprep.subr.mxu0 %v256
    %902 = vmatpush1.msra.mxu0 %v255
    %903 = vmatprep.subr.mxu0 %v264
    %904 = vmatpush1.msra.mxu0 %v263
    %905 = vmatprep.subr.mxu0 %v272
    %906 = vmatpush1.msra.mxu0 %v271
    %907 = vmatprep.subr.mxu0 %v280
    %908 = vmatpush1.msra.mxu0 %v279
    %909 = vmatprep.subr.mxu0 %v288
    %910 = vmatpush1.msra.mxu0 %v287
    %911 = vmatprep.subr.mxu0 %v296
    %912 = vmatpush1.msra.mxu0 %v295
    %913 = vmatprep.subr.mxu0 %v304
    %914 = vmatpush1.msra.mxu0 %v303
    %915 = vmatprep.subr.mxu0 %v312
    %916 = vmatpush1.msra.mxu0 %v311
    %917 = vmatprep.subr.mxu0 %v320
    %918 = vmatpush1.msra.mxu0 %v319
    %919 = vmatprep.subr.mxu0 %v328
    %920 = vmatpush1.msra.mxu0 %v327
    %921 = vmatprep.subr.mxu0 %v336
    %922 = vmatpush1.msra.mxu0 %v335
    %923 = vmatprep.subr.mxu0 %v344
    %924 = vmatpush1.msra.mxu0 %v343
    %925 = vmatprep.subr.mxu0 %v352
    %926 = vmatpush1.msra.mxu0 %v351
    %927 = vmatprep.subr.mxu0 %v360
    %928 = vmatpush1.msra.mxu0 %v359
    %929 = vmatprep.subr.mxu0 %v368
    %930 = vmatpush1.msra.mxu0 %v367
    %931 = vmatprep.subr.mxu0 %v376
    %932 = vmatpush1.msra.mxu0 %v375
    %933 = vmatprep.subr.mxu0 %v384
    %934 = vmatpush1.msra.mxu0 %v383
    %935 = vmatprep.subr.mxu0 %v392
    %936 = vmatpush1.msra.mxu0 %v391
    %937 = vmatprep.mubr.f32.mxu0 %v134
    %938 = vmatmul.mubr.f32.gmra.mrb[0].mxu0 %v133
    %v939 = vpop.f32.mrb[0].mxu0
    %v940 = vadd.f32 %v544, %v939
    %v941 = vpop.f32.mrb[0].mxu0
    %v942 = vadd.f32 %v548, %v941
    %943 = vmatprep.mubr.f32.mxu0 %v137
    %944 = vmatmul.mubr.f32.gmra.mrb[0].mxu0 %v136
    %v945 = vpop.f32.mrb[0].mxu0
    %v946 = vadd.f32 %v544, %v945
    %v947 = vpop.f32.mrb[0].mxu0
    %v948 = vadd.f32 %v548, %v947
    %949 = vdwg.mxu0
    %950 = vmatprep.subr.mxu0 %v400
    %951 = vmatpush1.msra.mxu0 %v399
    %952 = vmatprep.subr.mxu0 %v408
    %953 = vmatpush1.msra.mxu0 %v407
    %954 = vmatprep.subr.mxu0 %v416
    %955 = vmatpush1.msra.mxu0 %v415
    %956 = vmatprep.subr.mxu0 %v424
    %957 = vmatpush1.msra.mxu0 %v423
    %958 = vmatprep.subr.mxu0 %v432
    %959 = vmatpush1.msra.mxu0 %v431
    %960 = vmatprep.subr.mxu0 %v440
    %961 = vmatpush1.msra.mxu0 %v439
    %962 = vmatprep.subr.mxu0 %v448
    %963 = vmatpush1.msra.mxu0 %v447
    %964 = vmatprep.subr.mxu0 %v456
    %965 = vmatpush1.msra.mxu0 %v455
    %966 = vmatprep.subr.mxu0 %v464
    %967 = vmatpush1.msra.mxu0 %v463
    %968 = vmatprep.subr.mxu0 %v472
    %969 = vmatpush1.msra.mxu0 %v471
    %970 = vmatprep.subr.mxu0 %v480
    %971 = vmatpush1.msra.mxu0 %v479
    %972 = vmatprep.subr.mxu0 %v488
    %973 = vmatpush1.msra.mxu0 %v487
    %974 = vmatprep.subr.mxu0 %v496
    %975 = vmatpush1.msra.mxu0 %v495
    %976 = vmatprep.subr.mxu0 %v504
    %977 = vmatpush1.msra.mxu0 %v503
    %978 = vmatprep.subr.mxu0 %v512
    %979 = vmatpush1.msra.mxu0 %v511
    %980 = vmatprep.subr.mxu0 %v520
    %981 = vmatpush1.msra.mxu0 %v519
    %982 = vmatprep.subr.mxu0 0.0
    %983 = vmatpush1.msra.mxu0 0.0
    %984 = vmatprep.subr.mxu0 0.0
    %985 = vmatpush1.msra.mxu0 0.0
    %986 = vmatprep.subr.mxu0 0.0
    %987 = vmatpush1.msra.mxu0 0.0
    %988 = vmatprep.subr.mxu0 0.0
    %989 = vmatpush1.msra.mxu0 0.0
    %990 = vmatprep.subr.mxu0 0.0
    %991 = vmatpush1.msra.mxu0 0.0
    %992 = vmatprep.subr.mxu0 0.0
    %993 = vmatpush1.msra.mxu0 0.0
    %994 = vmatprep.subr.mxu0 0.0
    %995 = vmatpush1.msra.mxu0 0.0
    %996 = vmatprep.subr.mxu0 0.0
    %997 = vmatpush1.msra.mxu0 0.0
    %998 = vmatprep.subr.mxu0 0.0
    %999 = vmatpush1.msra.mxu0 0.0
    %1000 = vmatprep.subr.mxu0 0.0
    %1001 = vmatpush1.msra.mxu0 0.0
    %1002 = vmatprep.subr.mxu0 0.0
    %1003 = vmatpush1.msra.mxu0 0.0
    %1004 = vmatprep.subr.mxu0 0.0
    %1005 = vmatpush1.msra.mxu0 0.0
    %1006 = vmatprep.subr.mxu0 0.0
    %1007 = vmatpush1.msra.mxu0 0.0
    %1008 = vmatprep.subr.mxu0 0.0
    %1009 = vmatpush1.msra.mxu0 0.0
    %1010 = vmatprep.subr.mxu0 0.0
    %1011 = vmatpush1.msra.mxu0 0.0
    %1012 = vmatprep.subr.mxu0 0.0
    %1013 = vmatpush1.msra.mxu0 0.0
    %1014 = vmatprep.mubr.f32.mxu0 0.0
    %1015 = vmatmul.mubr.f32.gmra.mrb[0].mxu0 %v135
    %v1016 = vpop.f32.mrb[0].mxu0
    %v1017 = vadd.f32 %v940, %v1016
    %v1018 = vpop.f32.mrb[0].mxu0
    %v1019 = vadd.f32 %v942, %v1018
    %1020 = vmatprep.mubr.f32.mxu0 0.0
    %1021 = vmatmul.mubr.f32.gmra.mrb[0].mxu0 %v138
    %v1022 = vpop.f32.mrb[0].mxu0
    %v1023 = vadd.f32 %v946, %v1022
    %v1024 = vpop.f32.mrb[0].mxu0
    %v1025 = vadd.f32 %v948, %v1024
    %1026 = vdwg.mxu0
    %1027 = vmatprep.subr.mxu0 %v146
    %1028 = vmatpush1.msra.mxu0 %v145
    %1029 = vmatprep.subr.mxu0 %v154
    %1030 = vmatpush1.msra.mxu0 %v153
    %1031 = vmatprep.subr.mxu0 %v162
    %1032 = vmatpush1.msra.mxu0 %v161
    %1033 = vmatprep.subr.mxu0 %v170
    %1034 = vmatpush1.msra.mxu0 %v169
    %1035 = vmatprep.subr.mxu0 %v178
    %1036 = vmatpush1.msra.mxu0 %v177
    %1037 = vmatprep.subr.mxu0 %v186
    %1038 = vmatpush1.msra.mxu0 %v185
    %1039 = vmatprep.subr.mxu0 %v194
    %1040 = vmatpush1.msra.mxu0 %v193
    %1041 = vmatprep.subr.mxu0 %v202
    %1042 = vmatpush1.msra.mxu0 %v201
    %1043 = vmatprep.subr.mxu0 %v210
    %1044 = vmatpush1.msra.mxu0 %v209
    %1045 = vmatprep.subr.mxu0 %v218
    %1046 = vmatpush1.msra.mxu0 %v217
    %1047 = vmatprep.subr.mxu0 %v226
    %1048 = vmatpush1.msra.mxu0 %v225
    %1049 = vmatprep.subr.mxu0 %v234
    %1050 = vmatpush1.msra.mxu0 %v233
    %1051 = vmatprep.subr.mxu0 %v242
    %1052 = vmatpush1.msra.mxu0 %v241
    %1053 = vmatprep.subr.mxu0 %v250
    %1054 = vmatpush1.msra.mxu0 %v249
    %1055 = vmatprep.subr.mxu0 %v258
    %1056 = vmatpush1.msra.mxu0 %v257
    %1057 = vmatprep.subr.mxu0 %v266
    %1058 = vmatpush1.msra.mxu0 %v265
    %1059 = vmatprep.subr.mxu0 %v274
    %1060 = vmatpush1.msra.mxu0 %v273
    %1061 = vmatprep.subr.mxu0 %v282
    %1062 = vmatpush1.msra.mxu0 %v281
    %1063 = vmatprep.subr.mxu0 %v290
    %1064 = vmatpush1.msra.mxu0 %v289
    %1065 = vmatprep.subr.mxu0 %v298
    %1066 = vmatpush1.msra.mxu0 %v297
    %1067 = vmatprep.subr.mxu0 %v306
    %1068 = vmatpush1.msra.mxu0 %v305
    %1069 = vmatprep.subr.mxu0 %v314
    %1070 = vmatpush1.msra.mxu0 %v313
    %1071 = vmatprep.subr.mxu0 %v322
    %1072 = vmatpush1.msra.mxu0 %v321
    %1073 = vmatprep.subr.mxu0 %v330
    %1074 = vmatpush1.msra.mxu0 %v329
    %1075 = vmatprep.subr.mxu0 %v338
    %1076 = vmatpush1.msra.mxu0 %v337
    %1077 = vmatprep.subr.mxu0 %v346
    %1078 = vmatpush1.msra.mxu0 %v345
    %1079 = vmatprep.subr.mxu0 %v354
    %1080 = vmatpush1.msra.mxu0 %v353
    %1081 = vmatprep.subr.mxu0 %v362
    %1082 = vmatpush1.msra.mxu0 %v361
    %1083 = vmatprep.subr.mxu0 %v370
    %1084 = vmatpush1.msra.mxu0 %v369
    %1085 = vmatprep.subr.mxu0 %v378
    %1086 = vmatpush1.msra.mxu0 %v377
    %1087 = vmatprep.subr.mxu0 %v386
    %1088 = vmatpush1.msra.mxu0 %v385
    %1089 = vmatprep.subr.mxu0 %v394
    %1090 = vmatpush1.msra.mxu0 %v393
    %1091 = vmatprep.mubr.f32.mxu0 %v134
    %1092 = vmatmul.mubr.f32.gmra.mrb[0].mxu0 %v133
    %v1093 = vpop.f32.mrb[0].mxu0
    %v1094 = vadd.f32 %v552, %v1093
    %v1095 = vpop.f32.mrb[0].mxu0
    %v1096 = vadd.f32 %v556, %v1095
    %1097 = vmatprep.mubr.f32.mxu0 %v137
    %1098 = vmatmul.mubr.f32.gmra.mrb[0].mxu0 %v136
    %v1099 = vpop.f32.mrb[0].mxu0
    %v1100 = vadd.f32 %v552, %v1099
    %v1101 = vpop.f32.mrb[0].mxu0
    %v1102 = vadd.f32 %v556, %v1101
    %1103 = vdwg.mxu0
    %1104 = vmatprep.subr.mxu0 %v402
    %1105 = vmatpush1.msra.mxu0 %v401
    %1106 = vmatprep.subr.mxu0 %v410
    %1107 = vmatpush1.msra.mxu0 %v409
    %1108 = vmatprep.subr.mxu0 %v418
    %1109 = vmatpush1.msra.mxu0 %v417
    %1110 = vmatprep.subr.mxu0 %v426
    %1111 = vmatpush1.msra.mxu0 %v425
    %1112 = vmatprep.subr.mxu0 %v434
    %1113 = vmatpush1.msra.mxu0 %v433
    %1114 = vmatprep.subr.mxu0 %v442
    %1115 = vmatpush1.msra.mxu0 %v441
    %1116 = vmatprep.subr.mxu0 %v450
    %1117 = vmatpush1.msra.mxu0 %v449
    %1118 = vmatprep.subr.mxu0 %v458
    %1119 = vmatpush1.msra.mxu0 %v457
    %1120 = vmatprep.subr.mxu0 %v466
    %1121 = vmatpush1.msra.mxu0 %v465
    %1122 = vmatprep.subr.mxu0 %v474
    %1123 = vmatpush1.msra.mxu0 %v473
    %1124 = vmatprep.subr.mxu0 %v482
    %1125 = vmatpush1.msra.mxu0 %v481
    %1126 = vmatprep.subr.mxu0 %v490
    %1127 = vmatpush1.msra.mxu0 %v489
    %1128 = vmatprep.subr.mxu0 %v498
    %1129 = vmatpush1.msra.mxu0 %v497
    %1130 = vmatprep.subr.mxu0 %v506
    %1131 = vmatpush1.msra.mxu0 %v505
    %1132 = vmatprep.subr.mxu0 %v514
    %1133 = vmatpush1.msra.mxu0 %v513
    %1134 = vmatprep.subr.mxu0 %v522
    %1135 = vmatpush1.msra.mxu0 %v521
    %1136 = vmatprep.subr.mxu0 0.0
    %1137 = vmatpush1.msra.mxu0 0.0
    %1138 = vmatprep.subr.mxu0 0.0
    %1139 = vmatpush1.msra.mxu0 0.0
    %1140 = vmatprep.subr.mxu0 0.0
    %1141 = vmatpush1.msra.mxu0 0.0
    %1142 = vmatprep.subr.mxu0 0.0
    %1143 = vmatpush1.msra.mxu0 0.0
    %1144 = vmatprep.subr.mxu0 0.0
    %1145 = vmatpush1.msra.mxu0 0.0
    %1146 = vmatprep.subr.mxu0 0.0
    %1147 = vmatpush1.msra.mxu0 0.0
    %1148 = vmatprep.subr.mxu0 0.0
    %1149 = vmatpush1.msra.mxu0 0.0
    %1150 = vmatprep.subr.mxu0 0.0
    %1151 = vmatpush1.msra.mxu0 0.0
    %1152 = vmatprep.subr.mxu0 0.0
    %1153 = vmatpush1.msra.mxu0 0.0
    %1154 = vmatprep.subr.mxu0 0.0
    %1155 = vmatpush1.msra.mxu0 0.0
    %1156 = vmatprep.subr.mxu0 0.0
    %1157 = vmatpush1.msra.mxu0 0.0
    %1158 = vmatprep.subr.mxu0 0.0
    %1159 = vmatpush1.msra.mxu0 0.0
    %1160 = vmatprep.subr.mxu0 0.0
    %1161 = vmatpush1.msra.mxu0 0.0
    %1162 = vmatprep.subr.mxu0 0.0
    %1163 = vmatpush1.msra.mxu0 0.0
    %1164 = vmatprep.subr.mxu0 0.0
    %1165 = vmatpush1.msra.mxu0 0.0
    %1166 = vmatprep.subr.mxu0 0.0
    %1167 = vmatpush1.msra.mxu0 0.0
    %1168 = vmatprep.mubr.f32.mxu0 0.0
    %1169 = vmatmul.mubr.f32.gmra.mrb[0].mxu0 %v135
    %v1170 = vpop.f32.mrb[0].mxu0
    %v1171 = vadd.f32 %v1094, %v1170
    %v1172 = vpop.f32.mrb[0].mxu0
    %v1173 = vadd.f32 %v1096, %v1172
    %1174 = vmatprep.mubr.f32.mxu0 0.0
    %1175 = vmatmul.mubr.f32.gmra.mrb[0].mxu0 %v138
    %v1176 = vpop.f32.mrb[0].mxu0
    %v1177 = vadd.f32 %v1100, %v1176
    %v1178 = vpop.f32.mrb[0].mxu0
    %v1179 = vadd.f32 %v1102, %v1178
    %1180 = vdwg.mxu0
    %v1181 = vmax.f32 %v709, 0.0
    %v1182 = vmax.f32 %v711, 0.0
    %v1183 = vmax.f32 %v863, 0.0
    %v1184 = vmax.f32 %v865, 0.0
    %v1185 = vmax.f32 %v1017, 0.0
    %v1186 = vmax.f32 %v1019, 0.0
    %v1187 = vmax.f32 %v1171, 0.0
    %v1188 = vmax.f32 %v1173, 0.0
    %v1189 = vmax.f32 %v715, 0.0
    %v1190 = vmax.f32 %v717, 0.0
    %v1191 = vmax.f32 %v869, 0.0
    %v1192 = vmax.f32 %v871, 0.0
    %v1193 = vmax.f32 %v1023, 0.0
    %v1194 = vmax.f32 %v1025, 0.0
    %v1195 = vmax.f32 %v1177, 0.0
    %v1196 = vmax.f32 %v1179, 0.0
    %v1197 = vld [vmem:[#allocation6] sm:$0xff]
    %v1198 = vld [vmem:[#allocation6 + $0x8] sm:$0xff]
    %v1199 = vld [vmem:[#allocation6 + $0x10] sm:$0xff]
    %v1200 = vld [vmem:[#allocation6 + $0x18] sm:$0xff]
    %v1201 = vld [vmem:[#allocation6 + $0x20] sm:$0xff]
    %v1202 = vld [vmem:[#allocation6 + $0x28] sm:$0xff]
    %v1203 = vld [vmem:[#allocation6 + $0x30] sm:$0xff]
    %v1204 = vld [vmem:[#allocation6 + $0x38] sm:$0xff]
    %v1205 = vld [vmem:[#allocation6 + $0x40] sm:$0xff]
    %v1206 = vld [vmem:[#allocation6 + $0x48] sm:$0xff]
    %v1207 = vld [vmem:[#allocation6 + $0x50] sm:$0xff]
    %v1208 = vld [vmem:[#allocation6 + $0x58] sm:$0xff]
    %v1209 = vld [vmem:[#allocation6 + $0x60] sm:$0xff]
    %v1210 = vld [vmem:[#allocation6 + $0x68] sm:$0xff]
    %v1211 = vld [vmem:[#allocation6 + $0x70] sm:$0xff]
    %v1212 = vld [vmem:[#allocation6 + $0x78] sm:$0xff]
    %v1213 = vld [vmem:[#allocation6 + $0x80] sm:$0xff]
    %v1214 = vld [vmem:[#allocation6 + $0x88] sm:$0xff]
    %v1215 = vld [vmem:[#allocation6 + $0x90] sm:$0xff]
    %v1216 = vld [vmem:[#allocation6 + $0x98] sm:$0xff]
    %v1217 = vld [vmem:[#allocation6 + $0xa0] sm:$0xff]
    %v1218 = vld [vmem:[#allocation6 + $0xa8] sm:$0xff]
    %v1219 = vld [vmem:[#allocation6 + $0xb0] sm:$0xff]
    %v1220 = vld [vmem:[#allocation6 + $0xb8] sm:$0xff]
    %v1221 = vld [vmem:[#allocation6 + $0xc0] sm:$0xff]
    %v1222 = vld [vmem:[#allocation6 + $0xc8] sm:$0xff]
    %v1223 = vld [vmem:[#allocation6 + $0xd0] sm:$0xff]
    %v1224 = vld [vmem:[#allocation6 + $0xd8] sm:$0xff]
    %v1225 = vld [vmem:[#allocation6 + $0xe0] sm:$0xff]
    %v1226 = vld [vmem:[#allocation6 + $0xe8] sm:$0xff]
    %v1227 = vld [vmem:[#allocation6 + $0xf0] sm:$0xff]
    %v1228 = vld [vmem:[#allocation6 + $0xf8] sm:$0xff]
    %v1229 = vld [vmem:[#allocation6 + $0x100] sm:$0xff]
    %v1230 = vld [vmem:[#allocation6 + $0x108] sm:$0xff]
    %v1231 = vld [vmem:[#allocation6 + $0x110] sm:$0xff]
    %v1232 = vld [vmem:[#allocation6 + $0x118] sm:$0xff]
    %v1233 = vld [vmem:[#allocation6 + $0x120] sm:$0xff]
    %v1234 = vld [vmem:[#allocation6 + $0x128] sm:$0xff]
    %v1235 = vld [vmem:[#allocation6 + $0x130] sm:$0xff]
    %v1236 = vld [vmem:[#allocation6 + $0x138] sm:$0xff]
    %v1237 = vld [vmem:[#allocation6 + $0x140] sm:$0xff]
    %v1238 = vld [vmem:[#allocation6 + $0x148] sm:$0xff]
    %v1239 = vld [vmem:[#allocation6 + $0x150] sm:$0xff]
    %v1240 = vld [vmem:[#allocation6 + $0x158] sm:$0xff]
    %v1241 = vld [vmem:[#allocation6 + $0x160] sm:$0xff]
    %v1242 = vld [vmem:[#allocation6 + $0x168] sm:$0xff]
    %v1243 = vld [vmem:[#allocation6 + $0x170] sm:$0xff]
    %v1244 = vld [vmem:[#allocation6 + $0x178] sm:$0xff]
    %v1245 = vld [vmem:[#allocation6 + $0x180] sm:$0xff]
    %v1246 = vld [vmem:[#allocation6 + $0x188] sm:$0xff]
    %v1247 = vld [vmem:[#allocation6 + $0x190] sm:$0xff]
    %v1248 = vld [vmem:[#allocation6 + $0x198] sm:$0xff]
    %v1249 = vld [vmem:[#allocation6 + $0x1a0] sm:$0xff]
    %v1250 = vld [vmem:[#allocation6 + $0x1a8] sm:$0xff]
    %v1251 = vld [vmem:[#allocation6 + $0x1b0] sm:$0xff]
    %v1252 = vld [vmem:[#allocation6 + $0x1b8] sm:$0xff]
    %v1253 = vld [vmem:[#allocation6 + $0x1c0] sm:$0xff]
    %v1254 = vld [vmem:[#allocation6 + $0x1c8] sm:$0xff]
    %v1255 = vld [vmem:[#allocation6 + $0x1d0] sm:$0xff]
    %v1256 = vld [vmem:[#allocation6 + $0x1d8] sm:$0xff]
    %v1257 = vld [vmem:[#allocation6 + $0x1e0] sm:$0xff]
    %v1258 = vld [vmem:[#allocation6 + $0x1e8] sm:$0xff]
    %v1259 = vld [vmem:[#allocation6 + $0x1f0] sm:$0xff]
    %v1260 = vld [vmem:[#allocation6 + $0x1f8] sm:$0xff]
    %v1261 = vld [vmem:[#allocation6 + $0x200] sm:$0xff]
    %v1262 = vld [vmem:[#allocation6 + $0x208] sm:$0xff]
    %v1263 = vld [vmem:[#allocation6 + $0x210] sm:$0xff]
    %v1264 = vld [vmem:[#allocation6 + $0x218] sm:$0xff]
    %v1265 = vld [vmem:[#allocation6 + $0x220] sm:$0xff]
    %v1266 = vld [vmem:[#allocation6 + $0x228] sm:$0xff]
    %v1267 = vld [vmem:[#allocation6 + $0x230] sm:$0xff]
    %v1268 = vld [vmem:[#allocation6 + $0x238] sm:$0xff]
    %v1269 = vld [vmem:[#allocation6 + $0x240] sm:$0xff]
    %v1270 = vld [vmem:[#allocation6 + $0x248] sm:$0xff]
    %v1271 = vld [vmem:[#allocation6 + $0x250] sm:$0xff]
    %v1272 = vld [vmem:[#allocation6 + $0x258] sm:$0xff]
    %v1273 = vld [vmem:[#allocation6 + $0x260] sm:$0xff]
    %v1274 = vld [vmem:[#allocation6 + $0x268] sm:$0xff]
    %v1275 = vld [vmem:[#allocation6 + $0x270] sm:$0xff]
    %v1276 = vld [vmem:[#allocation6 + $0x278] sm:$0xff]
    %v1277 = vld [vmem:[#allocation6 + $0x280] sm:$0xff]
    %v1278 = vld [vmem:[#allocation6 + $0x288] sm:$0xff]
    %v1279 = vld [vmem:[#allocation6 + $0x290] sm:$0xff]
    %v1280 = vld [vmem:[#allocation6 + $0x298] sm:$0xff]
    %v1281 = vld [vmem:[#allocation6 + $0x2a0] sm:$0xff]
    %v1282 = vld [vmem:[#allocation6 + $0x2a8] sm:$0xff]
    %v1283 = vld [vmem:[#allocation6 + $0x2b0] sm:$0xff]
    %v1284 = vld [vmem:[#allocation6 + $0x2b8] sm:$0xff]
    %v1285 = vld [vmem:[#allocation6 + $0x2c0] sm:$0xff]
    %v1286 = vld [vmem:[#allocation6 + $0x2c8] sm:$0xff]
    %v1287 = vld [vmem:[#allocation6 + $0x2d0] sm:$0xff]
    %v1288 = vld [vmem:[#allocation6 + $0x2d8] sm:$0xff]
    %v1289 = vld [vmem:[#allocation6 + $0x2e0] sm:$0xff]
    %v1290 = vld [vmem:[#allocation6 + $0x2e8] sm:$0xff]
    %v1291 = vld [vmem:[#allocation6 + $0x2f0] sm:$0xff]
    %v1292 = vld [vmem:[#allocation6 + $0x2f8] sm:$0xff]
    %v1293 = vld [vmem:[#allocation6 + $0x300] sm:$0xff]
    %v1294 = vld [vmem:[#allocation6 + $0x308] sm:$0xff]
    %v1295 = vld [vmem:[#allocation6 + $0x310] sm:$0xff]
    %v1296 = vld [vmem:[#allocation6 + $0x318] sm:$0xff]
    %v1297 = vld [vmem:[#allocation6 + $0x320] sm:$0xff]
    %v1298 = vld [vmem:[#allocation6 + $0x328] sm:$0xff]
    %v1299 = vld [vmem:[#allocation6 + $0x330] sm:$0xff]
    %v1300 = vld [vmem:[#allocation6 + $0x338] sm:$0xff]
    %v1301 = vld [vmem:[#allocation6 + $0x340] sm:$0xff]
    %v1302 = vld [vmem:[#allocation6 + $0x348] sm:$0xff]
    %v1303 = vld [vmem:[#allocation6 + $0x350] sm:$0xff]
    %v1304 = vld [vmem:[#allocation6 + $0x358] sm:$0xff]
    %v1305 = vld [vmem:[#allocation6 + $0x360] sm:$0xff]
    %v1306 = vld [vmem:[#allocation6 + $0x368] sm:$0xff]
    %v1307 = vld [vmem:[#allocation6 + $0x370] sm:$0xff]
    %v1308 = vld [vmem:[#allocation6 + $0x378] sm:$0xff]
    %v1309 = vld [vmem:[#allocation6 + $0x380] sm:$0xff]
    %v1310 = vld [vmem:[#allocation6 + $0x388] sm:$0xff]
    %v1311 = vld [vmem:[#allocation6 + $0x390] sm:$0xff]
    %v1312 = vld [vmem:[#allocation6 + $0x398] sm:$0xff]
    %v1313 = vld [vmem:[#allocation6 + $0x3a0] sm:$0xff]
    %v1314 = vld [vmem:[#allocation6 + $0x3a8] sm:$0xff]
    %v1315 = vld [vmem:[#allocation6 + $0x3b0] sm:$0xff]
    %v1316 = vld [vmem:[#allocation6 + $0x3b8] sm:$0xff]
    %v1317 = vld [vmem:[#allocation6 + $0x3c0] sm:$0xff]
    %v1318 = vld [vmem:[#allocation6 + $0x3c8] sm:$0xff]
    %v1319 = vld [vmem:[#allocation6 + $0x3d0] sm:$0xff]
    %v1320 = vld [vmem:[#allocation6 + $0x3d8] sm:$0xff]
    %v1321 = vld [vmem:[#allocation6 + $0x3e0] sm:$0xff]
    %v1322 = vld [vmem:[#allocation6 + $0x3e8] sm:$0xff]
    %v1323 = vld [vmem:[#allocation6 + $0x3f0] sm:$0xff]
    %v1324 = vld [vmem:[#allocation6 + $0x3f8] sm:$0xff]
    %v1325 = vld [vmem:[#allocation6 + $0x400] sm:$0xff]
    %v1326 = vld [vmem:[#allocation6 + $0x408] sm:$0xff]
    %v1327 = vld [vmem:[#allocation6 + $0x410] sm:$0xff]
    %v1328 = vld [vmem:[#allocation6 + $0x418] sm:$0xff]
    %v1329 = vld [vmem:[#allocation6 + $0x420] sm:$0xff]
    %v1330 = vld [vmem:[#allocation6 + $0x428] sm:$0xff]
    %v1331 = vld [vmem:[#allocation6 + $0x430] sm:$0xff]
    %v1332 = vld [vmem:[#allocation6 + $0x438] sm:$0xff]
    %v1333 = vld [vmem:[#allocation6 + $0x440] sm:$0xff]
    %v1334 = vld [vmem:[#allocation6 + $0x448] sm:$0xff]
    %v1335 = vld [vmem:[#allocation6 + $0x450] sm:$0xff]
    %v1336 = vld [vmem:[#allocation6 + $0x458] sm:$0xff]
    %v1337 = vld [vmem:[#allocation6 + $0x460] sm:$0xff]
    %v1338 = vld [vmem:[#allocation6 + $0x468] sm:$0xff]
    %v1339 = vld [vmem:[#allocation6 + $0x470] sm:$0xff]
    %v1340 = vld [vmem:[#allocation6 + $0x478] sm:$0xff]
    %v1341 = vld [vmem:[#allocation6 + $0x480] sm:$0xff]
    %v1342 = vld [vmem:[#allocation6 + $0x488] sm:$0xff]
    %v1343 = vld [vmem:[#allocation6 + $0x490] sm:$0xff]
    %v1344 = vld [vmem:[#allocation6 + $0x498] sm:$0xff]
    %v1345 = vld [vmem:[#allocation6 + $0x4a0] sm:$0xff]
    %v1346 = vld [vmem:[#allocation6 + $0x4a8] sm:$0xff]
    %v1347 = vld [vmem:[#allocation6 + $0x4b0] sm:$0xff]
    %v1348 = vld [vmem:[#allocation6 + $0x4b8] sm:$0xff]
    %v1349 = vld [vmem:[#allocation6 + $0x4c0] sm:$0xff]
    %v1350 = vld [vmem:[#allocation6 + $0x4c8] sm:$0xff]
    %v1351 = vld [vmem:[#allocation6 + $0x4d0] sm:$0xff]
    %v1352 = vld [vmem:[#allocation6 + $0x4d8] sm:$0xff]
    %v1353 = vld [vmem:[#allocation6 + $0x4e0] sm:$0xff]
    %v1354 = vld [vmem:[#allocation6 + $0x4e8] sm:$0xff]
    %v1355 = vld [vmem:[#allocation6 + $0x4f0] sm:$0xff]
    %v1356 = vld [vmem:[#allocation6 + $0x4f8] sm:$0xff]
    %v1357 = vld [vmem:[#allocation6 + $0x500] sm:$0xff]
    %v1358 = vld [vmem:[#allocation6 + $0x508] sm:$0xff]
    %v1359 = vld [vmem:[#allocation6 + $0x510] sm:$0xff]
    %v1360 = vld [vmem:[#allocation6 + $0x518] sm:$0xff]
    %v1361 = vld [vmem:[#allocation6 + $0x520] sm:$0xff]
    %v1362 = vld [vmem:[#allocation6 + $0x528] sm:$0xff]
    %v1363 = vld [vmem:[#allocation6 + $0x530] sm:$0xff]
    %v1364 = vld [vmem:[#allocation6 + $0x538] sm:$0xff]
    %v1365 = vld [vmem:[#allocation6 + $0x540] sm:$0xff]
    %v1366 = vld [vmem:[#allocation6 + $0x548] sm:$0xff]
    %v1367 = vld [vmem:[#allocation6 + $0x550] sm:$0xff]
    %v1368 = vld [vmem:[#allocation6 + $0x558] sm:$0xff]
    %v1369 = vld [vmem:[#allocation6 + $0x560] sm:$0xff]
    %v1370 = vld [vmem:[#allocation6 + $0x568] sm:$0xff]
    %v1371 = vld [vmem:[#allocation6 + $0x570] sm:$0xff]
    %v1372 = vld [vmem:[#allocation6 + $0x578] sm:$0xff]
    %v1373 = vld [vmem:[#allocation6 + $0x580] sm:$0xff]
    %v1374 = vld [vmem:[#allocation6 + $0x588] sm:$0xff]
    %v1375 = vld [vmem:[#allocation6 + $0x590] sm:$0xff]
    %v1376 = vld [vmem:[#allocation6 + $0x598] sm:$0xff]
    %v1377 = vld [vmem:[#allocation6 + $0x5a0] sm:$0xff]
    %v1378 = vld [vmem:[#allocation6 + $0x5a8] sm:$0xff]
    %v1379 = vld [vmem:[#allocation6 + $0x5b0] sm:$0xff]
    %v1380 = vld [vmem:[#allocation6 + $0x5b8] sm:$0xff]
    %v1381 = vld [vmem:[#allocation6 + $0x5c0] sm:$0xff]
    %v1382 = vld [vmem:[#allocation6 + $0x5c8] sm:$0xff]
    %v1383 = vld [vmem:[#allocation6 + $0x5d0] sm:$0xff]
    %v1384 = vld [vmem:[#allocation6 + $0x5d8] sm:$0xff]
    %v1385 = vld [vmem:[#allocation6 + $0x5e0] sm:$0xff]
    %v1386 = vld [vmem:[#allocation6 + $0x5e8] sm:$0xff]
    %v1387 = vld [vmem:[#allocation6 + $0x5f0] sm:$0xff]
    %v1388 = vld [vmem:[#allocation6 + $0x5f8] sm:$0xff]
    %v1389 = vld [vmem:[#allocation6 + $0x600] sm:$0xff]
    %v1390 = vld [vmem:[#allocation6 + $0x608] sm:$0xff]
    %v1391 = vld [vmem:[#allocation6 + $0x610] sm:$0xff]
    %v1392 = vld [vmem:[#allocation6 + $0x618] sm:$0xff]
    %v1393 = vld [vmem:[#allocation6 + $0x620] sm:$0xff]
    %v1394 = vld [vmem:[#allocation6 + $0x628] sm:$0xff]
    %v1395 = vld [vmem:[#allocation6 + $0x630] sm:$0xff]
    %v1396 = vld [vmem:[#allocation6 + $0x638] sm:$0xff]
    %v1397 = vld [vmem:[#allocation6 + $0x640] sm:$0xff]
    %v1398 = vld [vmem:[#allocation6 + $0x648] sm:$0xff]
    %v1399 = vld [vmem:[#allocation6 + $0x650] sm:$0xff]
    %v1400 = vld [vmem:[#allocation6 + $0x658] sm:$0xff]
    %v1401 = vld [vmem:[#allocation6 + $0x660] sm:$0xff]
    %v1402 = vld [vmem:[#allocation6 + $0x668] sm:$0xff]
    %v1403 = vld [vmem:[#allocation6 + $0x670] sm:$0xff]
    %v1404 = vld [vmem:[#allocation6 + $0x678] sm:$0xff]
    %v1405 = vld [vmem:[#allocation6 + $0x680] sm:$0xff]
    %v1406 = vld [vmem:[#allocation6 + $0x688] sm:$0xff]
    %v1407 = vld [vmem:[#allocation6 + $0x690] sm:$0xff]
    %v1408 = vld [vmem:[#allocation6 + $0x698] sm:$0xff]
    %v1409 = vld [vmem:[#allocation6 + $0x6a0] sm:$0xff]
    %v1410 = vld [vmem:[#allocation6 + $0x6a8] sm:$0xff]
    %v1411 = vld [vmem:[#allocation6 + $0x6b0] sm:$0xff]
    %v1412 = vld [vmem:[#allocation6 + $0x6b8] sm:$0xff]
    %v1413 = vld [vmem:[#allocation6 + $0x6c0] sm:$0xff]
    %v1414 = vld [vmem:[#allocation6 + $0x6c8] sm:$0xff]
    %v1415 = vld [vmem:[#allocation6 + $0x6d0] sm:$0xff]
    %v1416 = vld [vmem:[#allocation6 + $0x6d8] sm:$0xff]
    %v1417 = vld [vmem:[#allocation6 + $0x6e0] sm:$0xff]
    %v1418 = vld [vmem:[#allocation6 + $0x6e8] sm:$0xff]
    %v1419 = vld [vmem:[#allocation6 + $0x6f0] sm:$0xff]
    %v1420 = vld [vmem:[#allocation6 + $0x6f8] sm:$0xff]
    %v1421 = vld [vmem:[#allocation6 + $0x700] sm:$0xff]
    %v1422 = vld [vmem:[#allocation6 + $0x708] sm:$0xff]
    %v1423 = vld [vmem:[#allocation6 + $0x710] sm:$0xff]
    %v1424 = vld [vmem:[#allocation6 + $0x718] sm:$0xff]
    %v1425 = vld [vmem:[#allocation6 + $0x720] sm:$0xff]
    %v1426 = vld [vmem:[#allocation6 + $0x728] sm:$0xff]
    %v1427 = vld [vmem:[#allocation6 + $0x730] sm:$0xff]
    %v1428 = vld [vmem:[#allocation6 + $0x738] sm:$0xff]
    %v1429 = vld [vmem:[#allocation6 + $0x740] sm:$0xff]
    %v1430 = vld [vmem:[#allocation6 + $0x748] sm:$0xff]
    %v1431 = vld [vmem:[#allocation6 + $0x750] sm:$0xff]
    %v1432 = vld [vmem:[#allocation6 + $0x758] sm:$0xff]
    %v1433 = vld [vmem:[#allocation6 + $0x760] sm:$0xff]
    %v1434 = vld [vmem:[#allocation6 + $0x768] sm:$0xff]
    %v1435 = vld [vmem:[#allocation6 + $0x770] sm:$0xff]
    %v1436 = vld [vmem:[#allocation6 + $0x778] sm:$0xff]
    %v1437 = vld [vmem:[#allocation6 + $0x780] sm:$0xff]
    %v1438 = vld [vmem:[#allocation6 + $0x788] sm:$0xff]
    %v1439 = vld [vmem:[#allocation6 + $0x790] sm:$0xff]
    %v1440 = vld [vmem:[#allocation6 + $0x798] sm:$0xff]
    %v1441 = vld [vmem:[#allocation6 + $0x7a0] sm:$0xff]
    %v1442 = vld [vmem:[#allocation6 + $0x7a8] sm:$0xff]
    %v1443 = vld [vmem:[#allocation6 + $0x7b0] sm:$0xff]
    %v1444 = vld [vmem:[#allocation6 + $0x7b8] sm:$0xff]
    %v1445 = vld [vmem:[#allocation6 + $0x7c0] sm:$0xff]
    %v1446 = vld [vmem:[#allocation6 + $0x7c8] sm:$0xff]
    %v1447 = vld [vmem:[#allocation6 + $0x7d0] sm:$0xff]
    %v1448 = vld [vmem:[#allocation6 + $0x7d8] sm:$0xff]
    %v1449 = vld [vmem:[#allocation6 + $0x7e0] sm:$0xff]
    %v1450 = vld [vmem:[#allocation6 + $0x7e8] sm:$0xff]
    %v1451 = vld [vmem:[#allocation6 + $0x7f0] sm:$0xff]
    %v1452 = vld [vmem:[#allocation6 + $0x7f8] sm:$0xff]
    %v1453 = vld [vmem:[#allocation6 + $0x800] sm:$0xff]
    %v1454 = vld [vmem:[#allocation6 + $0x808] sm:$0xff]
    %v1455 = vld [vmem:[#allocation6 + $0x810] sm:$0xff]
    %v1456 = vld [vmem:[#allocation6 + $0x818] sm:$0xff]
    %v1457 = vld [vmem:[#allocation6 + $0x820] sm:$0xff]
    %v1458 = vld [vmem:[#allocation6 + $0x828] sm:$0xff]
    %v1459 = vld [vmem:[#allocation6 + $0x830] sm:$0xff]
    %v1460 = vld [vmem:[#allocation6 + $0x838] sm:$0xff]
    %v1461 = vld [vmem:[#allocation6 + $0x840] sm:$0xff]
    %v1462 = vld [vmem:[#allocation6 + $0x848] sm:$0xff]
    %v1463 = vld [vmem:[#allocation6 + $0x850] sm:$0xff]
    %v1464 = vld [vmem:[#allocation6 + $0x858] sm:$0xff]
    %v1465 = vld [vmem:[#allocation6 + $0x860] sm:$0xff]
    %v1466 = vld [vmem:[#allocation6 + $0x868] sm:$0xff]
    %v1467 = vld [vmem:[#allocation6 + $0x870] sm:$0xff]
    %v1468 = vld [vmem:[#allocation6 + $0x878] sm:$0xff]
    %v1469 = vld [vmem:[#allocation6 + $0x880] sm:$0xff]
    %v1470 = vld [vmem:[#allocation6 + $0x888] sm:$0xff]
    %v1471 = vld [vmem:[#allocation6 + $0x890] sm:$0xff]
    %v1472 = vld [vmem:[#allocation6 + $0x898] sm:$0xff]
    %v1473 = vld [vmem:[#allocation6 + $0x8a0] sm:$0xff]
    %v1474 = vld [vmem:[#allocation6 + $0x8a8] sm:$0xff]
    %v1475 = vld [vmem:[#allocation6 + $0x8b0] sm:$0xff]
    %v1476 = vld [vmem:[#allocation6 + $0x8b8] sm:$0xff]
    %v1477 = vld [vmem:[#allocation6 + $0x8c0] sm:$0xff]
    %v1478 = vld [vmem:[#allocation6 + $0x8c8] sm:$0xff]
    %v1479 = vld [vmem:[#allocation6 + $0x8d0] sm:$0xff]
    %v1480 = vld [vmem:[#allocation6 + $0x8d8] sm:$0xff]
    %v1481 = vld [vmem:[#allocation6 + $0x8e0] sm:$0xff]
    %v1482 = vld [vmem:[#allocation6 + $0x8e8] sm:$0xff]
    %v1483 = vld [vmem:[#allocation6 + $0x8f0] sm:$0xff]
    %v1484 = vld [vmem:[#allocation6 + $0x8f8] sm:$0xff]
    %v1485 = vld [vmem:[#allocation6 + $0x900] sm:$0xff]
    %v1486 = vld [vmem:[#allocation6 + $0x908] sm:$0xff]
    %v1487 = vld [vmem:[#allocation6 + $0x910] sm:$0xff]
    %v1488 = vld [vmem:[#allocation6 + $0x918] sm:$0xff]
    %v1489 = vld [vmem:[#allocation6 + $0x920] sm:$0xff]
    %v1490 = vld [vmem:[#allocation6 + $0x928] sm:$0xff]
    %v1491 = vld [vmem:[#allocation6 + $0x930] sm:$0xff]
    %v1492 = vld [vmem:[#allocation6 + $0x938] sm:$0xff]
    %v1493 = vld [vmem:[#allocation6 + $0x940] sm:$0xff]
    %v1494 = vld [vmem:[#allocation6 + $0x948] sm:$0xff]
    %v1495 = vld [vmem:[#allocation6 + $0x950] sm:$0xff]
    %v1496 = vld [vmem:[#allocation6 + $0x958] sm:$0xff]
    %v1497 = vld [vmem:[#allocation6 + $0x960] sm:$0xff]
    %v1498 = vld [vmem:[#allocation6 + $0x968] sm:$0xff]
    %v1499 = vld [vmem:[#allocation6 + $0x970] sm:$0xff]
    %v1500 = vld [vmem:[#allocation6 + $0x978] sm:$0xff]
    %v1501 = vld [vmem:[#allocation6 + $0x980] sm:$0xff]
    %v1502 = vld [vmem:[#allocation6 + $0x988] sm:$0xff]
    %v1503 = vld [vmem:[#allocation6 + $0x990] sm:$0xff]
    %v1504 = vld [vmem:[#allocation6 + $0x998] sm:$0xff]
    %v1505 = vld [vmem:[#allocation6 + $0x9a0] sm:$0xff]
    %v1506 = vld [vmem:[#allocation6 + $0x9a8] sm:$0xff]
    %v1507 = vld [vmem:[#allocation6 + $0x9b0] sm:$0xff]
    %v1508 = vld [vmem:[#allocation6 + $0x9b8] sm:$0xff]
    %v1509 = vld [vmem:[#allocation6 + $0x9c0] sm:$0xff]
    %v1510 = vld [vmem:[#allocation6 + $0x9c8] sm:$0xff]
    %v1511 = vld [vmem:[#allocation6 + $0x9d0] sm:$0xff]
    %v1512 = vld [vmem:[#allocation6 + $0x9d8] sm:$0xff]
    %v1513 = vld [vmem:[#allocation6 + $0x9e0] sm:$0xff]
    %v1514 = vld [vmem:[#allocation6 + $0x9e8] sm:$0xff]
    %v1515 = vld [vmem:[#allocation6 + $0x9f0] sm:$0xff]
    %v1516 = vld [vmem:[#allocation6 + $0x9f8] sm:$0xff]
    %v1517 = vld [vmem:[#allocation6 + $0xa00] sm:$0xff]
    %v1518 = vld [vmem:[#allocation6 + $0xa08] sm:$0xff]
    %v1519 = vld [vmem:[#allocation6 + $0xa10] sm:$0xff]
    %v1520 = vld [vmem:[#allocation6 + $0xa18] sm:$0xff]
    %v1521 = vld [vmem:[#allocation6 + $0xa20] sm:$0xff]
    %v1522 = vld [vmem:[#allocation6 + $0xa28] sm:$0xff]
    %v1523 = vld [vmem:[#allocation6 + $0xa30] sm:$0xff]
    %v1524 = vld [vmem:[#allocation6 + $0xa38] sm:$0xff]
    %v1525 = vld [vmem:[#allocation6 + $0xa40] sm:$0xff]
    %v1526 = vld [vmem:[#allocation6 + $0xa48] sm:$0xff]
    %v1527 = vld [vmem:[#allocation6 + $0xa50] sm:$0xff]
    %v1528 = vld [vmem:[#allocation6 + $0xa58] sm:$0xff]
    %v1529 = vld [vmem:[#allocation6 + $0xa60] sm:$0xff]
    %v1530 = vld [vmem:[#allocation6 + $0xa68] sm:$0xff]
    %v1531 = vld [vmem:[#allocation6 + $0xa70] sm:$0xff]
    %v1532 = vld [vmem:[#allocation6 + $0xa78] sm:$0xff]
    %v1533 = vld [vmem:[#allocation6 + $0xa80] sm:$0xff]
    %v1534 = vld [vmem:[#allocation6 + $0xa88] sm:$0xff]
    %v1535 = vld [vmem:[#allocation6 + $0xa90] sm:$0xff]
    %v1536 = vld [vmem:[#allocation6 + $0xa98] sm:$0xff]
    %v1537 = vld [vmem:[#allocation6 + $0xaa0] sm:$0xff]
    %v1538 = vld [vmem:[#allocation6 + $0xaa8] sm:$0xff]
    %v1539 = vld [vmem:[#allocation6 + $0xab0] sm:$0xff]
    %v1540 = vld [vmem:[#allocation6 + $0xab8] sm:$0xff]
    %v1541 = vld [vmem:[#allocation6 + $0xac0] sm:$0xff]
    %v1542 = vld [vmem:[#allocation6 + $0xac8] sm:$0xff]
    %v1543 = vld [vmem:[#allocation6 + $0xad0] sm:$0xff]
    %v1544 = vld [vmem:[#allocation6 + $0xad8] sm:$0xff]
    %v1545 = vld [vmem:[#allocation6 + $0xae0] sm:$0xff]
    %v1546 = vld [vmem:[#allocation6 + $0xae8] sm:$0xff]
    %v1547 = vld [vmem:[#allocation6 + $0xaf0] sm:$0xff]
    %v1548 = vld [vmem:[#allocation6 + $0xaf8] sm:$0xff]
    %v1549 = vld [vmem:[#allocation6 + $0xb00] sm:$0xff]
    %v1550 = vld [vmem:[#allocation6 + $0xb08] sm:$0xff]
    %v1551 = vld [vmem:[#allocation6 + $0xb10] sm:$0xff]
    %v1552 = vld [vmem:[#allocation6 + $0xb18] sm:$0xff]
    %v1553 = vld [vmem:[#allocation6 + $0xb20] sm:$0xff]
    %v1554 = vld [vmem:[#allocation6 + $0xb28] sm:$0xff]
    %v1555 = vld [vmem:[#allocation6 + $0xb30] sm:$0xff]
    %v1556 = vld [vmem:[#allocation6 + $0xb38] sm:$0xff]
    %v1557 = vld [vmem:[#allocation6 + $0xb40] sm:$0xff]
    %v1558 = vld [vmem:[#allocation6 + $0xb48] sm:$0xff]
    %v1559 = vld [vmem:[#allocation6 + $0xb50] sm:$0xff]
    %v1560 = vld [vmem:[#allocation6 + $0xb58] sm:$0xff]
    %v1561 = vld [vmem:[#allocation6 + $0xb60] sm:$0xff]
    %v1562 = vld [vmem:[#allocation6 + $0xb68] sm:$0xff]
    %v1563 = vld [vmem:[#allocation6 + $0xb70] sm:$0xff]
    %v1564 = vld [vmem:[#allocation6 + $0xb78] sm:$0xff]
    %v1565 = vld [vmem:[#allocation6 + $0xb80] sm:$0xff]
    %v1566 = vld [vmem:[#allocation6 + $0xb88] sm:$0xff]
    %v1567 = vld [vmem:[#allocation6 + $0xb90] sm:$0xff]
    %v1568 = vld [vmem:[#allocation6 + $0xb98] sm:$0xff]
    %v1569 = vld [vmem:[#allocation6 + $0xba0] sm:$0xff]
    %v1570 = vld [vmem:[#allocation6 + $0xba8] sm:$0xff]
    %v1571 = vld [vmem:[#allocation6 + $0xbb0] sm:$0xff]
    %v1572 = vld [vmem:[#allocation6 + $0xbb8] sm:$0xff]
    %v1573 = vld [vmem:[#allocation6 + $0xbc0] sm:$0xff]
    %v1574 = vld [vmem:[#allocation6 + $0xbc8] sm:$0xff]
    %v1575 = vld [vmem:[#allocation6 + $0xbd0] sm:$0xff]
    %v1576 = vld [vmem:[#allocation6 + $0xbd8] sm:$0xff]
    %v1577 = vld [vmem:[#allocation6 + $0xbe0] sm:$0xff]
    %v1578 = vld [vmem:[#allocation6 + $0xbe8] sm:$0xff]
    %v1579 = vld [vmem:[#allocation6 + $0xbf0] sm:$0xff]
    %v1580 = vld [vmem:[#allocation6 + $0xbf8] sm:$0xff]
    %v1581 = vld [vmem:[#allocation6 + $0xc00] sm:$0xff]
    %v1582 = vld [vmem:[#allocation6 + $0xc08] sm:$0xff]
    %v1583 = vld [vmem:[#allocation6 + $0xc10] sm:$0xff]
    %v1584 = vld [vmem:[#allocation6 + $0xc18] sm:$0xff]
    %v1585 = vld [vmem:[#allocation6 + $0xc20] sm:$0xff]
    %v1586 = vld [vmem:[#allocation6 + $0xc28] sm:$0xff]
    %v1587 = vld [vmem:[#allocation6 + $0xc30] sm:$0xff]
    %v1588 = vld [vmem:[#allocation6 + $0xc38] sm:$0xff]
    %v1589 = vld [vmem:[#allocation6 + $0xc40] sm:$0xff]
    %v1590 = vld [vmem:[#allocation6 + $0xc48] sm:$0xff]
    %v1591 = vld [vmem:[#allocation6 + $0xc50] sm:$0xff]
    %v1592 = vld [vmem:[#allocation6 + $0xc58] sm:$0xff]
    %v1593 = vld [vmem:[#allocation6 + $0xc60] sm:$0xff]
    %v1594 = vld [vmem:[#allocation6 + $0xc68] sm:$0xff]
    %v1595 = vld [vmem:[#allocation6 + $0xc70] sm:$0xff]
    %v1596 = vld [vmem:[#allocation6 + $0xc78] sm:$0xff]
    %v1597 = vld [vmem:[#allocation6 + $0xc80] sm:$0xff]
    %v1598 = vld [vmem:[#allocation6 + $0xc88] sm:$0xff]
    %v1599 = vld [vmem:[#allocation6 + $0xc90] sm:$0xff]
    %v1600 = vld [vmem:[#allocation6 + $0xc98] sm:$0xff]
    %v1601 = vld [vmem:[#allocation6 + $0xca0] sm:$0xff]
    %v1602 = vld [vmem:[#allocation6 + $0xca8] sm:$0xff]
    %v1603 = vld [vmem:[#allocation6 + $0xcb0] sm:$0xff]
    %v1604 = vld [vmem:[#allocation6 + $0xcb8] sm:$0xff]
    %v1605 = vld [vmem:[#allocation6 + $0xcc0] sm:$0xff]
    %v1606 = vld [vmem:[#allocation6 + $0xcc8] sm:$0xff]
    %v1607 = vld [vmem:[#allocation6 + $0xcd0] sm:$0xff]
    %v1608 = vld [vmem:[#allocation6 + $0xcd8] sm:$0xff]
    %v1609 = vld [vmem:[#allocation6 + $0xce0] sm:$0xff]
    %v1610 = vld [vmem:[#allocation6 + $0xce8] sm:$0xff]
    %v1611 = vld [vmem:[#allocation6 + $0xcf0] sm:$0xff]
    %v1612 = vld [vmem:[#allocation6 + $0xcf8] sm:$0xff]
    %v1613 = vld [vmem:[#allocation6 + $0xd00] sm:$0xff]
    %v1614 = vld [vmem:[#allocation6 + $0xd08] sm:$0xff]
    %v1615 = vld [vmem:[#allocation6 + $0xd10] sm:$0xff]
    %v1616 = vld [vmem:[#allocation6 + $0xd18] sm:$0xff]
    %v1617 = vld [vmem:[#allocation6 + $0xd20] sm:$0xff]
    %v1618 = vld [vmem:[#allocation6 + $0xd28] sm:$0xff]
    %v1619 = vld [vmem:[#allocation6 + $0xd30] sm:$0xff]
    %v1620 = vld [vmem:[#allocation6 + $0xd38] sm:$0xff]
    %v1621 = vld [vmem:[#allocation6 + $0xd40] sm:$0xff]
    %v1622 = vld [vmem:[#allocation6 + $0xd48] sm:$0xff]
    %v1623 = vld [vmem:[#allocation6 + $0xd50] sm:$0xff]
    %v1624 = vld [vmem:[#allocation6 + $0xd58] sm:$0xff]
    %v1625 = vld [vmem:[#allocation6 + $0xd60] sm:$0xff]
    %v1626 = vld [vmem:[#allocation6 + $0xd68] sm:$0xff]
    %v1627 = vld [vmem:[#allocation6 + $0xd70] sm:$0xff]
    %v1628 = vld [vmem:[#allocation6 + $0xd78] sm:$0xff]
    %v1629 = vld [vmem:[#allocation6 + $0xd80] sm:$0xff]
    %v1630 = vld [vmem:[#allocation6 + $0xd88] sm:$0xff]
    %v1631 = vld [vmem:[#allocation6 + $0xd90] sm:$0xff]
    %v1632 = vld [vmem:[#allocation6 + $0xd98] sm:$0xff]
    %v1633 = vld [vmem:[#allocation6 + $0xda0] sm:$0xff]
    %v1634 = vld [vmem:[#allocation6 + $0xda8] sm:$0xff]
    %v1635 = vld [vmem:[#allocation6 + $0xdb0] sm:$0xff]
    %v1636 = vld [vmem:[#allocation6 + $0xdb8] sm:$0xff]
    %v1637 = vld [vmem:[#allocation6 + $0xdc0] sm:$0xff]
    %v1638 = vld [vmem:[#allocation6 + $0xdc8] sm:$0xff]
    %v1639 = vld [vmem:[#allocation6 + $0xdd0] sm:$0xff]
    %v1640 = vld [vmem:[#allocation6 + $0xdd8] sm:$0xff]
    %v1641 = vld [vmem:[#allocation6 + $0xde0] sm:$0xff]
    %v1642 = vld [vmem:[#allocation6 + $0xde8] sm:$0xff]
    %v1643 = vld [vmem:[#allocation6 + $0xdf0] sm:$0xff]
    %v1644 = vld [vmem:[#allocation6 + $0xdf8] sm:$0xff]
    %v1645 = vld [vmem:[#allocation6 + $0xe00] sm:$0xff]
    %v1646 = vld [vmem:[#allocation6 + $0xe08] sm:$0xff]
    %v1647 = vld [vmem:[#allocation6 + $0xe10] sm:$0xff]
    %v1648 = vld [vmem:[#allocation6 + $0xe18] sm:$0xff]
    %v1649 = vld [vmem:[#allocation6 + $0xe20] sm:$0xff]
    %v1650 = vld [vmem:[#allocation6 + $0xe28] sm:$0xff]
    %v1651 = vld [vmem:[#allocation6 + $0xe30] sm:$0xff]
    %v1652 = vld [vmem:[#allocation6 + $0xe38] sm:$0xff]
    %v1653 = vld [vmem:[#allocation6 + $0xe40] sm:$0xff]
    %v1654 = vld [vmem:[#allocation6 + $0xe48] sm:$0xff]
    %v1655 = vld [vmem:[#allocation6 + $0xe50] sm:$0xff]
    %v1656 = vld [vmem:[#allocation6 + $0xe58] sm:$0xff]
    %v1657 = vld [vmem:[#allocation6 + $0xe60] sm:$0xff]
    %v1658 = vld [vmem:[#allocation6 + $0xe68] sm:$0xff]
    %v1659 = vld [vmem:[#allocation6 + $0xe70] sm:$0xff]
    %v1660 = vld [vmem:[#allocation6 + $0xe78] sm:$0xff]
    %v1661 = vld [vmem:[#allocation6 + $0xe80] sm:$0xff]
    %v1662 = vld [vmem:[#allocation6 + $0xe88] sm:$0xff]
    %v1663 = vld [vmem:[#allocation6 + $0xe90] sm:$0xff]
    %v1664 = vld [vmem:[#allocation6 + $0xe98] sm:$0xff]
    %v1665 = vld [vmem:[#allocation6 + $0xea0] sm:$0xff]
    %v1666 = vld [vmem:[#allocation6 + $0xea8] sm:$0xff]
    %v1667 = vld [vmem:[#allocation6 + $0xeb0] sm:$0xff]
    %v1668 = vld [vmem:[#allocation6 + $0xeb8] sm:$0xff]
    %v1669 = vld [vmem:[#allocation6 + $0xec0] sm:$0xff]
    %v1670 = vld [vmem:[#allocation6 + $0xec8] sm:$0xff]
    %v1671 = vld [vmem:[#allocation6 + $0xed0] sm:$0xff]
    %v1672 = vld [vmem:[#allocation6 + $0xed8] sm:$0xff]
    %v1673 = vld [vmem:[#allocation6 + $0xee0] sm:$0xff]
    %v1674 = vld [vmem:[#allocation6 + $0xee8] sm:$0xff]
    %v1675 = vld [vmem:[#allocation6 + $0xef0] sm:$0xff]
    %v1676 = vld [vmem:[#allocation6 + $0xef8] sm:$0xff]
    %v1677 = vld [vmem:[#allocation6 + $0xf00] sm:$0xff]
    %v1678 = vld [vmem:[#allocation6 + $0xf08] sm:$0xff]
    %v1679 = vld [vmem:[#allocation6 + $0xf10] sm:$0xff]
    %v1680 = vld [vmem:[#allocation6 + $0xf18] sm:$0xff]
    %v1681 = vld [vmem:[#allocation6 + $0xf20] sm:$0xff]
    %v1682 = vld [vmem:[#allocation6 + $0xf28] sm:$0xff]
    %v1683 = vld [vmem:[#allocation6 + $0xf30] sm:$0xff]
    %v1684 = vld [vmem:[#allocation6 + $0xf38] sm:$0xff]
    %v1685 = vld [vmem:[#allocation6 + $0xf40] sm:$0xff]
    %v1686 = vld [vmem:[#allocation6 + $0xf48] sm:$0xff]
    %v1687 = vld [vmem:[#allocation6 + $0xf50] sm:$0xff]
    %v1688 = vld [vmem:[#allocation6 + $0xf58] sm:$0xff]
    %v1689 = vld [vmem:[#allocation6 + $0xf60] sm:$0xff]
    %v1690 = vld [vmem:[#allocation6 + $0xf68] sm:$0xff]
    %v1691 = vld [vmem:[#allocation6 + $0xf70] sm:$0xff]
    %v1692 = vld [vmem:[#allocation6 + $0xf78] sm:$0xff]
    %v1693 = vld [vmem:[#allocation6 + $0xf80] sm:$0xff]
    %v1694 = vld [vmem:[#allocation6 + $0xf88] sm:$0xff]
    %v1695 = vld [vmem:[#allocation6 + $0xf90] sm:$0xff]
    %v1696 = vld [vmem:[#allocation6 + $0xf98] sm:$0xff]
    %v1697 = vld [vmem:[#allocation6 + $0xfa0] sm:$0xff]
    %v1698 = vld [vmem:[#allocation6 + $0xfa8] sm:$0xff]
    %v1699 = vld [vmem:[#allocation6 + $0xfb0] sm:$0xff]
    %v1700 = vld [vmem:[#allocation6 + $0xfb8] sm:$0xff]
    %v1701 = vld [vmem:[#allocation6 + $0xfc0] sm:$0xff]
    %v1702 = vld [vmem:[#allocation6 + $0xfc8] sm:$0xff]
    %v1703 = vld [vmem:[#allocation6 + $0xfd0] sm:$0xff]
    %v1704 = vld [vmem:[#allocation6 + $0xfd8] sm:$0xff]
    %v1705 = vld [vmem:[#allocation6 + $0xfe0] sm:$0xff]
    %v1706 = vld [vmem:[#allocation6 + $0xfe8] sm:$0xff]
    %v1707 = vld [vmem:[#allocation6 + $0xff0] sm:$0xff]
    %v1708 = vld [vmem:[#allocation6 + $0xff8] sm:$0xff]
    %v1709 = vld [vmem:[#allocation6 + $0x1000] sm:$0xff]
    %v1710 = vld [vmem:[#allocation6 + $0x1008] sm:$0xff]
    %v1711 = vld [vmem:[#allocation6 + $0x1010] sm:$0xff]
    %v1712 = vld [vmem:[#allocation6 + $0x1018] sm:$0xff]
    %v1713 = vld [vmem:[#allocation6 + $0x1020] sm:$0xff]
    %v1714 = vld [vmem:[#allocation6 + $0x1028] sm:$0xff]
    %v1715 = vld [vmem:[#allocation6 + $0x1030] sm:$0xff]
    %v1716 = vld [vmem:[#allocation6 + $0x1038] sm:$0xff]
    %v1717 = vld [vmem:[#allocation6 + $0x1040] sm:$0xff]
    %v1718 = vld [vmem:[#allocation6 + $0x1048] sm:$0xff]
    %v1719 = vld [vmem:[#allocation6 + $0x1050] sm:$0xff]
    %v1720 = vld [vmem:[#allocation6 + $0x1058] sm:$0xff]
    %v1721 = vld [vmem:[#allocation6 + $0x1060] sm:$0xff]
    %v1722 = vld [vmem:[#allocation6 + $0x1068] sm:$0xff]
    %v1723 = vld [vmem:[#allocation6 + $0x1070] sm:$0xff]
    %v1724 = vld [vmem:[#allocation6 + $0x1078] sm:$0xff]
    %v1725 = vld [vmem:[#allocation6 + $0x1080] sm:$0xff]
    %v1726 = vld [vmem:[#allocation6 + $0x1088] sm:$0xff]
    %v1727 = vld [vmem:[#allocation6 + $0x1090] sm:$0xff]
    %v1728 = vld [vmem:[#allocation6 + $0x1098] sm:$0xff]
    %v1729 = vld [vmem:[#allocation6 + $0x10a0] sm:$0xff]
    %v1730 = vld [vmem:[#allocation6 + $0x10a8] sm:$0xff]
    %v1731 = vld [vmem:[#allocation6 + $0x10b0] sm:$0xff]
    %v1732 = vld [vmem:[#allocation6 + $0x10b8] sm:$0xff]
    %v1733 = vld [vmem:[#allocation6 + $0x10c0] sm:$0xff]
    %v1734 = vld [vmem:[#allocation6 + $0x10c8] sm:$0xff]
    %v1735 = vld [vmem:[#allocation6 + $0x10d0] sm:$0xff]
    %v1736 = vld [vmem:[#allocation6 + $0x10d8] sm:$0xff]
    %v1737 = vld [vmem:[#allocation6 + $0x10e0] sm:$0xff]
    %v1738 = vld [vmem:[#allocation6 + $0x10e8] sm:$0xff]
    %v1739 = vld [vmem:[#allocation6 + $0x10f0] sm:$0xff]
    %v1740 = vld [vmem:[#allocation6 + $0x10f8] sm:$0xff]
    %v1741 = vld [vmem:[#allocation6 + $0x1100] sm:$0xff]
    %v1742 = vld [vmem:[#allocation6 + $0x1108] sm:$0xff]
    %v1743 = vld [vmem:[#allocation6 + $0x1110] sm:$0xff]
    %v1744 = vld [vmem:[#allocation6 + $0x1118] sm:$0xff]
    %v1745 = vld [vmem:[#allocation6 + $0x1120] sm:$0xff]
    %v1746 = vld [vmem:[#allocation6 + $0x1128] sm:$0xff]
    %v1747 = vld [vmem:[#allocation6 + $0x1130] sm:$0xff]
    %v1748 = vld [vmem:[#allocation6 + $0x1138] sm:$0xff]
    %v1749 = vld [vmem:[#allocation6 + $0x1140] sm:$0xff]
    %v1750 = vld [vmem:[#allocation6 + $0x1148] sm:$0xff]
    %v1751 = vld [vmem:[#allocation6 + $0x1150] sm:$0xff]
    %v1752 = vld [vmem:[#allocation6 + $0x1158] sm:$0xff]
    %v1753 = vld [vmem:[#allocation6 + $0x1160] sm:$0xff]
    %v1754 = vld [vmem:[#allocation6 + $0x1168] sm:$0xff]
    %v1755 = vld [vmem:[#allocation6 + $0x1170] sm:$0xff]
    %v1756 = vld [vmem:[#allocation6 + $0x1178] sm:$0xff]
    %v1757 = vld [vmem:[#allocation6 + $0x1180] sm:$0xff]
    %v1758 = vld [vmem:[#allocation6 + $0x1188] sm:$0xff]
    %v1759 = vld [vmem:[#allocation6 + $0x1190] sm:$0xff]
    %v1760 = vld [vmem:[#allocation6 + $0x1198] sm:$0xff]
    %v1761 = vld [vmem:[#allocation6 + $0x11a0] sm:$0xff]
    %v1762 = vld [vmem:[#allocation6 + $0x11a8] sm:$0xff]
    %v1763 = vld [vmem:[#allocation6 + $0x11b0] sm:$0xff]
    %v1764 = vld [vmem:[#allocation6 + $0x11b8] sm:$0xff]
    %v1765 = vld [vmem:[#allocation6 + $0x11c0] sm:$0xff]
    %v1766 = vld [vmem:[#allocation6 + $0x11c8] sm:$0xff]
    %v1767 = vld [vmem:[#allocation6 + $0x11d0] sm:$0xff]
    %v1768 = vld [vmem:[#allocation6 + $0x11d8] sm:$0xff]
    %v1769 = vld [vmem:[#allocation6 + $0x11e0] sm:$0xff]
    %v1770 = vld [vmem:[#allocation6 + $0x11e8] sm:$0xff]
    %v1771 = vld [vmem:[#allocation6 + $0x11f0] sm:$0xff]
    %v1772 = vld [vmem:[#allocation6 + $0x11f8] sm:$0xff]
    %v1773 = vld [vmem:[#allocation6 + $0x1200] sm:$0xff]
    %v1774 = vld [vmem:[#allocation6 + $0x1208] sm:$0xff]
    %v1775 = vld [vmem:[#allocation6 + $0x1210] sm:$0xff]
    %v1776 = vld [vmem:[#allocation6 + $0x1218] sm:$0xff]
    %v1777 = vld [vmem:[#allocation6 + $0x1220] sm:$0xff]
    %v1778 = vld [vmem:[#allocation6 + $0x1228] sm:$0xff]
    %v1779 = vld [vmem:[#allocation6 + $0x1230] sm:$0xff]
    %v1780 = vld [vmem:[#allocation6 + $0x1238] sm:$0xff]
    %v1781 = vld [vmem:[#allocation6 + $0x1240] sm:$0xff]
    %v1782 = vld [vmem:[#allocation6 + $0x1248] sm:$0xff]
    %v1783 = vld [vmem:[#allocation6 + $0x1250] sm:$0xff]
    %v1784 = vld [vmem:[#allocation6 + $0x1258] sm:$0xff]
    %v1785 = vld [vmem:[#allocation6 + $0x1260] sm:$0xff]
    %v1786 = vld [vmem:[#allocation6 + $0x1268] sm:$0xff]
    %v1787 = vld [vmem:[#allocation6 + $0x1270] sm:$0xff]
    %v1788 = vld [vmem:[#allocation6 + $0x1278] sm:$0xff]
    %v1789 = vld [vmem:[#allocation6 + $0x1280] sm:$0xff]
    %v1790 = vld [vmem:[#allocation6 + $0x1288] sm:$0xff]
    %v1791 = vld [vmem:[#allocation6 + $0x1290] sm:$0xff]
    %v1792 = vld [vmem:[#allocation6 + $0x1298] sm:$0xff]
    %v1793 = vld [vmem:[#allocation6 + $0x12a0] sm:$0xff]
    %v1794 = vld [vmem:[#allocation6 + $0x12a8] sm:$0xff]
    %v1795 = vld [vmem:[#allocation6 + $0x12b0] sm:$0xff]
    %v1796 = vld [vmem:[#allocation6 + $0x12b8] sm:$0xff]
    %v1797 = vld [vmem:[#allocation6 + $0x12c0] sm:$0xff]
    %v1798 = vld [vmem:[#allocation6 + $0x12c8] sm:$0xff]
    %v1799 = vld [vmem:[#allocation6 + $0x12d0] sm:$0xff]
    %v1800 = vld [vmem:[#allocation6 + $0x12d8] sm:$0xff]
    %v1801 = vld [vmem:[#allocation6 + $0x12e0] sm:$0xff]
    %v1802 = vld [vmem:[#allocation6 + $0x12e8] sm:$0xff]
    %v1803 = vld [vmem:[#allocation6 + $0x12f0] sm:$0xff]
    %v1804 = vld [vmem:[#allocation6 + $0x12f8] sm:$0xff]
    %v1805 = vld [vmem:[#allocation6 + $0x1300] sm:$0xff]
    %v1806 = vld [vmem:[#allocation6 + $0x1308] sm:$0xff]
    %v1807 = vld [vmem:[#allocation6 + $0x1310] sm:$0xff]
    %v1808 = vld [vmem:[#allocation6 + $0x1318] sm:$0xff]
    %v1809 = vld [vmem:[#allocation6 + $0x1320] sm:$0xff]
    %v1810 = vld [vmem:[#allocation6 + $0x1328] sm:$0xff]
    %v1811 = vld [vmem:[#allocation6 + $0x1330] sm:$0xff]
    %v1812 = vld [vmem:[#allocation6 + $0x1338] sm:$0xff]
    %v1813 = vld [vmem:[#allocation6 + $0x1340] sm:$0xff]
    %v1814 = vld [vmem:[#allocation6 + $0x1348] sm:$0xff]
    %v1815 = vld [vmem:[#allocation6 + $0x1350] sm:$0xff]
    %v1816 = vld [vmem:[#allocation6 + $0x1358] sm:$0xff]
    %v1817 = vld [vmem:[#allocation6 + $0x1360] sm:$0xff]
    %v1818 = vld [vmem:[#allocation6 + $0x1368] sm:$0xff]
    %v1819 = vld [vmem:[#allocation6 + $0x1370] sm:$0xff]
    %v1820 = vld [vmem:[#allocation6 + $0x1378] sm:$0xff]
    %v1821 = vld [vmem:[#allocation6 + $0x1380] sm:$0xff]
    %v1822 = vld [vmem:[#allocation6 + $0x1388] sm:$0xff]
    %v1823 = vld [vmem:[#allocation6 + $0x1390] sm:$0xff]
    %v1824 = vld [vmem:[#allocation6 + $0x1398] sm:$0xff]
    %v1825 = vld [vmem:[#allocation6 + $0x13a0] sm:$0xff]
    %v1826 = vld [vmem:[#allocation6 + $0x13a8] sm:$0xff]
    %v1827 = vld [vmem:[#allocation6 + $0x13b0] sm:$0xff]
    %v1828 = vld [vmem:[#allocation6 + $0x13b8] sm:$0xff]
    %v1829 = vld [vmem:[#allocation6 + $0x13c0] sm:$0xff]
    %v1830 = vld [vmem:[#allocation6 + $0x13c8] sm:$0xff]
    %v1831 = vld [vmem:[#allocation6 + $0x13d0] sm:$0xff]
    %v1832 = vld [vmem:[#allocation6 + $0x13d8] sm:$0xff]
    %v1833 = vld [vmem:[#allocation6 + $0x13e0] sm:$0xff]
    %v1834 = vld [vmem:[#allocation6 + $0x13e8] sm:$0xff]
    %v1835 = vld [vmem:[#allocation6 + $0x13f0] sm:$0xff]
    %v1836 = vld [vmem:[#allocation6 + $0x13f8] sm:$0xff]
    %v1837 = vld [vmem:[#allocation6 + $0x1400] sm:$0xff]
    %v1838 = vld [vmem:[#allocation6 + $0x1408] sm:$0xff]
    %v1839 = vld [vmem:[#allocation6 + $0x1410] sm:$0xff]
    %v1840 = vld [vmem:[#allocation6 + $0x1418] sm:$0xff]
    %v1841 = vld [vmem:[#allocation6 + $0x1420] sm:$0xff]
    %v1842 = vld [vmem:[#allocation6 + $0x1428] sm:$0xff]
    %v1843 = vld [vmem:[#allocation6 + $0x1430] sm:$0xff]
    %v1844 = vld [vmem:[#allocation6 + $0x1438] sm:$0xff]
    %v1845 = vld [vmem:[#allocation6 + $0x1440] sm:$0xff]
    %v1846 = vld [vmem:[#allocation6 + $0x1448] sm:$0xff]
    %v1847 = vld [vmem:[#allocation6 + $0x1450] sm:$0xff]
    %v1848 = vld [vmem:[#allocation6 + $0x1458] sm:$0xff]
    %v1849 = vld [vmem:[#allocation6 + $0x1460] sm:$0xff]
    %v1850 = vld [vmem:[#allocation6 + $0x1468] sm:$0xff]
    %v1851 = vld [vmem:[#allocation6 + $0x1470] sm:$0xff]
    %v1852 = vld [vmem:[#allocation6 + $0x1478] sm:$0xff]
    %v1853 = vld [vmem:[#allocation6 + $0x1480] sm:$0xff]
    %v1854 = vld [vmem:[#allocation6 + $0x1488] sm:$0xff]
    %v1855 = vld [vmem:[#allocation6 + $0x1490] sm:$0xff]
    %v1856 = vld [vmem:[#allocation6 + $0x1498] sm:$0xff]
    %v1857 = vld [vmem:[#allocation6 + $0x14a0] sm:$0xff]
    %v1858 = vld [vmem:[#allocation6 + $0x14a8] sm:$0xff]
    %v1859 = vld [vmem:[#allocation6 + $0x14b0] sm:$0xff]
    %v1860 = vld [vmem:[#allocation6 + $0x14b8] sm:$0xff]
    %v1861 = vld [vmem:[#allocation6 + $0x14c0] sm:$0xff]
    %v1862 = vld [vmem:[#allocation6 + $0x14c8] sm:$0xff]
    %v1863 = vld [vmem:[#allocation6 + $0x14d0] sm:$0xff]
    %v1864 = vld [vmem:[#allocation6 + $0x14d8] sm:$0xff]
    %v1865 = vld [vmem:[#allocation6 + $0x14e0] sm:$0xff]
    %v1866 = vld [vmem:[#allocation6 + $0x14e8] sm:$0xff]
    %v1867 = vld [vmem:[#allocation6 + $0x14f0] sm:$0xff]
    %v1868 = vld [vmem:[#allocation6 + $0x14f8] sm:$0xff]
    %v1869 = vld [vmem:[#allocation6 + $0x1500] sm:$0xff]
    %v1870 = vld [vmem:[#allocation6 + $0x1508] sm:$0xff]
    %v1871 = vld [vmem:[#allocation6 + $0x1510] sm:$0xff]
    %v1872 = vld [vmem:[#allocation6 + $0x1518] sm:$0xff]
    %v1873 = vld [vmem:[#allocation6 + $0x1520] sm:$0xff]
    %v1874 = vld [vmem:[#allocation6 + $0x1528] sm:$0xff]
    %v1875 = vld [vmem:[#allocation6 + $0x1530] sm:$0xff]
    %v1876 = vld [vmem:[#allocation6 + $0x1538] sm:$0xff]
    %v1877 = vld [vmem:[#allocation6 + $0x1540] sm:$0xff]
    %v1878 = vld [vmem:[#allocation6 + $0x1548] sm:$0xff]
    %v1879 = vld [vmem:[#allocation6 + $0x1550] sm:$0xff]
    %v1880 = vld [vmem:[#allocation6 + $0x1558] sm:$0xff]
    %v1881 = vld [vmem:[#allocation6 + $0x1560] sm:$0xff]
    %v1882 = vld [vmem:[#allocation6 + $0x1568] sm:$0xff]
    %v1883 = vld [vmem:[#allocation6 + $0x1570] sm:$0xff]
    %v1884 = vld [vmem:[#allocation6 + $0x1578] sm:$0xff]
    %v1885 = vld [vmem:[#allocation6 + $0x1580] sm:$0xff]
    %v1886 = vld [vmem:[#allocation6 + $0x1588] sm:$0xff]
    %v1887 = vld [vmem:[#allocation6 + $0x1590] sm:$0xff]
    %v1888 = vld [vmem:[#allocation6 + $0x1598] sm:$0xff]
    %v1889 = vld [vmem:[#allocation6 + $0x15a0] sm:$0xff]
    %v1890 = vld [vmem:[#allocation6 + $0x15a8] sm:$0xff]
    %v1891 = vld [vmem:[#allocation6 + $0x15b0] sm:$0xff]
    %v1892 = vld [vmem:[#allocation6 + $0x15b8] sm:$0xff]
    %v1893 = vld [vmem:[#allocation6 + $0x15c0] sm:$0xff]
    %v1894 = vld [vmem:[#allocation6 + $0x15c8] sm:$0xff]
    %v1895 = vld [vmem:[#allocation6 + $0x15d0] sm:$0xff]
    %v1896 = vld [vmem:[#allocation6 + $0x15d8] sm:$0xff]
    %v1897 = vld [vmem:[#allocation6 + $0x15e0] sm:$0xff]
    %v1898 = vld [vmem:[#allocation6 + $0x15e8] sm:$0xff]
    %v1899 = vld [vmem:[#allocation6 + $0x15f0] sm:$0xff]
    %v1900 = vld [vmem:[#allocation6 + $0x15f8] sm:$0xff]
    %v1901 = vld [vmem:[#allocation6 + $0x1600] sm:$0xff]
    %v1902 = vld [vmem:[#allocation6 + $0x1608] sm:$0xff]
    %v1903 = vld [vmem:[#allocation6 + $0x1610] sm:$0xff]
    %v1904 = vld [vmem:[#allocation6 + $0x1618] sm:$0xff]
    %v1905 = vld [vmem:[#allocation6 + $0x1620] sm:$0xff]
    %v1906 = vld [vmem:[#allocation6 + $0x1628] sm:$0xff]
    %v1907 = vld [vmem:[#allocation6 + $0x1630] sm:$0xff]
    %v1908 = vld [vmem:[#allocation6 + $0x1638] sm:$0xff]
    %v1909 = vld [vmem:[#allocation6 + $0x1640] sm:$0xff]
    %v1910 = vld [vmem:[#allocation6 + $0x1648] sm:$0xff]
    %v1911 = vld [vmem:[#allocation6 + $0x1650] sm:$0xff]
    %v1912 = vld [vmem:[#allocation6 + $0x1658] sm:$0xff]
    %v1913 = vld [vmem:[#allocation6 + $0x1660] sm:$0xff]
    %v1914 = vld [vmem:[#allocation6 + $0x1668] sm:$0xff]
    %v1915 = vld [vmem:[#allocation6 + $0x1670] sm:$0xff]
    %v1916 = vld [vmem:[#allocation6 + $0x1678] sm:$0xff]
    %v1917 = vld [vmem:[#allocation6 + $0x1680] sm:$0xff]
    %v1918 = vld [vmem:[#allocation6 + $0x1688] sm:$0xff]
    %v1919 = vld [vmem:[#allocation6 + $0x1690] sm:$0xff]
    %v1920 = vld [vmem:[#allocation6 + $0x1698] sm:$0xff]
    %v1921 = vld [vmem:[#allocation6 + $0x16a0] sm:$0xff]
    %v1922 = vld [vmem:[#allocation6 + $0x16a8] sm:$0xff]
    %v1923 = vld [vmem:[#allocation6 + $0x16b0] sm:$0xff]
    %v1924 = vld [vmem:[#allocation6 + $0x16b8] sm:$0xff]
    %v1925 = vld [vmem:[#allocation6 + $0x16c0] sm:$0xff]
    %v1926 = vld [vmem:[#allocation6 + $0x16c8] sm:$0xff]
    %v1927 = vld [vmem:[#allocation6 + $0x16d0] sm:$0xff]
    %v1928 = vld [vmem:[#allocation6 + $0x16d8] sm:$0xff]
    %v1929 = vld [vmem:[#allocation6 + $0x16e0] sm:$0xff]
    %v1930 = vld [vmem:[#allocation6 + $0x16e8] sm:$0xff]
    %v1931 = vld [vmem:[#allocation6 + $0x16f0] sm:$0xff]
    %v1932 = vld [vmem:[#allocation6 + $0x16f8] sm:$0xff]
    %v1933 = vld [vmem:[#allocation6 + $0x1700] sm:$0xff]
    %v1934 = vld [vmem:[#allocation6 + $0x1708] sm:$0xff]
    %v1935 = vld [vmem:[#allocation6 + $0x1710] sm:$0xff]
    %v1936 = vld [vmem:[#allocation6 + $0x1718] sm:$0xff]
    %v1937 = vld [vmem:[#allocation6 + $0x1720] sm:$0xff]
    %v1938 = vld [vmem:[#allocation6 + $0x1728] sm:$0xff]
    %v1939 = vld [vmem:[#allocation6 + $0x1730] sm:$0xff]
    %v1940 = vld [vmem:[#allocation6 + $0x1738] sm:$0xff]
    %v1941 = vld [vmem:[#allocation6 + $0x1740] sm:$0xff]
    %v1942 = vld [vmem:[#allocation6 + $0x1748] sm:$0xff]
    %v1943 = vld [vmem:[#allocation6 + $0x1750] sm:$0xff]
    %v1944 = vld [vmem:[#allocation6 + $0x1758] sm:$0xff]
    %v1945 = vld [vmem:[#allocation6 + $0x1760] sm:$0xff]
    %v1946 = vld [vmem:[#allocation6 + $0x1768] sm:$0xff]
    %v1947 = vld [vmem:[#allocation6 + $0x1770] sm:$0xff]
    %v1948 = vld [vmem:[#allocation6 + $0x1778] sm:$0xff]
    %v1949 = vld [vmem:[#allocation6 + $0x1780] sm:$0xff]
    %v1950 = vld [vmem:[#allocation6 + $0x1788] sm:$0xff]
    %v1951 = vld [vmem:[#allocation6 + $0x1790] sm:$0xff]
    %v1952 = vld [vmem:[#allocation6 + $0x1798] sm:$0xff]
    %v1953 = vld [vmem:[#allocation6 + $0x17a0] sm:$0xff]
    %v1954 = vld [vmem:[#allocation6 + $0x17a8] sm:$0xff]
    %v1955 = vld [vmem:[#allocation6 + $0x17b0] sm:$0xff]
    %v1956 = vld [vmem:[#allocation6 + $0x17b8] sm:$0xff]
    %v1957 = vld [vmem:[#allocation6 + $0x17c0] sm:$0xff]
    %v1958 = vld [vmem:[#allocation6 + $0x17c8] sm:$0xff]
    %v1959 = vld [vmem:[#allocation6 + $0x17d0] sm:$0xff]
    %v1960 = vld [vmem:[#allocation6 + $0x17d8] sm:$0xff]
    %v1961 = vld [vmem:[#allocation6 + $0x17e0] sm:$0xff]
    %v1962 = vld [vmem:[#allocation6 + $0x17e8] sm:$0xff]
    %v1963 = vld [vmem:[#allocation6 + $0x17f0] sm:$0xff]
    %v1964 = vld [vmem:[#allocation6 + $0x17f8] sm:$0xff]
    %v1965 = vld [vmem:[#allocation6 + $0x1800] sm:$0xff]
    %v1966 = vld [vmem:[#allocation6 + $0x1808] sm:$0xff]
    %v1967 = vld [vmem:[#allocation6 + $0x1810] sm:$0xff]
    %v1968 = vld [vmem:[#allocation6 + $0x1818] sm:$0xff]
    %v1969 = vld [vmem:[#allocation6 + $0x1820] sm:$0xff]
    %v1970 = vld [vmem:[#allocation6 + $0x1828] sm:$0xff]
    %v1971 = vld [vmem:[#allocation6 + $0x1830] sm:$0xff]
    %v1972 = vld [vmem:[#allocation6 + $0x1838] sm:$0xff]
    %v1973 = vld [vmem:[#allocation6 + $0x1840] sm:$0xff]
    %v1974 = vld [vmem:[#allocation6 + $0x1848] sm:$0xff]
    %v1975 = vld [vmem:[#allocation6 + $0x1850] sm:$0xff]
    %v1976 = vld [vmem:[#allocation6 + $0x1858] sm:$0xff]
    %v1977 = vld [vmem:[#allocation6 + $0x1860] sm:$0xff]
    %v1978 = vld [vmem:[#allocation6 + $0x1868] sm:$0xff]
    %v1979 = vld [vmem:[#allocation6 + $0x1870] sm:$0xff]
    %v1980 = vld [vmem:[#allocation6 + $0x1878] sm:$0xff]
    %v1981 = vld [vmem:[#allocation6 + $0x1880] sm:$0xff]
    %v1982 = vld [vmem:[#allocation6 + $0x1888] sm:$0xff]
    %v1983 = vld [vmem:[#allocation6 + $0x1890] sm:$0xff]
    %v1984 = vld [vmem:[#allocation6 + $0x1898] sm:$0xff]
    %v1985 = vld [vmem:[#allocation6 + $0x18a0] sm:$0xff]
    %v1986 = vld [vmem:[#allocation6 + $0x18a8] sm:$0xff]
    %v1987 = vld [vmem:[#allocation6 + $0x18b0] sm:$0xff]
    %v1988 = vld [vmem:[#allocation6 + $0x18b8] sm:$0xff]
    %v1989 = vld [vmem:[#allocation6 + $0x18c0] sm:$0xff]
    %v1990 = vld [vmem:[#allocation6 + $0x18c8] sm:$0xff]
    %v1991 = vld [vmem:[#allocation6 + $0x18d0] sm:$0xff]
    %v1992 = vld [vmem:[#allocation6 + $0x18d8] sm:$0xff]
    %v1993 = vld [vmem:[#allocation6 + $0x18e0] sm:$0xff]
    %v1994 = vld [vmem:[#allocation6 + $0x18e8] sm:$0xff]
    %v1995 = vld [vmem:[#allocation6 + $0x18f0] sm:$0xff]
    %v1996 = vld [vmem:[#allocation6 + $0x18f8] sm:$0xff]
    %v1997 = vld [vmem:[#allocation6 + $0x1900] sm:$0xff]
    %v1998 = vld [vmem:[#allocation6 + $0x1908] sm:$0xff]
    %v1999 = vld [vmem:[#allocation6 + $0x1910] sm:$0xff]
    %v2000 = vld [vmem:[#allocation6 + $0x1918] sm:$0xff]
    %v2001 = vld [vmem:[#allocation6 + $0x1920] sm:$0xff]
    %v2002 = vld [vmem:[#allocation6 + $0x1928] sm:$0xff]
    %v2003 = vld [vmem:[#allocation6 + $0x1930] sm:$0xff]
    %v2004 = vld [vmem:[#allocation6 + $0x1938] sm:$0xff]
    %v2005 = vld [vmem:[#allocation6 + $0x1940] sm:$0xff]
    %v2006 = vld [vmem:[#allocation6 + $0x1948] sm:$0xff]
    %v2007 = vld [vmem:[#allocation6 + $0x1950] sm:$0xff]
    %v2008 = vld [vmem:[#allocation6 + $0x1958] sm:$0xff]
    %v2009 = vld [vmem:[#allocation6 + $0x1960] sm:$0xff]
    %v2010 = vld [vmem:[#allocation6 + $0x1968] sm:$0xff]
    %v2011 = vld [vmem:[#allocation6 + $0x1970] sm:$0xff]
    %v2012 = vld [vmem:[#allocation6 + $0x1978] sm:$0xff]
    %v2013 = vld [vmem:[#allocation6 + $0x1980] sm:$0xff]
    %v2014 = vld [vmem:[#allocation6 + $0x1988] sm:$0xff]
    %v2015 = vld [vmem:[#allocation6 + $0x1990] sm:$0xff]
    %v2016 = vld [vmem:[#allocation6 + $0x1998] sm:$0xff]
    %v2017 = vld [vmem:[#allocation6 + $0x19a0] sm:$0xff]
    %v2018 = vld [vmem:[#allocation6 + $0x19a8] sm:$0xff]
    %v2019 = vld [vmem:[#allocation6 + $0x19b0] sm:$0xff]
    %v2020 = vld [vmem:[#allocation6 + $0x19b8] sm:$0xff]
    %v2021 = vld [vmem:[#allocation6 + $0x19c0] sm:$0xff]
    %v2022 = vld [vmem:[#allocation6 + $0x19c8] sm:$0xff]
    %v2023 = vld [vmem:[#allocation6 + $0x19d0] sm:$0xff]
    %v2024 = vld [vmem:[#allocation6 + $0x19d8] sm:$0xff]
    %v2025 = vld [vmem:[#allocation6 + $0x19e0] sm:$0xff]
    %v2026 = vld [vmem:[#allocation6 + $0x19e8] sm:$0xff]
    %v2027 = vld [vmem:[#allocation6 + $0x19f0] sm:$0xff]
    %v2028 = vld [vmem:[#allocation6 + $0x19f8] sm:$0xff]
    %v2029 = vld [vmem:[#allocation6 + $0x1a00] sm:$0xff]
    %v2030 = vld [vmem:[#allocation6 + $0x1a08] sm:$0xff]
    %v2031 = vld [vmem:[#allocation6 + $0x1a10] sm:$0xff]
    %v2032 = vld [vmem:[#allocation6 + $0x1a18] sm:$0xff]
    %v2033 = vld [vmem:[#allocation6 + $0x1a20] sm:$0xff]
    %v2034 = vld [vmem:[#allocation6 + $0x1a28] sm:$0xff]
    %v2035 = vld [vmem:[#allocation6 + $0x1a30] sm:$0xff]
    %v2036 = vld [vmem:[#allocation6 + $0x1a38] sm:$0xff]
    %v2037 = vld [vmem:[#allocation6 + $0x1a40] sm:$0xff]
    %v2038 = vld [vmem:[#allocation6 + $0x1a48] sm:$0xff]
    %v2039 = vld [vmem:[#allocation6 + $0x1a50] sm:$0xff]
    %v2040 = vld [vmem:[#allocation6 + $0x1a58] sm:$0xff]
    %v2041 = vld [vmem:[#allocation6 + $0x1a60] sm:$0xff]
    %v2042 = vld [vmem:[#allocation6 + $0x1a68] sm:$0xff]
    %v2043 = vld [vmem:[#allocation6 + $0x1a70] sm:$0xff]
    %v2044 = vld [vmem:[#allocation6 + $0x1a78] sm:$0xff]
    %v2045 = vld [vmem:[#allocation6 + $0x1a80] sm:$0xff]
    %v2046 = vld [vmem:[#allocation6 + $0x1a88] sm:$0xff]
    %v2047 = vld [vmem:[#allocation6 + $0x1a90] sm:$0xff]
    %v2048 = vld [vmem:[#allocation6 + $0x1a98] sm:$0xff]
    %v2049 = vld [vmem:[#allocation6 + $0x1aa0] sm:$0xff]
    %v2050 = vld [vmem:[#allocation6 + $0x1aa8] sm:$0xff]
    %v2051 = vld [vmem:[#allocation6 + $0x1ab0] sm:$0xff]
    %v2052 = vld [vmem:[#allocation6 + $0x1ab8] sm:$0xff]
    %v2053 = vld [vmem:[#allocation6 + $0x1ac0] sm:$0xff]
    %v2054 = vld [vmem:[#allocation6 + $0x1ac8] sm:$0xff]
    %v2055 = vld [vmem:[#allocation6 + $0x1ad0] sm:$0xff]
    %v2056 = vld [vmem:[#allocation6 + $0x1ad8] sm:$0xff]
    %v2057 = vld [vmem:[#allocation6 + $0x1ae0] sm:$0xff]
    %v2058 = vld [vmem:[#allocation6 + $0x1ae8] sm:$0xff]
    %v2059 = vld [vmem:[#allocation6 + $0x1af0] sm:$0xff]
    %v2060 = vld [vmem:[#allocation6 + $0x1af8] sm:$0xff]
    %v2061 = vld [vmem:[#allocation6 + $0x1b00] sm:$0xff]
    %v2062 = vld [vmem:[#allocation6 + $0x1b08] sm:$0xff]
    %v2063 = vld [vmem:[#allocation6 + $0x1b10] sm:$0xff]
    %v2064 = vld [vmem:[#allocation6 + $0x1b18] sm:$0xff]
    %v2065 = vld [vmem:[#allocation6 + $0x1b20] sm:$0xff]
    %v2066 = vld [vmem:[#allocation6 + $0x1b28] sm:$0xff]
    %v2067 = vld [vmem:[#allocation6 + $0x1b30] sm:$0xff]
    %v2068 = vld [vmem:[#allocation6 + $0x1b38] sm:$0xff]
    %v2069 = vld [vmem:[#allocation6 + $0x1b40] sm:$0xff]
    %v2070 = vld [vmem:[#allocation6 + $0x1b48] sm:$0xff]
    %v2071 = vld [vmem:[#allocation6 + $0x1b50] sm:$0xff]
    %v2072 = vld [vmem:[#allocation6 + $0x1b58] sm:$0xff]
    %v2073 = vld [vmem:[#allocation6 + $0x1b60] sm:$0xff]
    %v2074 = vld [vmem:[#allocation6 + $0x1b68] sm:$0xff]
    %v2075 = vld [vmem:[#allocation6 + $0x1b70] sm:$0xff]
    %v2076 = vld [vmem:[#allocation6 + $0x1b78] sm:$0xff]
    %v2077 = vld [vmem:[#allocation6 + $0x1b80] sm:$0xff]
    %v2078 = vld [vmem:[#allocation6 + $0x1b88] sm:$0xff]
    %v2079 = vld [vmem:[#allocation6 + $0x1b90] sm:$0xff]
    %v2080 = vld [vmem:[#allocation6 + $0x1b98] sm:$0xff]
    %v2081 = vld [vmem:[#allocation6 + $0x1ba0] sm:$0xff]
    %v2082 = vld [vmem:[#allocation6 + $0x1ba8] sm:$0xff]
    %v2083 = vld [vmem:[#allocation6 + $0x1bb0] sm:$0xff]
    %v2084 = vld [vmem:[#allocation6 + $0x1bb8] sm:$0xff]
    %v2085 = vld [vmem:[#allocation6 + $0x1bc0] sm:$0xff]
    %v2086 = vld [vmem:[#allocation6 + $0x1bc8] sm:$0xff]
    %v2087 = vld [vmem:[#allocation6 + $0x1bd0] sm:$0xff]
    %v2088 = vld [vmem:[#allocation6 + $0x1bd8] sm:$0xff]
    %v2089 = vld [vmem:[#allocation6 + $0x1be0] sm:$0xff]
    %v2090 = vld [vmem:[#allocation6 + $0x1be8] sm:$0xff]
    %v2091 = vld [vmem:[#allocation6 + $0x1bf0] sm:$0xff]
    %v2092 = vld [vmem:[#allocation6 + $0x1bf8] sm:$0xff]
    %v2093 = vld [vmem:[#allocation6 + $0x1c00] sm:$0xff]
    %v2094 = vld [vmem:[#allocation6 + $0x1c08] sm:$0xff]
    %v2095 = vld [vmem:[#allocation6 + $0x1c10] sm:$0xff]
    %v2096 = vld [vmem:[#allocation6 + $0x1c18] sm:$0xff]
    %v2097 = vld [vmem:[#allocation6 + $0x1c20] sm:$0xff]
    %v2098 = vld [vmem:[#allocation6 + $0x1c28] sm:$0xff]
    %v2099 = vld [vmem:[#allocation6 + $0x1c30] sm:$0xff]
    %v2100 = vld [vmem:[#allocation6 + $0x1c38] sm:$0xff]
    %v2101 = vld [vmem:[#allocation6 + $0x1c40] sm:$0xff]
    %v2102 = vld [vmem:[#allocation6 + $0x1c48] sm:$0xff]
    %v2103 = vld [vmem:[#allocation6 + $0x1c50] sm:$0xff]
    %v2104 = vld [vmem:[#allocation6 + $0x1c58] sm:$0xff]
    %v2105 = vld [vmem:[#allocation6 + $0x1c60] sm:$0xff]
    %v2106 = vld [vmem:[#allocation6 + $0x1c68] sm:$0xff]
    %v2107 = vld [vmem:[#allocation6 + $0x1c70] sm:$0xff]
    %v2108 = vld [vmem:[#allocation6 + $0x1c78] sm:$0xff]
    %v2109 = vld [vmem:[#allocation6 + $0x1c80] sm:$0xff]
    %v2110 = vld [vmem:[#allocation6 + $0x1c88] sm:$0xff]
    %v2111 = vld [vmem:[#allocation6 + $0x1c90] sm:$0xff]
    %v2112 = vld [vmem:[#allocation6 + $0x1c98] sm:$0xff]
    %v2113 = vld [vmem:[#allocation6 + $0x1ca0] sm:$0xff]
    %v2114 = vld [vmem:[#allocation6 + $0x1ca8] sm:$0xff]
    %v2115 = vld [vmem:[#allocation6 + $0x1cb0] sm:$0xff]
    %v2116 = vld [vmem:[#allocation6 + $0x1cb8] sm:$0xff]
    %v2117 = vld [vmem:[#allocation6 + $0x1cc0] sm:$0xff]
    %v2118 = vld [vmem:[#allocation6 + $0x1cc8] sm:$0xff]
    %v2119 = vld [vmem:[#allocation6 + $0x1cd0] sm:$0xff]
    %v2120 = vld [vmem:[#allocation6 + $0x1cd8] sm:$0xff]
    %v2121 = vld [vmem:[#allocation6 + $0x1ce0] sm:$0xff]
    %v2122 = vld [vmem:[#allocation6 + $0x1ce8] sm:$0xff]
    %v2123 = vld [vmem:[#allocation6 + $0x1cf0] sm:$0xff]
    %v2124 = vld [vmem:[#allocation6 + $0x1cf8] sm:$0xff]
    %v2125 = vld [vmem:[#allocation6 + $0x1d00] sm:$0xff]
    %v2126 = vld [vmem:[#allocation6 + $0x1d08] sm:$0xff]
    %v2127 = vld [vmem:[#allocation6 + $0x1d10] sm:$0xff]
    %v2128 = vld [vmem:[#allocation6 + $0x1d18] sm:$0xff]
    %v2129 = vld [vmem:[#allocation6 + $0x1d20] sm:$0xff]
    %v2130 = vld [vmem:[#allocation6 + $0x1d28] sm:$0xff]
    %v2131 = vld [vmem:[#allocation6 + $0x1d30] sm:$0xff]
    %v2132 = vld [vmem:[#allocation6 + $0x1d38] sm:$0xff]
    %v2133 = vld [vmem:[#allocation6 + $0x1d40] sm:$0xff]
    %v2134 = vld [vmem:[#allocation6 + $0x1d48] sm:$0xff]
    %v2135 = vld [vmem:[#allocation6 + $0x1d50] sm:$0xff]
    %v2136 = vld [vmem:[#allocation6 + $0x1d58] sm:$0xff]
    %v2137 = vld [vmem:[#allocation6 + $0x1d60] sm:$0xff]
    %v2138 = vld [vmem:[#allocation6 + $0x1d68] sm:$0xff]
    %v2139 = vld [vmem:[#allocation6 + $0x1d70] sm:$0xff]
    %v2140 = vld [vmem:[#allocation6 + $0x1d78] sm:$0xff]
    %v2141 = vld [vmem:[#allocation6 + $0x1d80] sm:$0xff]
    %v2142 = vld [vmem:[#allocation6 + $0x1d88] sm:$0xff]
    %v2143 = vld [vmem:[#allocation6 + $0x1d90] sm:$0xff]
    %v2144 = vld [vmem:[#allocation6 + $0x1d98] sm:$0xff]
    %v2145 = vld [vmem:[#allocation6 + $0x1da0] sm:$0xff]
    %v2146 = vld [vmem:[#allocation6 + $0x1da8] sm:$0xff]
    %v2147 = vld [vmem:[#allocation6 + $0x1db0] sm:$0xff]
    %v2148 = vld [vmem:[#allocation6 + $0x1db8] sm:$0xff]
    %v2149 = vld [vmem:[#allocation6 + $0x1dc0] sm:$0xff]
    %v2150 = vld [vmem:[#allocation6 + $0x1dc8] sm:$0xff]
    %v2151 = vld [vmem:[#allocation6 + $0x1dd0] sm:$0xff]
    %v2152 = vld [vmem:[#allocation6 + $0x1dd8] sm:$0xff]
    %v2153 = vld [vmem:[#allocation6 + $0x1de0] sm:$0xff]
    %v2154 = vld [vmem:[#allocation6 + $0x1de8] sm:$0xff]
    %v2155 = vld [vmem:[#allocation6 + $0x1df0] sm:$0xff]
    %v2156 = vld [vmem:[#allocation6 + $0x1df8] sm:$0xff]
    %v2157 = vld [vmem:[#allocation6 + $0x1e00] sm:$0xff]
    %v2158 = vld [vmem:[#allocation6 + $0x1e08] sm:$0xff]
    %v2159 = vld [vmem:[#allocation6 + $0x1e10] sm:$0xff]
    %v2160 = vld [vmem:[#allocation6 + $0x1e18] sm:$0xff]
    %v2161 = vld [vmem:[#allocation6 + $0x1e20] sm:$0xff]
    %v2162 = vld [vmem:[#allocation6 + $0x1e28] sm:$0xff]
    %v2163 = vld [vmem:[#allocation6 + $0x1e30] sm:$0xff]
    %v2164 = vld [vmem:[#allocation6 + $0x1e38] sm:$0xff]
    %v2165 = vld [vmem:[#allocation6 + $0x1e40] sm:$0xff]
    %v2166 = vld [vmem:[#allocation6 + $0x1e48] sm:$0xff]
    %v2167 = vld [vmem:[#allocation6 + $0x1e50] sm:$0xff]
    %v2168 = vld [vmem:[#allocation6 + $0x1e58] sm:$0xff]
    %v2169 = vld [vmem:[#allocation6 + $0x1e60] sm:$0xff]
    %v2170 = vld [vmem:[#allocation6 + $0x1e68] sm:$0xff]
    %v2171 = vld [vmem:[#allocation6 + $0x1e70] sm:$0xff]
    %v2172 = vld [vmem:[#allocation6 + $0x1e78] sm:$0xff]
    %v2173 = vld [vmem:[#allocation6 + $0x1e80] sm:$0xff]
    %v2174 = vld [vmem:[#allocation6 + $0x1e88] sm:$0xff]
    %v2175 = vld [vmem:[#allocation6 + $0x1e90] sm:$0xff]
    %v2176 = vld [vmem:[#allocation6 + $0x1e98] sm:$0xff]
    %v2177 = vld [vmem:[#allocation6 + $0x1ea0] sm:$0xff]
    %v2178 = vld [vmem:[#allocation6 + $0x1ea8] sm:$0xff]
    %v2179 = vld [vmem:[#allocation6 + $0x1eb0] sm:$0xff]
    %v2180 = vld [vmem:[#allocation6 + $0x1eb8] sm:$0xff]
    %v2181 = vld [vmem:[#allocation6 + $0x1ec0] sm:$0xff]
    %v2182 = vld [vmem:[#allocation6 + $0x1ec8] sm:$0xff]
    %v2183 = vld [vmem:[#allocation6 + $0x1ed0] sm:$0xff]
    %v2184 = vld [vmem:[#allocation6 + $0x1ed8] sm:$0xff]
    %v2185 = vld [vmem:[#allocation6 + $0x1ee0] sm:$0xff]
    %v2186 = vld [vmem:[#allocation6 + $0x1ee8] sm:$0xff]
    %v2187 = vld [vmem:[#allocation6 + $0x1ef0] sm:$0xff]
    %v2188 = vld [vmem:[#allocation6 + $0x1ef8] sm:$0xff]
    %v2189 = vld [vmem:[#allocation6 + $0x1f00] sm:$0xff]
    %v2190 = vld [vmem:[#allocation6 + $0x1f08] sm:$0xff]
    %v2191 = vld [vmem:[#allocation6 + $0x1f10] sm:$0xff]
    %v2192 = vld [vmem:[#allocation6 + $0x1f18] sm:$0xff]
    %v2193 = vld [vmem:[#allocation6 + $0x1f20] sm:$0xff]
    %v2194 = vld [vmem:[#allocation6 + $0x1f28] sm:$0xff]
    %v2195 = vld [vmem:[#allocation6 + $0x1f30] sm:$0xff]
    %v2196 = vld [vmem:[#allocation6 + $0x1f38] sm:$0xff]
    %v2197 = vld [vmem:[#allocation6 + $0x1f40] sm:$0xff]
    %v2198 = vld [vmem:[#allocation6 + $0x1f48] sm:$0xff]
    %v2199 = vld [vmem:[#allocation6 + $0x1f50] sm:$0xff]
    %v2200 = vld [vmem:[#allocation6 + $0x1f58] sm:$0xff]
    %v2201 = vld [vmem:[#allocation6 + $0x1f60] sm:$0xff]
    %v2202 = vld [vmem:[#allocation6 + $0x1f68] sm:$0xff]
    %v2203 = vld [vmem:[#allocation6 + $0x1f70] sm:$0xff]
    %v2204 = vld [vmem:[#allocation6 + $0x1f78] sm:$0xff]
    %v2205 = vld [vmem:[#allocation6 + $0x1f80] sm:$0xff]
    %v2206 = vld [vmem:[#allocation6 + $0x1f88] sm:$0xff]
    %v2207 = vld [vmem:[#allocation6 + $0x1f90] sm:$0xff]
    %v2208 = vld [vmem:[#allocation6 + $0x1f98] sm:$0xff]
    %v2209 = vld [vmem:[#allocation6 + $0x1fa0] sm:$0xff]
    %v2210 = vld [vmem:[#allocation6 + $0x1fa8] sm:$0xff]
    %v2211 = vld [vmem:[#allocation6 + $0x1fb0] sm:$0xff]
    %v2212 = vld [vmem:[#allocation6 + $0x1fb8] sm:$0xff]
    %v2213 = vld [vmem:[#allocation6 + $0x1fc0] sm:$0xff]
    %v2214 = vld [vmem:[#allocation6 + $0x1fc8] sm:$0xff]
    %v2215 = vld [vmem:[#allocation6 + $0x1fd0] sm:$0xff]
    %v2216 = vld [vmem:[#allocation6 + $0x1fd8] sm:$0xff]
    %v2217 = vld [vmem:[#allocation6 + $0x1fe0] sm:$0xff]
    %v2218 = vld [vmem:[#allocation6 + $0x1fe8] sm:$0xff]
    %v2219 = vld [vmem:[#allocation6 + $0x1ff0] sm:$0xff]
    %v2220 = vld [vmem:[#allocation6 + $0x1ff8] sm:$0xff]
    %v2221 = vld [vmem:[#allocation7] sm:$0xff]
    %v2223 = vlaneseq
    %v2224 = vshrl.u32 %v2223, 7
    %v2225 = vsub.s32 0, %v2224
    %v2226 = vrot.slane %v2221, %v2225
    %v2227 = vlaneseq
    %v2228 = vshrl.u32 %v2227, 7
    %v2229 = vsub.s32 1, %v2228
    %v2230 = vrot.slane %v2221, %v2229
    %v2231 = vlaneseq
    %v2232 = vshrl.u32 %v2231, 7
    %v2233 = vsub.s32 2, %v2232
    %v2234 = vrot.slane %v2221, %v2233
    %v2235 = vlaneseq
    %v2236 = vshrl.u32 %v2235, 7
    %v2237 = vsub.s32 3, %v2236
    %v2238 = vrot.slane %v2221, %v2237
    %v2239 = vlaneseq
    %v2240 = vshrl.u32 %v2239, 7
    %v2241 = vsub.s32 4, %v2240
    %v2242 = vrot.slane %v2221, %v2241
    %v2243 = vlaneseq
    %v2244 = vshrl.u32 %v2243, 7
    %v2245 = vsub.s32 5, %v2244
    %v2246 = vrot.slane %v2221, %v2245
    %v2247 = vlaneseq
    %v2248 = vshrl.u32 %v2247, 7
    %v2249 = vsub.s32 6, %v2248
    %v2250 = vrot.slane %v2221, %v2249
    %v2251 = vlaneseq
    %v2252 = vshrl.u32 %v2251, 7
    %v2253 = vsub.s32 7, %v2252
    %v2254 = vrot.slane %v2221, %v2253
    %2263 = vmatprep.subr.mxu0 %v1198
    %2264 = vmatpush1.msra.mxu0 %v1197
    %2265 = vmatprep.subr.mxu0 %v1206
    %2266 = vmatpush1.msra.mxu0 %v1205
    %2267 = vmatprep.subr.mxu0 %v1214
    %2268 = vmatpush1.msra.mxu0 %v1213
    %2269 = vmatprep.subr.mxu0 %v1222
    %2270 = vmatpush1.msra.mxu0 %v1221
    %2271 = vmatprep.subr.mxu0 %v1230
    %2272 = vmatpush1.msra.mxu0 %v1229
    %2273 = vmatprep.subr.mxu0 %v1238
    %2274 = vmatpush1.msra.mxu0 %v1237
    %2275 = vmatprep.subr.mxu0 %v1246
    %2276 = vmatpush1.msra.mxu0 %v1245
    %2277 = vmatprep.subr.mxu0 %v1254
    %2278 = vmatpush1.msra.mxu0 %v1253
    %2279 = vmatprep.subr.mxu0 %v1262
    %2280 = vmatpush1.msra.mxu0 %v1261
    %2281 = vmatprep.subr.mxu0 %v1270
    %2282 = vmatpush1.msra.mxu0 %v1269
    %2283 = vmatprep.subr.mxu0 %v1278
    %2284 = vmatpush1.msra.mxu0 %v1277
    %2285 = vmatprep.subr.mxu0 %v1286
    %2286 = vmatpush1.msra.mxu0 %v1285
    %2287 = vmatprep.subr.mxu0 %v1294
    %2288 = vmatpush1.msra.mxu0 %v1293
    %2289 = vmatprep.subr.mxu0 %v1302
    %2290 = vmatpush1.msra.mxu0 %v1301
    %2291 = vmatprep.subr.mxu0 %v1310
    %2292 = vmatpush1.msra.mxu0 %v1309
    %2293 = vmatprep.subr.mxu0 %v1318
    %2294 = vmatpush1.msra.mxu0 %v1317
    %2295 = vmatprep.subr.mxu0 %v1326
    %2296 = vmatpush1.msra.mxu0 %v1325
    %2297 = vmatprep.subr.mxu0 %v1334
    %2298 = vmatpush1.msra.mxu0 %v1333
    %2299 = vmatprep.subr.mxu0 %v1342
    %2300 = vmatpush1.msra.mxu0 %v1341
    %2301 = vmatprep.subr.mxu0 %v1350
    %2302 = vmatpush1.msra.mxu0 %v1349
    %2303 = vmatprep.subr.mxu0 %v1358
    %2304 = vmatpush1.msra.mxu0 %v1357
    %2305 = vmatprep.subr.mxu0 %v1366
    %2306 = vmatpush1.msra.mxu0 %v1365
    %2307 = vmatprep.subr.mxu0 %v1374
    %2308 = vmatpush1.msra.mxu0 %v1373
    %2309 = vmatprep.subr.mxu0 %v1382
    %2310 = vmatpush1.msra.mxu0 %v1381
    %2311 = vmatprep.subr.mxu0 %v1390
    %2312 = vmatpush1.msra.mxu0 %v1389
    %2313 = vmatprep.subr.mxu0 %v1398
    %2314 = vmatpush1.msra.mxu0 %v1397
    %2315 = vmatprep.subr.mxu0 %v1406
    %2316 = vmatpush1.msra.mxu0 %v1405
    %2317 = vmatprep.subr.mxu0 %v1414
    %2318 = vmatpush1.msra.mxu0 %v1413
    %2319 = vmatprep.subr.mxu0 %v1422
    %2320 = vmatpush1.msra.mxu0 %v1421
    %2321 = vmatprep.subr.mxu0 %v1430
    %2322 = vmatpush1.msra.mxu0 %v1429
    %2323 = vmatprep.subr.mxu0 %v1438
    %2324 = vmatpush1.msra.mxu0 %v1437
    %2325 = vmatprep.subr.mxu0 %v1446
    %2326 = vmatpush1.msra.mxu0 %v1445
    %2327 = vmatprep.mubr.f32.mxu0 %v1182
    %2328 = vmatmul.mubr.f32.gmra.mrb[0].mxu0 %v1181
    %v2329 = vpop.f32.mrb[0].mxu0
    %v2330 = vadd.f32 %v2226, %v2329
    %v2331 = vpop.f32.mrb[0].mxu0
    %v2332 = vadd.f32 %v2230, %v2331
    %2333 = vmatprep.mubr.f32.mxu0 %v1190
    %2334 = vmatmul.mubr.f32.gmra.mrb[0].mxu0 %v1189
    %v2335 = vpop.f32.mrb[0].mxu0
    %v2336 = vadd.f32 %v2226, %v2335
    %v2337 = vpop.f32.mrb[0].mxu0
    %v2338 = vadd.f32 %v2230, %v2337
    %2339 = vdwg.mxu0
    %2340 = vmatprep.subr.mxu0 %v1454
    %2341 = vmatpush1.msra.mxu0 %v1453
    %2342 = vmatprep.subr.mxu0 %v1462
    %2343 = vmatpush1.msra.mxu0 %v1461
    %2344 = vmatprep.subr.mxu0 %v1470
    %2345 = vmatpush1.msra.mxu0 %v1469
    %2346 = vmatprep.subr.mxu0 %v1478
    %2347 = vmatpush1.msra.mxu0 %v1477
    %2348 = vmatprep.subr.mxu0 %v1486
    %2349 = vmatpush1.msra.mxu0 %v1485
    %2350 = vmatprep.subr.mxu0 %v1494
    %2351 = vmatpush1.msra.mxu0 %v1493
    %2352 = vmatprep.subr.mxu0 %v1502
    %2353 = vmatpush1.msra.mxu0 %v1501
    %2354 = vmatprep.subr.mxu0 %v1510
    %2355 = vmatpush1.msra.mxu0 %v1509
    %2356 = vmatprep.subr.mxu0 %v1518
    %2357 = vmatpush1.msra.mxu0 %v1517
    %2358 = vmatprep.subr.mxu0 %v1526
    %2359 = vmatpush1.msra.mxu0 %v1525
    %2360 = vmatprep.subr.mxu0 %v1534
    %2361 = vmatpush1.msra.mxu0 %v1533
    %2362 = vmatprep.subr.mxu0 %v1542
    %2363 = vmatpush1.msra.mxu0 %v1541
    %2364 = vmatprep.subr.mxu0 %v1550
    %2365 = vmatpush1.msra.mxu0 %v1549
    %2366 = vmatprep.subr.mxu0 %v1558
    %2367 = vmatpush1.msra.mxu0 %v1557
    %2368 = vmatprep.subr.mxu0 %v1566
    %2369 = vmatpush1.msra.mxu0 %v1565
    %2370 = vmatprep.subr.mxu0 %v1574
    %2371 = vmatpush1.msra.mxu0 %v1573
    %2372 = vmatprep.subr.mxu0 %v1582
    %2373 = vmatpush1.msra.mxu0 %v1581
    %2374 = vmatprep.subr.mxu0 %v1590
    %2375 = vmatpush1.msra.mxu0 %v1589
    %2376 = vmatprep.subr.mxu0 %v1598
    %2377 = vmatpush1.msra.mxu0 %v1597
    %2378 = vmatprep.subr.mxu0 %v1606
    %2379 = vmatpush1.msra.mxu0 %v1605
    %2380 = vmatprep.subr.mxu0 %v1614
    %2381 = vmatpush1.msra.mxu0 %v1613
    %2382 = vmatprep.subr.mxu0 %v1622
    %2383 = vmatpush1.msra.mxu0 %v1621
    %2384 = vmatprep.subr.mxu0 %v1630
    %2385 = vmatpush1.msra.mxu0 %v1629
    %2386 = vmatprep.subr.mxu0 %v1638
    %2387 = vmatpush1.msra.mxu0 %v1637
    %2388 = vmatprep.subr.mxu0 %v1646
    %2389 = vmatpush1.msra.mxu0 %v1645
    %2390 = vmatprep.subr.mxu0 %v1654
    %2391 = vmatpush1.msra.mxu0 %v1653
    %2392 = vmatprep.subr.mxu0 %v1662
    %2393 = vmatpush1.msra.mxu0 %v1661
    %2394 = vmatprep.subr.mxu0 %v1670
    %2395 = vmatpush1.msra.mxu0 %v1669
    %2396 = vmatprep.subr.mxu0 %v1678
    %2397 = vmatpush1.msra.mxu0 %v1677
    %2398 = vmatprep.subr.mxu0 %v1686
    %2399 = vmatpush1.msra.mxu0 %v1685
    %2400 = vmatprep.subr.mxu0 %v1694
    %2401 = vmatpush1.msra.mxu0 %v1693
    %2402 = vmatprep.subr.mxu0 %v1702
    %2403 = vmatpush1.msra.mxu0 %v1701
    %2404 = vmatprep.mubr.f32.mxu0 %v1184
    %2405 = vmatmul.mubr.f32.gmra.mrb[0].mxu0 %v1183
    %v2406 = vpop.f32.mrb[0].mxu0
    %v2407 = vadd.f32 %v2330, %v2406
    %v2408 = vpop.f32.mrb[0].mxu0
    %v2409 = vadd.f32 %v2332, %v2408
    %2410 = vmatprep.mubr.f32.mxu0 %v1192
    %2411 = vmatmul.mubr.f32.gmra.mrb[0].mxu0 %v1191
    %v2412 = vpop.f32.mrb[0].mxu0
    %v2413 = vadd.f32 %v2336, %v2412
    %v2414 = vpop.f32.mrb[0].mxu0
    %v2415 = vadd.f32 %v2338, %v2414
    %2416 = vdwg.mxu0
    %2417 = vmatprep.subr.mxu0 %v1710
    %2418 = vmatpush1.msra.mxu0 %v1709
    %2419 = vmatprep.subr.mxu0 %v1718
    %2420 = vmatpush1.msra.mxu0 %v1717
    %2421 = vmatprep.subr.mxu0 %v1726
    %2422 = vmatpush1.msra.mxu0 %v1725
    %2423 = vmatprep.subr.mxu0 %v1734
    %2424 = vmatpush1.msra.mxu0 %v1733
    %2425 = vmatprep.subr.mxu0 %v1742
    %2426 = vmatpush1.msra.mxu0 %v1741
    %2427 = vmatprep.subr.mxu0 %v1750
    %2428 = vmatpush1.msra.mxu0 %v1749
    %2429 = vmatprep.subr.mxu0 %v1758
    %2430 = vmatpush1.msra.mxu0 %v1757
    %2431 = vmatprep.subr.mxu0 %v1766
    %2432 = vmatpush1.msra.mxu0 %v1765
    %2433 = vmatprep.subr.mxu0 %v1774
    %2434 = vmatpush1.msra.mxu0 %v1773
    %2435 = vmatprep.subr.mxu0 %v1782
    %2436 = vmatpush1.msra.mxu0 %v1781
    %2437 = vmatprep.subr.mxu0 %v1790
    %2438 = vmatpush1.msra.mxu0 %v1789
    %2439 = vmatprep.subr.mxu0 %v1798
    %2440 = vmatpush1.msra.mxu0 %v1797
    %2441 = vmatprep.subr.mxu0 %v1806
    %2442 = vmatpush1.msra.mxu0 %v1805
    %2443 = vmatprep.subr.mxu0 %v1814
    %2444 = vmatpush1.msra.mxu0 %v1813
    %2445 = vmatprep.subr.mxu0 %v1822
    %2446 = vmatpush1.msra.mxu0 %v1821
    %2447 = vmatprep.subr.mxu0 %v1830
    %2448 = vmatpush1.msra.mxu0 %v1829
    %2449 = vmatprep.subr.mxu0 %v1838
    %2450 = vmatpush1.msra.mxu0 %v1837
    %2451 = vmatprep.subr.mxu0 %v1846
    %2452 = vmatpush1.msra.mxu0 %v1845
    %2453 = vmatprep.subr.mxu0 %v1854
    %2454 = vmatpush1.msra.mxu0 %v1853
    %2455 = vmatprep.subr.mxu0 %v1862
    %2456 = vmatpush1.msra.mxu0 %v1861
    %2457 = vmatprep.subr.mxu0 %v1870
    %2458 = vmatpush1.msra.mxu0 %v1869
    %2459 = vmatprep.subr.mxu0 %v1878
    %2460 = vmatpush1.msra.mxu0 %v1877
    %2461 = vmatprep.subr.mxu0 %v1886
    %2462 = vmatpush1.msra.mxu0 %v1885
    %2463 = vmatprep.subr.mxu0 %v1894
    %2464 = vmatpush1.msra.mxu0 %v1893
    %2465 = vmatprep.subr.mxu0 %v1902
    %2466 = vmatpush1.msra.mxu0 %v1901
    %2467 = vmatprep.subr.mxu0 %v1910
    %2468 = vmatpush1.msra.mxu0 %v1909
    %2469 = vmatprep.subr.mxu0 %v1918
    %2470 = vmatpush1.msra.mxu0 %v1917
    %2471 = vmatprep.subr.mxu0 %v1926
    %2472 = vmatpush1.msra.mxu0 %v1925
    %2473 = vmatprep.subr.mxu0 %v1934
    %2474 = vmatpush1.msra.mxu0 %v1933
    %2475 = vmatprep.subr.mxu0 %v1942
    %2476 = vmatpush1.msra.mxu0 %v1941
    %2477 = vmatprep.subr.mxu0 %v1950
    %2478 = vmatpush1.msra.mxu0 %v1949
    %2479 = vmatprep.subr.mxu0 %v1958
    %2480 = vmatpush1.msra.mxu0 %v1957
    %2481 = vmatprep.mubr.f32.mxu0 %v1186
    %2482 = vmatmul.mubr.f32.gmra.mrb[0].mxu0 %v1185
    %v2483 = vpop.f32.mrb[0].mxu0
    %v2484 = vadd.f32 %v2407, %v2483
    %v2485 = vpop.f32.mrb[0].mxu0
    %v2486 = vadd.f32 %v2409, %v2485
    %2487 = vmatprep.mubr.f32.mxu0 %v1194
    %2488 = vmatmul.mubr.f32.gmra.mrb[0].mxu0 %v1193
    %v2489 = vpop.f32.mrb[0].mxu0
    %v2490 = vadd.f32 %v2413, %v2489
    %v2491 = vpop.f32.mrb[0].mxu0
    %v2492 = vadd.f32 %v2415, %v2491
    %2493 = vdwg.mxu0
    %2494 = vmatprep.subr.mxu0 %v1966
    %2495 = vmatpush1.msra.mxu0 %v1965
    %2496 = vmatprep.subr.mxu0 %v1974
    %2497 = vmatpush1.msra.mxu0 %v1973
    %2498 = vmatprep.subr.mxu0 %v1982
    %2499 = vmatpush1.msra.mxu0 %v1981
    %2500 = vmatprep.subr.mxu0 %v1990
    %2501 = vmatpush1.msra.mxu0 %v1989
    %2502 = vmatprep.subr.mxu0 %v1998
    %2503 = vmatpush1.msra.mxu0 %v1997
    %2504 = vmatprep.subr.mxu0 %v2006
    %2505 = vmatpush1.msra.mxu0 %v2005
    %2506 = vmatprep.subr.mxu0 %v2014
    %2507 = vmatpush1.msra.mxu0 %v2013
    %2508 = vmatprep.subr.mxu0 %v2022
    %2509 = vmatpush1.msra.mxu0 %v2021
    %2510 = vmatprep.subr.mxu0 %v2030
    %2511 = vmatpush1.msra.mxu0 %v2029
    %2512 = vmatprep.subr.mxu0 %v2038
    %2513 = vmatpush1.msra.mxu0 %v2037
    %2514 = vmatprep.subr.mxu0 %v2046
    %2515 = vmatpush1.msra.mxu0 %v2045
    %2516 = vmatprep.subr.mxu0 %v2054
    %2517 = vmatpush1.msra.mxu0 %v2053
    %2518 = vmatprep.subr.mxu0 %v2062
    %2519 = vmatpush1.msra.mxu0 %v2061
    %2520 = vmatprep.subr.mxu0 %v2070
    %2521 = vmatpush1.msra.mxu0 %v2069
    %2522 = vmatprep.subr.mxu0 %v2078
    %2523 = vmatpush1.msra.mxu0 %v2077
    %2524 = vmatprep.subr.mxu0 %v2086
    %2525 = vmatpush1.msra.mxu0 %v2085
    %2526 = vmatprep.subr.mxu0 %v2094
    %2527 = vmatpush1.msra.mxu0 %v2093
    %2528 = vmatprep.subr.mxu0 %v2102
    %2529 = vmatpush1.msra.mxu0 %v2101
    %2530 = vmatprep.subr.mxu0 %v2110
    %2531 = vmatpush1.msra.mxu0 %v2109
    %2532 = vmatprep.subr.mxu0 %v2118
    %2533 = vmatpush1.msra.mxu0 %v2117
    %2534 = vmatprep.subr.mxu0 %v2126
    %2535 = vmatpush1.msra.mxu0 %v2125
    %2536 = vmatprep.subr.mxu0 %v2134
    %2537 = vmatpush1.msra.mxu0 %v2133
    %2538 = vmatprep.subr.mxu0 %v2142
    %2539 = vmatpush1.msra.mxu0 %v2141
    %2540 = vmatprep.subr.mxu0 %v2150
    %2541 = vmatpush1.msra.mxu0 %v2149
    %2542 = vmatprep.subr.mxu0 %v2158
    %2543 = vmatpush1.msra.mxu0 %v2157
    %2544 = vmatprep.subr.mxu0 %v2166
    %2545 = vmatpush1.msra.mxu0 %v2165
    %2546 = vmatprep.subr.mxu0 %v2174
    %2547 = vmatpush1.msra.mxu0 %v2173
    %2548 = vmatprep.subr.mxu0 %v2182
    %2549 = vmatpush1.msra.mxu0 %v2181
    %2550 = vmatprep.subr.mxu0 %v2190
    %2551 = vmatpush1.msra.mxu0 %v2189
    %2552 = vmatprep.subr.mxu0 %v2198
    %2553 = vmatpush1.msra.mxu0 %v2197
    %2554 = vmatprep.subr.mxu0 %v2206
    %2555 = vmatpush1.msra.mxu0 %v2205
    %2556 = vmatprep.subr.mxu0 %v2214
    %2557 = vmatpush1.msra.mxu0 %v2213
    %2558 = vmatprep.mubr.f32.mxu0 %v1188
    %2559 = vmatmul.mubr.f32.gmra.mrb[0].mxu0 %v1187
    %v2560 = vpop.f32.mrb[0].mxu0
    %v2561 = vadd.f32 %v2484, %v2560
    %v2562 = vpop.f32.mrb[0].mxu0
    %v2563 = vadd.f32 %v2486, %v2562
    %2564 = vmatprep.mubr.f32.mxu0 %v1196
    %2565 = vmatmul.mubr.f32.gmra.mrb[0].mxu0 %v1195
    %v2566 = vpop.f32.mrb[0].mxu0
    %v2567 = vadd.f32 %v2490, %v2566
    %v2568 = vpop.f32.mrb[0].mxu0
    %v2569 = vadd.f32 %v2492, %v2568
    %2570 = vdwg.mxu0
    %2571 = vmatprep.subr.mxu0 %v1200
    %2572 = vmatpush1.msra.mxu0 %v1199
    %2573 = vmatprep.subr.mxu0 %v1208
    %2574 = vmatpush1.msra.mxu0 %v1207
    %2575 = vmatprep.subr.mxu0 %v1216
    %2576 = vmatpush1.msra.mxu0 %v1215
    %2577 = vmatprep.subr.mxu0 %v1224
    %2578 = vmatpush1.msra.mxu0 %v1223
    %2579 = vmatprep.subr.mxu0 %v1232
    %2580 = vmatpush1.msra.mxu0 %v1231
    %2581 = vmatprep.subr.mxu0 %v1240
    %2582 = vmatpush1.msra.mxu0 %v1239
    %2583 = vmatprep.subr.mxu0 %v1248
    %2584 = vmatpush1.msra.mxu0 %v1247
    %2585 = vmatprep.subr.mxu0 %v1256
    %2586 = vmatpush1.msra.mxu0 %v1255
    %2587 = vmatprep.subr.mxu0 %v1264
    %2588 = vmatpush1.msra.mxu0 %v1263
    %2589 = vmatprep.subr.mxu0 %v1272
    %2590 = vmatpush1.msra.mxu0 %v1271
    %2591 = vmatprep.subr.mxu0 %v1280
    %2592 = vmatpush1.msra.mxu0 %v1279
    %2593 = vmatprep.subr.mxu0 %v1288
    %2594 = vmatpush1.msra.mxu0 %v1287
    %2595 = vmatprep.subr.mxu0 %v1296
    %2596 = vmatpush1.msra.mxu0 %v1295
    %2597 = vmatprep.subr.mxu0 %v1304
    %2598 = vmatpush1.msra.mxu0 %v1303
    %2599 = vmatprep.subr.mxu0 %v1312
    %2600 = vmatpush1.msra.mxu0 %v1311
    %2601 = vmatprep.subr.mxu0 %v1320
    %2602 = vmatpush1.msra.mxu0 %v1319
    %2603 = vmatprep.subr.mxu0 %v1328
    %2604 = vmatpush1.msra.mxu0 %v1327
    %2605 = vmatprep.subr.mxu0 %v1336
    %2606 = vmatpush1.msra.mxu0 %v1335
    %2607 = vmatprep.subr.mxu0 %v1344
    %2608 = vmatpush1.msra.mxu0 %v1343
    %2609 = vmatprep.subr.mxu0 %v1352
    %2610 = vmatpush1.msra.mxu0 %v1351
    %2611 = vmatprep.subr.mxu0 %v1360
    %2612 = vmatpush1.msra.mxu0 %v1359
    %2613 = vmatprep.subr.mxu0 %v1368
    %2614 = vmatpush1.msra.mxu0 %v1367
    %2615 = vmatprep.subr.mxu0 %v1376
    %2616 = vmatpush1.msra.mxu0 %v1375
    %2617 = vmatprep.subr.mxu0 %v1384
    %2618 = vmatpush1.msra.mxu0 %v1383
    %2619 = vmatprep.subr.mxu0 %v1392
    %2620 = vmatpush1.msra.mxu0 %v1391
    %2621 = vmatprep.subr.mxu0 %v1400
    %2622 = vmatpush1.msra.mxu0 %v1399
    %2623 = vmatprep.subr.mxu0 %v1408
    %2624 = vmatpush1.msra.mxu0 %v1407
    %2625 = vmatprep.subr.mxu0 %v1416
    %2626 = vmatpush1.msra.mxu0 %v1415
    %2627 = vmatprep.subr.mxu0 %v1424
    %2628 = vmatpush1.msra.mxu0 %v1423
    %2629 = vmatprep.subr.mxu0 %v1432
    %2630 = vmatpush1.msra.mxu0 %v1431
    %2631 = vmatprep.subr.mxu0 %v1440
    %2632 = vmatpush1.msra.mxu0 %v1439
    %2633 = vmatprep.subr.mxu0 %v1448
    %2634 = vmatpush1.msra.mxu0 %v1447
    %2635 = vmatprep.mubr.f32.mxu0 %v1182
    %2636 = vmatmul.mubr.f32.gmra.mrb[0].mxu0 %v1181
    %v2637 = vpop.f32.mrb[0].mxu0
    %v2638 = vadd.f32 %v2234, %v2637
    %v2639 = vpop.f32.mrb[0].mxu0
    %v2640 = vadd.f32 %v2238, %v2639
    %2641 = vmatprep.mubr.f32.mxu0 %v1190
    %2642 = vmatmul.mubr.f32.gmra.mrb[0].mxu0 %v1189
    %v2643 = vpop.f32.mrb[0].mxu0
    %v2644 = vadd.f32 %v2234, %v2643
    %v2645 = vpop.f32.mrb[0].mxu0
    %v2646 = vadd.f32 %v2238, %v2645
    %2647 = vdwg.mxu0
    %2648 = vmatprep.subr.mxu0 %v1456
    %2649 = vmatpush1.msra.mxu0 %v1455
    %2650 = vmatprep.subr.mxu0 %v1464
    %2651 = vmatpush1.msra.mxu0 %v1463
    %2652 = vmatprep.subr.mxu0 %v1472
    %2653 = vmatpush1.msra.mxu0 %v1471
    %2654 = vmatprep.subr.mxu0 %v1480
    %2655 = vmatpush1.msra.mxu0 %v1479
    %2656 = vmatprep.subr.mxu0 %v1488
    %2657 = vmatpush1.msra.mxu0 %v1487
    %2658 = vmatprep.subr.mxu0 %v1496
    %2659 = vmatpush1.msra.mxu0 %v1495
    %2660 = vmatprep.subr.mxu0 %v1504
    %2661 = vmatpush1.msra.mxu0 %v1503
    %2662 = vmatprep.subr.mxu0 %v1512
    %2663 = vmatpush1.msra.mxu0 %v1511
    %2664 = vmatprep.subr.mxu0 %v1520
    %2665 = vmatpush1.msra.mxu0 %v1519
    %2666 = vmatprep.subr.mxu0 %v1528
    %2667 = vmatpush1.msra.mxu0 %v1527
    %2668 = vmatprep.subr.mxu0 %v1536
    %2669 = vmatpush1.msra.mxu0 %v1535
    %2670 = vmatprep.subr.mxu0 %v1544
    %2671 = vmatpush1.msra.mxu0 %v1543
    %2672 = vmatprep.subr.mxu0 %v1552
    %2673 = vmatpush1.msra.mxu0 %v1551
    %2674 = vmatprep.subr.mxu0 %v1560
    %2675 = vmatpush1.msra.mxu0 %v1559
    %2676 = vmatprep.subr.mxu0 %v1568
    %2677 = vmatpush1.msra.mxu0 %v1567
    %2678 = vmatprep.subr.mxu0 %v1576
    %2679 = vmatpush1.msra.mxu0 %v1575
    %2680 = vmatprep.subr.mxu0 %v1584
    %2681 = vmatpush1.msra.mxu0 %v1583
    %2682 = vmatprep.subr.mxu0 %v1592
    %2683 = vmatpush1.msra.mxu0 %v1591
    %2684 = vmatprep.subr.mxu0 %v1600
    %2685 = vmatpush1.msra.mxu0 %v1599
    %2686 = vmatprep.subr.mxu0 %v1608
    %2687 = vmatpush1.msra.mxu0 %v1607
    %2688 = vmatprep.subr.mxu0 %v1616
    %2689 = vmatpush1.msra.mxu0 %v1615
    %2690 = vmatprep.subr.mxu0 %v1624
    %2691 = vmatpush1.msra.mxu0 %v1623
    %2692 = vmatprep.subr.mxu0 %v1632
    %2693 = vmatpush1.msra.mxu0 %v1631
    %2694 = vmatprep.subr.mxu0 %v1640
    %2695 = vmatpush1.msra.mxu0 %v1639
    %2696 = vmatprep.subr.mxu0 %v1648
    %2697 = vmatpush1.msra.mxu0 %v1647
    %2698 = vmatprep.subr.mxu0 %v1656
    %2699 = vmatpush1.msra.mxu0 %v1655
    %2700 = vmatprep.subr.mxu0 %v1664
    %2701 = vmatpush1.msra.mxu0 %v1663
    %2702 = vmatprep.subr.mxu0 %v1672
    %2703 = vmatpush1.msra.mxu0 %v1671
    %2704 = vmatprep.subr.mxu0 %v1680
    %2705 = vmatpush1.msra.mxu0 %v1679
    %2706 = vmatprep.subr.mxu0 %v1688
    %2707 = vmatpush1.msra.mxu0 %v1687
    %2708 = vmatprep.subr.mxu0 %v1696
    %2709 = vmatpush1.msra.mxu0 %v1695
    %2710 = vmatprep.subr.mxu0 %v1704
    %2711 = vmatpush1.msra.mxu0 %v1703
    %2712 = vmatprep.mubr.f32.mxu0 %v1184
    %2713 = vmatmul.mubr.f32.gmra.mrb[0].mxu0 %v1183
    %v2714 = vpop.f32.mrb[0].mxu0
    %v2715 = vadd.f32 %v2638, %v2714
    %v2716 = vpop.f32.mrb[0].mxu0
    %v2717 = vadd.f32 %v2640, %v2716
    %2718 = vmatprep.mubr.f32.mxu0 %v1192
    %2719 = vmatmul.mubr.f32.gmra.mrb[0].mxu0 %v1191
    %v2720 = vpop.f32.mrb[0].mxu0
    %v2721 = vadd.f32 %v2644, %v2720
    %v2722 = vpop.f32.mrb[0].mxu0
    %v2723 = vadd.f32 %v2646, %v2722
    %2724 = vdwg.mxu0
    %2725 = vmatprep.subr.mxu0 %v1712
    %2726 = vmatpush1.msra.mxu0 %v1711
    %2727 = vmatprep.subr.mxu0 %v1720
    %2728 = vmatpush1.msra.mxu0 %v1719
    %2729 = vmatprep.subr.mxu0 %v1728
    %2730 = vmatpush1.msra.mxu0 %v1727
    %2731 = vmatprep.subr.mxu0 %v1736
    %2732 = vmatpush1.msra.mxu0 %v1735
    %2733 = vmatprep.subr.mxu0 %v1744
    %2734 = vmatpush1.msra.mxu0 %v1743
    %2735 = vmatprep.subr.mxu0 %v1752
    %2736 = vmatpush1.msra.mxu0 %v1751
    %2737 = vmatprep.subr.mxu0 %v1760
    %2738 = vmatpush1.msra.mxu0 %v1759
    %2739 = vmatprep.subr.mxu0 %v1768
    %2740 = vmatpush1.msra.mxu0 %v1767
    %2741 = vmatprep.subr.mxu0 %v1776
    %2742 = vmatpush1.msra.mxu0 %v1775
    %2743 = vmatprep.subr.mxu0 %v1784
    %2744 = vmatpush1.msra.mxu0 %v1783
    %2745 = vmatprep.subr.mxu0 %v1792
    %2746 = vmatpush1.msra.mxu0 %v1791
    %2747 = vmatprep.subr.mxu0 %v1800
    %2748 = vmatpush1.msra.mxu0 %v1799
    %2749 = vmatprep.subr.mxu0 %v1808
    %2750 = vmatpush1.msra.mxu0 %v1807
    %2751 = vmatprep.subr.mxu0 %v1816
    %2752 = vmatpush1.msra.mxu0 %v1815
    %2753 = vmatprep.subr.mxu0 %v1824
    %2754 = vmatpush1.msra.mxu0 %v1823
    %2755 = vmatprep.subr.mxu0 %v1832
    %2756 = vmatpush1.msra.mxu0 %v1831
    %2757 = vmatprep.subr.mxu0 %v1840
    %2758 = vmatpush1.msra.mxu0 %v1839
    %2759 = vmatprep.subr.mxu0 %v1848
    %2760 = vmatpush1.msra.mxu0 %v1847
    %2761 = vmatprep.subr.mxu0 %v1856
    %2762 = vmatpush1.msra.mxu0 %v1855
    %2763 = vmatprep.subr.mxu0 %v1864
    %2764 = vmatpush1.msra.mxu0 %v1863
    %2765 = vmatprep.subr.mxu0 %v1872
    %2766 = vmatpush1.msra.mxu0 %v1871
    %2767 = vmatprep.subr.mxu0 %v1880
    %2768 = vmatpush1.msra.mxu0 %v1879
    %2769 = vmatprep.subr.mxu0 %v1888
    %2770 = vmatpush1.msra.mxu0 %v1887
    %2771 = vmatprep.subr.mxu0 %v1896
    %2772 = vmatpush1.msra.mxu0 %v1895
    %2773 = vmatprep.subr.mxu0 %v1904
    %2774 = vmatpush1.msra.mxu0 %v1903
    %2775 = vmatprep.subr.mxu0 %v1912
    %2776 = vmatpush1.msra.mxu0 %v1911
    %2777 = vmatprep.subr.mxu0 %v1920
    %2778 = vmatpush1.msra.mxu0 %v1919
    %2779 = vmatprep.subr.mxu0 %v1928
    %2780 = vmatpush1.msra.mxu0 %v1927
    %2781 = vmatprep.subr.mxu0 %v1936
    %2782 = vmatpush1.msra.mxu0 %v1935
    %2783 = vmatprep.subr.mxu0 %v1944
    %2784 = vmatpush1.msra.mxu0 %v1943
    %2785 = vmatprep.subr.mxu0 %v1952
    %2786 = vmatpush1.msra.mxu0 %v1951
    %2787 = vmatprep.subr.mxu0 %v1960
    %2788 = vmatpush1.msra.mxu0 %v1959
    %2789 = vmatprep.mubr.f32.mxu0 %v1186
    %2790 = vmatmul.mubr.f32.gmra.mrb[0].mxu0 %v1185
    %v2791 = vpop.f32.mrb[0].mxu0
    %v2792 = vadd.f32 %v2715, %v2791
    %v2793 = vpop.f32.mrb[0].mxu0
    %v2794 = vadd.f32 %v2717, %v2793
    %2795 = vmatprep.mubr.f32.mxu0 %v1194
    %2796 = vmatmul.mubr.f32.gmra.mrb[0].mxu0 %v1193
    %v2797 = vpop.f32.mrb[0].mxu0
    %v2798 = vadd.f32 %v2721, %v2797
    %v2799 = vpop.f32.mrb[0].mxu0
    %v2800 = vadd.f32 %v2723, %v2799
    %2801 = vdwg.mxu0
    %2802 = vmatprep.subr.mxu0 %v1968
    %2803 = vmatpush1.msra.mxu0 %v1967
    %2804 = vmatprep.subr.mxu0 %v1976
    %2805 = vmatpush1.msra.mxu0 %v1975
    %2806 = vmatprep.subr.mxu0 %v1984
    %2807 = vmatpush1.msra.mxu0 %v1983
    %2808 = vmatprep.subr.mxu0 %v1992
    %2809 = vmatpush1.msra.mxu0 %v1991
    %2810 = vmatprep.subr.mxu0 %v2000
    %2811 = vmatpush1.msra.mxu0 %v1999
    %2812 = vmatprep.subr.mxu0 %v2008
    %2813 = vmatpush1.msra.mxu0 %v2007
    %2814 = vmatprep.subr.mxu0 %v2016
    %2815 = vmatpush1.msra.mxu0 %v2015
    %2816 = vmatprep.subr.mxu0 %v2024
    %2817 = vmatpush1.msra.mxu0 %v2023
    %2818 = vmatprep.subr.mxu0 %v2032
    %2819 = vmatpush1.msra.mxu0 %v2031
    %2820 = vmatprep.subr.mxu0 %v2040
    %2821 = vmatpush1.msra.mxu0 %v2039
    %2822 = vmatprep.subr.mxu0 %v2048
    %2823 = vmatpush1.msra.mxu0 %v2047
    %2824 = vmatprep.subr.mxu0 %v2056
    %2825 = vmatpush1.msra.mxu0 %v2055
    %2826 = vmatprep.subr.mxu0 %v2064
    %2827 = vmatpush1.msra.mxu0 %v2063
    %2828 = vmatprep.subr.mxu0 %v2072
    %2829 = vmatpush1.msra.mxu0 %v2071
    %2830 = vmatprep.subr.mxu0 %v2080
    %2831 = vmatpush1.msra.mxu0 %v2079
    %2832 = vmatprep.subr.mxu0 %v2088
    %2833 = vmatpush1.msra.mxu0 %v2087
    %2834 = vmatprep.subr.mxu0 %v2096
    %2835 = vmatpush1.msra.mxu0 %v2095
    %2836 = vmatprep.subr.mxu0 %v2104
    %2837 = vmatpush1.msra.mxu0 %v2103
    %2838 = vmatprep.subr.mxu0 %v2112
    %2839 = vmatpush1.msra.mxu0 %v2111
    %2840 = vmatprep.subr.mxu0 %v2120
    %2841 = vmatpush1.msra.mxu0 %v2119
    %2842 = vmatprep.subr.mxu0 %v2128
    %2843 = vmatpush1.msra.mxu0 %v2127
    %2844 = vmatprep.subr.mxu0 %v2136
    %2845 = vmatpush1.msra.mxu0 %v2135
    %2846 = vmatprep.subr.mxu0 %v2144
    %2847 = vmatpush1.msra.mxu0 %v2143
    %2848 = vmatprep.subr.mxu0 %v2152
    %2849 = vmatpush1.msra.mxu0 %v2151
    %2850 = vmatprep.subr.mxu0 %v2160
    %2851 = vmatpush1.msra.mxu0 %v2159
    %2852 = vmatprep.subr.mxu0 %v2168
    %2853 = vmatpush1.msra.mxu0 %v2167
    %2854 = vmatprep.subr.mxu0 %v2176
    %2855 = vmatpush1.msra.mxu0 %v2175
    %2856 = vmatprep.subr.mxu0 %v2184
    %2857 = vmatpush1.msra.mxu0 %v2183
    %2858 = vmatprep.subr.mxu0 %v2192
    %2859 = vmatpush1.msra.mxu0 %v2191
    %2860 = vmatprep.subr.mxu0 %v2200
    %2861 = vmatpush1.msra.mxu0 %v2199
    %2862 = vmatprep.subr.mxu0 %v2208
    %2863 = vmatpush1.msra.mxu0 %v2207
    %2864 = vmatprep.subr.mxu0 %v2216
    %2865 = vmatpush1.msra.mxu0 %v2215
    %2866 = vmatprep.mubr.f32.mxu0 %v1188
    %2867 = vmatmul.mubr.f32.gmra.mrb[0].mxu0 %v1187
    %v2868 = vpop.f32.mrb[0].mxu0
    %v2869 = vadd.f32 %v2792, %v2868
    %v2870 = vpop.f32.mrb[0].mxu0
    %v2871 = vadd.f32 %v2794, %v2870
    %2872 = vmatprep.mubr.f32.mxu0 %v1196
    %2873 = vmatmul.mubr.f32.gmra.mrb[0].mxu0 %v1195
    %v2874 = vpop.f32.mrb[0].mxu0
    %v2875 = vadd.f32 %v2798, %v2874
    %v2876 = vpop.f32.mrb[0].mxu0
    %v2877 = vadd.f32 %v2800, %v2876
    %2878 = vdwg.mxu0
    %2879 = vmatprep.subr.mxu0 %v1202
    %2880 = vmatpush1.msra.mxu0 %v1201
    %2881 = vmatprep.subr.mxu0 %v1210
    %2882 = vmatpush1.msra.mxu0 %v1209
    %2883 = vmatprep.subr.mxu0 %v1218
    %2884 = vmatpush1.msra.mxu0 %v1217
    %2885 = vmatprep.subr.mxu0 %v1226
    %2886 = vmatpush1.msra.mxu0 %v1225
    %2887 = vmatprep.subr.mxu0 %v1234
    %2888 = vmatpush1.msra.mxu0 %v1233
    %2889 = vmatprep.subr.mxu0 %v1242
    %2890 = vmatpush1.msra.mxu0 %v1241
    %2891 = vmatprep.subr.mxu0 %v1250
    %2892 = vmatpush1.msra.mxu0 %v1249
    %2893 = vmatprep.subr.mxu0 %v1258
    %2894 = vmatpush1.msra.mxu0 %v1257
    %2895 = vmatprep.subr.mxu0 %v1266
    %2896 = vmatpush1.msra.mxu0 %v1265
    %2897 = vmatprep.subr.mxu0 %v1274
    %2898 = vmatpush1.msra.mxu0 %v1273
    %2899 = vmatprep.subr.mxu0 %v1282
    %2900 = vmatpush1.msra.mxu0 %v1281
    %2901 = vmatprep.subr.mxu0 %v1290
    %2902 = vmatpush1.msra.mxu0 %v1289
    %2903 = vmatprep.subr.mxu0 %v1298
    %2904 = vmatpush1.msra.mxu0 %v1297
    %2905 = vmatprep.subr.mxu0 %v1306
    %2906 = vmatpush1.msra.mxu0 %v1305
    %2907 = vmatprep.subr.mxu0 %v1314
    %2908 = vmatpush1.msra.mxu0 %v1313
    %2909 = vmatprep.subr.mxu0 %v1322
    %2910 = vmatpush1.msra.mxu0 %v1321
    %2911 = vmatprep.subr.mxu0 %v1330
    %2912 = vmatpush1.msra.mxu0 %v1329
    %2913 = vmatprep.subr.mxu0 %v1338
    %2914 = vmatpush1.msra.mxu0 %v1337
    %2915 = vmatprep.subr.mxu0 %v1346
    %2916 = vmatpush1.msra.mxu0 %v1345
    %2917 = vmatprep.subr.mxu0 %v1354
    %2918 = vmatpush1.msra.mxu0 %v1353
    %2919 = vmatprep.subr.mxu0 %v1362
    %2920 = vmatpush1.msra.mxu0 %v1361
    %2921 = vmatprep.subr.mxu0 %v1370
    %2922 = vmatpush1.msra.mxu0 %v1369
    %2923 = vmatprep.subr.mxu0 %v1378
    %2924 = vmatpush1.msra.mxu0 %v1377
    %2925 = vmatprep.subr.mxu0 %v1386
    %2926 = vmatpush1.msra.mxu0 %v1385
    %2927 = vmatprep.subr.mxu0 %v1394
    %2928 = vmatpush1.msra.mxu0 %v1393
    %2929 = vmatprep.subr.mxu0 %v1402
    %2930 = vmatpush1.msra.mxu0 %v1401
    %2931 = vmatprep.subr.mxu0 %v1410
    %2932 = vmatpush1.msra.mxu0 %v1409
    %2933 = vmatprep.subr.mxu0 %v1418
    %2934 = vmatpush1.msra.mxu0 %v1417
    %2935 = vmatprep.subr.mxu0 %v1426
    %2936 = vmatpush1.msra.mxu0 %v1425
    %2937 = vmatprep.subr.mxu0 %v1434
    %2938 = vmatpush1.msra.mxu0 %v1433
    %2939 = vmatprep.subr.mxu0 %v1442
    %2940 = vmatpush1.msra.mxu0 %v1441
    %2941 = vmatprep.subr.mxu0 %v1450
    %2942 = vmatpush1.msra.mxu0 %v1449
    %2943 = vmatprep.mubr.f32.mxu0 %v1182
    %2944 = vmatmul.mubr.f32.gmra.mrb[0].mxu0 %v1181
    %v2945 = vpop.f32.mrb[0].mxu0
    %v2946 = vadd.f32 %v2242, %v2945
    %v2947 = vpop.f32.mrb[0].mxu0
    %v2948 = vadd.f32 %v2246, %v2947
    %2949 = vmatprep.mubr.f32.mxu0 %v1190
    %2950 = vmatmul.mubr.f32.gmra.mrb[0].mxu0 %v1189
    %v2951 = vpop.f32.mrb[0].mxu0
    %v2952 = vadd.f32 %v2242, %v2951
    %v2953 = vpop.f32.mrb[0].mxu0
    %v2954 = vadd.f32 %v2246, %v2953
    %2955 = vdwg.mxu0
    %2956 = vmatprep.subr.mxu0 %v1458
    %2957 = vmatpush1.msra.mxu0 %v1457
    %2958 = vmatprep.subr.mxu0 %v1466
    %2959 = vmatpush1.msra.mxu0 %v1465
    %2960 = vmatprep.subr.mxu0 %v1474
    %2961 = vmatpush1.msra.mxu0 %v1473
    %2962 = vmatprep.subr.mxu0 %v1482
    %2963 = vmatpush1.msra.mxu0 %v1481
    %2964 = vmatprep.subr.mxu0 %v1490
    %2965 = vmatpush1.msra.mxu0 %v1489
    %2966 = vmatprep.subr.mxu0 %v1498
    %2967 = vmatpush1.msra.mxu0 %v1497
    %2968 = vmatprep.subr.mxu0 %v1506
    %2969 = vmatpush1.msra.mxu0 %v1505
    %2970 = vmatprep.subr.mxu0 %v1514
    %2971 = vmatpush1.msra.mxu0 %v1513
    %2972 = vmatprep.subr.mxu0 %v1522
    %2973 = vmatpush1.msra.mxu0 %v1521
    %2974 = vmatprep.subr.mxu0 %v1530
    %2975 = vmatpush1.msra.mxu0 %v1529
    %2976 = vmatprep.subr.mxu0 %v1538
    %2977 = vmatpush1.msra.mxu0 %v1537
    %2978 = vmatprep.subr.mxu0 %v1546
    %2979 = vmatpush1.msra.mxu0 %v1545
    %2980 = vmatprep.subr.mxu0 %v1554
    %2981 = vmatpush1.msra.mxu0 %v1553
    %2982 = vmatprep.subr.mxu0 %v1562
    %2983 = vmatpush1.msra.mxu0 %v1561
    %2984 = vmatprep.subr.mxu0 %v1570
    %2985 = vmatpush1.msra.mxu0 %v1569
    %2986 = vmatprep.subr.mxu0 %v1578
    %2987 = vmatpush1.msra.mxu0 %v1577
    %2988 = vmatprep.subr.mxu0 %v1586
    %2989 = vmatpush1.msra.mxu0 %v1585
    %2990 = vmatprep.subr.mxu0 %v1594
    %2991 = vmatpush1.msra.mxu0 %v1593
    %2992 = vmatprep.subr.mxu0 %v1602
    %2993 = vmatpush1.msra.mxu0 %v1601
    %2994 = vmatprep.subr.mxu0 %v1610
    %2995 = vmatpush1.msra.mxu0 %v1609
    %2996 = vmatprep.subr.mxu0 %v1618
    %2997 = vmatpush1.msra.mxu0 %v1617
    %2998 = vmatprep.subr.mxu0 %v1626
    %2999 = vmatpush1.msra.mxu0 %v1625
    %3000 = vmatprep.subr.mxu0 %v1634
    %3001 = vmatpush1.msra.mxu0 %v1633
    %3002 = vmatprep.subr.mxu0 %v1642
    %3003 = vmatpush1.msra.mxu0 %v1641
    %3004 = vmatprep.subr.mxu0 %v1650
    %3005 = vmatpush1.msra.mxu0 %v1649
    %3006 = vmatprep.subr.mxu0 %v1658
    %3007 = vmatpush1.msra.mxu0 %v1657
    %3008 = vmatprep.subr.mxu0 %v1666
    %3009 = vmatpush1.msra.mxu0 %v1665
    %3010 = vmatprep.subr.mxu0 %v1674
    %3011 = vmatpush1.msra.mxu0 %v1673
    %3012 = vmatprep.subr.mxu0 %v1682
    %3013 = vmatpush1.msra.mxu0 %v1681
    %3014 = vmatprep.subr.mxu0 %v1690
    %3015 = vmatpush1.msra.mxu0 %v1689
    %3016 = vmatprep.subr.mxu0 %v1698
    %3017 = vmatpush1.msra.mxu0 %v1697
    %3018 = vmatprep.subr.mxu0 %v1706
    %3019 = vmatpush1.msra.mxu0 %v1705
    %3020 = vmatprep.mubr.f32.mxu0 %v1184
    %3021 = vmatmul.mubr.f32.gmra.mrb[0].mxu0 %v1183
    %v3022 = vpop.f32.mrb[0].mxu0
    %v3023 = vadd.f32 %v2946, %v3022
    %v3024 = vpop.f32.mrb[0].mxu0
    %v3025 = vadd.f32 %v2948, %v3024
    %3026 = vmatprep.mubr.f32.mxu0 %v1192
    %3027 = vmatmul.mubr.f32.gmra.mrb[0].mxu0 %v1191
    %v3028 = vpop.f32.mrb[0].mxu0
    %v3029 = vadd.f32 %v2952, %v3028
    %v3030 = vpop.f32.mrb[0].mxu0
    %v3031 = vadd.f32 %v2954, %v3030
    %3032 = vdwg.mxu0
    %3033 = vmatprep.subr.mxu0 %v1714
    %3034 = vmatpush1.msra.mxu0 %v1713
    %3035 = vmatprep.subr.mxu0 %v1722
    %3036 = vmatpush1.msra.mxu0 %v1721
    %3037 = vmatprep.subr.mxu0 %v1730
    %3038 = vmatpush1.msra.mxu0 %v1729
    %3039 = vmatprep.subr.mxu0 %v1738
    %3040 = vmatpush1.msra.mxu0 %v1737
    %3041 = vmatprep.subr.mxu0 %v1746
    %3042 = vmatpush1.msra.mxu0 %v1745
    %3043 = vmatprep.subr.mxu0 %v1754
    %3044 = vmatpush1.msra.mxu0 %v1753
    %3045 = vmatprep.subr.mxu0 %v1762
    %3046 = vmatpush1.msra.mxu0 %v1761
    %3047 = vmatprep.subr.mxu0 %v1770
    %3048 = vmatpush1.msra.mxu0 %v1769
    %3049 = vmatprep.subr.mxu0 %v1778
    %3050 = vmatpush1.msra.mxu0 %v1777
    %3051 = vmatprep.subr.mxu0 %v1786
    %3052 = vmatpush1.msra.mxu0 %v1785
    %3053 = vmatprep.subr.mxu0 %v1794
    %3054 = vmatpush1.msra.mxu0 %v1793
    %3055 = vmatprep.subr.mxu0 %v1802
    %3056 = vmatpush1.msra.mxu0 %v1801
    %3057 = vmatprep.subr.mxu0 %v1810
    %3058 = vmatpush1.msra.mxu0 %v1809
    %3059 = vmatprep.subr.mxu0 %v1818
    %3060 = vmatpush1.msra.mxu0 %v1817
    %3061 = vmatprep.subr.mxu0 %v1826
    %3062 = vmatpush1.msra.mxu0 %v1825
    %3063 = vmatprep.subr.mxu0 %v1834
    %3064 = vmatpush1.msra.mxu0 %v1833
    %3065 = vmatprep.subr.mxu0 %v1842
    %3066 = vmatpush1.msra.mxu0 %v1841
    %3067 = vmatprep.subr.mxu0 %v1850
    %3068 = vmatpush1.msra.mxu0 %v1849
    %3069 = vmatprep.subr.mxu0 %v1858
    %3070 = vmatpush1.msra.mxu0 %v1857
    %3071 = vmatprep.subr.mxu0 %v1866
    %3072 = vmatpush1.msra.mxu0 %v1865
    %3073 = vmatprep.subr.mxu0 %v1874
    %3074 = vmatpush1.msra.mxu0 %v1873
    %3075 = vmatprep.subr.mxu0 %v1882
    %3076 = vmatpush1.msra.mxu0 %v1881
    %3077 = vmatprep.subr.mxu0 %v1890
    %3078 = vmatpush1.msra.mxu0 %v1889
    %3079 = vmatprep.subr.mxu0 %v1898
    %3080 = vmatpush1.msra.mxu0 %v1897
    %3081 = vmatprep.subr.mxu0 %v1906
    %3082 = vmatpush1.msra.mxu0 %v1905
    %3083 = vmatprep.subr.mxu0 %v1914
    %3084 = vmatpush1.msra.mxu0 %v1913
    %3085 = vmatprep.subr.mxu0 %v1922
    %3086 = vmatpush1.msra.mxu0 %v1921
    %3087 = vmatprep.subr.mxu0 %v1930
    %3088 = vmatpush1.msra.mxu0 %v1929
    %3089 = vmatprep.subr.mxu0 %v1938
    %3090 = vmatpush1.msra.mxu0 %v1937
    %3091 = vmatprep.subr.mxu0 %v1946
    %3092 = vmatpush1.msra.mxu0 %v1945
    %3093 = vmatprep.subr.mxu0 %v1954
    %3094 = vmatpush1.msra.mxu0 %v1953
    %3095 = vmatprep.subr.mxu0 %v1962
    %3096 = vmatpush1.msra.mxu0 %v1961
    %3097 = vmatprep.mubr.f32.mxu0 %v1186
    %3098 = vmatmul.mubr.f32.gmra.mrb[0].mxu0 %v1185
    %v3099 = vpop.f32.mrb[0].mxu0
    %v3100 = vadd.f32 %v3023, %v3099
    %v3101 = vpop.f32.mrb[0].mxu0
    %v3102 = vadd.f32 %v3025, %v3101
    %3103 = vmatprep.mubr.f32.mxu0 %v1194
    %3104 = vmatmul.mubr.f32.gmra.mrb[0].mxu0 %v1193
    %v3105 = vpop.f32.mrb[0].mxu0
    %v3106 = vadd.f32 %v3029, %v3105
    %v3107 = vpop.f32.mrb[0].mxu0
    %v3108 = vadd.f32 %v3031, %v3107
    %3109 = vdwg.mxu0
    %3110 = vmatprep.subr.mxu0 %v1970
    %3111 = vmatpush1.msra.mxu0 %v1969
    %3112 = vmatprep.subr.mxu0 %v1978
    %3113 = vmatpush1.msra.mxu0 %v1977
    %3114 = vmatprep.subr.mxu0 %v1986
    %3115 = vmatpush1.msra.mxu0 %v1985
    %3116 = vmatprep.subr.mxu0 %v1994
    %3117 = vmatpush1.msra.mxu0 %v1993
    %3118 = vmatprep.subr.mxu0 %v2002
    %3119 = vmatpush1.msra.mxu0 %v2001
    %3120 = vmatprep.subr.mxu0 %v2010
    %3121 = vmatpush1.msra.mxu0 %v2009
    %3122 = vmatprep.subr.mxu0 %v2018
    %3123 = vmatpush1.msra.mxu0 %v2017
    %3124 = vmatprep.subr.mxu0 %v2026
    %3125 = vmatpush1.msra.mxu0 %v2025
    %3126 = vmatprep.subr.mxu0 %v2034
    %3127 = vmatpush1.msra.mxu0 %v2033
    %3128 = vmatprep.subr.mxu0 %v2042
    %3129 = vmatpush1.msra.mxu0 %v2041
    %3130 = vmatprep.subr.mxu0 %v2050
    %3131 = vmatpush1.msra.mxu0 %v2049
    %3132 = vmatprep.subr.mxu0 %v2058
    %3133 = vmatpush1.msra.mxu0 %v2057
    %3134 = vmatprep.subr.mxu0 %v2066
    %3135 = vmatpush1.msra.mxu0 %v2065
    %3136 = vmatprep.subr.mxu0 %v2074
    %3137 = vmatpush1.msra.mxu0 %v2073
    %3138 = vmatprep.subr.mxu0 %v2082
    %3139 = vmatpush1.msra.mxu0 %v2081
    %3140 = vmatprep.subr.mxu0 %v2090
    %3141 = vmatpush1.msra.mxu0 %v2089
    %3142 = vmatprep.subr.mxu0 %v2098
    %3143 = vmatpush1.msra.mxu0 %v2097
    %3144 = vmatprep.subr.mxu0 %v2106
    %3145 = vmatpush1.msra.mxu0 %v2105
    %3146 = vmatprep.subr.mxu0 %v2114
    %3147 = vmatpush1.msra.mxu0 %v2113
    %3148 = vmatprep.subr.mxu0 %v2122
    %3149 = vmatpush1.msra.mxu0 %v2121
    %3150 = vmatprep.subr.mxu0 %v2130
    %3151 = vmatpush1.msra.mxu0 %v2129
    %3152 = vmatprep.subr.mxu0 %v2138
    %3153 = vmatpush1.msra.mxu0 %v2137
    %3154 = vmatprep.subr.mxu0 %v2146
    %3155 = vmatpush1.msra.mxu0 %v2145
    %3156 = vmatprep.subr.mxu0 %v2154
    %3157 = vmatpush1.msra.mxu0 %v2153
    %3158 = vmatprep.subr.mxu0 %v2162
    %3159 = vmatpush1.msra.mxu0 %v2161
    %3160 = vmatprep.subr.mxu0 %v2170
    %3161 = vmatpush1.msra.mxu0 %v2169
    %3162 = vmatprep.subr.mxu0 %v2178
    %3163 = vmatpush1.msra.mxu0 %v2177
    %3164 = vmatprep.subr.mxu0 %v2186
    %3165 = vmatpush1.msra.mxu0 %v2185
    %3166 = vmatprep.subr.mxu0 %v2194
    %3167 = vmatpush1.msra.mxu0 %v2193
    %3168 = vmatprep.subr.mxu0 %v2202
    %3169 = vmatpush1.msra.mxu0 %v2201
    %3170 = vmatprep.subr.mxu0 %v2210
    %3171 = vmatpush1.msra.mxu0 %v2209
    %3172 = vmatprep.subr.mxu0 %v2218
    %3173 = vmatpush1.msra.mxu0 %v2217
    %3174 = vmatprep.mubr.f32.mxu0 %v1188
    %3175 = vmatmul.mubr.f32.gmra.mrb[0].mxu0 %v1187
    %v3176 = vpop.f32.mrb[0].mxu0
    %v3177 = vadd.f32 %v3100, %v3176
    %v3178 = vpop.f32.mrb[0].mxu0
    %v3179 = vadd.f32 %v3102, %v3178
    %3180 = vmatprep.mubr.f32.mxu0 %v1196
    %3181 = vmatmul.mubr.f32.gmra.mrb[0].mxu0 %v1195
    %v3182 = vpop.f32.mrb[0].mxu0
    %v3183 = vadd.f32 %v3106, %v3182
    %v3184 = vpop.f32.mrb[0].mxu0
    %v3185 = vadd.f32 %v3108, %v3184
    %3186 = vdwg.mxu0
    %3187 = vmatprep.subr.mxu0 %v1204
    %3188 = vmatpush1.msra.mxu0 %v1203
    %3189 = vmatprep.subr.mxu0 %v1212
    %3190 = vmatpush1.msra.mxu0 %v1211
    %3191 = vmatprep.subr.mxu0 %v1220
    %3192 = vmatpush1.msra.mxu0 %v1219
    %3193 = vmatprep.subr.mxu0 %v1228
    %3194 = vmatpush1.msra.mxu0 %v1227
    %3195 = vmatprep.subr.mxu0 %v1236
    %3196 = vmatpush1.msra.mxu0 %v1235
    %3197 = vmatprep.subr.mxu0 %v1244
    %3198 = vmatpush1.msra.mxu0 %v1243
    %3199 = vmatprep.subr.mxu0 %v1252
    %3200 = vmatpush1.msra.mxu0 %v1251
    %3201 = vmatprep.subr.mxu0 %v1260
    %3202 = vmatpush1.msra.mxu0 %v1259
    %3203 = vmatprep.subr.mxu0 %v1268
    %3204 = vmatpush1.msra.mxu0 %v1267
    %3205 = vmatprep.subr.mxu0 %v1276
    %3206 = vmatpush1.msra.mxu0 %v1275
    %3207 = vmatprep.subr.mxu0 %v1284
    %3208 = vmatpush1.msra.mxu0 %v1283
    %3209 = vmatprep.subr.mxu0 %v1292
    %3210 = vmatpush1.msra.mxu0 %v1291
    %3211 = vmatprep.subr.mxu0 %v1300
    %3212 = vmatpush1.msra.mxu0 %v1299
    %3213 = vmatprep.subr.mxu0 %v1308
    %3214 = vmatpush1.msra.mxu0 %v1307
    %3215 = vmatprep.subr.mxu0 %v1316
    %3216 = vmatpush1.msra.mxu0 %v1315
    %3217 = vmatprep.subr.mxu0 %v1324
    %3218 = vmatpush1.msra.mxu0 %v1323
    %3219 = vmatprep.subr.mxu0 %v1332
    %3220 = vmatpush1.msra.mxu0 %v1331
    %3221 = vmatprep.subr.mxu0 %v1340
    %3222 = vmatpush1.msra.mxu0 %v1339
    %3223 = vmatprep.subr.mxu0 %v1348
    %3224 = vmatpush1.msra.mxu0 %v1347
    %3225 = vmatprep.subr.mxu0 %v1356
    %3226 = vmatpush1.msra.mxu0 %v1355
    %3227 = vmatprep.subr.mxu0 %v1364
    %3228 = vmatpush1.msra.mxu0 %v1363
    %3229 = vmatprep.subr.mxu0 %v1372
    %3230 = vmatpush1.msra.mxu0 %v1371
    %3231 = vmatprep.subr.mxu0 %v1380
    %3232 = vmatpush1.msra.mxu0 %v1379
    %3233 = vmatprep.subr.mxu0 %v1388
    %3234 = vmatpush1.msra.mxu0 %v1387
    %3235 = vmatprep.subr.mxu0 %v1396
    %3236 = vmatpush1.msra.mxu0 %v1395
    %3237 = vmatprep.subr.mxu0 %v1404
    %3238 = vmatpush1.msra.mxu0 %v1403
    %3239 = vmatprep.subr.mxu0 %v1412
    %3240 = vmatpush1.msra.mxu0 %v1411
    %3241 = vmatprep.subr.mxu0 %v1420
    %3242 = vmatpush1.msra.mxu0 %v1419
    %3243 = vmatprep.subr.mxu0 %v1428
    %3244 = vmatpush1.msra.mxu0 %v1427
    %3245 = vmatprep.subr.mxu0 %v1436
    %3246 = vmatpush1.msra.mxu0 %v1435
    %3247 = vmatprep.subr.mxu0 %v1444
    %3248 = vmatpush1.msra.mxu0 %v1443
    %3249 = vmatprep.subr.mxu0 %v1452
    %3250 = vmatpush1.msra.mxu0 %v1451
    %3251 = vmatprep.mubr.f32.mxu0 %v1182
    %3252 = vmatmul.mubr.f32.gmra.mrb[0].mxu0 %v1181
    %v3253 = vpop.f32.mrb[0].mxu0
    %v3254 = vadd.f32 %v2250, %v3253
    %v3255 = vpop.f32.mrb[0].mxu0
    %v3256 = vadd.f32 %v2254, %v3255
    %3257 = vmatprep.mubr.f32.mxu0 %v1190
    %3258 = vmatmul.mubr.f32.gmra.mrb[0].mxu0 %v1189
    %v3259 = vpop.f32.mrb[0].mxu0
    %v3260 = vadd.f32 %v2250, %v3259
    %v3261 = vpop.f32.mrb[0].mxu0
    %v3262 = vadd.f32 %v2254, %v3261
    %3263 = vdwg.mxu0
    %3264 = vmatprep.subr.mxu0 %v1460
    %3265 = vmatpush1.msra.mxu0 %v1459
    %3266 = vmatprep.subr.mxu0 %v1468
    %3267 = vmatpush1.msra.mxu0 %v1467
    %3268 = vmatprep.subr.mxu0 %v1476
    %3269 = vmatpush1.msra.mxu0 %v1475
    %3270 = vmatprep.subr.mxu0 %v1484
    %3271 = vmatpush1.msra.mxu0 %v1483
    %3272 = vmatprep.subr.mxu0 %v1492
    %3273 = vmatpush1.msra.mxu0 %v1491
    %3274 = vmatprep.subr.mxu0 %v1500
    %3275 = vmatpush1.msra.mxu0 %v1499
    %3276 = vmatprep.subr.mxu0 %v1508
    %3277 = vmatpush1.msra.mxu0 %v1507
    %3278 = vmatprep.subr.mxu0 %v1516
    %3279 = vmatpush1.msra.mxu0 %v1515
    %3280 = vmatprep.subr.mxu0 %v1524
    %3281 = vmatpush1.msra.mxu0 %v1523
    %3282 = vmatprep.subr.mxu0 %v1532
    %3283 = vmatpush1.msra.mxu0 %v1531
    %3284 = vmatprep.subr.mxu0 %v1540
    %3285 = vmatpush1.msra.mxu0 %v1539
    %3286 = vmatprep.subr.mxu0 %v1548
    %3287 = vmatpush1.msra.mxu0 %v1547
    %3288 = vmatprep.subr.mxu0 %v1556
    %3289 = vmatpush1.msra.mxu0 %v1555
    %3290 = vmatprep.subr.mxu0 %v1564
    %3291 = vmatpush1.msra.mxu0 %v1563
    %3292 = vmatprep.subr.mxu0 %v1572
    %3293 = vmatpush1.msra.mxu0 %v1571
    %3294 = vmatprep.subr.mxu0 %v1580
    %3295 = vmatpush1.msra.mxu0 %v1579
    %3296 = vmatprep.subr.mxu0 %v1588
    %3297 = vmatpush1.msra.mxu0 %v1587
    %3298 = vmatprep.subr.mxu0 %v1596
    %3299 = vmatpush1.msra.mxu0 %v1595
    %3300 = vmatprep.subr.mxu0 %v1604
    %3301 = vmatpush1.msra.mxu0 %v1603
    %3302 = vmatprep.subr.mxu0 %v1612
    %3303 = vmatpush1.msra.mxu0 %v1611
    %3304 = vmatprep.subr.mxu0 %v1620
    %3305 = vmatpush1.msra.mxu0 %v1619
    %3306 = vmatprep.subr.mxu0 %v1628
    %3307 = vmatpush1.msra.mxu0 %v1627
    %3308 = vmatprep.subr.mxu0 %v1636
    %3309 = vmatpush1.msra.mxu0 %v1635
    %3310 = vmatprep.subr.mxu0 %v1644
    %3311 = vmatpush1.msra.mxu0 %v1643
    %3312 = vmatprep.subr.mxu0 %v1652
    %3313 = vmatpush1.msra.mxu0 %v1651
    %3314 = vmatprep.subr.mxu0 %v1660
    %3315 = vmatpush1.msra.mxu0 %v1659
    %3316 = vmatprep.subr.mxu0 %v1668
    %3317 = vmatpush1.msra.mxu0 %v1667
    %3318 = vmatprep.subr.mxu0 %v1676
    %3319 = vmatpush1.msra.mxu0 %v1675
    %3320 = vmatprep.subr.mxu0 %v1684
    %3321 = vmatpush1.msra.mxu0 %v1683
    %3322 = vmatprep.subr.mxu0 %v1692
    %3323 = vmatpush1.msra.mxu0 %v1691
    %3324 = vmatprep.subr.mxu0 %v1700
    %3325 = vmatpush1.msra.mxu0 %v1699
    %3326 = vmatprep.subr.mxu0 %v1708
    %3327 = vmatpush1.msra.mxu0 %v1707
    %3328 = vmatprep.mubr.f32.mxu0 %v1184
    %3329 = vmatmul.mubr.f32.gmra.mrb[0].mxu0 %v1183
    %v3330 = vpop.f32.mrb[0].mxu0
    %v3331 = vadd.f32 %v3254, %v3330
    %v3332 = vpop.f32.mrb[0].mxu0
    %v3333 = vadd.f32 %v3256, %v3332
    %3334 = vmatprep.mubr.f32.mxu0 %v1192
    %3335 = vmatmul.mubr.f32.gmra.mrb[0].mxu0 %v1191
    %v3336 = vpop.f32.mrb[0].mxu0
    %v3337 = vadd.f32 %v3260, %v3336
    %v3338 = vpop.f32.mrb[0].mxu0
    %v3339 = vadd.f32 %v3262, %v3338
    %3340 = vdwg.mxu0
    %3341 = vmatprep.subr.mxu0 %v1716
    %3342 = vmatpush1.msra.mxu0 %v1715
    %3343 = vmatprep.subr.mxu0 %v1724
    %3344 = vmatpush1.msra.mxu0 %v1723
    %3345 = vmatprep.subr.mxu0 %v1732
    %3346 = vmatpush1.msra.mxu0 %v1731
    %3347 = vmatprep.subr.mxu0 %v1740
    %3348 = vmatpush1.msra.mxu0 %v1739
    %3349 = vmatprep.subr.mxu0 %v1748
    %3350 = vmatpush1.msra.mxu0 %v1747
    %3351 = vmatprep.subr.mxu0 %v1756
    %3352 = vmatpush1.msra.mxu0 %v1755
    %3353 = vmatprep.subr.mxu0 %v1764
    %3354 = vmatpush1.msra.mxu0 %v1763
    %3355 = vmatprep.subr.mxu0 %v1772
    %3356 = vmatpush1.msra.mxu0 %v1771
    %3357 = vmatprep.subr.mxu0 %v1780
    %3358 = vmatpush1.msra.mxu0 %v1779
    %3359 = vmatprep.subr.mxu0 %v1788
    %3360 = vmatpush1.msra.mxu0 %v1787
    %3361 = vmatprep.subr.mxu0 %v1796
    %3362 = vmatpush1.msra.mxu0 %v1795
    %3363 = vmatprep.subr.mxu0 %v1804
    %3364 = vmatpush1.msra.mxu0 %v1803
    %3365 = vmatprep.subr.mxu0 %v1812
    %3366 = vmatpush1.msra.mxu0 %v1811
    %3367 = vmatprep.subr.mxu0 %v1820
    %3368 = vmatpush1.msra.mxu0 %v1819
    %3369 = vmatprep.subr.mxu0 %v1828
    %3370 = vmatpush1.msra.mxu0 %v1827
    %3371 = vmatprep.subr.mxu0 %v1836
    %3372 = vmatpush1.msra.mxu0 %v1835
    %3373 = vmatprep.subr.mxu0 %v1844
    %3374 = vmatpush1.msra.mxu0 %v1843
    %3375 = vmatprep.subr.mxu0 %v1852
    %3376 = vmatpush1.msra.mxu0 %v1851
    %3377 = vmatprep.subr.mxu0 %v1860
    %3378 = vmatpush1.msra.mxu0 %v1859
    %3379 = vmatprep.subr.mxu0 %v1868
    %3380 = vmatpush1.msra.mxu0 %v1867
    %3381 = vmatprep.subr.mxu0 %v1876
    %3382 = vmatpush1.msra.mxu0 %v1875
    %3383 = vmatprep.subr.mxu0 %v1884
    %3384 = vmatpush1.msra.mxu0 %v1883
    %3385 = vmatprep.subr.mxu0 %v1892
    %3386 = vmatpush1.msra.mxu0 %v1891
    %3387 = vmatprep.subr.mxu0 %v1900
    %3388 = vmatpush1.msra.mxu0 %v1899
    %3389 = vmatprep.subr.mxu0 %v1908
    %3390 = vmatpush1.msra.mxu0 %v1907
    %3391 = vmatprep.subr.mxu0 %v1916
    %3392 = vmatpush1.msra.mxu0 %v1915
    %3393 = vmatprep.subr.mxu0 %v1924
    %3394 = vmatpush1.msra.mxu0 %v1923
    %3395 = vmatprep.subr.mxu0 %v1932
    %3396 = vmatpush1.msra.mxu0 %v1931
    %3397 = vmatprep.subr.mxu0 %v1940
    %3398 = vmatpush1.msra.mxu0 %v1939
    %3399 = vmatprep.subr.mxu0 %v1948
    %3400 = vmatpush1.msra.mxu0 %v1947
    %3401 = vmatprep.subr.mxu0 %v1956
    %3402 = vmatpush1.msra.mxu0 %v1955
    %3403 = vmatprep.subr.mxu0 %v1964
    %3404 = vmatpush1.msra.mxu0 %v1963
    %3405 = vmatprep.mubr.f32.mxu0 %v1186
    %3406 = vmatmul.mubr.f32.gmra.mrb[0].mxu0 %v1185
    %v3407 = vpop.f32.mrb[0].mxu0
    %v3408 = vadd.f32 %v3331, %v3407
    %v3409 = vpop.f32.mrb[0].mxu0
    %v3410 = vadd.f32 %v3333, %v3409
    %3411 = vmatprep.mubr.f32.mxu0 %v1194
    %3412 = vmatmul.mubr.f32.gmra.mrb[0].mxu0 %v1193
    %v3413 = vpop.f32.mrb[0].mxu0
    %v3414 = vadd.f32 %v3337, %v3413
    %v3415 = vpop.f32.mrb[0].mxu0
    %v3416 = vadd.f32 %v3339, %v3415
    %3417 = vdwg.mxu0
    %3418 = vmatprep.subr.mxu0 %v1972
    %3419 = vmatpush1.msra.mxu0 %v1971
    %3420 = vmatprep.subr.mxu0 %v1980
    %3421 = vmatpush1.msra.mxu0 %v1979
    %3422 = vmatprep.subr.mxu0 %v1988
    %3423 = vmatpush1.msra.mxu0 %v1987
    %3424 = vmatprep.subr.mxu0 %v1996
    %3425 = vmatpush1.msra.mxu0 %v1995
    %3426 = vmatprep.subr.mxu0 %v2004
    %3427 = vmatpush1.msra.mxu0 %v2003
    %3428 = vmatprep.subr.mxu0 %v2012
    %3429 = vmatpush1.msra.mxu0 %v2011
    %3430 = vmatprep.subr.mxu0 %v2020
    %3431 = vmatpush1.msra.mxu0 %v2019
    %3432 = vmatprep.subr.mxu0 %v2028
    %3433 = vmatpush1.msra.mxu0 %v2027
    %3434 = vmatprep.subr.mxu0 %v2036
    %3435 = vmatpush1.msra.mxu0 %v2035
    %3436 = vmatprep.subr.mxu0 %v2044
    %3437 = vmatpush1.msra.mxu0 %v2043
    %3438 = vmatprep.subr.mxu0 %v2052
    %3439 = vmatpush1.msra.mxu0 %v2051
    %3440 = vmatprep.subr.mxu0 %v2060
    %3441 = vmatpush1.msra.mxu0 %v2059
    %3442 = vmatprep.subr.mxu0 %v2068
    %3443 = vmatpush1.msra.mxu0 %v2067
    %3444 = vmatprep.subr.mxu0 %v2076
    %3445 = vmatpush1.msra.mxu0 %v2075
    %3446 = vmatprep.subr.mxu0 %v2084
    %3447 = vmatpush1.msra.mxu0 %v2083
    %3448 = vmatprep.subr.mxu0 %v2092
    %3449 = vmatpush1.msra.mxu0 %v2091
    %3450 = vmatprep.subr.mxu0 %v2100
    %3451 = vmatpush1.msra.mxu0 %v2099
    %3452 = vmatprep.subr.mxu0 %v2108
    %3453 = vmatpush1.msra.mxu0 %v2107
    %3454 = vmatprep.subr.mxu0 %v2116
    %3455 = vmatpush1.msra.mxu0 %v2115
    %3456 = vmatprep.subr.mxu0 %v2124
    %3457 = vmatpush1.msra.mxu0 %v2123
    %3458 = vmatprep.subr.mxu0 %v2132
    %3459 = vmatpush1.msra.mxu0 %v2131
    %3460 = vmatprep.subr.mxu0 %v2140
    %3461 = vmatpush1.msra.mxu0 %v2139
    %3462 = vmatprep.subr.mxu0 %v2148
    %3463 = vmatpush1.msra.mxu0 %v2147
    %3464 = vmatprep.subr.mxu0 %v2156
    %3465 = vmatpush1.msra.mxu0 %v2155
    %3466 = vmatprep.subr.mxu0 %v2164
    %3467 = vmatpush1.msra.mxu0 %v2163
    %3468 = vmatprep.subr.mxu0 %v2172
    %3469 = vmatpush1.msra.mxu0 %v2171
    %3470 = vmatprep.subr.mxu0 %v2180
    %3471 = vmatpush1.msra.mxu0 %v2179
    %3472 = vmatprep.subr.mxu0 %v2188
    %3473 = vmatpush1.msra.mxu0 %v2187
    %3474 = vmatprep.subr.mxu0 %v2196
    %3475 = vmatpush1.msra.mxu0 %v2195
    %3476 = vmatprep.subr.mxu0 %v2204
    %3477 = vmatpush1.msra.mxu0 %v2203
    %3478 = vmatprep.subr.mxu0 %v2212
    %3479 = vmatpush1.msra.mxu0 %v2211
    %3480 = vmatprep.subr.mxu0 %v2220
    %3481 = vmatpush1.msra.mxu0 %v2219
    %3482 = vmatprep.mubr.f32.mxu0 %v1188
    %3483 = vmatmul.mubr.f32.gmra.mrb[0].mxu0 %v1187
    %v3484 = vpop.f32.mrb[0].mxu0
    %v3485 = vadd.f32 %v3408, %v3484
    %v3486 = vpop.f32.mrb[0].mxu0
    %v3487 = vadd.f32 %v3410, %v3486
    %3488 = vmatprep.mubr.f32.mxu0 %v1196
    %3489 = vmatmul.mubr.f32.gmra.mrb[0].mxu0 %v1195
    %v3490 = vpop.f32.mrb[0].mxu0
    %v3491 = vadd.f32 %v3414, %v3490
    %v3492 = vpop.f32.mrb[0].mxu0
    %v3493 = vadd.f32 %v3416, %v3492
    %3494 = vdwg.mxu0
    %v3495 = vmax.f32 %v2561, 0.0
    %v3496 = vmax.f32 %v2563, 0.0
    %v3497 = vmax.f32 %v2869, 0.0
    %v3498 = vmax.f32 %v2871, 0.0
    %v3499 = vmax.f32 %v3177, 0.0
    %v3500 = vmax.f32 %v3179, 0.0
    %v3501 = vmax.f32 %v3485, 0.0
    %v3502 = vmax.f32 %v3487, 0.0
    %v3503 = vmax.f32 %v2567, 0.0
    %v3504 = vmax.f32 %v2569, 0.0
    %v3505 = vmax.f32 %v2875, 0.0
    %v3506 = vmax.f32 %v2877, 0.0
    %v3507 = vmax.f32 %v3183, 0.0
    %v3508 = vmax.f32 %v3185, 0.0
    %v3509 = vmax.f32 %v3491, 0.0
    %v3510 = vmax.f32 %v3493, 0.0
    %v3511 = vld [vmem:[#allocation9] sm:$0xff]
    %v3512 = vld [vmem:[#allocation9 + $0x8] sm:$0xff]
    %v3513 = vld [vmem:[#allocation9 + $0x10] sm:$0xff]
    %v3514 = vld [vmem:[#allocation9 + $0x18] sm:$0xff]
    %v3515 = vld [vmem:[#allocation9 + $0x20] sm:$0xff]
    %v3516 = vld [vmem:[#allocation9 + $0x28] sm:$0xff]
    %v3517 = vld [vmem:[#allocation9 + $0x30] sm:$0xff]
    %v3518 = vld [vmem:[#allocation9 + $0x38] sm:$0xff]
    %v3519 = vld [vmem:[#allocation9 + $0x40] sm:$0xff]
    %v3520 = vld [vmem:[#allocation9 + $0x48] sm:$0xff]
    %v3521 = vld [vmem:[#allocation9 + $0x50] sm:$0xff]
    %v3522 = vld [vmem:[#allocation9 + $0x58] sm:$0xff]
    %v3523 = vld [vmem:[#allocation9 + $0x60] sm:$0xff]
    %v3524 = vld [vmem:[#allocation9 + $0x68] sm:$0xff]
    %v3525 = vld [vmem:[#allocation9 + $0x70] sm:$0xff]
    %v3526 = vld [vmem:[#allocation9 + $0x78] sm:$0xff]
    %v3527 = vld [vmem:[#allocation9 + $0x80] sm:$0xff]
    %v3528 = vld [vmem:[#allocation9 + $0x88] sm:$0xff]
    %v3529 = vld [vmem:[#allocation9 + $0x90] sm:$0xff]
    %v3530 = vld [vmem:[#allocation9 + $0x98] sm:$0xff]
    %v3531 = vld [vmem:[#allocation9 + $0xa0] sm:$0xff]
    %v3532 = vld [vmem:[#allocation9 + $0xa8] sm:$0xff]
    %v3533 = vld [vmem:[#allocation9 + $0xb0] sm:$0xff]
    %v3534 = vld [vmem:[#allocation9 + $0xb8] sm:$0xff]
    %v3535 = vld [vmem:[#allocation9 + $0xc0] sm:$0xff]
    %v3536 = vld [vmem:[#allocation9 + $0xc8] sm:$0xff]
    %v3537 = vld [vmem:[#allocation9 + $0xd0] sm:$0xff]
    %v3538 = vld [vmem:[#allocation9 + $0xd8] sm:$0xff]
    %v3539 = vld [vmem:[#allocation9 + $0xe0] sm:$0xff]
    %v3540 = vld [vmem:[#allocation9 + $0xe8] sm:$0xff]
    %v3541 = vld [vmem:[#allocation9 + $0xf0] sm:$0xff]
    %v3542 = vld [vmem:[#allocation9 + $0xf8] sm:$0xff]
    %v3543 = vld [vmem:[#allocation9 + $0x100] sm:$0xff]
    %v3544 = vld [vmem:[#allocation9 + $0x108] sm:$0xff]
    %v3545 = vld [vmem:[#allocation9 + $0x110] sm:$0xff]
    %v3546 = vld [vmem:[#allocation9 + $0x118] sm:$0xff]
    %v3547 = vld [vmem:[#allocation9 + $0x120] sm:$0xff]
    %v3548 = vld [vmem:[#allocation9 + $0x128] sm:$0xff]
    %v3549 = vld [vmem:[#allocation9 + $0x130] sm:$0xff]
    %v3550 = vld [vmem:[#allocation9 + $0x138] sm:$0xff]
    %v3551 = vld [vmem:[#allocation9 + $0x140] sm:$0xff]
    %v3552 = vld [vmem:[#allocation9 + $0x148] sm:$0xff]
    %v3553 = vld [vmem:[#allocation9 + $0x150] sm:$0xff]
    %v3554 = vld [vmem:[#allocation9 + $0x158] sm:$0xff]
    %v3555 = vld [vmem:[#allocation9 + $0x160] sm:$0xff]
    %v3556 = vld [vmem:[#allocation9 + $0x168] sm:$0xff]
    %v3557 = vld [vmem:[#allocation9 + $0x170] sm:$0xff]
    %v3558 = vld [vmem:[#allocation9 + $0x178] sm:$0xff]
    %v3559 = vld [vmem:[#allocation9 + $0x180] sm:$0xff]
    %v3560 = vld [vmem:[#allocation9 + $0x188] sm:$0xff]
    %v3561 = vld [vmem:[#allocation9 + $0x190] sm:$0xff]
    %v3562 = vld [vmem:[#allocation9 + $0x198] sm:$0xff]
    %v3563 = vld [vmem:[#allocation9 + $0x1a0] sm:$0xff]
    %v3564 = vld [vmem:[#allocation9 + $0x1a8] sm:$0xff]
    %v3565 = vld [vmem:[#allocation9 + $0x1b0] sm:$0xff]
    %v3566 = vld [vmem:[#allocation9 + $0x1b8] sm:$0xff]
    %v3567 = vld [vmem:[#allocation9 + $0x1c0] sm:$0xff]
    %v3568 = vld [vmem:[#allocation9 + $0x1c8] sm:$0xff]
    %v3569 = vld [vmem:[#allocation9 + $0x1d0] sm:$0xff]
    %v3570 = vld [vmem:[#allocation9 + $0x1d8] sm:$0xff]
    %v3571 = vld [vmem:[#allocation9 + $0x1e0] sm:$0xff]
    %v3572 = vld [vmem:[#allocation9 + $0x1e8] sm:$0xff]
    %v3573 = vld [vmem:[#allocation9 + $0x1f0] sm:$0xff]
    %v3574 = vld [vmem:[#allocation9 + $0x1f8] sm:$0xff]
    %v3575 = vld [vmem:[#allocation9 + $0x200] sm:$0xff]
    %v3576 = vld [vmem:[#allocation9 + $0x208] sm:$0xff]
    %v3577 = vld [vmem:[#allocation9 + $0x210] sm:$0xff]
    %v3578 = vld [vmem:[#allocation9 + $0x218] sm:$0xff]
    %v3579 = vld [vmem:[#allocation9 + $0x220] sm:$0xff]
    %v3580 = vld [vmem:[#allocation9 + $0x228] sm:$0xff]
    %v3581 = vld [vmem:[#allocation9 + $0x230] sm:$0xff]
    %v3582 = vld [vmem:[#allocation9 + $0x238] sm:$0xff]
    %v3583 = vld [vmem:[#allocation9 + $0x240] sm:$0xff]
    %v3584 = vld [vmem:[#allocation9 + $0x248] sm:$0xff]
    %v3585 = vld [vmem:[#allocation9 + $0x250] sm:$0xff]
    %v3586 = vld [vmem:[#allocation9 + $0x258] sm:$0xff]
    %v3587 = vld [vmem:[#allocation9 + $0x260] sm:$0xff]
    %v3588 = vld [vmem:[#allocation9 + $0x268] sm:$0xff]
    %v3589 = vld [vmem:[#allocation9 + $0x270] sm:$0xff]
    %v3590 = vld [vmem:[#allocation9 + $0x278] sm:$0xff]
    %v3591 = vld [vmem:[#allocation9 + $0x280] sm:$0xff]
    %v3592 = vld [vmem:[#allocation9 + $0x288] sm:$0xff]
    %v3593 = vld [vmem:[#allocation9 + $0x290] sm:$0xff]
    %v3594 = vld [vmem:[#allocation9 + $0x298] sm:$0xff]
    %v3595 = vld [vmem:[#allocation9 + $0x2a0] sm:$0xff]
    %v3596 = vld [vmem:[#allocation9 + $0x2a8] sm:$0xff]
    %v3597 = vld [vmem:[#allocation9 + $0x2b0] sm:$0xff]
    %v3598 = vld [vmem:[#allocation9 + $0x2b8] sm:$0xff]
    %v3599 = vld [vmem:[#allocation9 + $0x2c0] sm:$0xff]
    %v3600 = vld [vmem:[#allocation9 + $0x2c8] sm:$0xff]
    %v3601 = vld [vmem:[#allocation9 + $0x2d0] sm:$0xff]
    %v3602 = vld [vmem:[#allocation9 + $0x2d8] sm:$0xff]
    %v3603 = vld [vmem:[#allocation9 + $0x2e0] sm:$0xff]
    %v3604 = vld [vmem:[#allocation9 + $0x2e8] sm:$0xff]
    %v3605 = vld [vmem:[#allocation9 + $0x2f0] sm:$0xff]
    %v3606 = vld [vmem:[#allocation9 + $0x2f8] sm:$0xff]
    %v3607 = vld [vmem:[#allocation9 + $0x300] sm:$0xff]
    %v3608 = vld [vmem:[#allocation9 + $0x308] sm:$0xff]
    %v3609 = vld [vmem:[#allocation9 + $0x310] sm:$0xff]
    %v3610 = vld [vmem:[#allocation9 + $0x318] sm:$0xff]
    %v3611 = vld [vmem:[#allocation9 + $0x320] sm:$0xff]
    %v3612 = vld [vmem:[#allocation9 + $0x328] sm:$0xff]
    %v3613 = vld [vmem:[#allocation9 + $0x330] sm:$0xff]
    %v3614 = vld [vmem:[#allocation9 + $0x338] sm:$0xff]
    %v3615 = vld [vmem:[#allocation9 + $0x340] sm:$0xff]
    %v3616 = vld [vmem:[#allocation9 + $0x348] sm:$0xff]
    %v3617 = vld [vmem:[#allocation9 + $0x350] sm:$0xff]
    %v3618 = vld [vmem:[#allocation9 + $0x358] sm:$0xff]
    %v3619 = vld [vmem:[#allocation9 + $0x360] sm:$0xff]
    %v3620 = vld [vmem:[#allocation9 + $0x368] sm:$0xff]
    %v3621 = vld [vmem:[#allocation9 + $0x370] sm:$0xff]
    %v3622 = vld [vmem:[#allocation9 + $0x378] sm:$0xff]
    %v3623 = vld [vmem:[#allocation9 + $0x380] sm:$0xff]
    %v3624 = vld [vmem:[#allocation9 + $0x388] sm:$0xff]
    %v3625 = vld [vmem:[#allocation9 + $0x390] sm:$0xff]
    %v3626 = vld [vmem:[#allocation9 + $0x398] sm:$0xff]
    %v3627 = vld [vmem:[#allocation9 + $0x3a0] sm:$0xff]
    %v3628 = vld [vmem:[#allocation9 + $0x3a8] sm:$0xff]
    %v3629 = vld [vmem:[#allocation9 + $0x3b0] sm:$0xff]
    %v3630 = vld [vmem:[#allocation9 + $0x3b8] sm:$0xff]
    %v3631 = vld [vmem:[#allocation9 + $0x3c0] sm:$0xff]
    %v3632 = vld [vmem:[#allocation9 + $0x3c8] sm:$0xff]
    %v3633 = vld [vmem:[#allocation9 + $0x3d0] sm:$0xff]
    %v3634 = vld [vmem:[#allocation9 + $0x3d8] sm:$0xff]
    %v3635 = vld [vmem:[#allocation9 + $0x3e0] sm:$0xff]
    %v3636 = vld [vmem:[#allocation9 + $0x3e8] sm:$0xff]
    %v3637 = vld [vmem:[#allocation9 + $0x3f0] sm:$0xff]
    %v3638 = vld [vmem:[#allocation9 + $0x3f8] sm:$0xff]
    %v3639 = vld [vmem:[#allocation9 + $0x400] sm:$0xff]
    %v3640 = vld [vmem:[#allocation9 + $0x408] sm:$0xff]
    %v3641 = vld [vmem:[#allocation9 + $0x410] sm:$0xff]
    %v3642 = vld [vmem:[#allocation9 + $0x418] sm:$0xff]
    %v3643 = vld [vmem:[#allocation9 + $0x420] sm:$0xff]
    %v3644 = vld [vmem:[#allocation9 + $0x428] sm:$0xff]
    %v3645 = vld [vmem:[#allocation9 + $0x430] sm:$0xff]
    %v3646 = vld [vmem:[#allocation9 + $0x438] sm:$0xff]
    %v3647 = vld [vmem:[#allocation9 + $0x440] sm:$0xff]
    %v3648 = vld [vmem:[#allocation9 + $0x448] sm:$0xff]
    %v3649 = vld [vmem:[#allocation9 + $0x450] sm:$0xff]
    %v3650 = vld [vmem:[#allocation9 + $0x458] sm:$0xff]
    %v3651 = vld [vmem:[#allocation9 + $0x460] sm:$0xff]
    %v3652 = vld [vmem:[#allocation9 + $0x468] sm:$0xff]
    %v3653 = vld [vmem:[#allocation9 + $0x470] sm:$0xff]
    %v3654 = vld [vmem:[#allocation9 + $0x478] sm:$0xff]
    %v3655 = vld [vmem:[#allocation9 + $0x480] sm:$0xff]
    %v3656 = vld [vmem:[#allocation9 + $0x488] sm:$0xff]
    %v3657 = vld [vmem:[#allocation9 + $0x490] sm:$0xff]
    %v3658 = vld [vmem:[#allocation9 + $0x498] sm:$0xff]
    %v3659 = vld [vmem:[#allocation9 + $0x4a0] sm:$0xff]
    %v3660 = vld [vmem:[#allocation9 + $0x4a8] sm:$0xff]
    %v3661 = vld [vmem:[#allocation9 + $0x4b0] sm:$0xff]
    %v3662 = vld [vmem:[#allocation9 + $0x4b8] sm:$0xff]
    %v3663 = vld [vmem:[#allocation9 + $0x4c0] sm:$0xff]
    %v3664 = vld [vmem:[#allocation9 + $0x4c8] sm:$0xff]
    %v3665 = vld [vmem:[#allocation9 + $0x4d0] sm:$0xff]
    %v3666 = vld [vmem:[#allocation9 + $0x4d8] sm:$0xff]
    %v3667 = vld [vmem:[#allocation9 + $0x4e0] sm:$0xff]
    %v3668 = vld [vmem:[#allocation9 + $0x4e8] sm:$0xff]
    %v3669 = vld [vmem:[#allocation9 + $0x4f0] sm:$0xff]
    %v3670 = vld [vmem:[#allocation9 + $0x4f8] sm:$0xff]
    %v3671 = vld [vmem:[#allocation9 + $0x500] sm:$0xff]
    %v3672 = vld [vmem:[#allocation9 + $0x508] sm:$0xff]
    %v3673 = vld [vmem:[#allocation9 + $0x510] sm:$0xff]
    %v3674 = vld [vmem:[#allocation9 + $0x518] sm:$0xff]
    %v3675 = vld [vmem:[#allocation9 + $0x520] sm:$0xff]
    %v3676 = vld [vmem:[#allocation9 + $0x528] sm:$0xff]
    %v3677 = vld [vmem:[#allocation9 + $0x530] sm:$0xff]
    %v3678 = vld [vmem:[#allocation9 + $0x538] sm:$0xff]
    %v3679 = vld [vmem:[#allocation9 + $0x540] sm:$0xff]
    %v3680 = vld [vmem:[#allocation9 + $0x548] sm:$0xff]
    %v3681 = vld [vmem:[#allocation9 + $0x550] sm:$0xff]
    %v3682 = vld [vmem:[#allocation9 + $0x558] sm:$0xff]
    %v3683 = vld [vmem:[#allocation9 + $0x560] sm:$0xff]
    %v3684 = vld [vmem:[#allocation9 + $0x568] sm:$0xff]
    %v3685 = vld [vmem:[#allocation9 + $0x570] sm:$0xff]
    %v3686 = vld [vmem:[#allocation9 + $0x578] sm:$0xff]
    %v3687 = vld [vmem:[#allocation9 + $0x580] sm:$0xff]
    %v3688 = vld [vmem:[#allocation9 + $0x588] sm:$0xff]
    %v3689 = vld [vmem:[#allocation9 + $0x590] sm:$0xff]
    %v3690 = vld [vmem:[#allocation9 + $0x598] sm:$0xff]
    %v3691 = vld [vmem:[#allocation9 + $0x5a0] sm:$0xff]
    %v3692 = vld [vmem:[#allocation9 + $0x5a8] sm:$0xff]
    %v3693 = vld [vmem:[#allocation9 + $0x5b0] sm:$0xff]
    %v3694 = vld [vmem:[#allocation9 + $0x5b8] sm:$0xff]
    %v3695 = vld [vmem:[#allocation9 + $0x5c0] sm:$0xff]
    %v3696 = vld [vmem:[#allocation9 + $0x5c8] sm:$0xff]
    %v3697 = vld [vmem:[#allocation9 + $0x5d0] sm:$0xff]
    %v3698 = vld [vmem:[#allocation9 + $0x5d8] sm:$0xff]
    %v3699 = vld [vmem:[#allocation9 + $0x5e0] sm:$0xff]
    %v3700 = vld [vmem:[#allocation9 + $0x5e8] sm:$0xff]
    %v3701 = vld [vmem:[#allocation9 + $0x5f0] sm:$0xff]
    %v3702 = vld [vmem:[#allocation9 + $0x5f8] sm:$0xff]
    %v3703 = vld [vmem:[#allocation9 + $0x600] sm:$0xff]
    %v3704 = vld [vmem:[#allocation9 + $0x608] sm:$0xff]
    %v3705 = vld [vmem:[#allocation9 + $0x610] sm:$0xff]
    %v3706 = vld [vmem:[#allocation9 + $0x618] sm:$0xff]
    %v3707 = vld [vmem:[#allocation9 + $0x620] sm:$0xff]
    %v3708 = vld [vmem:[#allocation9 + $0x628] sm:$0xff]
    %v3709 = vld [vmem:[#allocation9 + $0x630] sm:$0xff]
    %v3710 = vld [vmem:[#allocation9 + $0x638] sm:$0xff]
    %v3711 = vld [vmem:[#allocation9 + $0x640] sm:$0xff]
    %v3712 = vld [vmem:[#allocation9 + $0x648] sm:$0xff]
    %v3713 = vld [vmem:[#allocation9 + $0x650] sm:$0xff]
    %v3714 = vld [vmem:[#allocation9 + $0x658] sm:$0xff]
    %v3715 = vld [vmem:[#allocation9 + $0x660] sm:$0xff]
    %v3716 = vld [vmem:[#allocation9 + $0x668] sm:$0xff]
    %v3717 = vld [vmem:[#allocation9 + $0x670] sm:$0xff]
    %v3718 = vld [vmem:[#allocation9 + $0x678] sm:$0xff]
    %v3719 = vld [vmem:[#allocation9 + $0x680] sm:$0xff]
    %v3720 = vld [vmem:[#allocation9 + $0x688] sm:$0xff]
    %v3721 = vld [vmem:[#allocation9 + $0x690] sm:$0xff]
    %v3722 = vld [vmem:[#allocation9 + $0x698] sm:$0xff]
    %v3723 = vld [vmem:[#allocation9 + $0x6a0] sm:$0xff]
    %v3724 = vld [vmem:[#allocation9 + $0x6a8] sm:$0xff]
    %v3725 = vld [vmem:[#allocation9 + $0x6b0] sm:$0xff]
    %v3726 = vld [vmem:[#allocation9 + $0x6b8] sm:$0xff]
    %v3727 = vld [vmem:[#allocation9 + $0x6c0] sm:$0xff]
    %v3728 = vld [vmem:[#allocation9 + $0x6c8] sm:$0xff]
    %v3729 = vld [vmem:[#allocation9 + $0x6d0] sm:$0xff]
    %v3730 = vld [vmem:[#allocation9 + $0x6d8] sm:$0xff]
    %v3731 = vld [vmem:[#allocation9 + $0x6e0] sm:$0xff]
    %v3732 = vld [vmem:[#allocation9 + $0x6e8] sm:$0xff]
    %v3733 = vld [vmem:[#allocation9 + $0x6f0] sm:$0xff]
    %v3734 = vld [vmem:[#allocation9 + $0x6f8] sm:$0xff]
    %v3735 = vld [vmem:[#allocation9 + $0x700] sm:$0xff]
    %v3736 = vld [vmem:[#allocation9 + $0x708] sm:$0xff]
    %v3737 = vld [vmem:[#allocation9 + $0x710] sm:$0xff]
    %v3738 = vld [vmem:[#allocation9 + $0x718] sm:$0xff]
    %v3739 = vld [vmem:[#allocation9 + $0x720] sm:$0xff]
    %v3740 = vld [vmem:[#allocation9 + $0x728] sm:$0xff]
    %v3741 = vld [vmem:[#allocation9 + $0x730] sm:$0xff]
    %v3742 = vld [vmem:[#allocation9 + $0x738] sm:$0xff]
    %v3743 = vld [vmem:[#allocation9 + $0x740] sm:$0xff]
    %v3744 = vld [vmem:[#allocation9 + $0x748] sm:$0xff]
    %v3745 = vld [vmem:[#allocation9 + $0x750] sm:$0xff]
    %v3746 = vld [vmem:[#allocation9 + $0x758] sm:$0xff]
    %v3747 = vld [vmem:[#allocation9 + $0x760] sm:$0xff]
    %v3748 = vld [vmem:[#allocation9 + $0x768] sm:$0xff]
    %v3749 = vld [vmem:[#allocation9 + $0x770] sm:$0xff]
    %v3750 = vld [vmem:[#allocation9 + $0x778] sm:$0xff]
    %v3751 = vld [vmem:[#allocation9 + $0x780] sm:$0xff]
    %v3752 = vld [vmem:[#allocation9 + $0x788] sm:$0xff]
    %v3753 = vld [vmem:[#allocation9 + $0x790] sm:$0xff]
    %v3754 = vld [vmem:[#allocation9 + $0x798] sm:$0xff]
    %v3755 = vld [vmem:[#allocation9 + $0x7a0] sm:$0xff]
    %v3756 = vld [vmem:[#allocation9 + $0x7a8] sm:$0xff]
    %v3757 = vld [vmem:[#allocation9 + $0x7b0] sm:$0xff]
    %v3758 = vld [vmem:[#allocation9 + $0x7b8] sm:$0xff]
    %v3759 = vld [vmem:[#allocation9 + $0x7c0] sm:$0xff]
    %v3760 = vld [vmem:[#allocation9 + $0x7c8] sm:$0xff]
    %v3761 = vld [vmem:[#allocation9 + $0x7d0] sm:$0xff]
    %v3762 = vld [vmem:[#allocation9 + $0x7d8] sm:$0xff]
    %v3763 = vld [vmem:[#allocation9 + $0x7e0] sm:$0xff]
    %v3764 = vld [vmem:[#allocation9 + $0x7e8] sm:$0xff]
    %v3765 = vld [vmem:[#allocation9 + $0x7f0] sm:$0xff]
    %v3766 = vld [vmem:[#allocation9 + $0x7f8] sm:$0xff]
    %v3767 = vld [vmem:[#allocation9 + $0x800] sm:$0xff]
    %v3768 = vld [vmem:[#allocation9 + $0x808] sm:$0xff]
    %v3769 = vld [vmem:[#allocation9 + $0x810] sm:$0xff]
    %v3770 = vld [vmem:[#allocation9 + $0x818] sm:$0xff]
    %v3771 = vld [vmem:[#allocation9 + $0x820] sm:$0xff]
    %v3772 = vld [vmem:[#allocation9 + $0x828] sm:$0xff]
    %v3773 = vld [vmem:[#allocation9 + $0x830] sm:$0xff]
    %v3774 = vld [vmem:[#allocation9 + $0x838] sm:$0xff]
    %v3775 = vld [vmem:[#allocation9 + $0x840] sm:$0xff]
    %v3776 = vld [vmem:[#allocation9 + $0x848] sm:$0xff]
    %v3777 = vld [vmem:[#allocation9 + $0x850] sm:$0xff]
    %v3778 = vld [vmem:[#allocation9 + $0x858] sm:$0xff]
    %v3779 = vld [vmem:[#allocation9 + $0x860] sm:$0xff]
    %v3780 = vld [vmem:[#allocation9 + $0x868] sm:$0xff]
    %v3781 = vld [vmem:[#allocation9 + $0x870] sm:$0xff]
    %v3782 = vld [vmem:[#allocation9 + $0x878] sm:$0xff]
    %v3783 = vld [vmem:[#allocation9 + $0x880] sm:$0xff]
    %v3784 = vld [vmem:[#allocation9 + $0x888] sm:$0xff]
    %v3785 = vld [vmem:[#allocation9 + $0x890] sm:$0xff]
    %v3786 = vld [vmem:[#allocation9 + $0x898] sm:$0xff]
    %v3787 = vld [vmem:[#allocation9 + $0x8a0] sm:$0xff]
    %v3788 = vld [vmem:[#allocation9 + $0x8a8] sm:$0xff]
    %v3789 = vld [vmem:[#allocation9 + $0x8b0] sm:$0xff]
    %v3790 = vld [vmem:[#allocation9 + $0x8b8] sm:$0xff]
    %v3791 = vld [vmem:[#allocation9 + $0x8c0] sm:$0xff]
    %v3792 = vld [vmem:[#allocation9 + $0x8c8] sm:$0xff]
    %v3793 = vld [vmem:[#allocation9 + $0x8d0] sm:$0xff]
    %v3794 = vld [vmem:[#allocation9 + $0x8d8] sm:$0xff]
    %v3795 = vld [vmem:[#allocation9 + $0x8e0] sm:$0xff]
    %v3796 = vld [vmem:[#allocation9 + $0x8e8] sm:$0xff]
    %v3797 = vld [vmem:[#allocation9 + $0x8f0] sm:$0xff]
    %v3798 = vld [vmem:[#allocation9 + $0x8f8] sm:$0xff]
    %v3799 = vld [vmem:[#allocation9 + $0x900] sm:$0xff]
    %v3800 = vld [vmem:[#allocation9 + $0x908] sm:$0xff]
    %v3801 = vld [vmem:[#allocation9 + $0x910] sm:$0xff]
    %v3802 = vld [vmem:[#allocation9 + $0x918] sm:$0xff]
    %v3803 = vld [vmem:[#allocation9 + $0x920] sm:$0xff]
    %v3804 = vld [vmem:[#allocation9 + $0x928] sm:$0xff]
    %v3805 = vld [vmem:[#allocation9 + $0x930] sm:$0xff]
    %v3806 = vld [vmem:[#allocation9 + $0x938] sm:$0xff]
    %v3807 = vld [vmem:[#allocation9 + $0x940] sm:$0xff]
    %v3808 = vld [vmem:[#allocation9 + $0x948] sm:$0xff]
    %v3809 = vld [vmem:[#allocation9 + $0x950] sm:$0xff]
    %v3810 = vld [vmem:[#allocation9 + $0x958] sm:$0xff]
    %v3811 = vld [vmem:[#allocation9 + $0x960] sm:$0xff]
    %v3812 = vld [vmem:[#allocation9 + $0x968] sm:$0xff]
    %v3813 = vld [vmem:[#allocation9 + $0x970] sm:$0xff]
    %v3814 = vld [vmem:[#allocation9 + $0x978] sm:$0xff]
    %v3815 = vld [vmem:[#allocation9 + $0x980] sm:$0xff]
    %v3816 = vld [vmem:[#allocation9 + $0x988] sm:$0xff]
    %v3817 = vld [vmem:[#allocation9 + $0x990] sm:$0xff]
    %v3818 = vld [vmem:[#allocation9 + $0x998] sm:$0xff]
    %v3819 = vld [vmem:[#allocation9 + $0x9a0] sm:$0xff]
    %v3820 = vld [vmem:[#allocation9 + $0x9a8] sm:$0xff]
    %v3821 = vld [vmem:[#allocation9 + $0x9b0] sm:$0xff]
    %v3822 = vld [vmem:[#allocation9 + $0x9b8] sm:$0xff]
    %v3823 = vld [vmem:[#allocation9 + $0x9c0] sm:$0xff]
    %v3824 = vld [vmem:[#allocation9 + $0x9c8] sm:$0xff]
    %v3825 = vld [vmem:[#allocation9 + $0x9d0] sm:$0xff]
    %v3826 = vld [vmem:[#allocation9 + $0x9d8] sm:$0xff]
    %v3827 = vld [vmem:[#allocation9 + $0x9e0] sm:$0xff]
    %v3828 = vld [vmem:[#allocation9 + $0x9e8] sm:$0xff]
    %v3829 = vld [vmem:[#allocation9 + $0x9f0] sm:$0xff]
    %v3830 = vld [vmem:[#allocation9 + $0x9f8] sm:$0xff]
    %v3831 = vld [vmem:[#allocation9 + $0xa00] sm:$0xff]
    %v3832 = vld [vmem:[#allocation9 + $0xa08] sm:$0xff]
    %v3833 = vld [vmem:[#allocation9 + $0xa10] sm:$0xff]
    %v3834 = vld [vmem:[#allocation9 + $0xa18] sm:$0xff]
    %v3835 = vld [vmem:[#allocation9 + $0xa20] sm:$0xff]
    %v3836 = vld [vmem:[#allocation9 + $0xa28] sm:$0xff]
    %v3837 = vld [vmem:[#allocation9 + $0xa30] sm:$0xff]
    %v3838 = vld [vmem:[#allocation9 + $0xa38] sm:$0xff]
    %v3839 = vld [vmem:[#allocation9 + $0xa40] sm:$0xff]
    %v3840 = vld [vmem:[#allocation9 + $0xa48] sm:$0xff]
    %v3841 = vld [vmem:[#allocation9 + $0xa50] sm:$0xff]
    %v3842 = vld [vmem:[#allocation9 + $0xa58] sm:$0xff]
    %v3843 = vld [vmem:[#allocation9 + $0xa60] sm:$0xff]
    %v3844 = vld [vmem:[#allocation9 + $0xa68] sm:$0xff]
    %v3845 = vld [vmem:[#allocation9 + $0xa70] sm:$0xff]
    %v3846 = vld [vmem:[#allocation9 + $0xa78] sm:$0xff]
    %v3847 = vld [vmem:[#allocation9 + $0xa80] sm:$0xff]
    %v3848 = vld [vmem:[#allocation9 + $0xa88] sm:$0xff]
    %v3849 = vld [vmem:[#allocation9 + $0xa90] sm:$0xff]
    %v3850 = vld [vmem:[#allocation9 + $0xa98] sm:$0xff]
    %v3851 = vld [vmem:[#allocation9 + $0xaa0] sm:$0xff]
    %v3852 = vld [vmem:[#allocation9 + $0xaa8] sm:$0xff]
    %v3853 = vld [vmem:[#allocation9 + $0xab0] sm:$0xff]
    %v3854 = vld [vmem:[#allocation9 + $0xab8] sm:$0xff]
    %v3855 = vld [vmem:[#allocation9 + $0xac0] sm:$0xff]
    %v3856 = vld [vmem:[#allocation9 + $0xac8] sm:$0xff]
    %v3857 = vld [vmem:[#allocation9 + $0xad0] sm:$0xff]
    %v3858 = vld [vmem:[#allocation9 + $0xad8] sm:$0xff]
    %v3859 = vld [vmem:[#allocation9 + $0xae0] sm:$0xff]
    %v3860 = vld [vmem:[#allocation9 + $0xae8] sm:$0xff]
    %v3861 = vld [vmem:[#allocation9 + $0xaf0] sm:$0xff]
    %v3862 = vld [vmem:[#allocation9 + $0xaf8] sm:$0xff]
    %v3863 = vld [vmem:[#allocation9 + $0xb00] sm:$0xff]
    %v3864 = vld [vmem:[#allocation9 + $0xb08] sm:$0xff]
    %v3865 = vld [vmem:[#allocation9 + $0xb10] sm:$0xff]
    %v3866 = vld [vmem:[#allocation9 + $0xb18] sm:$0xff]
    %v3867 = vld [vmem:[#allocation9 + $0xb20] sm:$0xff]
    %v3868 = vld [vmem:[#allocation9 + $0xb28] sm:$0xff]
    %v3869 = vld [vmem:[#allocation9 + $0xb30] sm:$0xff]
    %v3870 = vld [vmem:[#allocation9 + $0xb38] sm:$0xff]
    %v3871 = vld [vmem:[#allocation9 + $0xb40] sm:$0xff]
    %v3872 = vld [vmem:[#allocation9 + $0xb48] sm:$0xff]
    %v3873 = vld [vmem:[#allocation9 + $0xb50] sm:$0xff]
    %v3874 = vld [vmem:[#allocation9 + $0xb58] sm:$0xff]
    %v3875 = vld [vmem:[#allocation9 + $0xb60] sm:$0xff]
    %v3876 = vld [vmem:[#allocation9 + $0xb68] sm:$0xff]
    %v3877 = vld [vmem:[#allocation9 + $0xb70] sm:$0xff]
    %v3878 = vld [vmem:[#allocation9 + $0xb78] sm:$0xff]
    %v3879 = vld [vmem:[#allocation9 + $0xb80] sm:$0xff]
    %v3880 = vld [vmem:[#allocation9 + $0xb88] sm:$0xff]
    %v3881 = vld [vmem:[#allocation9 + $0xb90] sm:$0xff]
    %v3882 = vld [vmem:[#allocation9 + $0xb98] sm:$0xff]
    %v3883 = vld [vmem:[#allocation9 + $0xba0] sm:$0xff]
    %v3884 = vld [vmem:[#allocation9 + $0xba8] sm:$0xff]
    %v3885 = vld [vmem:[#allocation9 + $0xbb0] sm:$0xff]
    %v3886 = vld [vmem:[#allocation9 + $0xbb8] sm:$0xff]
    %v3887 = vld [vmem:[#allocation9 + $0xbc0] sm:$0xff]
    %v3888 = vld [vmem:[#allocation9 + $0xbc8] sm:$0xff]
    %v3889 = vld [vmem:[#allocation9 + $0xbd0] sm:$0xff]
    %v3890 = vld [vmem:[#allocation9 + $0xbd8] sm:$0xff]
    %v3891 = vld [vmem:[#allocation9 + $0xbe0] sm:$0xff]
    %v3892 = vld [vmem:[#allocation9 + $0xbe8] sm:$0xff]
    %v3893 = vld [vmem:[#allocation9 + $0xbf0] sm:$0xff]
    %v3894 = vld [vmem:[#allocation9 + $0xbf8] sm:$0xff]
    %v3895 = vld [vmem:[#allocation9 + $0xc00] sm:$0xff]
    %v3896 = vld [vmem:[#allocation9 + $0xc08] sm:$0xff]
    %v3897 = vld [vmem:[#allocation9 + $0xc10] sm:$0xff]
    %v3898 = vld [vmem:[#allocation9 + $0xc18] sm:$0xff]
    %v3899 = vld [vmem:[#allocation9 + $0xc20] sm:$0xff]
    %v3900 = vld [vmem:[#allocation9 + $0xc28] sm:$0xff]
    %v3901 = vld [vmem:[#allocation9 + $0xc30] sm:$0xff]
    %v3902 = vld [vmem:[#allocation9 + $0xc38] sm:$0xff]
    %v3903 = vld [vmem:[#allocation9 + $0xc40] sm:$0xff]
    %v3904 = vld [vmem:[#allocation9 + $0xc48] sm:$0xff]
    %v3905 = vld [vmem:[#allocation9 + $0xc50] sm:$0xff]
    %v3906 = vld [vmem:[#allocation9 + $0xc58] sm:$0xff]
    %v3907 = vld [vmem:[#allocation9 + $0xc60] sm:$0xff]
    %v3908 = vld [vmem:[#allocation9 + $0xc68] sm:$0xff]
    %v3909 = vld [vmem:[#allocation9 + $0xc70] sm:$0xff]
    %v3910 = vld [vmem:[#allocation9 + $0xc78] sm:$0xff]
    %v3911 = vld [vmem:[#allocation9 + $0xc80] sm:$0xff]
    %v3912 = vld [vmem:[#allocation9 + $0xc88] sm:$0xff]
    %v3913 = vld [vmem:[#allocation9 + $0xc90] sm:$0xff]
    %v3914 = vld [vmem:[#allocation9 + $0xc98] sm:$0xff]
    %v3915 = vld [vmem:[#allocation9 + $0xca0] sm:$0xff]
    %v3916 = vld [vmem:[#allocation9 + $0xca8] sm:$0xff]
    %v3917 = vld [vmem:[#allocation9 + $0xcb0] sm:$0xff]
    %v3918 = vld [vmem:[#allocation9 + $0xcb8] sm:$0xff]
    %v3919 = vld [vmem:[#allocation9 + $0xcc0] sm:$0xff]
    %v3920 = vld [vmem:[#allocation9 + $0xcc8] sm:$0xff]
    %v3921 = vld [vmem:[#allocation9 + $0xcd0] sm:$0xff]
    %v3922 = vld [vmem:[#allocation9 + $0xcd8] sm:$0xff]
    %v3923 = vld [vmem:[#allocation9 + $0xce0] sm:$0xff]
    %v3924 = vld [vmem:[#allocation9 + $0xce8] sm:$0xff]
    %v3925 = vld [vmem:[#allocation9 + $0xcf0] sm:$0xff]
    %v3926 = vld [vmem:[#allocation9 + $0xcf8] sm:$0xff]
    %v3927 = vld [vmem:[#allocation9 + $0xd00] sm:$0xff]
    %v3928 = vld [vmem:[#allocation9 + $0xd08] sm:$0xff]
    %v3929 = vld [vmem:[#allocation9 + $0xd10] sm:$0xff]
    %v3930 = vld [vmem:[#allocation9 + $0xd18] sm:$0xff]
    %v3931 = vld [vmem:[#allocation9 + $0xd20] sm:$0xff]
    %v3932 = vld [vmem:[#allocation9 + $0xd28] sm:$0xff]
    %v3933 = vld [vmem:[#allocation9 + $0xd30] sm:$0xff]
    %v3934 = vld [vmem:[#allocation9 + $0xd38] sm:$0xff]
    %v3935 = vld [vmem:[#allocation9 + $0xd40] sm:$0xff]
    %v3936 = vld [vmem:[#allocation9 + $0xd48] sm:$0xff]
    %v3937 = vld [vmem:[#allocation9 + $0xd50] sm:$0xff]
    %v3938 = vld [vmem:[#allocation9 + $0xd58] sm:$0xff]
    %v3939 = vld [vmem:[#allocation9 + $0xd60] sm:$0xff]
    %v3940 = vld [vmem:[#allocation9 + $0xd68] sm:$0xff]
    %v3941 = vld [vmem:[#allocation9 + $0xd70] sm:$0xff]
    %v3942 = vld [vmem:[#allocation9 + $0xd78] sm:$0xff]
    %v3943 = vld [vmem:[#allocation9 + $0xd80] sm:$0xff]
    %v3944 = vld [vmem:[#allocation9 + $0xd88] sm:$0xff]
    %v3945 = vld [vmem:[#allocation9 + $0xd90] sm:$0xff]
    %v3946 = vld [vmem:[#allocation9 + $0xd98] sm:$0xff]
    %v3947 = vld [vmem:[#allocation9 + $0xda0] sm:$0xff]
    %v3948 = vld [vmem:[#allocation9 + $0xda8] sm:$0xff]
    %v3949 = vld [vmem:[#allocation9 + $0xdb0] sm:$0xff]
    %v3950 = vld [vmem:[#allocation9 + $0xdb8] sm:$0xff]
    %v3951 = vld [vmem:[#allocation9 + $0xdc0] sm:$0xff]
    %v3952 = vld [vmem:[#allocation9 + $0xdc8] sm:$0xff]
    %v3953 = vld [vmem:[#allocation9 + $0xdd0] sm:$0xff]
    %v3954 = vld [vmem:[#allocation9 + $0xdd8] sm:$0xff]
    %v3955 = vld [vmem:[#allocation9 + $0xde0] sm:$0xff]
    %v3956 = vld [vmem:[#allocation9 + $0xde8] sm:$0xff]
    %v3957 = vld [vmem:[#allocation9 + $0xdf0] sm:$0xff]
    %v3958 = vld [vmem:[#allocation9 + $0xdf8] sm:$0xff]
    %v3959 = vld [vmem:[#allocation9 + $0xe00] sm:$0xff]
    %v3960 = vld [vmem:[#allocation9 + $0xe08] sm:$0xff]
    %v3961 = vld [vmem:[#allocation9 + $0xe10] sm:$0xff]
    %v3962 = vld [vmem:[#allocation9 + $0xe18] sm:$0xff]
    %v3963 = vld [vmem:[#allocation9 + $0xe20] sm:$0xff]
    %v3964 = vld [vmem:[#allocation9 + $0xe28] sm:$0xff]
    %v3965 = vld [vmem:[#allocation9 + $0xe30] sm:$0xff]
    %v3966 = vld [vmem:[#allocation9 + $0xe38] sm:$0xff]
    %v3967 = vld [vmem:[#allocation9 + $0xe40] sm:$0xff]
    %v3968 = vld [vmem:[#allocation9 + $0xe48] sm:$0xff]
    %v3969 = vld [vmem:[#allocation9 + $0xe50] sm:$0xff]
    %v3970 = vld [vmem:[#allocation9 + $0xe58] sm:$0xff]
    %v3971 = vld [vmem:[#allocation9 + $0xe60] sm:$0xff]
    %v3972 = vld [vmem:[#allocation9 + $0xe68] sm:$0xff]
    %v3973 = vld [vmem:[#allocation9 + $0xe70] sm:$0xff]
    %v3974 = vld [vmem:[#allocation9 + $0xe78] sm:$0xff]
    %v3975 = vld [vmem:[#allocation9 + $0xe80] sm:$0xff]
    %v3976 = vld [vmem:[#allocation9 + $0xe88] sm:$0xff]
    %v3977 = vld [vmem:[#allocation9 + $0xe90] sm:$0xff]
    %v3978 = vld [vmem:[#allocation9 + $0xe98] sm:$0xff]
    %v3979 = vld [vmem:[#allocation9 + $0xea0] sm:$0xff]
    %v3980 = vld [vmem:[#allocation9 + $0xea8] sm:$0xff]
    %v3981 = vld [vmem:[#allocation9 + $0xeb0] sm:$0xff]
    %v3982 = vld [vmem:[#allocation9 + $0xeb8] sm:$0xff]
    %v3983 = vld [vmem:[#allocation9 + $0xec0] sm:$0xff]
    %v3984 = vld [vmem:[#allocation9 + $0xec8] sm:$0xff]
    %v3985 = vld [vmem:[#allocation9 + $0xed0] sm:$0xff]
    %v3986 = vld [vmem:[#allocation9 + $0xed8] sm:$0xff]
    %v3987 = vld [vmem:[#allocation9 + $0xee0] sm:$0xff]
    %v3988 = vld [vmem:[#allocation9 + $0xee8] sm:$0xff]
    %v3989 = vld [vmem:[#allocation9 + $0xef0] sm:$0xff]
    %v3990 = vld [vmem:[#allocation9 + $0xef8] sm:$0xff]
    %v3991 = vld [vmem:[#allocation9 + $0xf00] sm:$0xff]
    %v3992 = vld [vmem:[#allocation9 + $0xf08] sm:$0xff]
    %v3993 = vld [vmem:[#allocation9 + $0xf10] sm:$0xff]
    %v3994 = vld [vmem:[#allocation9 + $0xf18] sm:$0xff]
    %v3995 = vld [vmem:[#allocation9 + $0xf20] sm:$0xff]
    %v3996 = vld [vmem:[#allocation9 + $0xf28] sm:$0xff]
    %v3997 = vld [vmem:[#allocation9 + $0xf30] sm:$0xff]
    %v3998 = vld [vmem:[#allocation9 + $0xf38] sm:$0xff]
    %v3999 = vld [vmem:[#allocation9 + $0xf40] sm:$0xff]
    %v4000 = vld [vmem:[#allocation9 + $0xf48] sm:$0xff]
    %v4001 = vld [vmem:[#allocation9 + $0xf50] sm:$0xff]
    %v4002 = vld [vmem:[#allocation9 + $0xf58] sm:$0xff]
    %v4003 = vld [vmem:[#allocation9 + $0xf60] sm:$0xff]
    %v4004 = vld [vmem:[#allocation9 + $0xf68] sm:$0xff]
    %v4005 = vld [vmem:[#allocation9 + $0xf70] sm:$0xff]
    %v4006 = vld [vmem:[#allocation9 + $0xf78] sm:$0xff]
    %v4007 = vld [vmem:[#allocation9 + $0xf80] sm:$0xff]
    %v4008 = vld [vmem:[#allocation9 + $0xf88] sm:$0xff]
    %v4009 = vld [vmem:[#allocation9 + $0xf90] sm:$0xff]
    %v4010 = vld [vmem:[#allocation9 + $0xf98] sm:$0xff]
    %v4011 = vld [vmem:[#allocation9 + $0xfa0] sm:$0xff]
    %v4012 = vld [vmem:[#allocation9 + $0xfa8] sm:$0xff]
    %v4013 = vld [vmem:[#allocation9 + $0xfb0] sm:$0xff]
    %v4014 = vld [vmem:[#allocation9 + $0xfb8] sm:$0xff]
    %v4015 = vld [vmem:[#allocation9 + $0xfc0] sm:$0xff]
    %v4016 = vld [vmem:[#allocation9 + $0xfc8] sm:$0xff]
    %v4017 = vld [vmem:[#allocation9 + $0xfd0] sm:$0xff]
    %v4018 = vld [vmem:[#allocation9 + $0xfd8] sm:$0xff]
    %v4019 = vld [vmem:[#allocation9 + $0xfe0] sm:$0xff]
    %v4020 = vld [vmem:[#allocation9 + $0xfe8] sm:$0xff]
    %v4021 = vld [vmem:[#allocation9 + $0xff0] sm:$0xff]
    %v4022 = vld [vmem:[#allocation9 + $0xff8] sm:$0xff]
    %v4023 = vld [vmem:[#allocation9 + $0x1000] sm:$0xff]
    %v4024 = vld [vmem:[#allocation9 + $0x1008] sm:$0xff]
    %v4025 = vld [vmem:[#allocation9 + $0x1010] sm:$0xff]
    %v4026 = vld [vmem:[#allocation9 + $0x1018] sm:$0xff]
    %v4027 = vld [vmem:[#allocation9 + $0x1020] sm:$0xff]
    %v4028 = vld [vmem:[#allocation9 + $0x1028] sm:$0xff]
    %v4029 = vld [vmem:[#allocation9 + $0x1030] sm:$0xff]
    %v4030 = vld [vmem:[#allocation9 + $0x1038] sm:$0xff]
    %v4031 = vld [vmem:[#allocation9 + $0x1040] sm:$0xff]
    %v4032 = vld [vmem:[#allocation9 + $0x1048] sm:$0xff]
    %v4033 = vld [vmem:[#allocation9 + $0x1050] sm:$0xff]
    %v4034 = vld [vmem:[#allocation9 + $0x1058] sm:$0xff]
    %v4035 = vld [vmem:[#allocation9 + $0x1060] sm:$0xff]
    %v4036 = vld [vmem:[#allocation9 + $0x1068] sm:$0xff]
    %v4037 = vld [vmem:[#allocation9 + $0x1070] sm:$0xff]
    %v4038 = vld [vmem:[#allocation9 + $0x1078] sm:$0xff]
    %v4039 = vld [vmem:[#allocation9 + $0x1080] sm:$0xff]
    %v4040 = vld [vmem:[#allocation9 + $0x1088] sm:$0xff]
    %v4041 = vld [vmem:[#allocation9 + $0x1090] sm:$0xff]
    %v4042 = vld [vmem:[#allocation9 + $0x1098] sm:$0xff]
    %v4043 = vld [vmem:[#allocation9 + $0x10a0] sm:$0xff]
    %v4044 = vld [vmem:[#allocation9 + $0x10a8] sm:$0xff]
    %v4045 = vld [vmem:[#allocation9 + $0x10b0] sm:$0xff]
    %v4046 = vld [vmem:[#allocation9 + $0x10b8] sm:$0xff]
    %v4047 = vld [vmem:[#allocation9 + $0x10c0] sm:$0xff]
    %v4048 = vld [vmem:[#allocation9 + $0x10c8] sm:$0xff]
    %v4049 = vld [vmem:[#allocation9 + $0x10d0] sm:$0xff]
    %v4050 = vld [vmem:[#allocation9 + $0x10d8] sm:$0xff]
    %v4051 = vld [vmem:[#allocation9 + $0x10e0] sm:$0xff]
    %v4052 = vld [vmem:[#allocation9 + $0x10e8] sm:$0xff]
    %v4053 = vld [vmem:[#allocation9 + $0x10f0] sm:$0xff]
    %v4054 = vld [vmem:[#allocation9 + $0x10f8] sm:$0xff]
    %v4055 = vld [vmem:[#allocation9 + $0x1100] sm:$0xff]
    %v4056 = vld [vmem:[#allocation9 + $0x1108] sm:$0xff]
    %v4057 = vld [vmem:[#allocation9 + $0x1110] sm:$0xff]
    %v4058 = vld [vmem:[#allocation9 + $0x1118] sm:$0xff]
    %v4059 = vld [vmem:[#allocation9 + $0x1120] sm:$0xff]
    %v4060 = vld [vmem:[#allocation9 + $0x1128] sm:$0xff]
    %v4061 = vld [vmem:[#allocation9 + $0x1130] sm:$0xff]
    %v4062 = vld [vmem:[#allocation9 + $0x1138] sm:$0xff]
    %v4063 = vld [vmem:[#allocation9 + $0x1140] sm:$0xff]
    %v4064 = vld [vmem:[#allocation9 + $0x1148] sm:$0xff]
    %v4065 = vld [vmem:[#allocation9 + $0x1150] sm:$0xff]
    %v4066 = vld [vmem:[#allocation9 + $0x1158] sm:$0xff]
    %v4067 = vld [vmem:[#allocation9 + $0x1160] sm:$0xff]
    %v4068 = vld [vmem:[#allocation9 + $0x1168] sm:$0xff]
    %v4069 = vld [vmem:[#allocation9 + $0x1170] sm:$0xff]
    %v4070 = vld [vmem:[#allocation9 + $0x1178] sm:$0xff]
    %v4071 = vld [vmem:[#allocation9 + $0x1180] sm:$0xff]
    %v4072 = vld [vmem:[#allocation9 + $0x1188] sm:$0xff]
    %v4073 = vld [vmem:[#allocation9 + $0x1190] sm:$0xff]
    %v4074 = vld [vmem:[#allocation9 + $0x1198] sm:$0xff]
    %v4075 = vld [vmem:[#allocation9 + $0x11a0] sm:$0xff]
    %v4076 = vld [vmem:[#allocation9 + $0x11a8] sm:$0xff]
    %v4077 = vld [vmem:[#allocation9 + $0x11b0] sm:$0xff]
    %v4078 = vld [vmem:[#allocation9 + $0x11b8] sm:$0xff]
    %v4079 = vld [vmem:[#allocation9 + $0x11c0] sm:$0xff]
    %v4080 = vld [vmem:[#allocation9 + $0x11c8] sm:$0xff]
    %v4081 = vld [vmem:[#allocation9 + $0x11d0] sm:$0xff]
    %v4082 = vld [vmem:[#allocation9 + $0x11d8] sm:$0xff]
    %v4083 = vld [vmem:[#allocation9 + $0x11e0] sm:$0xff]
    %v4084 = vld [vmem:[#allocation9 + $0x11e8] sm:$0xff]
    %v4085 = vld [vmem:[#allocation9 + $0x11f0] sm:$0xff]
    %v4086 = vld [vmem:[#allocation9 + $0x11f8] sm:$0xff]
    %v4087 = vld [vmem:[#allocation9 + $0x1200] sm:$0xff]
    %v4088 = vld [vmem:[#allocation9 + $0x1208] sm:$0xff]
    %v4089 = vld [vmem:[#allocation9 + $0x1210] sm:$0xff]
    %v4090 = vld [vmem:[#allocation9 + $0x1218] sm:$0xff]
    %v4091 = vld [vmem:[#allocation9 + $0x1220] sm:$0xff]
    %v4092 = vld [vmem:[#allocation9 + $0x1228] sm:$0xff]
    %v4093 = vld [vmem:[#allocation9 + $0x1230] sm:$0xff]
    %v4094 = vld [vmem:[#allocation9 + $0x1238] sm:$0xff]
    %v4095 = vld [vmem:[#allocation9 + $0x1240] sm:$0xff]
    %v4096 = vld [vmem:[#allocation9 + $0x1248] sm:$0xff]
    %v4097 = vld [vmem:[#allocation9 + $0x1250] sm:$0xff]
    %v4098 = vld [vmem:[#allocation9 + $0x1258] sm:$0xff]
    %v4099 = vld [vmem:[#allocation9 + $0x1260] sm:$0xff]
    %v4100 = vld [vmem:[#allocation9 + $0x1268] sm:$0xff]
    %v4101 = vld [vmem:[#allocation9 + $0x1270] sm:$0xff]
    %v4102 = vld [vmem:[#allocation9 + $0x1278] sm:$0xff]
    %v4103 = vld [vmem:[#allocation9 + $0x1280] sm:$0xff]
    %v4104 = vld [vmem:[#allocation9 + $0x1288] sm:$0xff]
    %v4105 = vld [vmem:[#allocation9 + $0x1290] sm:$0xff]
    %v4106 = vld [vmem:[#allocation9 + $0x1298] sm:$0xff]
    %v4107 = vld [vmem:[#allocation9 + $0x12a0] sm:$0xff]
    %v4108 = vld [vmem:[#allocation9 + $0x12a8] sm:$0xff]
    %v4109 = vld [vmem:[#allocation9 + $0x12b0] sm:$0xff]
    %v4110 = vld [vmem:[#allocation9 + $0x12b8] sm:$0xff]
    %v4111 = vld [vmem:[#allocation9 + $0x12c0] sm:$0xff]
    %v4112 = vld [vmem:[#allocation9 + $0x12c8] sm:$0xff]
    %v4113 = vld [vmem:[#allocation9 + $0x12d0] sm:$0xff]
    %v4114 = vld [vmem:[#allocation9 + $0x12d8] sm:$0xff]
    %v4115 = vld [vmem:[#allocation9 + $0x12e0] sm:$0xff]
    %v4116 = vld [vmem:[#allocation9 + $0x12e8] sm:$0xff]
    %v4117 = vld [vmem:[#allocation9 + $0x12f0] sm:$0xff]
    %v4118 = vld [vmem:[#allocation9 + $0x12f8] sm:$0xff]
    %v4119 = vld [vmem:[#allocation9 + $0x1300] sm:$0xff]
    %v4120 = vld [vmem:[#allocation9 + $0x1308] sm:$0xff]
    %v4121 = vld [vmem:[#allocation9 + $0x1310] sm:$0xff]
    %v4122 = vld [vmem:[#allocation9 + $0x1318] sm:$0xff]
    %v4123 = vld [vmem:[#allocation9 + $0x1320] sm:$0xff]
    %v4124 = vld [vmem:[#allocation9 + $0x1328] sm:$0xff]
    %v4125 = vld [vmem:[#allocation9 + $0x1330] sm:$0xff]
    %v4126 = vld [vmem:[#allocation9 + $0x1338] sm:$0xff]
    %v4127 = vld [vmem:[#allocation9 + $0x1340] sm:$0xff]
    %v4128 = vld [vmem:[#allocation9 + $0x1348] sm:$0xff]
    %v4129 = vld [vmem:[#allocation9 + $0x1350] sm:$0xff]
    %v4130 = vld [vmem:[#allocation9 + $0x1358] sm:$0xff]
    %v4131 = vld [vmem:[#allocation9 + $0x1360] sm:$0xff]
    %v4132 = vld [vmem:[#allocation9 + $0x1368] sm:$0xff]
    %v4133 = vld [vmem:[#allocation9 + $0x1370] sm:$0xff]
    %v4134 = vld [vmem:[#allocation9 + $0x1378] sm:$0xff]
    %v4135 = vld [vmem:[#allocation9 + $0x1380] sm:$0xff]
    %v4136 = vld [vmem:[#allocation9 + $0x1388] sm:$0xff]
    %v4137 = vld [vmem:[#allocation9 + $0x1390] sm:$0xff]
    %v4138 = vld [vmem:[#allocation9 + $0x1398] sm:$0xff]
    %v4139 = vld [vmem:[#allocation9 + $0x13a0] sm:$0xff]
    %v4140 = vld [vmem:[#allocation9 + $0x13a8] sm:$0xff]
    %v4141 = vld [vmem:[#allocation9 + $0x13b0] sm:$0xff]
    %v4142 = vld [vmem:[#allocation9 + $0x13b8] sm:$0xff]
    %v4143 = vld [vmem:[#allocation9 + $0x13c0] sm:$0xff]
    %v4144 = vld [vmem:[#allocation9 + $0x13c8] sm:$0xff]
    %v4145 = vld [vmem:[#allocation9 + $0x13d0] sm:$0xff]
    %v4146 = vld [vmem:[#allocation9 + $0x13d8] sm:$0xff]
    %v4147 = vld [vmem:[#allocation9 + $0x13e0] sm:$0xff]
    %v4148 = vld [vmem:[#allocation9 + $0x13e8] sm:$0xff]
    %v4149 = vld [vmem:[#allocation9 + $0x13f0] sm:$0xff]
    %v4150 = vld [vmem:[#allocation9 + $0x13f8] sm:$0xff]
    %v4151 = vld [vmem:[#allocation9 + $0x1400] sm:$0xff]
    %v4152 = vld [vmem:[#allocation9 + $0x1408] sm:$0xff]
    %v4153 = vld [vmem:[#allocation9 + $0x1410] sm:$0xff]
    %v4154 = vld [vmem:[#allocation9 + $0x1418] sm:$0xff]
    %v4155 = vld [vmem:[#allocation9 + $0x1420] sm:$0xff]
    %v4156 = vld [vmem:[#allocation9 + $0x1428] sm:$0xff]
    %v4157 = vld [vmem:[#allocation9 + $0x1430] sm:$0xff]
    %v4158 = vld [vmem:[#allocation9 + $0x1438] sm:$0xff]
    %v4159 = vld [vmem:[#allocation9 + $0x1440] sm:$0xff]
    %v4160 = vld [vmem:[#allocation9 + $0x1448] sm:$0xff]
    %v4161 = vld [vmem:[#allocation9 + $0x1450] sm:$0xff]
    %v4162 = vld [vmem:[#allocation9 + $0x1458] sm:$0xff]
    %v4163 = vld [vmem:[#allocation9 + $0x1460] sm:$0xff]
    %v4164 = vld [vmem:[#allocation9 + $0x1468] sm:$0xff]
    %v4165 = vld [vmem:[#allocation9 + $0x1470] sm:$0xff]
    %v4166 = vld [vmem:[#allocation9 + $0x1478] sm:$0xff]
    %v4167 = vld [vmem:[#allocation9 + $0x1480] sm:$0xff]
    %v4168 = vld [vmem:[#allocation9 + $0x1488] sm:$0xff]
    %v4169 = vld [vmem:[#allocation9 + $0x1490] sm:$0xff]
    %v4170 = vld [vmem:[#allocation9 + $0x1498] sm:$0xff]
    %v4171 = vld [vmem:[#allocation9 + $0x14a0] sm:$0xff]
    %v4172 = vld [vmem:[#allocation9 + $0x14a8] sm:$0xff]
    %v4173 = vld [vmem:[#allocation9 + $0x14b0] sm:$0xff]
    %v4174 = vld [vmem:[#allocation9 + $0x14b8] sm:$0xff]
    %v4175 = vld [vmem:[#allocation9 + $0x14c0] sm:$0xff]
    %v4176 = vld [vmem:[#allocation9 + $0x14c8] sm:$0xff]
    %v4177 = vld [vmem:[#allocation9 + $0x14d0] sm:$0xff]
    %v4178 = vld [vmem:[#allocation9 + $0x14d8] sm:$0xff]
    %v4179 = vld [vmem:[#allocation9 + $0x14e0] sm:$0xff]
    %v4180 = vld [vmem:[#allocation9 + $0x14e8] sm:$0xff]
    %v4181 = vld [vmem:[#allocation9 + $0x14f0] sm:$0xff]
    %v4182 = vld [vmem:[#allocation9 + $0x14f8] sm:$0xff]
    %v4183 = vld [vmem:[#allocation9 + $0x1500] sm:$0xff]
    %v4184 = vld [vmem:[#allocation9 + $0x1508] sm:$0xff]
    %v4185 = vld [vmem:[#allocation9 + $0x1510] sm:$0xff]
    %v4186 = vld [vmem:[#allocation9 + $0x1518] sm:$0xff]
    %v4187 = vld [vmem:[#allocation9 + $0x1520] sm:$0xff]
    %v4188 = vld [vmem:[#allocation9 + $0x1528] sm:$0xff]
    %v4189 = vld [vmem:[#allocation9 + $0x1530] sm:$0xff]
    %v4190 = vld [vmem:[#allocation9 + $0x1538] sm:$0xff]
    %v4191 = vld [vmem:[#allocation9 + $0x1540] sm:$0xff]
    %v4192 = vld [vmem:[#allocation9 + $0x1548] sm:$0xff]
    %v4193 = vld [vmem:[#allocation9 + $0x1550] sm:$0xff]
    %v4194 = vld [vmem:[#allocation9 + $0x1558] sm:$0xff]
    %v4195 = vld [vmem:[#allocation9 + $0x1560] sm:$0xff]
    %v4196 = vld [vmem:[#allocation9 + $0x1568] sm:$0xff]
    %v4197 = vld [vmem:[#allocation9 + $0x1570] sm:$0xff]
    %v4198 = vld [vmem:[#allocation9 + $0x1578] sm:$0xff]
    %v4199 = vld [vmem:[#allocation9 + $0x1580] sm:$0xff]
    %v4200 = vld [vmem:[#allocation9 + $0x1588] sm:$0xff]
    %v4201 = vld [vmem:[#allocation9 + $0x1590] sm:$0xff]
    %v4202 = vld [vmem:[#allocation9 + $0x1598] sm:$0xff]
    %v4203 = vld [vmem:[#allocation9 + $0x15a0] sm:$0xff]
    %v4204 = vld [vmem:[#allocation9 + $0x15a8] sm:$0xff]
    %v4205 = vld [vmem:[#allocation9 + $0x15b0] sm:$0xff]
    %v4206 = vld [vmem:[#allocation9 + $0x15b8] sm:$0xff]
    %v4207 = vld [vmem:[#allocation9 + $0x15c0] sm:$0xff]
    %v4208 = vld [vmem:[#allocation9 + $0x15c8] sm:$0xff]
    %v4209 = vld [vmem:[#allocation9 + $0x15d0] sm:$0xff]
    %v4210 = vld [vmem:[#allocation9 + $0x15d8] sm:$0xff]
    %v4211 = vld [vmem:[#allocation9 + $0x15e0] sm:$0xff]
    %v4212 = vld [vmem:[#allocation9 + $0x15e8] sm:$0xff]
    %v4213 = vld [vmem:[#allocation9 + $0x15f0] sm:$0xff]
    %v4214 = vld [vmem:[#allocation9 + $0x15f8] sm:$0xff]
    %v4215 = vld [vmem:[#allocation9 + $0x1600] sm:$0xff]
    %v4216 = vld [vmem:[#allocation9 + $0x1608] sm:$0xff]
    %v4217 = vld [vmem:[#allocation9 + $0x1610] sm:$0xff]
    %v4218 = vld [vmem:[#allocation9 + $0x1618] sm:$0xff]
    %v4219 = vld [vmem:[#allocation9 + $0x1620] sm:$0xff]
    %v4220 = vld [vmem:[#allocation9 + $0x1628] sm:$0xff]
    %v4221 = vld [vmem:[#allocation9 + $0x1630] sm:$0xff]
    %v4222 = vld [vmem:[#allocation9 + $0x1638] sm:$0xff]
    %v4223 = vld [vmem:[#allocation9 + $0x1640] sm:$0xff]
    %v4224 = vld [vmem:[#allocation9 + $0x1648] sm:$0xff]
    %v4225 = vld [vmem:[#allocation9 + $0x1650] sm:$0xff]
    %v4226 = vld [vmem:[#allocation9 + $0x1658] sm:$0xff]
    %v4227 = vld [vmem:[#allocation9 + $0x1660] sm:$0xff]
    %v4228 = vld [vmem:[#allocation9 + $0x1668] sm:$0xff]
    %v4229 = vld [vmem:[#allocation9 + $0x1670] sm:$0xff]
    %v4230 = vld [vmem:[#allocation9 + $0x1678] sm:$0xff]
    %v4231 = vld [vmem:[#allocation9 + $0x1680] sm:$0xff]
    %v4232 = vld [vmem:[#allocation9 + $0x1688] sm:$0xff]
    %v4233 = vld [vmem:[#allocation9 + $0x1690] sm:$0xff]
    %v4234 = vld [vmem:[#allocation9 + $0x1698] sm:$0xff]
    %v4235 = vld [vmem:[#allocation9 + $0x16a0] sm:$0xff]
    %v4236 = vld [vmem:[#allocation9 + $0x16a8] sm:$0xff]
    %v4237 = vld [vmem:[#allocation9 + $0x16b0] sm:$0xff]
    %v4238 = vld [vmem:[#allocation9 + $0x16b8] sm:$0xff]
    %v4239 = vld [vmem:[#allocation9 + $0x16c0] sm:$0xff]
    %v4240 = vld [vmem:[#allocation9 + $0x16c8] sm:$0xff]
    %v4241 = vld [vmem:[#allocation9 + $0x16d0] sm:$0xff]
    %v4242 = vld [vmem:[#allocation9 + $0x16d8] sm:$0xff]
    %v4243 = vld [vmem:[#allocation9 + $0x16e0] sm:$0xff]
    %v4244 = vld [vmem:[#allocation9 + $0x16e8] sm:$0xff]
    %v4245 = vld [vmem:[#allocation9 + $0x16f0] sm:$0xff]
    %v4246 = vld [vmem:[#allocation9 + $0x16f8] sm:$0xff]
    %v4247 = vld [vmem:[#allocation9 + $0x1700] sm:$0xff]
    %v4248 = vld [vmem:[#allocation9 + $0x1708] sm:$0xff]
    %v4249 = vld [vmem:[#allocation9 + $0x1710] sm:$0xff]
    %v4250 = vld [vmem:[#allocation9 + $0x1718] sm:$0xff]
    %v4251 = vld [vmem:[#allocation9 + $0x1720] sm:$0xff]
    %v4252 = vld [vmem:[#allocation9 + $0x1728] sm:$0xff]
    %v4253 = vld [vmem:[#allocation9 + $0x1730] sm:$0xff]
    %v4254 = vld [vmem:[#allocation9 + $0x1738] sm:$0xff]
    %v4255 = vld [vmem:[#allocation9 + $0x1740] sm:$0xff]
    %v4256 = vld [vmem:[#allocation9 + $0x1748] sm:$0xff]
    %v4257 = vld [vmem:[#allocation9 + $0x1750] sm:$0xff]
    %v4258 = vld [vmem:[#allocation9 + $0x1758] sm:$0xff]
    %v4259 = vld [vmem:[#allocation9 + $0x1760] sm:$0xff]
    %v4260 = vld [vmem:[#allocation9 + $0x1768] sm:$0xff]
    %v4261 = vld [vmem:[#allocation9 + $0x1770] sm:$0xff]
    %v4262 = vld [vmem:[#allocation9 + $0x1778] sm:$0xff]
    %v4263 = vld [vmem:[#allocation9 + $0x1780] sm:$0xff]
    %v4264 = vld [vmem:[#allocation9 + $0x1788] sm:$0xff]
    %v4265 = vld [vmem:[#allocation9 + $0x1790] sm:$0xff]
    %v4266 = vld [vmem:[#allocation9 + $0x1798] sm:$0xff]
    %v4267 = vld [vmem:[#allocation9 + $0x17a0] sm:$0xff]
    %v4268 = vld [vmem:[#allocation9 + $0x17a8] sm:$0xff]
    %v4269 = vld [vmem:[#allocation9 + $0x17b0] sm:$0xff]
    %v4270 = vld [vmem:[#allocation9 + $0x17b8] sm:$0xff]
    %v4271 = vld [vmem:[#allocation9 + $0x17c0] sm:$0xff]
    %v4272 = vld [vmem:[#allocation9 + $0x17c8] sm:$0xff]
    %v4273 = vld [vmem:[#allocation9 + $0x17d0] sm:$0xff]
    %v4274 = vld [vmem:[#allocation9 + $0x17d8] sm:$0xff]
    %v4275 = vld [vmem:[#allocation9 + $0x17e0] sm:$0xff]
    %v4276 = vld [vmem:[#allocation9 + $0x17e8] sm:$0xff]
    %v4277 = vld [vmem:[#allocation9 + $0x17f0] sm:$0xff]
    %v4278 = vld [vmem:[#allocation9 + $0x17f8] sm:$0xff]
    %v4279 = vld [vmem:[#allocation9 + $0x1800] sm:$0xff]
    %v4280 = vld [vmem:[#allocation9 + $0x1808] sm:$0xff]
    %v4281 = vld [vmem:[#allocation9 + $0x1810] sm:$0xff]
    %v4282 = vld [vmem:[#allocation9 + $0x1818] sm:$0xff]
    %v4283 = vld [vmem:[#allocation9 + $0x1820] sm:$0xff]
    %v4284 = vld [vmem:[#allocation9 + $0x1828] sm:$0xff]
    %v4285 = vld [vmem:[#allocation9 + $0x1830] sm:$0xff]
    %v4286 = vld [vmem:[#allocation9 + $0x1838] sm:$0xff]
    %v4287 = vld [vmem:[#allocation9 + $0x1840] sm:$0xff]
    %v4288 = vld [vmem:[#allocation9 + $0x1848] sm:$0xff]
    %v4289 = vld [vmem:[#allocation9 + $0x1850] sm:$0xff]
    %v4290 = vld [vmem:[#allocation9 + $0x1858] sm:$0xff]
    %v4291 = vld [vmem:[#allocation9 + $0x1860] sm:$0xff]
    %v4292 = vld [vmem:[#allocation9 + $0x1868] sm:$0xff]
    %v4293 = vld [vmem:[#allocation9 + $0x1870] sm:$0xff]
    %v4294 = vld [vmem:[#allocation9 + $0x1878] sm:$0xff]
    %v4295 = vld [vmem:[#allocation9 + $0x1880] sm:$0xff]
    %v4296 = vld [vmem:[#allocation9 + $0x1888] sm:$0xff]
    %v4297 = vld [vmem:[#allocation9 + $0x1890] sm:$0xff]
    %v4298 = vld [vmem:[#allocation9 + $0x1898] sm:$0xff]
    %v4299 = vld [vmem:[#allocation9 + $0x18a0] sm:$0xff]
    %v4300 = vld [vmem:[#allocation9 + $0x18a8] sm:$0xff]
    %v4301 = vld [vmem:[#allocation9 + $0x18b0] sm:$0xff]
    %v4302 = vld [vmem:[#allocation9 + $0x18b8] sm:$0xff]
    %v4303 = vld [vmem:[#allocation9 + $0x18c0] sm:$0xff]
    %v4304 = vld [vmem:[#allocation9 + $0x18c8] sm:$0xff]
    %v4305 = vld [vmem:[#allocation9 + $0x18d0] sm:$0xff]
    %v4306 = vld [vmem:[#allocation9 + $0x18d8] sm:$0xff]
    %v4307 = vld [vmem:[#allocation9 + $0x18e0] sm:$0xff]
    %v4308 = vld [vmem:[#allocation9 + $0x18e8] sm:$0xff]
    %v4309 = vld [vmem:[#allocation9 + $0x18f0] sm:$0xff]
    %v4310 = vld [vmem:[#allocation9 + $0x18f8] sm:$0xff]
    %v4311 = vld [vmem:[#allocation9 + $0x1900] sm:$0xff]
    %v4312 = vld [vmem:[#allocation9 + $0x1908] sm:$0xff]
    %v4313 = vld [vmem:[#allocation9 + $0x1910] sm:$0xff]
    %v4314 = vld [vmem:[#allocation9 + $0x1918] sm:$0xff]
    %v4315 = vld [vmem:[#allocation9 + $0x1920] sm:$0xff]
    %v4316 = vld [vmem:[#allocation9 + $0x1928] sm:$0xff]
    %v4317 = vld [vmem:[#allocation9 + $0x1930] sm:$0xff]
    %v4318 = vld [vmem:[#allocation9 + $0x1938] sm:$0xff]
    %v4319 = vld [vmem:[#allocation9 + $0x1940] sm:$0xff]
    %v4320 = vld [vmem:[#allocation9 + $0x1948] sm:$0xff]
    %v4321 = vld [vmem:[#allocation9 + $0x1950] sm:$0xff]
    %v4322 = vld [vmem:[#allocation9 + $0x1958] sm:$0xff]
    %v4323 = vld [vmem:[#allocation9 + $0x1960] sm:$0xff]
    %v4324 = vld [vmem:[#allocation9 + $0x1968] sm:$0xff]
    %v4325 = vld [vmem:[#allocation9 + $0x1970] sm:$0xff]
    %v4326 = vld [vmem:[#allocation9 + $0x1978] sm:$0xff]
    %v4327 = vld [vmem:[#allocation9 + $0x1980] sm:$0xff]
    %v4328 = vld [vmem:[#allocation9 + $0x1988] sm:$0xff]
    %v4329 = vld [vmem:[#allocation9 + $0x1990] sm:$0xff]
    %v4330 = vld [vmem:[#allocation9 + $0x1998] sm:$0xff]
    %v4331 = vld [vmem:[#allocation9 + $0x19a0] sm:$0xff]
    %v4332 = vld [vmem:[#allocation9 + $0x19a8] sm:$0xff]
    %v4333 = vld [vmem:[#allocation9 + $0x19b0] sm:$0xff]
    %v4334 = vld [vmem:[#allocation9 + $0x19b8] sm:$0xff]
    %v4335 = vld [vmem:[#allocation9 + $0x19c0] sm:$0xff]
    %v4336 = vld [vmem:[#allocation9 + $0x19c8] sm:$0xff]
    %v4337 = vld [vmem:[#allocation9 + $0x19d0] sm:$0xff]
    %v4338 = vld [vmem:[#allocation9 + $0x19d8] sm:$0xff]
    %v4339 = vld [vmem:[#allocation9 + $0x19e0] sm:$0xff]
    %v4340 = vld [vmem:[#allocation9 + $0x19e8] sm:$0xff]
    %v4341 = vld [vmem:[#allocation9 + $0x19f0] sm:$0xff]
    %v4342 = vld [vmem:[#allocation9 + $0x19f8] sm:$0xff]
    %v4343 = vld [vmem:[#allocation9 + $0x1a00] sm:$0xff]
    %v4344 = vld [vmem:[#allocation9 + $0x1a08] sm:$0xff]
    %v4345 = vld [vmem:[#allocation9 + $0x1a10] sm:$0xff]
    %v4346 = vld [vmem:[#allocation9 + $0x1a18] sm:$0xff]
    %v4347 = vld [vmem:[#allocation9 + $0x1a20] sm:$0xff]
    %v4348 = vld [vmem:[#allocation9 + $0x1a28] sm:$0xff]
    %v4349 = vld [vmem:[#allocation9 + $0x1a30] sm:$0xff]
    %v4350 = vld [vmem:[#allocation9 + $0x1a38] sm:$0xff]
    %v4351 = vld [vmem:[#allocation9 + $0x1a40] sm:$0xff]
    %v4352 = vld [vmem:[#allocation9 + $0x1a48] sm:$0xff]
    %v4353 = vld [vmem:[#allocation9 + $0x1a50] sm:$0xff]
    %v4354 = vld [vmem:[#allocation9 + $0x1a58] sm:$0xff]
    %v4355 = vld [vmem:[#allocation9 + $0x1a60] sm:$0xff]
    %v4356 = vld [vmem:[#allocation9 + $0x1a68] sm:$0xff]
    %v4357 = vld [vmem:[#allocation9 + $0x1a70] sm:$0xff]
    %v4358 = vld [vmem:[#allocation9 + $0x1a78] sm:$0xff]
    %v4359 = vld [vmem:[#allocation9 + $0x1a80] sm:$0xff]
    %v4360 = vld [vmem:[#allocation9 + $0x1a88] sm:$0xff]
    %v4361 = vld [vmem:[#allocation9 + $0x1a90] sm:$0xff]
    %v4362 = vld [vmem:[#allocation9 + $0x1a98] sm:$0xff]
    %v4363 = vld [vmem:[#allocation9 + $0x1aa0] sm:$0xff]
    %v4364 = vld [vmem:[#allocation9 + $0x1aa8] sm:$0xff]
    %v4365 = vld [vmem:[#allocation9 + $0x1ab0] sm:$0xff]
    %v4366 = vld [vmem:[#allocation9 + $0x1ab8] sm:$0xff]
    %v4367 = vld [vmem:[#allocation9 + $0x1ac0] sm:$0xff]
    %v4368 = vld [vmem:[#allocation9 + $0x1ac8] sm:$0xff]
    %v4369 = vld [vmem:[#allocation9 + $0x1ad0] sm:$0xff]
    %v4370 = vld [vmem:[#allocation9 + $0x1ad8] sm:$0xff]
    %v4371 = vld [vmem:[#allocation9 + $0x1ae0] sm:$0xff]
    %v4372 = vld [vmem:[#allocation9 + $0x1ae8] sm:$0xff]
    %v4373 = vld [vmem:[#allocation9 + $0x1af0] sm:$0xff]
    %v4374 = vld [vmem:[#allocation9 + $0x1af8] sm:$0xff]
    %v4375 = vld [vmem:[#allocation9 + $0x1b00] sm:$0xff]
    %v4376 = vld [vmem:[#allocation9 + $0x1b08] sm:$0xff]
    %v4377 = vld [vmem:[#allocation9 + $0x1b10] sm:$0xff]
    %v4378 = vld [vmem:[#allocation9 + $0x1b18] sm:$0xff]
    %v4379 = vld [vmem:[#allocation9 + $0x1b20] sm:$0xff]
    %v4380 = vld [vmem:[#allocation9 + $0x1b28] sm:$0xff]
    %v4381 = vld [vmem:[#allocation9 + $0x1b30] sm:$0xff]
    %v4382 = vld [vmem:[#allocation9 + $0x1b38] sm:$0xff]
    %v4383 = vld [vmem:[#allocation9 + $0x1b40] sm:$0xff]
    %v4384 = vld [vmem:[#allocation9 + $0x1b48] sm:$0xff]
    %v4385 = vld [vmem:[#allocation9 + $0x1b50] sm:$0xff]
    %v4386 = vld [vmem:[#allocation9 + $0x1b58] sm:$0xff]
    %v4387 = vld [vmem:[#allocation9 + $0x1b60] sm:$0xff]
    %v4388 = vld [vmem:[#allocation9 + $0x1b68] sm:$0xff]
    %v4389 = vld [vmem:[#allocation9 + $0x1b70] sm:$0xff]
    %v4390 = vld [vmem:[#allocation9 + $0x1b78] sm:$0xff]
    %v4391 = vld [vmem:[#allocation9 + $0x1b80] sm:$0xff]
    %v4392 = vld [vmem:[#allocation9 + $0x1b88] sm:$0xff]
    %v4393 = vld [vmem:[#allocation9 + $0x1b90] sm:$0xff]
    %v4394 = vld [vmem:[#allocation9 + $0x1b98] sm:$0xff]
    %v4395 = vld [vmem:[#allocation9 + $0x1ba0] sm:$0xff]
    %v4396 = vld [vmem:[#allocation9 + $0x1ba8] sm:$0xff]
    %v4397 = vld [vmem:[#allocation9 + $0x1bb0] sm:$0xff]
    %v4398 = vld [vmem:[#allocation9 + $0x1bb8] sm:$0xff]
    %v4399 = vld [vmem:[#allocation9 + $0x1bc0] sm:$0xff]
    %v4400 = vld [vmem:[#allocation9 + $0x1bc8] sm:$0xff]
    %v4401 = vld [vmem:[#allocation9 + $0x1bd0] sm:$0xff]
    %v4402 = vld [vmem:[#allocation9 + $0x1bd8] sm:$0xff]
    %v4403 = vld [vmem:[#allocation9 + $0x1be0] sm:$0xff]
    %v4404 = vld [vmem:[#allocation9 + $0x1be8] sm:$0xff]
    %v4405 = vld [vmem:[#allocation9 + $0x1bf0] sm:$0xff]
    %v4406 = vld [vmem:[#allocation9 + $0x1bf8] sm:$0xff]
    %v4407 = vld [vmem:[#allocation9 + $0x1c00] sm:$0xff]
    %v4408 = vld [vmem:[#allocation9 + $0x1c08] sm:$0xff]
    %v4409 = vld [vmem:[#allocation9 + $0x1c10] sm:$0xff]
    %v4410 = vld [vmem:[#allocation9 + $0x1c18] sm:$0xff]
    %v4411 = vld [vmem:[#allocation9 + $0x1c20] sm:$0xff]
    %v4412 = vld [vmem:[#allocation9 + $0x1c28] sm:$0xff]
    %v4413 = vld [vmem:[#allocation9 + $0x1c30] sm:$0xff]
    %v4414 = vld [vmem:[#allocation9 + $0x1c38] sm:$0xff]
    %v4415 = vld [vmem:[#allocation9 + $0x1c40] sm:$0xff]
    %v4416 = vld [vmem:[#allocation9 + $0x1c48] sm:$0xff]
    %v4417 = vld [vmem:[#allocation9 + $0x1c50] sm:$0xff]
    %v4418 = vld [vmem:[#allocation9 + $0x1c58] sm:$0xff]
    %v4419 = vld [vmem:[#allocation9 + $0x1c60] sm:$0xff]
    %v4420 = vld [vmem:[#allocation9 + $0x1c68] sm:$0xff]
    %v4421 = vld [vmem:[#allocation9 + $0x1c70] sm:$0xff]
    %v4422 = vld [vmem:[#allocation9 + $0x1c78] sm:$0xff]
    %v4423 = vld [vmem:[#allocation9 + $0x1c80] sm:$0xff]
    %v4424 = vld [vmem:[#allocation9 + $0x1c88] sm:$0xff]
    %v4425 = vld [vmem:[#allocation9 + $0x1c90] sm:$0xff]
    %v4426 = vld [vmem:[#allocation9 + $0x1c98] sm:$0xff]
    %v4427 = vld [vmem:[#allocation9 + $0x1ca0] sm:$0xff]
    %v4428 = vld [vmem:[#allocation9 + $0x1ca8] sm:$0xff]
    %v4429 = vld [vmem:[#allocation9 + $0x1cb0] sm:$0xff]
    %v4430 = vld [vmem:[#allocation9 + $0x1cb8] sm:$0xff]
    %v4431 = vld [vmem:[#allocation9 + $0x1cc0] sm:$0xff]
    %v4432 = vld [vmem:[#allocation9 + $0x1cc8] sm:$0xff]
    %v4433 = vld [vmem:[#allocation9 + $0x1cd0] sm:$0xff]
    %v4434 = vld [vmem:[#allocation9 + $0x1cd8] sm:$0xff]
    %v4435 = vld [vmem:[#allocation9 + $0x1ce0] sm:$0xff]
    %v4436 = vld [vmem:[#allocation9 + $0x1ce8] sm:$0xff]
    %v4437 = vld [vmem:[#allocation9 + $0x1cf0] sm:$0xff]
    %v4438 = vld [vmem:[#allocation9 + $0x1cf8] sm:$0xff]
    %v4439 = vld [vmem:[#allocation9 + $0x1d00] sm:$0xff]
    %v4440 = vld [vmem:[#allocation9 + $0x1d08] sm:$0xff]
    %v4441 = vld [vmem:[#allocation9 + $0x1d10] sm:$0xff]
    %v4442 = vld [vmem:[#allocation9 + $0x1d18] sm:$0xff]
    %v4443 = vld [vmem:[#allocation9 + $0x1d20] sm:$0xff]
    %v4444 = vld [vmem:[#allocation9 + $0x1d28] sm:$0xff]
    %v4445 = vld [vmem:[#allocation9 + $0x1d30] sm:$0xff]
    %v4446 = vld [vmem:[#allocation9 + $0x1d38] sm:$0xff]
    %v4447 = vld [vmem:[#allocation9 + $0x1d40] sm:$0xff]
    %v4448 = vld [vmem:[#allocation9 + $0x1d48] sm:$0xff]
    %v4449 = vld [vmem:[#allocation9 + $0x1d50] sm:$0xff]
    %v4450 = vld [vmem:[#allocation9 + $0x1d58] sm:$0xff]
    %v4451 = vld [vmem:[#allocation9 + $0x1d60] sm:$0xff]
    %v4452 = vld [vmem:[#allocation9 + $0x1d68] sm:$0xff]
    %v4453 = vld [vmem:[#allocation9 + $0x1d70] sm:$0xff]
    %v4454 = vld [vmem:[#allocation9 + $0x1d78] sm:$0xff]
    %v4455 = vld [vmem:[#allocation9 + $0x1d80] sm:$0xff]
    %v4456 = vld [vmem:[#allocation9 + $0x1d88] sm:$0xff]
    %v4457 = vld [vmem:[#allocation9 + $0x1d90] sm:$0xff]
    %v4458 = vld [vmem:[#allocation9 + $0x1d98] sm:$0xff]
    %v4459 = vld [vmem:[#allocation9 + $0x1da0] sm:$0xff]
    %v4460 = vld [vmem:[#allocation9 + $0x1da8] sm:$0xff]
    %v4461 = vld [vmem:[#allocation9 + $0x1db0] sm:$0xff]
    %v4462 = vld [vmem:[#allocation9 + $0x1db8] sm:$0xff]
    %v4463 = vld [vmem:[#allocation9 + $0x1dc0] sm:$0xff]
    %v4464 = vld [vmem:[#allocation9 + $0x1dc8] sm:$0xff]
    %v4465 = vld [vmem:[#allocation9 + $0x1dd0] sm:$0xff]
    %v4466 = vld [vmem:[#allocation9 + $0x1dd8] sm:$0xff]
    %v4467 = vld [vmem:[#allocation9 + $0x1de0] sm:$0xff]
    %v4468 = vld [vmem:[#allocation9 + $0x1de8] sm:$0xff]
    %v4469 = vld [vmem:[#allocation9 + $0x1df0] sm:$0xff]
    %v4470 = vld [vmem:[#allocation9 + $0x1df8] sm:$0xff]
    %v4471 = vld [vmem:[#allocation9 + $0x1e00] sm:$0xff]
    %v4472 = vld [vmem:[#allocation9 + $0x1e08] sm:$0xff]
    %v4473 = vld [vmem:[#allocation9 + $0x1e10] sm:$0xff]
    %v4474 = vld [vmem:[#allocation9 + $0x1e18] sm:$0xff]
    %v4475 = vld [vmem:[#allocation9 + $0x1e20] sm:$0xff]
    %v4476 = vld [vmem:[#allocation9 + $0x1e28] sm:$0xff]
    %v4477 = vld [vmem:[#allocation9 + $0x1e30] sm:$0xff]
    %v4478 = vld [vmem:[#allocation9 + $0x1e38] sm:$0xff]
    %v4479 = vld [vmem:[#allocation9 + $0x1e40] sm:$0xff]
    %v4480 = vld [vmem:[#allocation9 + $0x1e48] sm:$0xff]
    %v4481 = vld [vmem:[#allocation9 + $0x1e50] sm:$0xff]
    %v4482 = vld [vmem:[#allocation9 + $0x1e58] sm:$0xff]
    %v4483 = vld [vmem:[#allocation9 + $0x1e60] sm:$0xff]
    %v4484 = vld [vmem:[#allocation9 + $0x1e68] sm:$0xff]
    %v4485 = vld [vmem:[#allocation9 + $0x1e70] sm:$0xff]
    %v4486 = vld [vmem:[#allocation9 + $0x1e78] sm:$0xff]
    %v4487 = vld [vmem:[#allocation9 + $0x1e80] sm:$0xff]
    %v4488 = vld [vmem:[#allocation9 + $0x1e88] sm:$0xff]
    %v4489 = vld [vmem:[#allocation9 + $0x1e90] sm:$0xff]
    %v4490 = vld [vmem:[#allocation9 + $0x1e98] sm:$0xff]
    %v4491 = vld [vmem:[#allocation9 + $0x1ea0] sm:$0xff]
    %v4492 = vld [vmem:[#allocation9 + $0x1ea8] sm:$0xff]
    %v4493 = vld [vmem:[#allocation9 + $0x1eb0] sm:$0xff]
    %v4494 = vld [vmem:[#allocation9 + $0x1eb8] sm:$0xff]
    %v4495 = vld [vmem:[#allocation9 + $0x1ec0] sm:$0xff]
    %v4496 = vld [vmem:[#allocation9 + $0x1ec8] sm:$0xff]
    %v4497 = vld [vmem:[#allocation9 + $0x1ed0] sm:$0xff]
    %v4498 = vld [vmem:[#allocation9 + $0x1ed8] sm:$0xff]
    %v4499 = vld [vmem:[#allocation9 + $0x1ee0] sm:$0xff]
    %v4500 = vld [vmem:[#allocation9 + $0x1ee8] sm:$0xff]
    %v4501 = vld [vmem:[#allocation9 + $0x1ef0] sm:$0xff]
    %v4502 = vld [vmem:[#allocation9 + $0x1ef8] sm:$0xff]
    %v4503 = vld [vmem:[#allocation9 + $0x1f00] sm:$0xff]
    %v4504 = vld [vmem:[#allocation9 + $0x1f08] sm:$0xff]
    %v4505 = vld [vmem:[#allocation9 + $0x1f10] sm:$0xff]
    %v4506 = vld [vmem:[#allocation9 + $0x1f18] sm:$0xff]
    %v4507 = vld [vmem:[#allocation9 + $0x1f20] sm:$0xff]
    %v4508 = vld [vmem:[#allocation9 + $0x1f28] sm:$0xff]
    %v4509 = vld [vmem:[#allocation9 + $0x1f30] sm:$0xff]
    %v4510 = vld [vmem:[#allocation9 + $0x1f38] sm:$0xff]
    %v4511 = vld [vmem:[#allocation9 + $0x1f40] sm:$0xff]
    %v4512 = vld [vmem:[#allocation9 + $0x1f48] sm:$0xff]
    %v4513 = vld [vmem:[#allocation9 + $0x1f50] sm:$0xff]
    %v4514 = vld [vmem:[#allocation9 + $0x1f58] sm:$0xff]
    %v4515 = vld [vmem:[#allocation9 + $0x1f60] sm:$0xff]
    %v4516 = vld [vmem:[#allocation9 + $0x1f68] sm:$0xff]
    %v4517 = vld [vmem:[#allocation9 + $0x1f70] sm:$0xff]
    %v4518 = vld [vmem:[#allocation9 + $0x1f78] sm:$0xff]
    %v4519 = vld [vmem:[#allocation9 + $0x1f80] sm:$0xff]
    %v4520 = vld [vmem:[#allocation9 + $0x1f88] sm:$0xff]
    %v4521 = vld [vmem:[#allocation9 + $0x1f90] sm:$0xff]
    %v4522 = vld [vmem:[#allocation9 + $0x1f98] sm:$0xff]
    %v4523 = vld [vmem:[#allocation9 + $0x1fa0] sm:$0xff]
    %v4524 = vld [vmem:[#allocation9 + $0x1fa8] sm:$0xff]
    %v4525 = vld [vmem:[#allocation9 + $0x1fb0] sm:$0xff]
    %v4526 = vld [vmem:[#allocation9 + $0x1fb8] sm:$0xff]
    %v4527 = vld [vmem:[#allocation9 + $0x1fc0] sm:$0xff]
    %v4528 = vld [vmem:[#allocation9 + $0x1fc8] sm:$0xff]
    %v4529 = vld [vmem:[#allocation9 + $0x1fd0] sm:$0xff]
    %v4530 = vld [vmem:[#allocation9 + $0x1fd8] sm:$0xff]
    %v4531 = vld [vmem:[#allocation9 + $0x1fe0] sm:$0xff]
    %v4532 = vld [vmem:[#allocation9 + $0x1fe8] sm:$0xff]
    %v4533 = vld [vmem:[#allocation9 + $0x1ff0] sm:$0xff]
    %v4534 = vld [vmem:[#allocation9 + $0x1ff8] sm:$0xff]
    %v4535 = vld [vmem:[#allocation10] sm:$0xff]
    %v4537 = vlaneseq
    %v4538 = vshrl.u32 %v4537, 7
    %v4539 = vsub.s32 0, %v4538
    %v4540 = vrot.slane %v4535, %v4539
    %v4541 = vlaneseq
    %v4542 = vshrl.u32 %v4541, 7
    %v4543 = vsub.s32 1, %v4542
    %v4544 = vrot.slane %v4535, %v4543
    %v4545 = vlaneseq
    %v4546 = vshrl.u32 %v4545, 7
    %v4547 = vsub.s32 2, %v4546
    %v4548 = vrot.slane %v4535, %v4547
    %v4549 = vlaneseq
    %v4550 = vshrl.u32 %v4549, 7
    %v4551 = vsub.s32 3, %v4550
    %v4552 = vrot.slane %v4535, %v4551
    %v4553 = vlaneseq
    %v4554 = vshrl.u32 %v4553, 7
    %v4555 = vsub.s32 4, %v4554
    %v4556 = vrot.slane %v4535, %v4555
    %v4557 = vlaneseq
    %v4558 = vshrl.u32 %v4557, 7
    %v4559 = vsub.s32 5, %v4558
    %v4560 = vrot.slane %v4535, %v4559
    %v4561 = vlaneseq
    %v4562 = vshrl.u32 %v4561, 7
    %v4563 = vsub.s32 6, %v4562
    %v4564 = vrot.slane %v4535, %v4563
    %v4565 = vlaneseq
    %v4566 = vshrl.u32 %v4565, 7
    %v4567 = vsub.s32 7, %v4566
    %v4568 = vrot.slane %v4535, %v4567
    %4577 = vmatprep.subr.mxu0 %v3512
    %4578 = vmatpush1.msra.mxu0 %v3511
    %4579 = vmatprep.subr.mxu0 %v3520
    %4580 = vmatpush1.msra.mxu0 %v3519
    %4581 = vmatprep.subr.mxu0 %v3528
    %4582 = vmatpush1.msra.mxu0 %v3527
    %4583 = vmatprep.subr.mxu0 %v3536
    %4584 = vmatpush1.msra.mxu0 %v3535
    %4585 = vmatprep.subr.mxu0 %v3544
    %4586 = vmatpush1.msra.mxu0 %v3543
    %4587 = vmatprep.subr.mxu0 %v3552
    %4588 = vmatpush1.msra.mxu0 %v3551
    %4589 = vmatprep.subr.mxu0 %v3560
    %4590 = vmatpush1.msra.mxu0 %v3559
    %4591 = vmatprep.subr.mxu0 %v3568
    %4592 = vmatpush1.msra.mxu0 %v3567
    %4593 = vmatprep.subr.mxu0 %v3576
    %4594 = vmatpush1.msra.mxu0 %v3575
    %4595 = vmatprep.subr.mxu0 %v3584
    %4596 = vmatpush1.msra.mxu0 %v3583
    %4597 = vmatprep.subr.mxu0 %v3592
    %4598 = vmatpush1.msra.mxu0 %v3591
    %4599 = vmatprep.subr.mxu0 %v3600
    %4600 = vmatpush1.msra.mxu0 %v3599
    %4601 = vmatprep.subr.mxu0 %v3608
    %4602 = vmatpush1.msra.mxu0 %v3607
    %4603 = vmatprep.subr.mxu0 %v3616
    %4604 = vmatpush1.msra.mxu0 %v3615
    %4605 = vmatprep.subr.mxu0 %v3624
    %4606 = vmatpush1.msra.mxu0 %v3623
    %4607 = vmatprep.subr.mxu0 %v3632
    %4608 = vmatpush1.msra.mxu0 %v3631
    %4609 = vmatprep.subr.mxu0 %v3640
    %4610 = vmatpush1.msra.mxu0 %v3639
    %4611 = vmatprep.subr.mxu0 %v3648
    %4612 = vmatpush1.msra.mxu0 %v3647
    %4613 = vmatprep.subr.mxu0 %v3656
    %4614 = vmatpush1.msra.mxu0 %v3655
    %4615 = vmatprep.subr.mxu0 %v3664
    %4616 = vmatpush1.msra.mxu0 %v3663
    %4617 = vmatprep.subr.mxu0 %v3672
    %4618 = vmatpush1.msra.mxu0 %v3671
    %4619 = vmatprep.subr.mxu0 %v3680
    %4620 = vmatpush1.msra.mxu0 %v3679
    %4621 = vmatprep.subr.mxu0 %v3688
    %4622 = vmatpush1.msra.mxu0 %v3687
    %4623 = vmatprep.subr.mxu0 %v3696
    %4624 = vmatpush1.msra.mxu0 %v3695
    %4625 = vmatprep.subr.mxu0 %v3704
    %4626 = vmatpush1.msra.mxu0 %v3703
    %4627 = vmatprep.subr.mxu0 %v3712
    %4628 = vmatpush1.msra.mxu0 %v3711
    %4629 = vmatprep.subr.mxu0 %v3720
    %4630 = vmatpush1.msra.mxu0 %v3719
    %4631 = vmatprep.subr.mxu0 %v3728
    %4632 = vmatpush1.msra.mxu0 %v3727
    %4633 = vmatprep.subr.mxu0 %v3736
    %4634 = vmatpush1.msra.mxu0 %v3735
    %4635 = vmatprep.subr.mxu0 %v3744
    %4636 = vmatpush1.msra.mxu0 %v3743
    %4637 = vmatprep.subr.mxu0 %v3752
    %4638 = vmatpush1.msra.mxu0 %v3751
    %4639 = vmatprep.subr.mxu0 %v3760
    %4640 = vmatpush1.msra.mxu0 %v3759
    %4641 = vmatprep.mubr.f32.mxu0 %v3496
    %4642 = vmatmul.mubr.f32.gmra.mrb[0].mxu0 %v3495
    %v4643 = vpop.f32.mrb[0].mxu0
    %v4644 = vadd.f32 %v4540, %v4643
    %v4645 = vpop.f32.mrb[0].mxu0
    %v4646 = vadd.f32 %v4544, %v4645
    %4647 = vmatprep.mubr.f32.mxu0 %v3504
    %4648 = vmatmul.mubr.f32.gmra.mrb[0].mxu0 %v3503
    %v4649 = vpop.f32.mrb[0].mxu0
    %v4650 = vadd.f32 %v4540, %v4649
    %v4651 = vpop.f32.mrb[0].mxu0
    %v4652 = vadd.f32 %v4544, %v4651
    %4653 = vdwg.mxu0
    %4654 = vmatprep.subr.mxu0 %v3768
    %4655 = vmatpush1.msra.mxu0 %v3767
    %4656 = vmatprep.subr.mxu0 %v3776
    %4657 = vmatpush1.msra.mxu0 %v3775
    %4658 = vmatprep.subr.mxu0 %v3784
    %4659 = vmatpush1.msra.mxu0 %v3783
    %4660 = vmatprep.subr.mxu0 %v3792
    %4661 = vmatpush1.msra.mxu0 %v3791
    %4662 = vmatprep.subr.mxu0 %v3800
    %4663 = vmatpush1.msra.mxu0 %v3799
    %4664 = vmatprep.subr.mxu0 %v3808
    %4665 = vmatpush1.msra.mxu0 %v3807
    %4666 = vmatprep.subr.mxu0 %v3816
    %4667 = vmatpush1.msra.mxu0 %v3815
    %4668 = vmatprep.subr.mxu0 %v3824
    %4669 = vmatpush1.msra.mxu0 %v3823
    %4670 = vmatprep.subr.mxu0 %v3832
    %4671 = vmatpush1.msra.mxu0 %v3831
    %4672 = vmatprep.subr.mxu0 %v3840
    %4673 = vmatpush1.msra.mxu0 %v3839
    %4674 = vmatprep.subr.mxu0 %v3848
    %4675 = vmatpush1.msra.mxu0 %v3847
    %4676 = vmatprep.subr.mxu0 %v3856
    %4677 = vmatpush1.msra.mxu0 %v3855
    %4678 = vmatprep.subr.mxu0 %v3864
    %4679 = vmatpush1.msra.mxu0 %v3863
    %4680 = vmatprep.subr.mxu0 %v3872
    %4681 = vmatpush1.msra.mxu0 %v3871
    %4682 = vmatprep.subr.mxu0 %v3880
    %4683 = vmatpush1.msra.mxu0 %v3879
    %4684 = vmatprep.subr.mxu0 %v3888
    %4685 = vmatpush1.msra.mxu0 %v3887
    %4686 = vmatprep.subr.mxu0 %v3896
    %4687 = vmatpush1.msra.mxu0 %v3895
    %4688 = vmatprep.subr.mxu0 %v3904
    %4689 = vmatpush1.msra.mxu0 %v3903
    %4690 = vmatprep.subr.mxu0 %v3912
    %4691 = vmatpush1.msra.mxu0 %v3911
    %4692 = vmatprep.subr.mxu0 %v3920
    %4693 = vmatpush1.msra.mxu0 %v3919
    %4694 = vmatprep.subr.mxu0 %v3928
    %4695 = vmatpush1.msra.mxu0 %v3927
    %4696 = vmatprep.subr.mxu0 %v3936
    %4697 = vmatpush1.msra.mxu0 %v3935
    %4698 = vmatprep.subr.mxu0 %v3944
    %4699 = vmatpush1.msra.mxu0 %v3943
    %4700 = vmatprep.subr.mxu0 %v3952
    %4701 = vmatpush1.msra.mxu0 %v3951
    %4702 = vmatprep.subr.mxu0 %v3960
    %4703 = vmatpush1.msra.mxu0 %v3959
    %4704 = vmatprep.subr.mxu0 %v3968
    %4705 = vmatpush1.msra.mxu0 %v3967
    %4706 = vmatprep.subr.mxu0 %v3976
    %4707 = vmatpush1.msra.mxu0 %v3975
    %4708 = vmatprep.subr.mxu0 %v3984
    %4709 = vmatpush1.msra.mxu0 %v3983
    %4710 = vmatprep.subr.mxu0 %v3992
    %4711 = vmatpush1.msra.mxu0 %v3991
    %4712 = vmatprep.subr.mxu0 %v4000
    %4713 = vmatpush1.msra.mxu0 %v3999
    %4714 = vmatprep.subr.mxu0 %v4008
    %4715 = vmatpush1.msra.mxu0 %v4007
    %4716 = vmatprep.subr.mxu0 %v4016
    %4717 = vmatpush1.msra.mxu0 %v4015
    %4718 = vmatprep.mubr.f32.mxu0 %v3498
    %4719 = vmatmul.mubr.f32.gmra.mrb[0].mxu0 %v3497
    %v4720 = vpop.f32.mrb[0].mxu0
    %v4721 = vadd.f32 %v4644, %v4720
    %v4722 = vpop.f32.mrb[0].mxu0
    %v4723 = vadd.f32 %v4646, %v4722
    %4724 = vmatprep.mubr.f32.mxu0 %v3506
    %4725 = vmatmul.mubr.f32.gmra.mrb[0].mxu0 %v3505
    %v4726 = vpop.f32.mrb[0].mxu0
    %v4727 = vadd.f32 %v4650, %v4726
    %v4728 = vpop.f32.mrb[0].mxu0
    %v4729 = vadd.f32 %v4652, %v4728
    %4730 = vdwg.mxu0
    %4731 = vmatprep.subr.mxu0 %v4024
    %4732 = vmatpush1.msra.mxu0 %v4023
    %4733 = vmatprep.subr.mxu0 %v4032
    %4734 = vmatpush1.msra.mxu0 %v4031
    %4735 = vmatprep.subr.mxu0 %v4040
    %4736 = vmatpush1.msra.mxu0 %v4039
    %4737 = vmatprep.subr.mxu0 %v4048
    %4738 = vmatpush1.msra.mxu0 %v4047
    %4739 = vmatprep.subr.mxu0 %v4056
    %4740 = vmatpush1.msra.mxu0 %v4055
    %4741 = vmatprep.subr.mxu0 %v4064
    %4742 = vmatpush1.msra.mxu0 %v4063
    %4743 = vmatprep.subr.mxu0 %v4072
    %4744 = vmatpush1.msra.mxu0 %v4071
    %4745 = vmatprep.subr.mxu0 %v4080
    %4746 = vmatpush1.msra.mxu0 %v4079
    %4747 = vmatprep.subr.mxu0 %v4088
    %4748 = vmatpush1.msra.mxu0 %v4087
    %4749 = vmatprep.subr.mxu0 %v4096
    %4750 = vmatpush1.msra.mxu0 %v4095
    %4751 = vmatprep.subr.mxu0 %v4104
    %4752 = vmatpush1.msra.mxu0 %v4103
    %4753 = vmatprep.subr.mxu0 %v4112
    %4754 = vmatpush1.msra.mxu0 %v4111
    %4755 = vmatprep.subr.mxu0 %v4120
    %4756 = vmatpush1.msra.mxu0 %v4119
    %4757 = vmatprep.subr.mxu0 %v4128
    %4758 = vmatpush1.msra.mxu0 %v4127
    %4759 = vmatprep.subr.mxu0 %v4136
    %4760 = vmatpush1.msra.mxu0 %v4135
    %4761 = vmatprep.subr.mxu0 %v4144
    %4762 = vmatpush1.msra.mxu0 %v4143
    %4763 = vmatprep.subr.mxu0 %v4152
    %4764 = vmatpush1.msra.mxu0 %v4151
    %4765 = vmatprep.subr.mxu0 %v4160
    %4766 = vmatpush1.msra.mxu0 %v4159
    %4767 = vmatprep.subr.mxu0 %v4168
    %4768 = vmatpush1.msra.mxu0 %v4167
    %4769 = vmatprep.subr.mxu0 %v4176
    %4770 = vmatpush1.msra.mxu0 %v4175
    %4771 = vmatprep.subr.mxu0 %v4184
    %4772 = vmatpush1.msra.mxu0 %v4183
    %4773 = vmatprep.subr.mxu0 %v4192
    %4774 = vmatpush1.msra.mxu0 %v4191
    %4775 = vmatprep.subr.mxu0 %v4200
    %4776 = vmatpush1.msra.mxu0 %v4199
    %4777 = vmatprep.subr.mxu0 %v4208
    %4778 = vmatpush1.msra.mxu0 %v4207
    %4779 = vmatprep.subr.mxu0 %v4216
    %4780 = vmatpush1.msra.mxu0 %v4215
    %4781 = vmatprep.subr.mxu0 %v4224
    %4782 = vmatpush1.msra.mxu0 %v4223
    %4783 = vmatprep.subr.mxu0 %v4232
    %4784 = vmatpush1.msra.mxu0 %v4231
    %4785 = vmatprep.subr.mxu0 %v4240
    %4786 = vmatpush1.msra.mxu0 %v4239
    %4787 = vmatprep.subr.mxu0 %v4248
    %4788 = vmatpush1.msra.mxu0 %v4247
    %4789 = vmatprep.subr.mxu0 %v4256
    %4790 = vmatpush1.msra.mxu0 %v4255
    %4791 = vmatprep.subr.mxu0 %v4264
    %4792 = vmatpush1.msra.mxu0 %v4263
    %4793 = vmatprep.subr.mxu0 %v4272
    %4794 = vmatpush1.msra.mxu0 %v4271
    %4795 = vmatprep.mubr.f32.mxu0 %v3500
    %4796 = vmatmul.mubr.f32.gmra.mrb[0].mxu0 %v3499
    %v4797 = vpop.f32.mrb[0].mxu0
    %v4798 = vadd.f32 %v4721, %v4797
    %v4799 = vpop.f32.mrb[0].mxu0
    %v4800 = vadd.f32 %v4723, %v4799
    %4801 = vmatprep.mubr.f32.mxu0 %v3508
    %4802 = vmatmul.mubr.f32.gmra.mrb[0].mxu0 %v3507
    %v4803 = vpop.f32.mrb[0].mxu0
    %v4804 = vadd.f32 %v4727, %v4803
    %v4805 = vpop.f32.mrb[0].mxu0
    %v4806 = vadd.f32 %v4729, %v4805
    %4807 = vdwg.mxu0
    %4808 = vmatprep.subr.mxu0 %v4280
    %4809 = vmatpush1.msra.mxu0 %v4279
    %4810 = vmatprep.subr.mxu0 %v4288
    %4811 = vmatpush1.msra.mxu0 %v4287
    %4812 = vmatprep.subr.mxu0 %v4296
    %4813 = vmatpush1.msra.mxu0 %v4295
    %4814 = vmatprep.subr.mxu0 %v4304
    %4815 = vmatpush1.msra.mxu0 %v4303
    %4816 = vmatprep.subr.mxu0 %v4312
    %4817 = vmatpush1.msra.mxu0 %v4311
    %4818 = vmatprep.subr.mxu0 %v4320
    %4819 = vmatpush1.msra.mxu0 %v4319
    %4820 = vmatprep.subr.mxu0 %v4328
    %4821 = vmatpush1.msra.mxu0 %v4327
    %4822 = vmatprep.subr.mxu0 %v4336
    %4823 = vmatpush1.msra.mxu0 %v4335
    %4824 = vmatprep.subr.mxu0 %v4344
    %4825 = vmatpush1.msra.mxu0 %v4343
    %4826 = vmatprep.subr.mxu0 %v4352
    %4827 = vmatpush1.msra.mxu0 %v4351
    %4828 = vmatprep.subr.mxu0 %v4360
    %4829 = vmatpush1.msra.mxu0 %v4359
    %4830 = vmatprep.subr.mxu0 %v4368
    %4831 = vmatpush1.msra.mxu0 %v4367
    %4832 = vmatprep.subr.mxu0 %v4376
    %4833 = vmatpush1.msra.mxu0 %v4375
    %4834 = vmatprep.subr.mxu0 %v4384
    %4835 = vmatpush1.msra.mxu0 %v4383
    %4836 = vmatprep.subr.mxu0 %v4392
    %4837 = vmatpush1.msra.mxu0 %v4391
    %4838 = vmatprep.subr.mxu0 %v4400
    %4839 = vmatpush1.msra.mxu0 %v4399
    %4840 = vmatprep.subr.mxu0 %v4408
    %4841 = vmatpush1.msra.mxu0 %v4407
    %4842 = vmatprep.subr.mxu0 %v4416
    %4843 = vmatpush1.msra.mxu0 %v4415
    %4844 = vmatprep.subr.mxu0 %v4424
    %4845 = vmatpush1.msra.mxu0 %v4423
    %4846 = vmatprep.subr.mxu0 %v4432
    %4847 = vmatpush1.msra.mxu0 %v4431
    %4848 = vmatprep.subr.mxu0 %v4440
    %4849 = vmatpush1.msra.mxu0 %v4439
    %4850 = vmatprep.subr.mxu0 %v4448
    %4851 = vmatpush1.msra.mxu0 %v4447
    %4852 = vmatprep.subr.mxu0 %v4456
    %4853 = vmatpush1.msra.mxu0 %v4455
    %4854 = vmatprep.subr.mxu0 %v4464
    %4855 = vmatpush1.msra.mxu0 %v4463
    %4856 = vmatprep.subr.mxu0 %v4472
    %4857 = vmatpush1.msra.mxu0 %v4471
    %4858 = vmatprep.subr.mxu0 %v4480
    %4859 = vmatpush1.msra.mxu0 %v4479
    %4860 = vmatprep.subr.mxu0 %v4488
    %4861 = vmatpush1.msra.mxu0 %v4487
    %4862 = vmatprep.subr.mxu0 %v4496
    %4863 = vmatpush1.msra.mxu0 %v4495
    %4864 = vmatprep.subr.mxu0 %v4504
    %4865 = vmatpush1.msra.mxu0 %v4503
    %4866 = vmatprep.subr.mxu0 %v4512
    %4867 = vmatpush1.msra.mxu0 %v4511
    %4868 = vmatprep.subr.mxu0 %v4520
    %4869 = vmatpush1.msra.mxu0 %v4519
    %4870 = vmatprep.subr.mxu0 %v4528
    %4871 = vmatpush1.msra.mxu0 %v4527
    %4872 = vmatprep.mubr.f32.mxu0 %v3502
    %4873 = vmatmul.mubr.f32.gmra.mrb[0].mxu0 %v3501
    %v4874 = vpop.f32.mrb[0].mxu0
    %v4875 = vadd.f32 %v4798, %v4874
    %v4876 = vpop.f32.mrb[0].mxu0
    %v4877 = vadd.f32 %v4800, %v4876
    %4878 = vmatprep.mubr.f32.mxu0 %v3510
    %4879 = vmatmul.mubr.f32.gmra.mrb[0].mxu0 %v3509
    %v4880 = vpop.f32.mrb[0].mxu0
    %v4881 = vadd.f32 %v4804, %v4880
    %v4882 = vpop.f32.mrb[0].mxu0
    %v4883 = vadd.f32 %v4806, %v4882
    %4884 = vdwg.mxu0
    %4885 = vmatprep.subr.mxu0 %v3514
    %4886 = vmatpush1.msra.mxu0 %v3513
    %4887 = vmatprep.subr.mxu0 %v3522
    %4888 = vmatpush1.msra.mxu0 %v3521
    %4889 = vmatprep.subr.mxu0 %v3530
    %4890 = vmatpush1.msra.mxu0 %v3529
    %4891 = vmatprep.subr.mxu0 %v3538
    %4892 = vmatpush1.msra.mxu0 %v3537
    %4893 = vmatprep.subr.mxu0 %v3546
    %4894 = vmatpush1.msra.mxu0 %v3545
    %4895 = vmatprep.subr.mxu0 %v3554
    %4896 = vmatpush1.msra.mxu0 %v3553
    %4897 = vmatprep.subr.mxu0 %v3562
    %4898 = vmatpush1.msra.mxu0 %v3561
    %4899 = vmatprep.subr.mxu0 %v3570
    %4900 = vmatpush1.msra.mxu0 %v3569
    %4901 = vmatprep.subr.mxu0 %v3578
    %4902 = vmatpush1.msra.mxu0 %v3577
    %4903 = vmatprep.subr.mxu0 %v3586
    %4904 = vmatpush1.msra.mxu0 %v3585
    %4905 = vmatprep.subr.mxu0 %v3594
    %4906 = vmatpush1.msra.mxu0 %v3593
    %4907 = vmatprep.subr.mxu0 %v3602
    %4908 = vmatpush1.msra.mxu0 %v3601
    %4909 = vmatprep.subr.mxu0 %v3610
    %4910 = vmatpush1.msra.mxu0 %v3609
    %4911 = vmatprep.subr.mxu0 %v3618
    %4912 = vmatpush1.msra.mxu0 %v3617
    %4913 = vmatprep.subr.mxu0 %v3626
    %4914 = vmatpush1.msra.mxu0 %v3625
    %4915 = vmatprep.subr.mxu0 %v3634
    %4916 = vmatpush1.msra.mxu0 %v3633
    %4917 = vmatprep.subr.mxu0 %v3642
    %4918 = vmatpush1.msra.mxu0 %v3641
    %4919 = vmatprep.subr.mxu0 %v3650
    %4920 = vmatpush1.msra.mxu0 %v3649
    %4921 = vmatprep.subr.mxu0 %v3658
    %4922 = vmatpush1.msra.mxu0 %v3657
    %4923 = vmatprep.subr.mxu0 %v3666
    %4924 = vmatpush1.msra.mxu0 %v3665
    %4925 = vmatprep.subr.mxu0 %v3674
    %4926 = vmatpush1.msra.mxu0 %v3673
    %4927 = vmatprep.subr.mxu0 %v3682
    %4928 = vmatpush1.msra.mxu0 %v3681
    %4929 = vmatprep.subr.mxu0 %v3690
    %4930 = vmatpush1.msra.mxu0 %v3689
    %4931 = vmatprep.subr.mxu0 %v3698
    %4932 = vmatpush1.msra.mxu0 %v3697
    %4933 = vmatprep.subr.mxu0 %v3706
    %4934 = vmatpush1.msra.mxu0 %v3705
    %4935 = vmatprep.subr.mxu0 %v3714
    %4936 = vmatpush1.msra.mxu0 %v3713
    %4937 = vmatprep.subr.mxu0 %v3722
    %4938 = vmatpush1.msra.mxu0 %v3721
    %4939 = vmatprep.subr.mxu0 %v3730
    %4940 = vmatpush1.msra.mxu0 %v3729
    %4941 = vmatprep.subr.mxu0 %v3738
    %4942 = vmatpush1.msra.mxu0 %v3737
    %4943 = vmatprep.subr.mxu0 %v3746
    %4944 = vmatpush1.msra.mxu0 %v3745
    %4945 = vmatprep.subr.mxu0 %v3754
    %4946 = vmatpush1.msra.mxu0 %v3753
    %4947 = vmatprep.subr.mxu0 %v3762
    %4948 = vmatpush1.msra.mxu0 %v3761
    %4949 = vmatprep.mubr.f32.mxu0 %v3496
    %4950 = vmatmul.mubr.f32.gmra.mrb[0].mxu0 %v3495
    %v4951 = vpop.f32.mrb[0].mxu0
    %v4952 = vadd.f32 %v4548, %v4951
    %v4953 = vpop.f32.mrb[0].mxu0
    %v4954 = vadd.f32 %v4552, %v4953
    %4955 = vmatprep.mubr.f32.mxu0 %v3504
    %4956 = vmatmul.mubr.f32.gmra.mrb[0].mxu0 %v3503
    %v4957 = vpop.f32.mrb[0].mxu0
    %v4958 = vadd.f32 %v4548, %v4957
    %v4959 = vpop.f32.mrb[0].mxu0
    %v4960 = vadd.f32 %v4552, %v4959
    %4961 = vdwg.mxu0
    %4962 = vmatprep.subr.mxu0 %v3770
    %4963 = vmatpush1.msra.mxu0 %v3769
    %4964 = vmatprep.subr.mxu0 %v3778
    %4965 = vmatpush1.msra.mxu0 %v3777
    %4966 = vmatprep.subr.mxu0 %v3786
    %4967 = vmatpush1.msra.mxu0 %v3785
    %4968 = vmatprep.subr.mxu0 %v3794
    %4969 = vmatpush1.msra.mxu0 %v3793
    %4970 = vmatprep.subr.mxu0 %v3802
    %4971 = vmatpush1.msra.mxu0 %v3801
    %4972 = vmatprep.subr.mxu0 %v3810
    %4973 = vmatpush1.msra.mxu0 %v3809
    %4974 = vmatprep.subr.mxu0 %v3818
    %4975 = vmatpush1.msra.mxu0 %v3817
    %4976 = vmatprep.subr.mxu0 %v3826
    %4977 = vmatpush1.msra.mxu0 %v3825
    %4978 = vmatprep.subr.mxu0 %v3834
    %4979 = vmatpush1.msra.mxu0 %v3833
    %4980 = vmatprep.subr.mxu0 %v3842
    %4981 = vmatpush1.msra.mxu0 %v3841
    %4982 = vmatprep.subr.mxu0 %v3850
    %4983 = vmatpush1.msra.mxu0 %v3849
    %4984 = vmatprep.subr.mxu0 %v3858
    %4985 = vmatpush1.msra.mxu0 %v3857
    %4986 = vmatprep.subr.mxu0 %v3866
    %4987 = vmatpush1.msra.mxu0 %v3865
    %4988 = vmatprep.subr.mxu0 %v3874
    %4989 = vmatpush1.msra.mxu0 %v3873
    %4990 = vmatprep.subr.mxu0 %v3882
    %4991 = vmatpush1.msra.mxu0 %v3881
    %4992 = vmatprep.subr.mxu0 %v3890
    %4993 = vmatpush1.msra.mxu0 %v3889
    %4994 = vmatprep.subr.mxu0 %v3898
    %4995 = vmatpush1.msra.mxu0 %v3897
    %4996 = vmatprep.subr.mxu0 %v3906
    %4997 = vmatpush1.msra.mxu0 %v3905
    %4998 = vmatprep.subr.mxu0 %v3914
    %4999 = vmatpush1.msra.mxu0 %v3913
    %5000 = vmatprep.subr.mxu0 %v3922
    %5001 = vmatpush1.msra.mxu0 %v3921
    %5002 = vmatprep.subr.mxu0 %v3930
    %5003 = vmatpush1.msra.mxu0 %v3929
    %5004 = vmatprep.subr.mxu0 %v3938
    %5005 = vmatpush1.msra.mxu0 %v3937
    %5006 = vmatprep.subr.mxu0 %v3946
    %5007 = vmatpush1.msra.mxu0 %v3945
    %5008 = vmatprep.subr.mxu0 %v3954
    %5009 = vmatpush1.msra.mxu0 %v3953
    %5010 = vmatprep.subr.mxu0 %v3962
    %5011 = vmatpush1.msra.mxu0 %v3961
    %5012 = vmatprep.subr.mxu0 %v3970
    %5013 = vmatpush1.msra.mxu0 %v3969
    %5014 = vmatprep.subr.mxu0 %v3978
    %5015 = vmatpush1.msra.mxu0 %v3977
    %5016 = vmatprep.subr.mxu0 %v3986
    %5017 = vmatpush1.msra.mxu0 %v3985
    %5018 = vmatprep.subr.mxu0 %v3994
    %5019 = vmatpush1.msra.mxu0 %v3993
    %5020 = vmatprep.subr.mxu0 %v4002
    %5021 = vmatpush1.msra.mxu0 %v4001
    %5022 = vmatprep.subr.mxu0 %v4010
    %5023 = vmatpush1.msra.mxu0 %v4009
    %5024 = vmatprep.subr.mxu0 %v4018
    %5025 = vmatpush1.msra.mxu0 %v4017
    %5026 = vmatprep.mubr.f32.mxu0 %v3498
    %5027 = vmatmul.mubr.f32.gmra.mrb[0].mxu0 %v3497
    %v5028 = vpop.f32.mrb[0].mxu0
    %v5029 = vadd.f32 %v4952, %v5028
    %v5030 = vpop.f32.mrb[0].mxu0
    %v5031 = vadd.f32 %v4954, %v5030
    %5032 = vmatprep.mubr.f32.mxu0 %v3506
    %5033 = vmatmul.mubr.f32.gmra.mrb[0].mxu0 %v3505
    %v5034 = vpop.f32.mrb[0].mxu0
    %v5035 = vadd.f32 %v4958, %v5034
    %v5036 = vpop.f32.mrb[0].mxu0
    %v5037 = vadd.f32 %v4960, %v5036
    %5038 = vdwg.mxu0
    %5039 = vmatprep.subr.mxu0 %v4026
    %5040 = vmatpush1.msra.mxu0 %v4025
    %5041 = vmatprep.subr.mxu0 %v4034
    %5042 = vmatpush1.msra.mxu0 %v4033
    %5043 = vmatprep.subr.mxu0 %v4042
    %5044 = vmatpush1.msra.mxu0 %v4041
    %5045 = vmatprep.subr.mxu0 %v4050
    %5046 = vmatpush1.msra.mxu0 %v4049
    %5047 = vmatprep.subr.mxu0 %v4058
    %5048 = vmatpush1.msra.mxu0 %v4057
    %5049 = vmatprep.subr.mxu0 %v4066
    %5050 = vmatpush1.msra.mxu0 %v4065
    %5051 = vmatprep.subr.mxu0 %v4074
    %5052 = vmatpush1.msra.mxu0 %v4073
    %5053 = vmatprep.subr.mxu0 %v4082
    %5054 = vmatpush1.msra.mxu0 %v4081
    %5055 = vmatprep.subr.mxu0 %v4090
    %5056 = vmatpush1.msra.mxu0 %v4089
    %5057 = vmatprep.subr.mxu0 %v4098
    %5058 = vmatpush1.msra.mxu0 %v4097
    %5059 = vmatprep.subr.mxu0 %v4106
    %5060 = vmatpush1.msra.mxu0 %v4105
    %5061 = vmatprep.subr.mxu0 %v4114
    %5062 = vmatpush1.msra.mxu0 %v4113
    %5063 = vmatprep.subr.mxu0 %v4122
    %5064 = vmatpush1.msra.mxu0 %v4121
    %5065 = vmatprep.subr.mxu0 %v4130
    %5066 = vmatpush1.msra.mxu0 %v4129
    %5067 = vmatprep.subr.mxu0 %v4138
    %5068 = vmatpush1.msra.mxu0 %v4137
    %5069 = vmatprep.subr.mxu0 %v4146
    %5070 = vmatpush1.msra.mxu0 %v4145
    %5071 = vmatprep.subr.mxu0 %v4154
    %5072 = vmatpush1.msra.mxu0 %v4153
    %5073 = vmatprep.subr.mxu0 %v4162
    %5074 = vmatpush1.msra.mxu0 %v4161
    %5075 = vmatprep.subr.mxu0 %v4170
    %5076 = vmatpush1.msra.mxu0 %v4169
    %5077 = vmatprep.subr.mxu0 %v4178
    %5078 = vmatpush1.msra.mxu0 %v4177
    %5079 = vmatprep.subr.mxu0 %v4186
    %5080 = vmatpush1.msra.mxu0 %v4185
    %5081 = vmatprep.subr.mxu0 %v4194
    %5082 = vmatpush1.msra.mxu0 %v4193
    %5083 = vmatprep.subr.mxu0 %v4202
    %5084 = vmatpush1.msra.mxu0 %v4201
    %5085 = vmatprep.subr.mxu0 %v4210
    %5086 = vmatpush1.msra.mxu0 %v4209
    %5087 = vmatprep.subr.mxu0 %v4218
    %5088 = vmatpush1.msra.mxu0 %v4217
    %5089 = vmatprep.subr.mxu0 %v4226
    %5090 = vmatpush1.msra.mxu0 %v4225
    %5091 = vmatprep.subr.mxu0 %v4234
    %5092 = vmatpush1.msra.mxu0 %v4233
    %5093 = vmatprep.subr.mxu0 %v4242
    %5094 = vmatpush1.msra.mxu0 %v4241
    %5095 = vmatprep.subr.mxu0 %v4250
    %5096 = vmatpush1.msra.mxu0 %v4249
    %5097 = vmatprep.subr.mxu0 %v4258
    %5098 = vmatpush1.msra.mxu0 %v4257
    %5099 = vmatprep.subr.mxu0 %v4266
    %5100 = vmatpush1.msra.mxu0 %v4265
    %5101 = vmatprep.subr.mxu0 %v4274
    %5102 = vmatpush1.msra.mxu0 %v4273
    %5103 = vmatprep.mubr.f32.mxu0 %v3500
    %5104 = vmatmul.mubr.f32.gmra.mrb[0].mxu0 %v3499
    %v5105 = vpop.f32.mrb[0].mxu0
    %v5106 = vadd.f32 %v5029, %v5105
    %v5107 = vpop.f32.mrb[0].mxu0
    %v5108 = vadd.f32 %v5031, %v5107
    %5109 = vmatprep.mubr.f32.mxu0 %v3508
    %5110 = vmatmul.mubr.f32.gmra.mrb[0].mxu0 %v3507
    %v5111 = vpop.f32.mrb[0].mxu0
    %v5112 = vadd.f32 %v5035, %v5111
    %v5113 = vpop.f32.mrb[0].mxu0
    %v5114 = vadd.f32 %v5037, %v5113
    %5115 = vdwg.mxu0
    %5116 = vmatprep.subr.mxu0 %v4282
    %5117 = vmatpush1.msra.mxu0 %v4281
    %5118 = vmatprep.subr.mxu0 %v4290
    %5119 = vmatpush1.msra.mxu0 %v4289
    %5120 = vmatprep.subr.mxu0 %v4298
    %5121 = vmatpush1.msra.mxu0 %v4297
    %5122 = vmatprep.subr.mxu0 %v4306
    %5123 = vmatpush1.msra.mxu0 %v4305
    %5124 = vmatprep.subr.mxu0 %v4314
    %5125 = vmatpush1.msra.mxu0 %v4313
    %5126 = vmatprep.subr.mxu0 %v4322
    %5127 = vmatpush1.msra.mxu0 %v4321
    %5128 = vmatprep.subr.mxu0 %v4330
    %5129 = vmatpush1.msra.mxu0 %v4329
    %5130 = vmatprep.subr.mxu0 %v4338
    %5131 = vmatpush1.msra.mxu0 %v4337
    %5132 = vmatprep.subr.mxu0 %v4346
    %5133 = vmatpush1.msra.mxu0 %v4345
    %5134 = vmatprep.subr.mxu0 %v4354
    %5135 = vmatpush1.msra.mxu0 %v4353
    %5136 = vmatprep.subr.mxu0 %v4362
    %5137 = vmatpush1.msra.mxu0 %v4361
    %5138 = vmatprep.subr.mxu0 %v4370
    %5139 = vmatpush1.msra.mxu0 %v4369
    %5140 = vmatprep.subr.mxu0 %v4378
    %5141 = vmatpush1.msra.mxu0 %v4377
    %5142 = vmatprep.subr.mxu0 %v4386
    %5143 = vmatpush1.msra.mxu0 %v4385
    %5144 = vmatprep.subr.mxu0 %v4394
    %5145 = vmatpush1.msra.mxu0 %v4393
    %5146 = vmatprep.subr.mxu0 %v4402
    %5147 = vmatpush1.msra.mxu0 %v4401
    %5148 = vmatprep.subr.mxu0 %v4410
    %5149 = vmatpush1.msra.mxu0 %v4409
    %5150 = vmatprep.subr.mxu0 %v4418
    %5151 = vmatpush1.msra.mxu0 %v4417
    %5152 = vmatprep.subr.mxu0 %v4426
    %5153 = vmatpush1.msra.mxu0 %v4425
    %5154 = vmatprep.subr.mxu0 %v4434
    %5155 = vmatpush1.msra.mxu0 %v4433
    %5156 = vmatprep.subr.mxu0 %v4442
    %5157 = vmatpush1.msra.mxu0 %v4441
    %5158 = vmatprep.subr.mxu0 %v4450
    %5159 = vmatpush1.msra.mxu0 %v4449
    %5160 = vmatprep.subr.mxu0 %v4458
    %5161 = vmatpush1.msra.mxu0 %v4457
    %5162 = vmatprep.subr.mxu0 %v4466
    %5163 = vmatpush1.msra.mxu0 %v4465
    %5164 = vmatprep.subr.mxu0 %v4474
    %5165 = vmatpush1.msra.mxu0 %v4473
    %5166 = vmatprep.subr.mxu0 %v4482
    %5167 = vmatpush1.msra.mxu0 %v4481
    %5168 = vmatprep.subr.mxu0 %v4490
    %5169 = vmatpush1.msra.mxu0 %v4489
    %5170 = vmatprep.subr.mxu0 %v4498
    %5171 = vmatpush1.msra.mxu0 %v4497
    %5172 = vmatprep.subr.mxu0 %v4506
    %5173 = vmatpush1.msra.mxu0 %v4505
    %5174 = vmatprep.subr.mxu0 %v4514
    %5175 = vmatpush1.msra.mxu0 %v4513
    %5176 = vmatprep.subr.mxu0 %v4522
    %5177 = vmatpush1.msra.mxu0 %v4521
    %5178 = vmatprep.subr.mxu0 %v4530
    %5179 = vmatpush1.msra.mxu0 %v4529
    %5180 = vmatprep.mubr.f32.mxu0 %v3502
    %5181 = vmatmul.mubr.f32.gmra.mrb[0].mxu0 %v3501
    %v5182 = vpop.f32.mrb[0].mxu0
    %v5183 = vadd.f32 %v5106, %v5182
    %v5184 = vpop.f32.mrb[0].mxu0
    %v5185 = vadd.f32 %v5108, %v5184
    %5186 = vmatprep.mubr.f32.mxu0 %v3510
    %5187 = vmatmul.mubr.f32.gmra.mrb[0].mxu0 %v3509
    %v5188 = vpop.f32.mrb[0].mxu0
    %v5189 = vadd.f32 %v5112, %v5188
    %v5190 = vpop.f32.mrb[0].mxu0
    %v5191 = vadd.f32 %v5114, %v5190
    %5192 = vdwg.mxu0
    %5193 = vmatprep.subr.mxu0 %v3516
    %5194 = vmatpush1.msra.mxu0 %v3515
    %5195 = vmatprep.subr.mxu0 %v3524
    %5196 = vmatpush1.msra.mxu0 %v3523
    %5197 = vmatprep.subr.mxu0 %v3532
    %5198 = vmatpush1.msra.mxu0 %v3531
    %5199 = vmatprep.subr.mxu0 %v3540
    %5200 = vmatpush1.msra.mxu0 %v3539
    %5201 = vmatprep.subr.mxu0 %v3548
    %5202 = vmatpush1.msra.mxu0 %v3547
    %5203 = vmatprep.subr.mxu0 %v3556
    %5204 = vmatpush1.msra.mxu0 %v3555
    %5205 = vmatprep.subr.mxu0 %v3564
    %5206 = vmatpush1.msra.mxu0 %v3563
    %5207 = vmatprep.subr.mxu0 %v3572
    %5208 = vmatpush1.msra.mxu0 %v3571
    %5209 = vmatprep.subr.mxu0 %v3580
    %5210 = vmatpush1.msra.mxu0 %v3579
    %5211 = vmatprep.subr.mxu0 %v3588
    %5212 = vmatpush1.msra.mxu0 %v3587
    %5213 = vmatprep.subr.mxu0 %v3596
    %5214 = vmatpush1.msra.mxu0 %v3595
    %5215 = vmatprep.subr.mxu0 %v3604
    %5216 = vmatpush1.msra.mxu0 %v3603
    %5217 = vmatprep.subr.mxu0 %v3612
    %5218 = vmatpush1.msra.mxu0 %v3611
    %5219 = vmatprep.subr.mxu0 %v3620
    %5220 = vmatpush1.msra.mxu0 %v3619
    %5221 = vmatprep.subr.mxu0 %v3628
    %5222 = vmatpush1.msra.mxu0 %v3627
    %5223 = vmatprep.subr.mxu0 %v3636
    %5224 = vmatpush1.msra.mxu0 %v3635
    %5225 = vmatprep.subr.mxu0 %v3644
    %5226 = vmatpush1.msra.mxu0 %v3643
    %5227 = vmatprep.subr.mxu0 %v3652
    %5228 = vmatpush1.msra.mxu0 %v3651
    %5229 = vmatprep.subr.mxu0 %v3660
    %5230 = vmatpush1.msra.mxu0 %v3659
    %5231 = vmatprep.subr.mxu0 %v3668
    %5232 = vmatpush1.msra.mxu0 %v3667
    %5233 = vmatprep.subr.mxu0 %v3676
    %5234 = vmatpush1.msra.mxu0 %v3675
    %5235 = vmatprep.subr.mxu0 %v3684
    %5236 = vmatpush1.msra.mxu0 %v3683
    %5237 = vmatprep.subr.mxu0 %v3692
    %5238 = vmatpush1.msra.mxu0 %v3691
    %5239 = vmatprep.subr.mxu0 %v3700
    %5240 = vmatpush1.msra.mxu0 %v3699
    %5241 = vmatprep.subr.mxu0 %v3708
    %5242 = vmatpush1.msra.mxu0 %v3707
    %5243 = vmatprep.subr.mxu0 %v3716
    %5244 = vmatpush1.msra.mxu0 %v3715
    %5245 = vmatprep.subr.mxu0 %v3724
    %5246 = vmatpush1.msra.mxu0 %v3723
    %5247 = vmatprep.subr.mxu0 %v3732
    %5248 = vmatpush1.msra.mxu0 %v3731
    %5249 = vmatprep.subr.mxu0 %v3740
    %5250 = vmatpush1.msra.mxu0 %v3739
    %5251 = vmatprep.subr.mxu0 %v3748
    %5252 = vmatpush1.msra.mxu0 %v3747
    %5253 = vmatprep.subr.mxu0 %v3756
    %5254 = vmatpush1.msra.mxu0 %v3755
    %5255 = vmatprep.subr.mxu0 %v3764
    %5256 = vmatpush1.msra.mxu0 %v3763
    %5257 = vmatprep.mubr.f32.mxu0 %v3496
    %5258 = vmatmul.mubr.f32.gmra.mrb[0].mxu0 %v3495
    %v5259 = vpop.f32.mrb[0].mxu0
    %v5260 = vadd.f32 %v4556, %v5259
    %v5261 = vpop.f32.mrb[0].mxu0
    %v5262 = vadd.f32 %v4560, %v5261
    %5263 = vmatprep.mubr.f32.mxu0 %v3504
    %5264 = vmatmul.mubr.f32.gmra.mrb[0].mxu0 %v3503
    %v5265 = vpop.f32.mrb[0].mxu0
    %v5266 = vadd.f32 %v4556, %v5265
    %v5267 = vpop.f32.mrb[0].mxu0
    %v5268 = vadd.f32 %v4560, %v5267
    %5269 = vdwg.mxu0
    %5270 = vmatprep.subr.mxu0 %v3772
    %5271 = vmatpush1.msra.mxu0 %v3771
    %5272 = vmatprep.subr.mxu0 %v3780
    %5273 = vmatpush1.msra.mxu0 %v3779
    %5274 = vmatprep.subr.mxu0 %v3788
    %5275 = vmatpush1.msra.mxu0 %v3787
    %5276 = vmatprep.subr.mxu0 %v3796
    %5277 = vmatpush1.msra.mxu0 %v3795
    %5278 = vmatprep.subr.mxu0 %v3804
    %5279 = vmatpush1.msra.mxu0 %v3803
    %5280 = vmatprep.subr.mxu0 %v3812
    %5281 = vmatpush1.msra.mxu0 %v3811
    %5282 = vmatprep.subr.mxu0 %v3820
    %5283 = vmatpush1.msra.mxu0 %v3819
    %5284 = vmatprep.subr.mxu0 %v3828
    %5285 = vmatpush1.msra.mxu0 %v3827
    %5286 = vmatprep.subr.mxu0 %v3836
    %5287 = vmatpush1.msra.mxu0 %v3835
    %5288 = vmatprep.subr.mxu0 %v3844
    %5289 = vmatpush1.msra.mxu0 %v3843
    %5290 = vmatprep.subr.mxu0 %v3852
    %5291 = vmatpush1.msra.mxu0 %v3851
    %5292 = vmatprep.subr.mxu0 %v3860
    %5293 = vmatpush1.msra.mxu0 %v3859
    %5294 = vmatprep.subr.mxu0 %v3868
    %5295 = vmatpush1.msra.mxu0 %v3867
    %5296 = vmatprep.subr.mxu0 %v3876
    %5297 = vmatpush1.msra.mxu0 %v3875
    %5298 = vmatprep.subr.mxu0 %v3884
    %5299 = vmatpush1.msra.mxu0 %v3883
    %5300 = vmatprep.subr.mxu0 %v3892
    %5301 = vmatpush1.msra.mxu0 %v3891
    %5302 = vmatprep.subr.mxu0 %v3900
    %5303 = vmatpush1.msra.mxu0 %v3899
    %5304 = vmatprep.subr.mxu0 %v3908
    %5305 = vmatpush1.msra.mxu0 %v3907
    %5306 = vmatprep.subr.mxu0 %v3916
    %5307 = vmatpush1.msra.mxu0 %v3915
    %5308 = vmatprep.subr.mxu0 %v3924
    %5309 = vmatpush1.msra.mxu0 %v3923
    %5310 = vmatprep.subr.mxu0 %v3932
    %5311 = vmatpush1.msra.mxu0 %v3931
    %5312 = vmatprep.subr.mxu0 %v3940
    %5313 = vmatpush1.msra.mxu0 %v3939
    %5314 = vmatprep.subr.mxu0 %v3948
    %5315 = vmatpush1.msra.mxu0 %v3947
    %5316 = vmatprep.subr.mxu0 %v3956
    %5317 = vmatpush1.msra.mxu0 %v3955
    %5318 = vmatprep.subr.mxu0 %v3964
    %5319 = vmatpush1.msra.mxu0 %v3963
    %5320 = vmatprep.subr.mxu0 %v3972
    %5321 = vmatpush1.msra.mxu0 %v3971
    %5322 = vmatprep.subr.mxu0 %v3980
    %5323 = vmatpush1.msra.mxu0 %v3979
    %5324 = vmatprep.subr.mxu0 %v3988
    %5325 = vmatpush1.msra.mxu0 %v3987
    %5326 = vmatprep.subr.mxu0 %v3996
    %5327 = vmatpush1.msra.mxu0 %v3995
    %5328 = vmatprep.subr.mxu0 %v4004
    %5329 = vmatpush1.msra.mxu0 %v4003
    %5330 = vmatprep.subr.mxu0 %v4012
    %5331 = vmatpush1.msra.mxu0 %v4011
    %5332 = vmatprep.subr.mxu0 %v4020
    %5333 = vmatpush1.msra.mxu0 %v4019
    %5334 = vmatprep.mubr.f32.mxu0 %v3498
    %5335 = vmatmul.mubr.f32.gmra.mrb[0].mxu0 %v3497
    %v5336 = vpop.f32.mrb[0].mxu0
    %v5337 = vadd.f32 %v5260, %v5336
    %v5338 = vpop.f32.mrb[0].mxu0
    %v5339 = vadd.f32 %v5262, %v5338
    %5340 = vmatprep.mubr.f32.mxu0 %v3506
    %5341 = vmatmul.mubr.f32.gmra.mrb[0].mxu0 %v3505
    %v5342 = vpop.f32.mrb[0].mxu0
    %v5343 = vadd.f32 %v5266, %v5342
    %v5344 = vpop.f32.mrb[0].mxu0
    %v5345 = vadd.f32 %v5268, %v5344
    %5346 = vdwg.mxu0
    %5347 = vmatprep.subr.mxu0 %v4028
    %5348 = vmatpush1.msra.mxu0 %v4027
    %5349 = vmatprep.subr.mxu0 %v4036
    %5350 = vmatpush1.msra.mxu0 %v4035
    %5351 = vmatprep.subr.mxu0 %v4044
    %5352 = vmatpush1.msra.mxu0 %v4043
    %5353 = vmatprep.subr.mxu0 %v4052
    %5354 = vmatpush1.msra.mxu0 %v4051
    %5355 = vmatprep.subr.mxu0 %v4060
    %5356 = vmatpush1.msra.mxu0 %v4059
    %5357 = vmatprep.subr.mxu0 %v4068
    %5358 = vmatpush1.msra.mxu0 %v4067
    %5359 = vmatprep.subr.mxu0 %v4076
    %5360 = vmatpush1.msra.mxu0 %v4075
    %5361 = vmatprep.subr.mxu0 %v4084
    %5362 = vmatpush1.msra.mxu0 %v4083
    %5363 = vmatprep.subr.mxu0 %v4092
    %5364 = vmatpush1.msra.mxu0 %v4091
    %5365 = vmatprep.subr.mxu0 %v4100
    %5366 = vmatpush1.msra.mxu0 %v4099
    %5367 = vmatprep.subr.mxu0 %v4108
    %5368 = vmatpush1.msra.mxu0 %v4107
    %5369 = vmatprep.subr.mxu0 %v4116
    %5370 = vmatpush1.msra.mxu0 %v4115
    %5371 = vmatprep.subr.mxu0 %v4124
    %5372 = vmatpush1.msra.mxu0 %v4123
    %5373 = vmatprep.subr.mxu0 %v4132
    %5374 = vmatpush1.msra.mxu0 %v4131
    %5375 = vmatprep.subr.mxu0 %v4140
    %5376 = vmatpush1.msra.mxu0 %v4139
    %5377 = vmatprep.subr.mxu0 %v4148
    %5378 = vmatpush1.msra.mxu0 %v4147
    %5379 = vmatprep.subr.mxu0 %v4156
    %5380 = vmatpush1.msra.mxu0 %v4155
    %5381 = vmatprep.subr.mxu0 %v4164
    %5382 = vmatpush1.msra.mxu0 %v4163
    %5383 = vmatprep.subr.mxu0 %v4172
    %5384 = vmatpush1.msra.mxu0 %v4171
    %5385 = vmatprep.subr.mxu0 %v4180
    %5386 = vmatpush1.msra.mxu0 %v4179
    %5387 = vmatprep.subr.mxu0 %v4188
    %5388 = vmatpush1.msra.mxu0 %v4187
    %5389 = vmatprep.subr.mxu0 %v4196
    %5390 = vmatpush1.msra.mxu0 %v4195
    %5391 = vmatprep.subr.mxu0 %v4204
    %5392 = vmatpush1.msra.mxu0 %v4203
    %5393 = vmatprep.subr.mxu0 %v4212
    %5394 = vmatpush1.msra.mxu0 %v4211
    %5395 = vmatprep.subr.mxu0 %v4220
    %5396 = vmatpush1.msra.mxu0 %v4219
    %5397 = vmatprep.subr.mxu0 %v4228
    %5398 = vmatpush1.msra.mxu0 %v4227
    %5399 = vmatprep.subr.mxu0 %v4236
    %5400 = vmatpush1.msra.mxu0 %v4235
    %5401 = vmatprep.subr.mxu0 %v4244
    %5402 = vmatpush1.msra.mxu0 %v4243
    %5403 = vmatprep.subr.mxu0 %v4252
    %5404 = vmatpush1.msra.mxu0 %v4251
    %5405 = vmatprep.subr.mxu0 %v4260
    %5406 = vmatpush1.msra.mxu0 %v4259
    %5407 = vmatprep.subr.mxu0 %v4268
    %5408 = vmatpush1.msra.mxu0 %v4267
    %5409 = vmatprep.subr.mxu0 %v4276
    %5410 = vmatpush1.msra.mxu0 %v4275
    %5411 = vmatprep.mubr.f32.mxu0 %v3500
    %5412 = vmatmul.mubr.f32.gmra.mrb[0].mxu0 %v3499
    %v5413 = vpop.f32.mrb[0].mxu0
    %v5414 = vadd.f32 %v5337, %v5413
    %v5415 = vpop.f32.mrb[0].mxu0
    %v5416 = vadd.f32 %v5339, %v5415
    %5417 = vmatprep.mubr.f32.mxu0 %v3508
    %5418 = vmatmul.mubr.f32.gmra.mrb[0].mxu0 %v3507
    %v5419 = vpop.f32.mrb[0].mxu0
    %v5420 = vadd.f32 %v5343, %v5419
    %v5421 = vpop.f32.mrb[0].mxu0
    %v5422 = vadd.f32 %v5345, %v5421
    %5423 = vdwg.mxu0
    %5424 = vmatprep.subr.mxu0 %v4284
    %5425 = vmatpush1.msra.mxu0 %v4283
    %5426 = vmatprep.subr.mxu0 %v4292
    %5427 = vmatpush1.msra.mxu0 %v4291
    %5428 = vmatprep.subr.mxu0 %v4300
    %5429 = vmatpush1.msra.mxu0 %v4299
    %5430 = vmatprep.subr.mxu0 %v4308
    %5431 = vmatpush1.msra.mxu0 %v4307
    %5432 = vmatprep.subr.mxu0 %v4316
    %5433 = vmatpush1.msra.mxu0 %v4315
    %5434 = vmatprep.subr.mxu0 %v4324
    %5435 = vmatpush1.msra.mxu0 %v4323
    %5436 = vmatprep.subr.mxu0 %v4332
    %5437 = vmatpush1.msra.mxu0 %v4331
    %5438 = vmatprep.subr.mxu0 %v4340
    %5439 = vmatpush1.msra.mxu0 %v4339
    %5440 = vmatprep.subr.mxu0 %v4348
    %5441 = vmatpush1.msra.mxu0 %v4347
    %5442 = vmatprep.subr.mxu0 %v4356
    %5443 = vmatpush1.msra.mxu0 %v4355
    %5444 = vmatprep.subr.mxu0 %v4364
    %5445 = vmatpush1.msra.mxu0 %v4363
    %5446 = vmatprep.subr.mxu0 %v4372
    %5447 = vmatpush1.msra.mxu0 %v4371
    %5448 = vmatprep.subr.mxu0 %v4380
    %5449 = vmatpush1.msra.mxu0 %v4379
    %5450 = vmatprep.subr.mxu0 %v4388
    %5451 = vmatpush1.msra.mxu0 %v4387
    %5452 = vmatprep.subr.mxu0 %v4396
    %5453 = vmatpush1.msra.mxu0 %v4395
    %5454 = vmatprep.subr.mxu0 %v4404
    %5455 = vmatpush1.msra.mxu0 %v4403
    %5456 = vmatprep.subr.mxu0 %v4412
    %5457 = vmatpush1.msra.mxu0 %v4411
    %5458 = vmatprep.subr.mxu0 %v4420
    %5459 = vmatpush1.msra.mxu0 %v4419
    %5460 = vmatprep.subr.mxu0 %v4428
    %5461 = vmatpush1.msra.mxu0 %v4427
    %5462 = vmatprep.subr.mxu0 %v4436
    %5463 = vmatpush1.msra.mxu0 %v4435
    %5464 = vmatprep.subr.mxu0 %v4444
    %5465 = vmatpush1.msra.mxu0 %v4443
    %5466 = vmatprep.subr.mxu0 %v4452
    %5467 = vmatpush1.msra.mxu0 %v4451
    %5468 = vmatprep.subr.mxu0 %v4460
    %5469 = vmatpush1.msra.mxu0 %v4459
    %5470 = vmatprep.subr.mxu0 %v4468
    %5471 = vmatpush1.msra.mxu0 %v4467
    %5472 = vmatprep.subr.mxu0 %v4476
    %5473 = vmatpush1.msra.mxu0 %v4475
    %5474 = vmatprep.subr.mxu0 %v4484
    %5475 = vmatpush1.msra.mxu0 %v4483
    %5476 = vmatprep.subr.mxu0 %v4492
    %5477 = vmatpush1.msra.mxu0 %v4491
    %5478 = vmatprep.subr.mxu0 %v4500
    %5479 = vmatpush1.msra.mxu0 %v4499
    %5480 = vmatprep.subr.mxu0 %v4508
    %5481 = vmatpush1.msra.mxu0 %v4507
    %5482 = vmatprep.subr.mxu0 %v4516
    %5483 = vmatpush1.msra.mxu0 %v4515
    %5484 = vmatprep.subr.mxu0 %v4524
    %5485 = vmatpush1.msra.mxu0 %v4523
    %5486 = vmatprep.subr.mxu0 %v4532
    %5487 = vmatpush1.msra.mxu0 %v4531
    %5488 = vmatprep.mubr.f32.mxu0 %v3502
    %5489 = vmatmul.mubr.f32.gmra.mrb[0].mxu0 %v3501
    %v5490 = vpop.f32.mrb[0].mxu0
    %v5491 = vadd.f32 %v5414, %v5490
    %v5492 = vpop.f32.mrb[0].mxu0
    %v5493 = vadd.f32 %v5416, %v5492
    %5494 = vmatprep.mubr.f32.mxu0 %v3510
    %5495 = vmatmul.mubr.f32.gmra.mrb[0].mxu0 %v3509
    %v5496 = vpop.f32.mrb[0].mxu0
    %v5497 = vadd.f32 %v5420, %v5496
    %v5498 = vpop.f32.mrb[0].mxu0
    %v5499 = vadd.f32 %v5422, %v5498
    %5500 = vdwg.mxu0
    %5501 = vmatprep.subr.mxu0 %v3518
    %5502 = vmatpush1.msra.mxu0 %v3517
    %5503 = vmatprep.subr.mxu0 %v3526
    %5504 = vmatpush1.msra.mxu0 %v3525
    %5505 = vmatprep.subr.mxu0 %v3534
    %5506 = vmatpush1.msra.mxu0 %v3533
    %5507 = vmatprep.subr.mxu0 %v3542
    %5508 = vmatpush1.msra.mxu0 %v3541
    %5509 = vmatprep.subr.mxu0 %v3550
    %5510 = vmatpush1.msra.mxu0 %v3549
    %5511 = vmatprep.subr.mxu0 %v3558
    %5512 = vmatpush1.msra.mxu0 %v3557
    %5513 = vmatprep.subr.mxu0 %v3566
    %5514 = vmatpush1.msra.mxu0 %v3565
    %5515 = vmatprep.subr.mxu0 %v3574
    %5516 = vmatpush1.msra.mxu0 %v3573
    %5517 = vmatprep.subr.mxu0 %v3582
    %5518 = vmatpush1.msra.mxu0 %v3581
    %5519 = vmatprep.subr.mxu0 %v3590
    %5520 = vmatpush1.msra.mxu0 %v3589
    %5521 = vmatprep.subr.mxu0 %v3598
    %5522 = vmatpush1.msra.mxu0 %v3597
    %5523 = vmatprep.subr.mxu0 %v3606
    %5524 = vmatpush1.msra.mxu0 %v3605
    %5525 = vmatprep.subr.mxu0 %v3614
    %5526 = vmatpush1.msra.mxu0 %v3613
    %5527 = vmatprep.subr.mxu0 %v3622
    %5528 = vmatpush1.msra.mxu0 %v3621
    %5529 = vmatprep.subr.mxu0 %v3630
    %5530 = vmatpush1.msra.mxu0 %v3629
    %5531 = vmatprep.subr.mxu0 %v3638
    %5532 = vmatpush1.msra.mxu0 %v3637
    %5533 = vmatprep.subr.mxu0 %v3646
    %5534 = vmatpush1.msra.mxu0 %v3645
    %5535 = vmatprep.subr.mxu0 %v3654
    %5536 = vmatpush1.msra.mxu0 %v3653
    %5537 = vmatprep.subr.mxu0 %v3662
    %5538 = vmatpush1.msra.mxu0 %v3661
    %5539 = vmatprep.subr.mxu0 %v3670
    %5540 = vmatpush1.msra.mxu0 %v3669
    %5541 = vmatprep.subr.mxu0 %v3678
    %5542 = vmatpush1.msra.mxu0 %v3677
    %5543 = vmatprep.subr.mxu0 %v3686
    %5544 = vmatpush1.msra.mxu0 %v3685
    %5545 = vmatprep.subr.mxu0 %v3694
    %5546 = vmatpush1.msra.mxu0 %v3693
    %5547 = vmatprep.subr.mxu0 %v3702
    %5548 = vmatpush1.msra.mxu0 %v3701
    %5549 = vmatprep.subr.mxu0 %v3710
    %5550 = vmatpush1.msra.mxu0 %v3709
    %5551 = vmatprep.subr.mxu0 %v3718
    %5552 = vmatpush1.msra.mxu0 %v3717
    %5553 = vmatprep.subr.mxu0 %v3726
    %5554 = vmatpush1.msra.mxu0 %v3725
    %5555 = vmatprep.subr.mxu0 %v3734
    %5556 = vmatpush1.msra.mxu0 %v3733
    %5557 = vmatprep.subr.mxu0 %v3742
    %5558 = vmatpush1.msra.mxu0 %v3741
    %5559 = vmatprep.subr.mxu0 %v3750
    %5560 = vmatpush1.msra.mxu0 %v3749
    %5561 = vmatprep.subr.mxu0 %v3758
    %5562 = vmatpush1.msra.mxu0 %v3757
    %5563 = vmatprep.subr.mxu0 %v3766
    %5564 = vmatpush1.msra.mxu0 %v3765
    %5565 = vmatprep.mubr.f32.mxu0 %v3496
    %5566 = vmatmul.mubr.f32.gmra.mrb[0].mxu0 %v3495
    %v5567 = vpop.f32.mrb[0].mxu0
    %v5568 = vadd.f32 %v4564, %v5567
    %v5569 = vpop.f32.mrb[0].mxu0
    %v5570 = vadd.f32 %v4568, %v5569
    %5571 = vmatprep.mubr.f32.mxu0 %v3504
    %5572 = vmatmul.mubr.f32.gmra.mrb[0].mxu0 %v3503
    %v5573 = vpop.f32.mrb[0].mxu0
    %v5574 = vadd.f32 %v4564, %v5573
    %v5575 = vpop.f32.mrb[0].mxu0
    %v5576 = vadd.f32 %v4568, %v5575
    %5577 = vdwg.mxu0
    %5578 = vmatprep.subr.mxu0 %v3774
    %5579 = vmatpush1.msra.mxu0 %v3773
    %5580 = vmatprep.subr.mxu0 %v3782
    %5581 = vmatpush1.msra.mxu0 %v3781
    %5582 = vmatprep.subr.mxu0 %v3790
    %5583 = vmatpush1.msra.mxu0 %v3789
    %5584 = vmatprep.subr.mxu0 %v3798
    %5585 = vmatpush1.msra.mxu0 %v3797
    %5586 = vmatprep.subr.mxu0 %v3806
    %5587 = vmatpush1.msra.mxu0 %v3805
    %5588 = vmatprep.subr.mxu0 %v3814
    %5589 = vmatpush1.msra.mxu0 %v3813
    %5590 = vmatprep.subr.mxu0 %v3822
    %5591 = vmatpush1.msra.mxu0 %v3821
    %5592 = vmatprep.subr.mxu0 %v3830
    %5593 = vmatpush1.msra.mxu0 %v3829
    %5594 = vmatprep.subr.mxu0 %v3838
    %5595 = vmatpush1.msra.mxu0 %v3837
    %5596 = vmatprep.subr.mxu0 %v3846
    %5597 = vmatpush1.msra.mxu0 %v3845
    %5598 = vmatprep.subr.mxu0 %v3854
    %5599 = vmatpush1.msra.mxu0 %v3853
    %5600 = vmatprep.subr.mxu0 %v3862
    %5601 = vmatpush1.msra.mxu0 %v3861
    %5602 = vmatprep.subr.mxu0 %v3870
    %5603 = vmatpush1.msra.mxu0 %v3869
    %5604 = vmatprep.subr.mxu0 %v3878
    %5605 = vmatpush1.msra.mxu0 %v3877
    %5606 = vmatprep.subr.mxu0 %v3886
    %5607 = vmatpush1.msra.mxu0 %v3885
    %5608 = vmatprep.subr.mxu0 %v3894
    %5609 = vmatpush1.msra.mxu0 %v3893
    %5610 = vmatprep.subr.mxu0 %v3902
    %5611 = vmatpush1.msra.mxu0 %v3901
    %5612 = vmatprep.subr.mxu0 %v3910
    %5613 = vmatpush1.msra.mxu0 %v3909
    %5614 = vmatprep.subr.mxu0 %v3918
    %5615 = vmatpush1.msra.mxu0 %v3917
    %5616 = vmatprep.subr.mxu0 %v3926
    %5617 = vmatpush1.msra.mxu0 %v3925
    %5618 = vmatprep.subr.mxu0 %v3934
    %5619 = vmatpush1.msra.mxu0 %v3933
    %5620 = vmatprep.subr.mxu0 %v3942
    %5621 = vmatpush1.msra.mxu0 %v3941
    %5622 = vmatprep.subr.mxu0 %v3950
    %5623 = vmatpush1.msra.mxu0 %v3949
    %5624 = vmatprep.subr.mxu0 %v3958
    %5625 = vmatpush1.msra.mxu0 %v3957
    %5626 = vmatprep.subr.mxu0 %v3966
    %5627 = vmatpush1.msra.mxu0 %v3965
    %5628 = vmatprep.subr.mxu0 %v3974
    %5629 = vmatpush1.msra.mxu0 %v3973
    %5630 = vmatprep.subr.mxu0 %v3982
    %5631 = vmatpush1.msra.mxu0 %v3981
    %5632 = vmatprep.subr.mxu0 %v3990
    %5633 = vmatpush1.msra.mxu0 %v3989
    %5634 = vmatprep.subr.mxu0 %v3998
    %5635 = vmatpush1.msra.mxu0 %v3997
    %5636 = vmatprep.subr.mxu0 %v4006
    %5637 = vmatpush1.msra.mxu0 %v4005
    %5638 = vmatprep.subr.mxu0 %v4014
    %5639 = vmatpush1.msra.mxu0 %v4013
    %5640 = vmatprep.subr.mxu0 %v4022
    %5641 = vmatpush1.msra.mxu0 %v4021
    %5642 = vmatprep.mubr.f32.mxu0 %v3498
    %5643 = vmatmul.mubr.f32.gmra.mrb[0].mxu0 %v3497
    %v5644 = vpop.f32.mrb[0].mxu0
    %v5645 = vadd.f32 %v5568, %v5644
    %v5646 = vpop.f32.mrb[0].mxu0
    %v5647 = vadd.f32 %v5570, %v5646
    %5648 = vmatprep.mubr.f32.mxu0 %v3506
    %5649 = vmatmul.mubr.f32.gmra.mrb[0].mxu0 %v3505
    %v5650 = vpop.f32.mrb[0].mxu0
    %v5651 = vadd.f32 %v5574, %v5650
    %v5652 = vpop.f32.mrb[0].mxu0
    %v5653 = vadd.f32 %v5576, %v5652
    %5654 = vdwg.mxu0
    %5655 = vmatprep.subr.mxu0 %v4030
    %5656 = vmatpush1.msra.mxu0 %v4029
    %5657 = vmatprep.subr.mxu0 %v4038
    %5658 = vmatpush1.msra.mxu0 %v4037
    %5659 = vmatprep.subr.mxu0 %v4046
    %5660 = vmatpush1.msra.mxu0 %v4045
    %5661 = vmatprep.subr.mxu0 %v4054
    %5662 = vmatpush1.msra.mxu0 %v4053
    %5663 = vmatprep.subr.mxu0 %v4062
    %5664 = vmatpush1.msra.mxu0 %v4061
    %5665 = vmatprep.subr.mxu0 %v4070
    %5666 = vmatpush1.msra.mxu0 %v4069
    %5667 = vmatprep.subr.mxu0 %v4078
    %5668 = vmatpush1.msra.mxu0 %v4077
    %5669 = vmatprep.subr.mxu0 %v4086
    %5670 = vmatpush1.msra.mxu0 %v4085
    %5671 = vmatprep.subr.mxu0 %v4094
    %5672 = vmatpush1.msra.mxu0 %v4093
    %5673 = vmatprep.subr.mxu0 %v4102
    %5674 = vmatpush1.msra.mxu0 %v4101
    %5675 = vmatprep.subr.mxu0 %v4110
    %5676 = vmatpush1.msra.mxu0 %v4109
    %5677 = vmatprep.subr.mxu0 %v4118
    %5678 = vmatpush1.msra.mxu0 %v4117
    %5679 = vmatprep.subr.mxu0 %v4126
    %5680 = vmatpush1.msra.mxu0 %v4125
    %5681 = vmatprep.subr.mxu0 %v4134
    %5682 = vmatpush1.msra.mxu0 %v4133
    %5683 = vmatprep.subr.mxu0 %v4142
    %5684 = vmatpush1.msra.mxu0 %v4141
    %5685 = vmatprep.subr.mxu0 %v4150
    %5686 = vmatpush1.msra.mxu0 %v4149
    %5687 = vmatprep.subr.mxu0 %v4158
    %5688 = vmatpush1.msra.mxu0 %v4157
    %5689 = vmatprep.subr.mxu0 %v4166
    %5690 = vmatpush1.msra.mxu0 %v4165
    %5691 = vmatprep.subr.mxu0 %v4174
    %5692 = vmatpush1.msra.mxu0 %v4173
    %5693 = vmatprep.subr.mxu0 %v4182
    %5694 = vmatpush1.msra.mxu0 %v4181
    %5695 = vmatprep.subr.mxu0 %v4190
    %5696 = vmatpush1.msra.mxu0 %v4189
    %5697 = vmatprep.subr.mxu0 %v4198
    %5698 = vmatpush1.msra.mxu0 %v4197
    %5699 = vmatprep.subr.mxu0 %v4206
    %5700 = vmatpush1.msra.mxu0 %v4205
    %5701 = vmatprep.subr.mxu0 %v4214
    %5702 = vmatpush1.msra.mxu0 %v4213
    %5703 = vmatprep.subr.mxu0 %v4222
    %5704 = vmatpush1.msra.mxu0 %v4221
    %5705 = vmatprep.subr.mxu0 %v4230
    %5706 = vmatpush1.msra.mxu0 %v4229
    %5707 = vmatprep.subr.mxu0 %v4238
    %5708 = vmatpush1.msra.mxu0 %v4237
    %5709 = vmatprep.subr.mxu0 %v4246
    %5710 = vmatpush1.msra.mxu0 %v4245
    %5711 = vmatprep.subr.mxu0 %v4254
    %5712 = vmatpush1.msra.mxu0 %v4253
    %5713 = vmatprep.subr.mxu0 %v4262
    %5714 = vmatpush1.msra.mxu0 %v4261
    %5715 = vmatprep.subr.mxu0 %v4270
    %5716 = vmatpush1.msra.mxu0 %v4269
    %5717 = vmatprep.subr.mxu0 %v4278
    %5718 = vmatpush1.msra.mxu0 %v4277
    %5719 = vmatprep.mubr.f32.mxu0 %v3500
    %5720 = vmatmul.mubr.f32.gmra.mrb[0].mxu0 %v3499
    %v5721 = vpop.f32.mrb[0].mxu0
    %v5722 = vadd.f32 %v5645, %v5721
    %v5723 = vpop.f32.mrb[0].mxu0
    %v5724 = vadd.f32 %v5647, %v5723
    %5725 = vmatprep.mubr.f32.mxu0 %v3508
    %5726 = vmatmul.mubr.f32.gmra.mrb[0].mxu0 %v3507
    %v5727 = vpop.f32.mrb[0].mxu0
    %v5728 = vadd.f32 %v5651, %v5727
    %v5729 = vpop.f32.mrb[0].mxu0
    %v5730 = vadd.f32 %v5653, %v5729
    %5731 = vdwg.mxu0
    %5732 = vmatprep.subr.mxu0 %v4286
    %5733 = vmatpush1.msra.mxu0 %v4285
    %5734 = vmatprep.subr.mxu0 %v4294
    %5735 = vmatpush1.msra.mxu0 %v4293
    %5736 = vmatprep.subr.mxu0 %v4302
    %5737 = vmatpush1.msra.mxu0 %v4301
    %5738 = vmatprep.subr.mxu0 %v4310
    %5739 = vmatpush1.msra.mxu0 %v4309
    %5740 = vmatprep.subr.mxu0 %v4318
    %5741 = vmatpush1.msra.mxu0 %v4317
    %5742 = vmatprep.subr.mxu0 %v4326
    %5743 = vmatpush1.msra.mxu0 %v4325
    %5744 = vmatprep.subr.mxu0 %v4334
    %5745 = vmatpush1.msra.mxu0 %v4333
    %5746 = vmatprep.subr.mxu0 %v4342
    %5747 = vmatpush1.msra.mxu0 %v4341
    %5748 = vmatprep.subr.mxu0 %v4350
    %5749 = vmatpush1.msra.mxu0 %v4349
    %5750 = vmatprep.subr.mxu0 %v4358
    %5751 = vmatpush1.msra.mxu0 %v4357
    %5752 = vmatprep.subr.mxu0 %v4366
    %5753 = vmatpush1.msra.mxu0 %v4365
    %5754 = vmatprep.subr.mxu0 %v4374
    %5755 = vmatpush1.msra.mxu0 %v4373
    %5756 = vmatprep.subr.mxu0 %v4382
    %5757 = vmatpush1.msra.mxu0 %v4381
    %5758 = vmatprep.subr.mxu0 %v4390
    %5759 = vmatpush1.msra.mxu0 %v4389
    %5760 = vmatprep.subr.mxu0 %v4398
    %5761 = vmatpush1.msra.mxu0 %v4397
    %5762 = vmatprep.subr.mxu0 %v4406
    %5763 = vmatpush1.msra.mxu0 %v4405
    %5764 = vmatprep.subr.mxu0 %v4414
    %5765 = vmatpush1.msra.mxu0 %v4413
    %5766 = vmatprep.subr.mxu0 %v4422
    %5767 = vmatpush1.msra.mxu0 %v4421
    %5768 = vmatprep.subr.mxu0 %v4430
    %5769 = vmatpush1.msra.mxu0 %v4429
    %5770 = vmatprep.subr.mxu0 %v4438
    %5771 = vmatpush1.msra.mxu0 %v4437
    %5772 = vmatprep.subr.mxu0 %v4446
    %5773 = vmatpush1.msra.mxu0 %v4445
    %5774 = vmatprep.subr.mxu0 %v4454
    %5775 = vmatpush1.msra.mxu0 %v4453
    %5776 = vmatprep.subr.mxu0 %v4462
    %5777 = vmatpush1.msra.mxu0 %v4461
    %5778 = vmatprep.subr.mxu0 %v4470
    %5779 = vmatpush1.msra.mxu0 %v4469
    %5780 = vmatprep.subr.mxu0 %v4478
    %5781 = vmatpush1.msra.mxu0 %v4477
    %5782 = vmatprep.subr.mxu0 %v4486
    %5783 = vmatpush1.msra.mxu0 %v4485
    %5784 = vmatprep.subr.mxu0 %v4494
    %5785 = vmatpush1.msra.mxu0 %v4493
    %5786 = vmatprep.subr.mxu0 %v4502
    %5787 = vmatpush1.msra.mxu0 %v4501
    %5788 = vmatprep.subr.mxu0 %v4510
    %5789 = vmatpush1.msra.mxu0 %v4509
    %5790 = vmatprep.subr.mxu0 %v4518
    %5791 = vmatpush1.msra.mxu0 %v4517
    %5792 = vmatprep.subr.mxu0 %v4526
    %5793 = vmatpush1.msra.mxu0 %v4525
    %5794 = vmatprep.subr.mxu0 %v4534
    %5795 = vmatpush1.msra.mxu0 %v4533
    %5796 = vmatprep.mubr.f32.mxu0 %v3502
    %5797 = vmatmul.mubr.f32.gmra.mrb[0].mxu0 %v3501
    %v5798 = vpop.f32.mrb[0].mxu0
    %v5799 = vadd.f32 %v5722, %v5798
    %v5800 = vpop.f32.mrb[0].mxu0
    %v5801 = vadd.f32 %v5724, %v5800
    %5802 = vmatprep.mubr.f32.mxu0 %v3510
    %5803 = vmatmul.mubr.f32.gmra.mrb[0].mxu0 %v3509
    %v5804 = vpop.f32.mrb[0].mxu0
    %v5805 = vadd.f32 %v5728, %v5804
    %v5806 = vpop.f32.mrb[0].mxu0
    %v5807 = vadd.f32 %v5730, %v5806
    %5808 = vdwg.mxu0
    %v5809 = vmax.f32 %v4875, 0.0
    %v5810 = vmax.f32 %v4877, 0.0
    %v5811 = vmax.f32 %v5183, 0.0
    %v5812 = vmax.f32 %v5185, 0.0
    %v5813 = vmax.f32 %v5491, 0.0
    %v5814 = vmax.f32 %v5493, 0.0
    %v5815 = vmax.f32 %v5799, 0.0
    %v5816 = vmax.f32 %v5801, 0.0
    %v5817 = vmax.f32 %v4881, 0.0
    %v5818 = vmax.f32 %v4883, 0.0
    %v5819 = vmax.f32 %v5189, 0.0
    %v5820 = vmax.f32 %v5191, 0.0
    %v5821 = vmax.f32 %v5497, 0.0
    %v5822 = vmax.f32 %v5499, 0.0
    %v5823 = vmax.f32 %v5805, 0.0
    %v5824 = vmax.f32 %v5807, 0.0
    %v5825 = vld [vmem:[#allocation12] sm:$0xff]
    %v5826 = vld [vmem:[#allocation12 + $0x8] sm:$0xff]
    %v5827 = vld [vmem:[#allocation12 + $0x10] sm:$0xff]
    %v5828 = vld [vmem:[#allocation12 + $0x18] sm:$0xff]
    %v5829 = vld [vmem:[#allocation12 + $0x20] sm:$0xff]
    %v5830 = vld [vmem:[#allocation12 + $0x28] sm:$0xff]
    %v5831 = vld [vmem:[#allocation12 + $0x30] sm:$0xff]
    %v5832 = vld [vmem:[#allocation12 + $0x38] sm:$0xff]
    %v5833 = vld [vmem:[#allocation12 + $0x40] sm:$0xff]
    %v5834 = vld [vmem:[#allocation12 + $0x48] sm:$0xff]
    %v5835 = vld [vmem:[#allocation12 + $0x50] sm:$0xff]
    %v5836 = vld [vmem:[#allocation12 + $0x58] sm:$0xff]
    %v5837 = vld [vmem:[#allocation12 + $0x60] sm:$0xff]
    %v5838 = vld [vmem:[#allocation12 + $0x68] sm:$0xff]
    %v5839 = vld [vmem:[#allocation12 + $0x70] sm:$0xff]
    %v5840 = vld [vmem:[#allocation12 + $0x78] sm:$0xff]
    %v5841 = vld [vmem:[#allocation12 + $0x80] sm:$0xff]
    %v5842 = vld [vmem:[#allocation12 + $0x88] sm:$0xff]
    %v5843 = vld [vmem:[#allocation12 + $0x90] sm:$0xff]
    %v5844 = vld [vmem:[#allocation12 + $0x98] sm:$0xff]
    %v5845 = vld [vmem:[#allocation12 + $0xa0] sm:$0xff]
    %v5846 = vld [vmem:[#allocation12 + $0xa8] sm:$0xff]
    %v5847 = vld [vmem:[#allocation12 + $0xb0] sm:$0xff]
    %v5848 = vld [vmem:[#allocation12 + $0xb8] sm:$0xff]
    %v5849 = vld [vmem:[#allocation12 + $0xc0] sm:$0xff]
    %v5850 = vld [vmem:[#allocation12 + $0xc8] sm:$0xff]
    %v5851 = vld [vmem:[#allocation12 + $0xd0] sm:$0xff]
    %v5852 = vld [vmem:[#allocation12 + $0xd8] sm:$0xff]
    %v5853 = vld [vmem:[#allocation12 + $0xe0] sm:$0xff]
    %v5854 = vld [vmem:[#allocation12 + $0xe8] sm:$0xff]
    %v5855 = vld [vmem:[#allocation12 + $0xf0] sm:$0xff]
    %v5856 = vld [vmem:[#allocation12 + $0xf8] sm:$0xff]
    %v5857 = vld [vmem:[#allocation12 + $0x100] sm:$0xff]
    %v5858 = vld [vmem:[#allocation12 + $0x108] sm:$0xff]
    %v5859 = vld [vmem:[#allocation12 + $0x110] sm:$0xff]
    %v5860 = vld [vmem:[#allocation12 + $0x118] sm:$0xff]
    %v5861 = vld [vmem:[#allocation12 + $0x120] sm:$0xff]
    %v5862 = vld [vmem:[#allocation12 + $0x128] sm:$0xff]
    %v5863 = vld [vmem:[#allocation12 + $0x130] sm:$0xff]
    %v5864 = vld [vmem:[#allocation12 + $0x138] sm:$0xff]
    %v5865 = vld [vmem:[#allocation12 + $0x140] sm:$0xff]
    %v5866 = vld [vmem:[#allocation12 + $0x148] sm:$0xff]
    %v5867 = vld [vmem:[#allocation12 + $0x150] sm:$0xff]
    %v5868 = vld [vmem:[#allocation12 + $0x158] sm:$0xff]
    %v5869 = vld [vmem:[#allocation12 + $0x160] sm:$0xff]
    %v5870 = vld [vmem:[#allocation12 + $0x168] sm:$0xff]
    %v5871 = vld [vmem:[#allocation12 + $0x170] sm:$0xff]
    %v5872 = vld [vmem:[#allocation12 + $0x178] sm:$0xff]
    %v5873 = vld [vmem:[#allocation12 + $0x180] sm:$0xff]
    %v5874 = vld [vmem:[#allocation12 + $0x188] sm:$0xff]
    %v5875 = vld [vmem:[#allocation12 + $0x190] sm:$0xff]
    %v5876 = vld [vmem:[#allocation12 + $0x198] sm:$0xff]
    %v5877 = vld [vmem:[#allocation12 + $0x1a0] sm:$0xff]
    %v5878 = vld [vmem:[#allocation12 + $0x1a8] sm:$0xff]
    %v5879 = vld [vmem:[#allocation12 + $0x1b0] sm:$0xff]
    %v5880 = vld [vmem:[#allocation12 + $0x1b8] sm:$0xff]
    %v5881 = vld [vmem:[#allocation12 + $0x1c0] sm:$0xff]
    %v5882 = vld [vmem:[#allocation12 + $0x1c8] sm:$0xff]
    %v5883 = vld [vmem:[#allocation12 + $0x1d0] sm:$0xff]
    %v5884 = vld [vmem:[#allocation12 + $0x1d8] sm:$0xff]
    %v5885 = vld [vmem:[#allocation12 + $0x1e0] sm:$0xff]
    %v5886 = vld [vmem:[#allocation12 + $0x1e8] sm:$0xff]
    %v5887 = vld [vmem:[#allocation12 + $0x1f0] sm:$0xff]
    %v5888 = vld [vmem:[#allocation12 + $0x1f8] sm:$0xff]
    %v5889 = vld [vmem:[#allocation12 + $0x200] sm:$0xff]
    %v5890 = vld [vmem:[#allocation12 + $0x208] sm:$0xff]
    %v5891 = vld [vmem:[#allocation12 + $0x210] sm:$0xff]
    %v5892 = vld [vmem:[#allocation12 + $0x218] sm:$0xff]
    %v5893 = vld [vmem:[#allocation12 + $0x220] sm:$0xff]
    %v5894 = vld [vmem:[#allocation12 + $0x228] sm:$0xff]
    %v5895 = vld [vmem:[#allocation12 + $0x230] sm:$0xff]
    %v5896 = vld [vmem:[#allocation12 + $0x238] sm:$0xff]
    %v5897 = vld [vmem:[#allocation12 + $0x240] sm:$0xff]
    %v5898 = vld [vmem:[#allocation12 + $0x248] sm:$0xff]
    %v5899 = vld [vmem:[#allocation12 + $0x250] sm:$0xff]
    %v5900 = vld [vmem:[#allocation12 + $0x258] sm:$0xff]
    %v5901 = vld [vmem:[#allocation12 + $0x260] sm:$0xff]
    %v5902 = vld [vmem:[#allocation12 + $0x268] sm:$0xff]
    %v5903 = vld [vmem:[#allocation12 + $0x270] sm:$0xff]
    %v5904 = vld [vmem:[#allocation12 + $0x278] sm:$0xff]
    %v5905 = vld [vmem:[#allocation12 + $0x280] sm:$0xff]
    %v5906 = vld [vmem:[#allocation12 + $0x288] sm:$0xff]
    %v5907 = vld [vmem:[#allocation12 + $0x290] sm:$0xff]
    %v5908 = vld [vmem:[#allocation12 + $0x298] sm:$0xff]
    %v5909 = vld [vmem:[#allocation12 + $0x2a0] sm:$0xff]
    %v5910 = vld [vmem:[#allocation12 + $0x2a8] sm:$0xff]
    %v5911 = vld [vmem:[#allocation12 + $0x2b0] sm:$0xff]
    %v5912 = vld [vmem:[#allocation12 + $0x2b8] sm:$0xff]
    %v5913 = vld [vmem:[#allocation12 + $0x2c0] sm:$0xff]
    %v5914 = vld [vmem:[#allocation12 + $0x2c8] sm:$0xff]
    %v5915 = vld [vmem:[#allocation12 + $0x2d0] sm:$0xff]
    %v5916 = vld [vmem:[#allocation12 + $0x2d8] sm:$0xff]
    %v5917 = vld [vmem:[#allocation12 + $0x2e0] sm:$0xff]
    %v5918 = vld [vmem:[#allocation12 + $0x2e8] sm:$0xff]
    %v5919 = vld [vmem:[#allocation12 + $0x2f0] sm:$0xff]
    %v5920 = vld [vmem:[#allocation12 + $0x2f8] sm:$0xff]
    %v5921 = vld [vmem:[#allocation12 + $0x300] sm:$0xff]
    %v5922 = vld [vmem:[#allocation12 + $0x308] sm:$0xff]
    %v5923 = vld [vmem:[#allocation12 + $0x310] sm:$0xff]
    %v5924 = vld [vmem:[#allocation12 + $0x318] sm:$0xff]
    %v5925 = vld [vmem:[#allocation12 + $0x320] sm:$0xff]
    %v5926 = vld [vmem:[#allocation12 + $0x328] sm:$0xff]
    %v5927 = vld [vmem:[#allocation12 + $0x330] sm:$0xff]
    %v5928 = vld [vmem:[#allocation12 + $0x338] sm:$0xff]
    %v5929 = vld [vmem:[#allocation12 + $0x340] sm:$0xff]
    %v5930 = vld [vmem:[#allocation12 + $0x348] sm:$0xff]
    %v5931 = vld [vmem:[#allocation12 + $0x350] sm:$0xff]
    %v5932 = vld [vmem:[#allocation12 + $0x358] sm:$0xff]
    %v5933 = vld [vmem:[#allocation12 + $0x360] sm:$0xff]
    %v5934 = vld [vmem:[#allocation12 + $0x368] sm:$0xff]
    %v5935 = vld [vmem:[#allocation12 + $0x370] sm:$0xff]
    %v5936 = vld [vmem:[#allocation12 + $0x378] sm:$0xff]
    %v5937 = vld [vmem:[#allocation12 + $0x380] sm:$0xff]
    %v5938 = vld [vmem:[#allocation12 + $0x388] sm:$0xff]
    %v5939 = vld [vmem:[#allocation12 + $0x390] sm:$0xff]
    %v5940 = vld [vmem:[#allocation12 + $0x398] sm:$0xff]
    %v5941 = vld [vmem:[#allocation12 + $0x3a0] sm:$0xff]
    %v5942 = vld [vmem:[#allocation12 + $0x3a8] sm:$0xff]
    %v5943 = vld [vmem:[#allocation12 + $0x3b0] sm:$0xff]
    %v5944 = vld [vmem:[#allocation12 + $0x3b8] sm:$0xff]
    %v5945 = vld [vmem:[#allocation12 + $0x3c0] sm:$0xff]
    %v5946 = vld [vmem:[#allocation12 + $0x3c8] sm:$0xff]
    %v5947 = vld [vmem:[#allocation12 + $0x3d0] sm:$0xff]
    %v5948 = vld [vmem:[#allocation12 + $0x3d8] sm:$0xff]
    %v5949 = vld [vmem:[#allocation12 + $0x3e0] sm:$0xff]
    %v5950 = vld [vmem:[#allocation12 + $0x3e8] sm:$0xff]
    %v5951 = vld [vmem:[#allocation12 + $0x3f0] sm:$0xff]
    %v5952 = vld [vmem:[#allocation12 + $0x3f8] sm:$0xff]
    %v5953 = vld [vmem:[#allocation12 + $0x400] sm:$0xff]
    %v5954 = vld [vmem:[#allocation12 + $0x408] sm:$0xff]
    %v5955 = vld [vmem:[#allocation12 + $0x410] sm:$0xff]
    %v5956 = vld [vmem:[#allocation12 + $0x418] sm:$0xff]
    %v5957 = vld [vmem:[#allocation12 + $0x420] sm:$0xff]
    %v5958 = vld [vmem:[#allocation12 + $0x428] sm:$0xff]
    %v5959 = vld [vmem:[#allocation12 + $0x430] sm:$0xff]
    %v5960 = vld [vmem:[#allocation12 + $0x438] sm:$0xff]
    %v5961 = vld [vmem:[#allocation12 + $0x440] sm:$0xff]
    %v5962 = vld [vmem:[#allocation12 + $0x448] sm:$0xff]
    %v5963 = vld [vmem:[#allocation12 + $0x450] sm:$0xff]
    %v5964 = vld [vmem:[#allocation12 + $0x458] sm:$0xff]
    %v5965 = vld [vmem:[#allocation12 + $0x460] sm:$0xff]
    %v5966 = vld [vmem:[#allocation12 + $0x468] sm:$0xff]
    %v5967 = vld [vmem:[#allocation12 + $0x470] sm:$0xff]
    %v5968 = vld [vmem:[#allocation12 + $0x478] sm:$0xff]
    %v5969 = vld [vmem:[#allocation12 + $0x480] sm:$0xff]
    %v5970 = vld [vmem:[#allocation12 + $0x488] sm:$0xff]
    %v5971 = vld [vmem:[#allocation12 + $0x490] sm:$0xff]
    %v5972 = vld [vmem:[#allocation12 + $0x498] sm:$0xff]
    %v5973 = vld [vmem:[#allocation12 + $0x4a0] sm:$0xff]
    %v5974 = vld [vmem:[#allocation12 + $0x4a8] sm:$0xff]
    %v5975 = vld [vmem:[#allocation12 + $0x4b0] sm:$0xff]
    %v5976 = vld [vmem:[#allocation12 + $0x4b8] sm:$0xff]
    %v5977 = vld [vmem:[#allocation12 + $0x4c0] sm:$0xff]
    %v5978 = vld [vmem:[#allocation12 + $0x4c8] sm:$0xff]
    %v5979 = vld [vmem:[#allocation12 + $0x4d0] sm:$0xff]
    %v5980 = vld [vmem:[#allocation12 + $0x4d8] sm:$0xff]
    %v5981 = vld [vmem:[#allocation12 + $0x4e0] sm:$0xff]
    %v5982 = vld [vmem:[#allocation12 + $0x4e8] sm:$0xff]
    %v5983 = vld [vmem:[#allocation12 + $0x4f0] sm:$0xff]
    %v5984 = vld [vmem:[#allocation12 + $0x4f8] sm:$0xff]
    %v5985 = vld [vmem:[#allocation12 + $0x500] sm:$0xff]
    %v5986 = vld [vmem:[#allocation12 + $0x508] sm:$0xff]
    %v5987 = vld [vmem:[#allocation12 + $0x510] sm:$0xff]
    %v5988 = vld [vmem:[#allocation12 + $0x518] sm:$0xff]
    %v5989 = vld [vmem:[#allocation12 + $0x520] sm:$0xff]
    %v5990 = vld [vmem:[#allocation12 + $0x528] sm:$0xff]
    %v5991 = vld [vmem:[#allocation12 + $0x530] sm:$0xff]
    %v5992 = vld [vmem:[#allocation12 + $0x538] sm:$0xff]
    %v5993 = vld [vmem:[#allocation12 + $0x540] sm:$0xff]
    %v5994 = vld [vmem:[#allocation12 + $0x548] sm:$0xff]
    %v5995 = vld [vmem:[#allocation12 + $0x550] sm:$0xff]
    %v5996 = vld [vmem:[#allocation12 + $0x558] sm:$0xff]
    %v5997 = vld [vmem:[#allocation12 + $0x560] sm:$0xff]
    %v5998 = vld [vmem:[#allocation12 + $0x568] sm:$0xff]
    %v5999 = vld [vmem:[#allocation12 + $0x570] sm:$0xff]
    %v6000 = vld [vmem:[#allocation12 + $0x578] sm:$0xff]
    %v6001 = vld [vmem:[#allocation12 + $0x580] sm:$0xff]
    %v6002 = vld [vmem:[#allocation12 + $0x588] sm:$0xff]
    %v6003 = vld [vmem:[#allocation12 + $0x590] sm:$0xff]
    %v6004 = vld [vmem:[#allocation12 + $0x598] sm:$0xff]
    %v6005 = vld [vmem:[#allocation12 + $0x5a0] sm:$0xff]
    %v6006 = vld [vmem:[#allocation12 + $0x5a8] sm:$0xff]
    %v6007 = vld [vmem:[#allocation12 + $0x5b0] sm:$0xff]
    %v6008 = vld [vmem:[#allocation12 + $0x5b8] sm:$0xff]
    %v6009 = vld [vmem:[#allocation12 + $0x5c0] sm:$0xff]
    %v6010 = vld [vmem:[#allocation12 + $0x5c8] sm:$0xff]
    %v6011 = vld [vmem:[#allocation12 + $0x5d0] sm:$0xff]
    %v6012 = vld [vmem:[#allocation12 + $0x5d8] sm:$0xff]
    %v6013 = vld [vmem:[#allocation12 + $0x5e0] sm:$0xff]
    %v6014 = vld [vmem:[#allocation12 + $0x5e8] sm:$0xff]
    %v6015 = vld [vmem:[#allocation12 + $0x5f0] sm:$0xff]
    %v6016 = vld [vmem:[#allocation12 + $0x5f8] sm:$0xff]
    %v6017 = vld [vmem:[#allocation12 + $0x600] sm:$0xff]
    %v6018 = vld [vmem:[#allocation12 + $0x608] sm:$0xff]
    %v6019 = vld [vmem:[#allocation12 + $0x610] sm:$0xff]
    %v6020 = vld [vmem:[#allocation12 + $0x618] sm:$0xff]
    %v6021 = vld [vmem:[#allocation12 + $0x620] sm:$0xff]
    %v6022 = vld [vmem:[#allocation12 + $0x628] sm:$0xff]
    %v6023 = vld [vmem:[#allocation12 + $0x630] sm:$0xff]
    %v6024 = vld [vmem:[#allocation12 + $0x638] sm:$0xff]
    %v6025 = vld [vmem:[#allocation12 + $0x640] sm:$0xff]
    %v6026 = vld [vmem:[#allocation12 + $0x648] sm:$0xff]
    %v6027 = vld [vmem:[#allocation12 + $0x650] sm:$0xff]
    %v6028 = vld [vmem:[#allocation12 + $0x658] sm:$0xff]
    %v6029 = vld [vmem:[#allocation12 + $0x660] sm:$0xff]
    %v6030 = vld [vmem:[#allocation12 + $0x668] sm:$0xff]
    %v6031 = vld [vmem:[#allocation12 + $0x670] sm:$0xff]
    %v6032 = vld [vmem:[#allocation12 + $0x678] sm:$0xff]
    %v6033 = vld [vmem:[#allocation12 + $0x680] sm:$0xff]
    %v6034 = vld [vmem:[#allocation12 + $0x688] sm:$0xff]
    %v6035 = vld [vmem:[#allocation12 + $0x690] sm:$0xff]
    %v6036 = vld [vmem:[#allocation12 + $0x698] sm:$0xff]
    %v6037 = vld [vmem:[#allocation12 + $0x6a0] sm:$0xff]
    %v6038 = vld [vmem:[#allocation12 + $0x6a8] sm:$0xff]
    %v6039 = vld [vmem:[#allocation12 + $0x6b0] sm:$0xff]
    %v6040 = vld [vmem:[#allocation12 + $0x6b8] sm:$0xff]
    %v6041 = vld [vmem:[#allocation12 + $0x6c0] sm:$0xff]
    %v6042 = vld [vmem:[#allocation12 + $0x6c8] sm:$0xff]
    %v6043 = vld [vmem:[#allocation12 + $0x6d0] sm:$0xff]
    %v6044 = vld [vmem:[#allocation12 + $0x6d8] sm:$0xff]
    %v6045 = vld [vmem:[#allocation12 + $0x6e0] sm:$0xff]
    %v6046 = vld [vmem:[#allocation12 + $0x6e8] sm:$0xff]
    %v6047 = vld [vmem:[#allocation12 + $0x6f0] sm:$0xff]
    %v6048 = vld [vmem:[#allocation12 + $0x6f8] sm:$0xff]
    %v6049 = vld [vmem:[#allocation12 + $0x700] sm:$0xff]
    %v6050 = vld [vmem:[#allocation12 + $0x708] sm:$0xff]
    %v6051 = vld [vmem:[#allocation12 + $0x710] sm:$0xff]
    %v6052 = vld [vmem:[#allocation12 + $0x718] sm:$0xff]
    %v6053 = vld [vmem:[#allocation12 + $0x720] sm:$0xff]
    %v6054 = vld [vmem:[#allocation12 + $0x728] sm:$0xff]
    %v6055 = vld [vmem:[#allocation12 + $0x730] sm:$0xff]
    %v6056 = vld [vmem:[#allocation12 + $0x738] sm:$0xff]
    %v6057 = vld [vmem:[#allocation12 + $0x740] sm:$0xff]
    %v6058 = vld [vmem:[#allocation12 + $0x748] sm:$0xff]
    %v6059 = vld [vmem:[#allocation12 + $0x750] sm:$0xff]
    %v6060 = vld [vmem:[#allocation12 + $0x758] sm:$0xff]
    %v6061 = vld [vmem:[#allocation12 + $0x760] sm:$0xff]
    %v6062 = vld [vmem:[#allocation12 + $0x768] sm:$0xff]
    %v6063 = vld [vmem:[#allocation12 + $0x770] sm:$0xff]
    %v6064 = vld [vmem:[#allocation12 + $0x778] sm:$0xff]
    %v6065 = vld [vmem:[#allocation12 + $0x780] sm:$0xff]
    %v6066 = vld [vmem:[#allocation12 + $0x788] sm:$0xff]
    %v6067 = vld [vmem:[#allocation12 + $0x790] sm:$0xff]
    %v6068 = vld [vmem:[#allocation12 + $0x798] sm:$0xff]
    %v6069 = vld [vmem:[#allocation12 + $0x7a0] sm:$0xff]
    %v6070 = vld [vmem:[#allocation12 + $0x7a8] sm:$0xff]
    %v6071 = vld [vmem:[#allocation12 + $0x7b0] sm:$0xff]
    %v6072 = vld [vmem:[#allocation12 + $0x7b8] sm:$0xff]
    %v6073 = vld [vmem:[#allocation12 + $0x7c0] sm:$0xff]
    %v6074 = vld [vmem:[#allocation12 + $0x7c8] sm:$0xff]
    %v6075 = vld [vmem:[#allocation12 + $0x7d0] sm:$0xff]
    %v6076 = vld [vmem:[#allocation12 + $0x7d8] sm:$0xff]
    %v6077 = vld [vmem:[#allocation12 + $0x7e0] sm:$0xff]
    %v6078 = vld [vmem:[#allocation12 + $0x7e8] sm:$0xff]
    %v6079 = vld [vmem:[#allocation12 + $0x7f0] sm:$0xff]
    %v6080 = vld [vmem:[#allocation12 + $0x7f8] sm:$0xff]
    %v6081 = vld [vmem:[#allocation12 + $0x800] sm:$0xff]
    %v6082 = vld [vmem:[#allocation12 + $0x808] sm:$0xff]
    %v6083 = vld [vmem:[#allocation12 + $0x810] sm:$0xff]
    %v6084 = vld [vmem:[#allocation12 + $0x818] sm:$0xff]
    %v6085 = vld [vmem:[#allocation12 + $0x820] sm:$0xff]
    %v6086 = vld [vmem:[#allocation12 + $0x828] sm:$0xff]
    %v6087 = vld [vmem:[#allocation12 + $0x830] sm:$0xff]
    %v6088 = vld [vmem:[#allocation12 + $0x838] sm:$0xff]
    %v6089 = vld [vmem:[#allocation12 + $0x840] sm:$0xff]
    %v6090 = vld [vmem:[#allocation12 + $0x848] sm:$0xff]
    %v6091 = vld [vmem:[#allocation12 + $0x850] sm:$0xff]
    %v6092 = vld [vmem:[#allocation12 + $0x858] sm:$0xff]
    %v6093 = vld [vmem:[#allocation12 + $0x860] sm:$0xff]
    %v6094 = vld [vmem:[#allocation12 + $0x868] sm:$0xff]
    %v6095 = vld [vmem:[#allocation12 + $0x870] sm:$0xff]
    %v6096 = vld [vmem:[#allocation12 + $0x878] sm:$0xff]
    %v6097 = vld [vmem:[#allocation12 + $0x880] sm:$0xff]
    %v6098 = vld [vmem:[#allocation12 + $0x888] sm:$0xff]
    %v6099 = vld [vmem:[#allocation12 + $0x890] sm:$0xff]
    %v6100 = vld [vmem:[#allocation12 + $0x898] sm:$0xff]
    %v6101 = vld [vmem:[#allocation12 + $0x8a0] sm:$0xff]
    %v6102 = vld [vmem:[#allocation12 + $0x8a8] sm:$0xff]
    %v6103 = vld [vmem:[#allocation12 + $0x8b0] sm:$0xff]
    %v6104 = vld [vmem:[#allocation12 + $0x8b8] sm:$0xff]
    %v6105 = vld [vmem:[#allocation12 + $0x8c0] sm:$0xff]
    %v6106 = vld [vmem:[#allocation12 + $0x8c8] sm:$0xff]
    %v6107 = vld [vmem:[#allocation12 + $0x8d0] sm:$0xff]
    %v6108 = vld [vmem:[#allocation12 + $0x8d8] sm:$0xff]
    %v6109 = vld [vmem:[#allocation12 + $0x8e0] sm:$0xff]
    %v6110 = vld [vmem:[#allocation12 + $0x8e8] sm:$0xff]
    %v6111 = vld [vmem:[#allocation12 + $0x8f0] sm:$0xff]
    %v6112 = vld [vmem:[#allocation12 + $0x8f8] sm:$0xff]
    %v6113 = vld [vmem:[#allocation12 + $0x900] sm:$0xff]
    %v6114 = vld [vmem:[#allocation12 + $0x908] sm:$0xff]
    %v6115 = vld [vmem:[#allocation12 + $0x910] sm:$0xff]
    %v6116 = vld [vmem:[#allocation12 + $0x918] sm:$0xff]
    %v6117 = vld [vmem:[#allocation12 + $0x920] sm:$0xff]
    %v6118 = vld [vmem:[#allocation12 + $0x928] sm:$0xff]
    %v6119 = vld [vmem:[#allocation12 + $0x930] sm:$0xff]
    %v6120 = vld [vmem:[#allocation12 + $0x938] sm:$0xff]
    %v6121 = vld [vmem:[#allocation12 + $0x940] sm:$0xff]
    %v6122 = vld [vmem:[#allocation12 + $0x948] sm:$0xff]
    %v6123 = vld [vmem:[#allocation12 + $0x950] sm:$0xff]
    %v6124 = vld [vmem:[#allocation12 + $0x958] sm:$0xff]
    %v6125 = vld [vmem:[#allocation12 + $0x960] sm:$0xff]
    %v6126 = vld [vmem:[#allocation12 + $0x968] sm:$0xff]
    %v6127 = vld [vmem:[#allocation12 + $0x970] sm:$0xff]
    %v6128 = vld [vmem:[#allocation12 + $0x978] sm:$0xff]
    %v6129 = vld [vmem:[#allocation12 + $0x980] sm:$0xff]
    %v6130 = vld [vmem:[#allocation12 + $0x988] sm:$0xff]
    %v6131 = vld [vmem:[#allocation12 + $0x990] sm:$0xff]
    %v6132 = vld [vmem:[#allocation12 + $0x998] sm:$0xff]
    %v6133 = vld [vmem:[#allocation12 + $0x9a0] sm:$0xff]
    %v6134 = vld [vmem:[#allocation12 + $0x9a8] sm:$0xff]
    %v6135 = vld [vmem:[#allocation12 + $0x9b0] sm:$0xff]
    %v6136 = vld [vmem:[#allocation12 + $0x9b8] sm:$0xff]
    %v6137 = vld [vmem:[#allocation12 + $0x9c0] sm:$0xff]
    %v6138 = vld [vmem:[#allocation12 + $0x9c8] sm:$0xff]
    %v6139 = vld [vmem:[#allocation12 + $0x9d0] sm:$0xff]
    %v6140 = vld [vmem:[#allocation12 + $0x9d8] sm:$0xff]
    %v6141 = vld [vmem:[#allocation12 + $0x9e0] sm:$0xff]
    %v6142 = vld [vmem:[#allocation12 + $0x9e8] sm:$0xff]
    %v6143 = vld [vmem:[#allocation12 + $0x9f0] sm:$0xff]
    %v6144 = vld [vmem:[#allocation12 + $0x9f8] sm:$0xff]
    %v6145 = vld [vmem:[#allocation12 + $0xa00] sm:$0xff]
    %v6146 = vld [vmem:[#allocation12 + $0xa08] sm:$0xff]
    %v6147 = vld [vmem:[#allocation12 + $0xa10] sm:$0xff]
    %v6148 = vld [vmem:[#allocation12 + $0xa18] sm:$0xff]
    %v6149 = vld [vmem:[#allocation12 + $0xa20] sm:$0xff]
    %v6150 = vld [vmem:[#allocation12 + $0xa28] sm:$0xff]
    %v6151 = vld [vmem:[#allocation12 + $0xa30] sm:$0xff]
    %v6152 = vld [vmem:[#allocation12 + $0xa38] sm:$0xff]
    %v6153 = vld [vmem:[#allocation12 + $0xa40] sm:$0xff]
    %v6154 = vld [vmem:[#allocation12 + $0xa48] sm:$0xff]
    %v6155 = vld [vmem:[#allocation12 + $0xa50] sm:$0xff]
    %v6156 = vld [vmem:[#allocation12 + $0xa58] sm:$0xff]
    %v6157 = vld [vmem:[#allocation12 + $0xa60] sm:$0xff]
    %v6158 = vld [vmem:[#allocation12 + $0xa68] sm:$0xff]
    %v6159 = vld [vmem:[#allocation12 + $0xa70] sm:$0xff]
    %v6160 = vld [vmem:[#allocation12 + $0xa78] sm:$0xff]
    %v6161 = vld [vmem:[#allocation12 + $0xa80] sm:$0xff]
    %v6162 = vld [vmem:[#allocation12 + $0xa88] sm:$0xff]
    %v6163 = vld [vmem:[#allocation12 + $0xa90] sm:$0xff]
    %v6164 = vld [vmem:[#allocation12 + $0xa98] sm:$0xff]
    %v6165 = vld [vmem:[#allocation12 + $0xaa0] sm:$0xff]
    %v6166 = vld [vmem:[#allocation12 + $0xaa8] sm:$0xff]
    %v6167 = vld [vmem:[#allocation12 + $0xab0] sm:$0xff]
    %v6168 = vld [vmem:[#allocation12 + $0xab8] sm:$0xff]
    %v6169 = vld [vmem:[#allocation12 + $0xac0] sm:$0xff]
    %v6170 = vld [vmem:[#allocation12 + $0xac8] sm:$0xff]
    %v6171 = vld [vmem:[#allocation12 + $0xad0] sm:$0xff]
    %v6172 = vld [vmem:[#allocation12 + $0xad8] sm:$0xff]
    %v6173 = vld [vmem:[#allocation12 + $0xae0] sm:$0xff]
    %v6174 = vld [vmem:[#allocation12 + $0xae8] sm:$0xff]
    %v6175 = vld [vmem:[#allocation12 + $0xaf0] sm:$0xff]
    %v6176 = vld [vmem:[#allocation12 + $0xaf8] sm:$0xff]
    %v6177 = vld [vmem:[#allocation12 + $0xb00] sm:$0xff]
    %v6178 = vld [vmem:[#allocation12 + $0xb08] sm:$0xff]
    %v6179 = vld [vmem:[#allocation12 + $0xb10] sm:$0xff]
    %v6180 = vld [vmem:[#allocation12 + $0xb18] sm:$0xff]
    %v6181 = vld [vmem:[#allocation12 + $0xb20] sm:$0xff]
    %v6182 = vld [vmem:[#allocation12 + $0xb28] sm:$0xff]
    %v6183 = vld [vmem:[#allocation12 + $0xb30] sm:$0xff]
    %v6184 = vld [vmem:[#allocation12 + $0xb38] sm:$0xff]
    %v6185 = vld [vmem:[#allocation12 + $0xb40] sm:$0xff]
    %v6186 = vld [vmem:[#allocation12 + $0xb48] sm:$0xff]
    %v6187 = vld [vmem:[#allocation12 + $0xb50] sm:$0xff]
    %v6188 = vld [vmem:[#allocation12 + $0xb58] sm:$0xff]
    %v6189 = vld [vmem:[#allocation12 + $0xb60] sm:$0xff]
    %v6190 = vld [vmem:[#allocation12 + $0xb68] sm:$0xff]
    %v6191 = vld [vmem:[#allocation12 + $0xb70] sm:$0xff]
    %v6192 = vld [vmem:[#allocation12 + $0xb78] sm:$0xff]
    %v6193 = vld [vmem:[#allocation12 + $0xb80] sm:$0xff]
    %v6194 = vld [vmem:[#allocation12 + $0xb88] sm:$0xff]
    %v6195 = vld [vmem:[#allocation12 + $0xb90] sm:$0xff]
    %v6196 = vld [vmem:[#allocation12 + $0xb98] sm:$0xff]
    %v6197 = vld [vmem:[#allocation12 + $0xba0] sm:$0xff]
    %v6198 = vld [vmem:[#allocation12 + $0xba8] sm:$0xff]
    %v6199 = vld [vmem:[#allocation12 + $0xbb0] sm:$0xff]
    %v6200 = vld [vmem:[#allocation12 + $0xbb8] sm:$0xff]
    %v6201 = vld [vmem:[#allocation12 + $0xbc0] sm:$0xff]
    %v6202 = vld [vmem:[#allocation12 + $0xbc8] sm:$0xff]
    %v6203 = vld [vmem:[#allocation12 + $0xbd0] sm:$0xff]
    %v6204 = vld [vmem:[#allocation12 + $0xbd8] sm:$0xff]
    %v6205 = vld [vmem:[#allocation12 + $0xbe0] sm:$0xff]
    %v6206 = vld [vmem:[#allocation12 + $0xbe8] sm:$0xff]
    %v6207 = vld [vmem:[#allocation12 + $0xbf0] sm:$0xff]
    %v6208 = vld [vmem:[#allocation12 + $0xbf8] sm:$0xff]
    %v6209 = vld [vmem:[#allocation13] sm:$0x7]
    %v6211 = vlaneseq
    %v6212 = vshrl.u32 %v6211, 7
    %v6213 = vsub.s32 0, %v6212
    %v6214 = vrot.slane %v6209, %v6213
    %v6215 = vlaneseq
    %v6216 = vshrl.u32 %v6215, 7
    %v6217 = vsub.s32 1, %v6216
    %v6218 = vrot.slane %v6209, %v6217
    %v6219 = vlaneseq
    %v6220 = vshrl.u32 %v6219, 7
    %v6221 = vsub.s32 2, %v6220
    %v6222 = vrot.slane %v6209, %v6221
    %6226 = vmatprep.subr.mxu0 %v5826
    %6227 = vmatpush1.msra.mxu0 %v5825
    %6228 = vmatprep.subr.mxu0 %v5829
    %6229 = vmatpush1.msra.mxu0 %v5828
    %6230 = vmatprep.subr.mxu0 %v5832
    %6231 = vmatpush1.msra.mxu0 %v5831
    %6232 = vmatprep.subr.mxu0 %v5835
    %6233 = vmatpush1.msra.mxu0 %v5834
    %6234 = vmatprep.subr.mxu0 %v5838
    %6235 = vmatpush1.msra.mxu0 %v5837
    %6236 = vmatprep.subr.mxu0 %v5841
    %6237 = vmatpush1.msra.mxu0 %v5840
    %6238 = vmatprep.subr.mxu0 %v5844
    %6239 = vmatpush1.msra.mxu0 %v5843
    %6240 = vmatprep.subr.mxu0 %v5847
    %6241 = vmatpush1.msra.mxu0 %v5846
    %6242 = vmatprep.subr.mxu0 %v5850
    %6243 = vmatpush1.msra.mxu0 %v5849
    %6244 = vmatprep.subr.mxu0 %v5853
    %6245 = vmatpush1.msra.mxu0 %v5852
    %6246 = vmatprep.subr.mxu0 %v5856
    %6247 = vmatpush1.msra.mxu0 %v5855
    %6248 = vmatprep.subr.mxu0 %v5859
    %6249 = vmatpush1.msra.mxu0 %v5858
    %6250 = vmatprep.subr.mxu0 %v5862
    %6251 = vmatpush1.msra.mxu0 %v5861
    %6252 = vmatprep.subr.mxu0 %v5865
    %6253 = vmatpush1.msra.mxu0 %v5864
    %6254 = vmatprep.subr.mxu0 %v5868
    %6255 = vmatpush1.msra.mxu0 %v5867
    %6256 = vmatprep.subr.mxu0 %v5871
    %6257 = vmatpush1.msra.mxu0 %v5870
    %6258 = vmatprep.subr.mxu0 %v5874
    %6259 = vmatpush1.msra.mxu0 %v5873
    %6260 = vmatprep.subr.mxu0 %v5877
    %6261 = vmatpush1.msra.mxu0 %v5876
    %6262 = vmatprep.subr.mxu0 %v5880
    %6263 = vmatpush1.msra.mxu0 %v5879
    %6264 = vmatprep.subr.mxu0 %v5883
    %6265 = vmatpush1.msra.mxu0 %v5882
    %6266 = vmatprep.subr.mxu0 %v5886
    %6267 = vmatpush1.msra.mxu0 %v5885
    %6268 = vmatprep.subr.mxu0 %v5889
    %6269 = vmatpush1.msra.mxu0 %v5888
    %6270 = vmatprep.subr.mxu0 %v5892
    %6271 = vmatpush1.msra.mxu0 %v5891
    %6272 = vmatprep.subr.mxu0 %v5895
    %6273 = vmatpush1.msra.mxu0 %v5894
    %6274 = vmatprep.subr.mxu0 %v5898
    %6275 = vmatpush1.msra.mxu0 %v5897
    %6276 = vmatprep.subr.mxu0 %v5901
    %6277 = vmatpush1.msra.mxu0 %v5900
    %6278 = vmatprep.subr.mxu0 %v5904
    %6279 = vmatpush1.msra.mxu0 %v5903
    %6280 = vmatprep.subr.mxu0 %v5907
    %6281 = vmatpush1.msra.mxu0 %v5906
    %6282 = vmatprep.subr.mxu0 %v5910
    %6283 = vmatpush1.msra.mxu0 %v5909
    %6284 = vmatprep.subr.mxu0 %v5913
    %6285 = vmatpush1.msra.mxu0 %v5912
    %6286 = vmatprep.subr.mxu0 %v5916
    %6287 = vmatpush1.msra.mxu0 %v5915
    %6288 = vmatprep.subr.mxu0 %v5919
    %6289 = vmatpush1.msra.mxu0 %v5918
    %6290 = vmatprep.mubr.f32.mxu0 %v5810
    %6291 = vmatmul.mubr.f32.gmra.mrb[0].mxu0 %v5809
    %v6292 = vpop.f32.mrb[0].mxu0
    %v6293 = vadd.f32 %v6214, %v6292
    %v6294 = vpop.f32.mrb[0].mxu0
    %v6295 = vadd.f32 %v6218, %v6294
    %6296 = vmatprep.mubr.f32.mxu0 %v5818
    %6297 = vmatmul.mubr.f32.gmra.mrb[0].mxu0 %v5817
    %v6298 = vpop.f32.mrb[0].mxu0
    %v6299 = vadd.f32 %v6214, %v6298
    %v6300 = vpop.f32.mrb[0].mxu0
    %v6301 = vadd.f32 %v6218, %v6300
    %6302 = vdwg.mxu0
    %6303 = vmatprep.subr.mxu0 %v5922
    %6304 = vmatpush1.msra.mxu0 %v5921
    %6305 = vmatprep.subr.mxu0 %v5925
    %6306 = vmatpush1.msra.mxu0 %v5924
    %6307 = vmatprep.subr.mxu0 %v5928
    %6308 = vmatpush1.msra.mxu0 %v5927
    %6309 = vmatprep.subr.mxu0 %v5931
    %6310 = vmatpush1.msra.mxu0 %v5930
    %6311 = vmatprep.subr.mxu0 %v5934
    %6312 = vmatpush1.msra.mxu0 %v5933
    %6313 = vmatprep.subr.mxu0 %v5937
    %6314 = vmatpush1.msra.mxu0 %v5936
    %6315 = vmatprep.subr.mxu0 %v5940
    %6316 = vmatpush1.msra.mxu0 %v5939
    %6317 = vmatprep.subr.mxu0 %v5943
    %6318 = vmatpush1.msra.mxu0 %v5942
    %6319 = vmatprep.subr.mxu0 %v5946
    %6320 = vmatpush1.msra.mxu0 %v5945
    %6321 = vmatprep.subr.mxu0 %v5949
    %6322 = vmatpush1.msra.mxu0 %v5948
    %6323 = vmatprep.subr.mxu0 %v5952
    %6324 = vmatpush1.msra.mxu0 %v5951
    %6325 = vmatprep.subr.mxu0 %v5955
    %6326 = vmatpush1.msra.mxu0 %v5954
    %6327 = vmatprep.subr.mxu0 %v5958
    %6328 = vmatpush1.msra.mxu0 %v5957
    %6329 = vmatprep.subr.mxu0 %v5961
    %6330 = vmatpush1.msra.mxu0 %v5960
    %6331 = vmatprep.subr.mxu0 %v5964
    %6332 = vmatpush1.msra.mxu0 %v5963
    %6333 = vmatprep.subr.mxu0 %v5967
    %6334 = vmatpush1.msra.mxu0 %v5966
    %6335 = vmatprep.subr.mxu0 %v5970
    %6336 = vmatpush1.msra.mxu0 %v5969
    %6337 = vmatprep.subr.mxu0 %v5973
    %6338 = vmatpush1.msra.mxu0 %v5972
    %6339 = vmatprep.subr.mxu0 %v5976
    %6340 = vmatpush1.msra.mxu0 %v5975
    %6341 = vmatprep.subr.mxu0 %v5979
    %6342 = vmatpush1.msra.mxu0 %v5978
    %6343 = vmatprep.subr.mxu0 %v5982
    %6344 = vmatpush1.msra.mxu0 %v5981
    %6345 = vmatprep.subr.mxu0 %v5985
    %6346 = vmatpush1.msra.mxu0 %v5984
    %6347 = vmatprep.subr.mxu0 %v5988
    %6348 = vmatpush1.msra.mxu0 %v5987
    %6349 = vmatprep.subr.mxu0 %v5991
    %6350 = vmatpush1.msra.mxu0 %v5990
    %6351 = vmatprep.subr.mxu0 %v5994
    %6352 = vmatpush1.msra.mxu0 %v5993
    %6353 = vmatprep.subr.mxu0 %v5997
    %6354 = vmatpush1.msra.mxu0 %v5996
    %6355 = vmatprep.subr.mxu0 %v6000
    %6356 = vmatpush1.msra.mxu0 %v5999
    %6357 = vmatprep.subr.mxu0 %v6003
    %6358 = vmatpush1.msra.mxu0 %v6002
    %6359 = vmatprep.subr.mxu0 %v6006
    %6360 = vmatpush1.msra.mxu0 %v6005
    %6361 = vmatprep.subr.mxu0 %v6009
    %6362 = vmatpush1.msra.mxu0 %v6008
    %6363 = vmatprep.subr.mxu0 %v6012
    %6364 = vmatpush1.msra.mxu0 %v6011
    %6365 = vmatprep.subr.mxu0 %v6015
    %6366 = vmatpush1.msra.mxu0 %v6014
    %6367 = vmatprep.mubr.f32.mxu0 %v5812
    %6368 = vmatmul.mubr.f32.gmra.mrb[0].mxu0 %v5811
    %v6369 = vpop.f32.mrb[0].mxu0
    %v6370 = vadd.f32 %v6293, %v6369
    %v6371 = vpop.f32.mrb[0].mxu0
    %v6372 = vadd.f32 %v6295, %v6371
    %6373 = vmatprep.mubr.f32.mxu0 %v5820
    %6374 = vmatmul.mubr.f32.gmra.mrb[0].mxu0 %v5819
    %v6375 = vpop.f32.mrb[0].mxu0
    %v6376 = vadd.f32 %v6299, %v6375
    %v6377 = vpop.f32.mrb[0].mxu0
    %v6378 = vadd.f32 %v6301, %v6377
    %6379 = vdwg.mxu0
    %6380 = vmatprep.subr.mxu0 %v6018
    %6381 = vmatpush1.msra.mxu0 %v6017
    %6382 = vmatprep.subr.mxu0 %v6021
    %6383 = vmatpush1.msra.mxu0 %v6020
    %6384 = vmatprep.subr.mxu0 %v6024
    %6385 = vmatpush1.msra.mxu0 %v6023
    %6386 = vmatprep.subr.mxu0 %v6027
    %6387 = vmatpush1.msra.mxu0 %v6026
    %6388 = vmatprep.subr.mxu0 %v6030
    %6389 = vmatpush1.msra.mxu0 %v6029
    %6390 = vmatprep.subr.mxu0 %v6033
    %6391 = vmatpush1.msra.mxu0 %v6032
    %6392 = vmatprep.subr.mxu0 %v6036
    %6393 = vmatpush1.msra.mxu0 %v6035
    %6394 = vmatprep.subr.mxu0 %v6039
    %6395 = vmatpush1.msra.mxu0 %v6038
    %6396 = vmatprep.subr.mxu0 %v6042
    %6397 = vmatpush1.msra.mxu0 %v6041
    %6398 = vmatprep.subr.mxu0 %v6045
    %6399 = vmatpush1.msra.mxu0 %v6044
    %6400 = vmatprep.subr.mxu0 %v6048
    %6401 = vmatpush1.msra.mxu0 %v6047
    %6402 = vmatprep.subr.mxu0 %v6051
    %6403 = vmatpush1.msra.mxu0 %v6050
    %6404 = vmatprep.subr.mxu0 %v6054
    %6405 = vmatpush1.msra.mxu0 %v6053
    %6406 = vmatprep.subr.mxu0 %v6057
    %6407 = vmatpush1.msra.mxu0 %v6056
    %6408 = vmatprep.subr.mxu0 %v6060
    %6409 = vmatpush1.msra.mxu0 %v6059
    %6410 = vmatprep.subr.mxu0 %v6063
    %6411 = vmatpush1.msra.mxu0 %v6062
    %6412 = vmatprep.subr.mxu0 %v6066
    %6413 = vmatpush1.msra.mxu0 %v6065
    %6414 = vmatprep.subr.mxu0 %v6069
    %6415 = vmatpush1.msra.mxu0 %v6068
    %6416 = vmatprep.subr.mxu0 %v6072
    %6417 = vmatpush1.msra.mxu0 %v6071
    %6418 = vmatprep.subr.mxu0 %v6075
    %6419 = vmatpush1.msra.mxu0 %v6074
    %6420 = vmatprep.subr.mxu0 %v6078
    %6421 = vmatpush1.msra.mxu0 %v6077
    %6422 = vmatprep.subr.mxu0 %v6081
    %6423 = vmatpush1.msra.mxu0 %v6080
    %6424 = vmatprep.subr.mxu0 %v6084
    %6425 = vmatpush1.msra.mxu0 %v6083
    %6426 = vmatprep.subr.mxu0 %v6087
    %6427 = vmatpush1.msra.mxu0 %v6086
    %6428 = vmatprep.subr.mxu0 %v6090
    %6429 = vmatpush1.msra.mxu0 %v6089
    %6430 = vmatprep.subr.mxu0 %v6093
    %6431 = vmatpush1.msra.mxu0 %v6092
    %6432 = vmatprep.subr.mxu0 %v6096
    %6433 = vmatpush1.msra.mxu0 %v6095
    %6434 = vmatprep.subr.mxu0 %v6099
    %6435 = vmatpush1.msra.mxu0 %v6098
    %6436 = vmatprep.subr.mxu0 %v6102
    %6437 = vmatpush1.msra.mxu0 %v6101
    %6438 = vmatprep.subr.mxu0 %v6105
    %6439 = vmatpush1.msra.mxu0 %v6104
    %6440 = vmatprep.subr.mxu0 %v6108
    %6441 = vmatpush1.msra.mxu0 %v6107
    %6442 = vmatprep.subr.mxu0 %v6111
    %6443 = vmatpush1.msra.mxu0 %v6110
    %6444 = vmatprep.mubr.f32.mxu0 %v5814
    %6445 = vmatmul.mubr.f32.gmra.mrb[0].mxu0 %v5813
    %v6446 = vpop.f32.mrb[0].mxu0
    %v6447 = vadd.f32 %v6370, %v6446
    %v6448 = vpop.f32.mrb[0].mxu0
    %v6449 = vadd.f32 %v6372, %v6448
    %6450 = vmatprep.mubr.f32.mxu0 %v5822
    %6451 = vmatmul.mubr.f32.gmra.mrb[0].mxu0 %v5821
    %v6452 = vpop.f32.mrb[0].mxu0
    %v6453 = vadd.f32 %v6376, %v6452
    %v6454 = vpop.f32.mrb[0].mxu0
    %v6455 = vadd.f32 %v6378, %v6454
    %6456 = vdwg.mxu0
    %6457 = vmatprep.subr.mxu0 %v6114
    %6458 = vmatpush1.msra.mxu0 %v6113
    %6459 = vmatprep.subr.mxu0 %v6117
    %6460 = vmatpush1.msra.mxu0 %v6116
    %6461 = vmatprep.subr.mxu0 %v6120
    %6462 = vmatpush1.msra.mxu0 %v6119
    %6463 = vmatprep.subr.mxu0 %v6123
    %6464 = vmatpush1.msra.mxu0 %v6122
    %6465 = vmatprep.subr.mxu0 %v6126
    %6466 = vmatpush1.msra.mxu0 %v6125
    %6467 = vmatprep.subr.mxu0 %v6129
    %6468 = vmatpush1.msra.mxu0 %v6128
    %6469 = vmatprep.subr.mxu0 %v6132
    %6470 = vmatpush1.msra.mxu0 %v6131
    %6471 = vmatprep.subr.mxu0 %v6135
    %6472 = vmatpush1.msra.mxu0 %v6134
    %6473 = vmatprep.subr.mxu0 %v6138
    %6474 = vmatpush1.msra.mxu0 %v6137
    %6475 = vmatprep.subr.mxu0 %v6141
    %6476 = vmatpush1.msra.mxu0 %v6140
    %6477 = vmatprep.subr.mxu0 %v6144
    %6478 = vmatpush1.msra.mxu0 %v6143
    %6479 = vmatprep.subr.mxu0 %v6147
    %6480 = vmatpush1.msra.mxu0 %v6146
    %6481 = vmatprep.subr.mxu0 %v6150
    %6482 = vmatpush1.msra.mxu0 %v6149
    %6483 = vmatprep.subr.mxu0 %v6153
    %6484 = vmatpush1.msra.mxu0 %v6152
    %6485 = vmatprep.subr.mxu0 %v6156
    %6486 = vmatpush1.msra.mxu0 %v6155
    %6487 = vmatprep.subr.mxu0 %v6159
    %6488 = vmatpush1.msra.mxu0 %v6158
    %6489 = vmatprep.subr.mxu0 %v6162
    %6490 = vmatpush1.msra.mxu0 %v6161
    %6491 = vmatprep.subr.mxu0 %v6165
    %6492 = vmatpush1.msra.mxu0 %v6164
    %6493 = vmatprep.subr.mxu0 %v6168
    %6494 = vmatpush1.msra.mxu0 %v6167
    %6495 = vmatprep.subr.mxu0 %v6171
    %6496 = vmatpush1.msra.mxu0 %v6170
    %6497 = vmatprep.subr.mxu0 %v6174
    %6498 = vmatpush1.msra.mxu0 %v6173
    %6499 = vmatprep.subr.mxu0 %v6177
    %6500 = vmatpush1.msra.mxu0 %v6176
    %6501 = vmatprep.subr.mxu0 %v6180
    %6502 = vmatpush1.msra.mxu0 %v6179
    %6503 = vmatprep.subr.mxu0 %v6183
    %6504 = vmatpush1.msra.mxu0 %v6182
    %6505 = vmatprep.subr.mxu0 %v6186
    %6506 = vmatpush1.msra.mxu0 %v6185
    %6507 = vmatprep.subr.mxu0 %v6189
    %6508 = vmatpush1.msra.mxu0 %v6188
    %6509 = vmatprep.subr.mxu0 %v6192
    %6510 = vmatpush1.msra.mxu0 %v6191
    %6511 = vmatprep.subr.mxu0 %v6195
    %6512 = vmatpush1.msra.mxu0 %v6194
    %6513 = vmatprep.subr.mxu0 %v6198
    %6514 = vmatpush1.msra.mxu0 %v6197
    %6515 = vmatprep.subr.mxu0 %v6201
    %6516 = vmatpush1.msra.mxu0 %v6200
    %6517 = vmatprep.subr.mxu0 %v6204
    %6518 = vmatpush1.msra.mxu0 %v6203
    %6519 = vmatprep.subr.mxu0 %v6207
    %6520 = vmatpush1.msra.mxu0 %v6206
    %6521 = vmatprep.mubr.f32.mxu0 %v5816
    %6522 = vmatmul.mubr.f32.gmra.mrb[0].mxu0 %v5815
    %v6523 = vpop.f32.mrb[0].mxu0
    %v6524 = vadd.f32 %v6447, %v6523
    %v6525 = vpop.f32.mrb[0].mxu0
    %v6526 = vadd.f32 %v6449, %v6525
    %6527 = vmatprep.mubr.f32.mxu0 %v5824
    %6528 = vmatmul.mubr.f32.gmra.mrb[0].mxu0 %v5823
    %v6529 = vpop.f32.mrb[0].mxu0
    %v6530 = vadd.f32 %v6453, %v6529
    %v6531 = vpop.f32.mrb[0].mxu0
    %v6532 = vadd.f32 %v6455, %v6531
    %6533 = vdwg.mxu0
    %6534 = vmatprep.subr.mxu0 0.0
    %6535 = vmatpush1.msra.mxu0 %v5827
    %6536 = vmatprep.subr.mxu0 0.0
    %6537 = vmatpush1.msra.mxu0 %v5830
    %6538 = vmatprep.subr.mxu0 0.0
    %6539 = vmatpush1.msra.mxu0 %v5833
    %6540 = vmatprep.subr.mxu0 0.0
    %6541 = vmatpush1.msra.mxu0 %v5836
    %6542 = vmatprep.subr.mxu0 0.0
    %6543 = vmatpush1.msra.mxu0 %v5839
    %6544 = vmatprep.subr.mxu0 0.0
    %6545 = vmatpush1.msra.mxu0 %v5842
    %6546 = vmatprep.subr.mxu0 0.0
    %6547 = vmatpush1.msra.mxu0 %v5845
    %6548 = vmatprep.subr.mxu0 0.0
    %6549 = vmatpush1.msra.mxu0 %v5848
    %6550 = vmatprep.subr.mxu0 0.0
    %6551 = vmatpush1.msra.mxu0 %v5851
    %6552 = vmatprep.subr.mxu0 0.0
    %6553 = vmatpush1.msra.mxu0 %v5854
    %6554 = vmatprep.subr.mxu0 0.0
    %6555 = vmatpush1.msra.mxu0 %v5857
    %6556 = vmatprep.subr.mxu0 0.0
    %6557 = vmatpush1.msra.mxu0 %v5860
    %6558 = vmatprep.subr.mxu0 0.0
    %6559 = vmatpush1.msra.mxu0 %v5863
    %6560 = vmatprep.subr.mxu0 0.0
    %6561 = vmatpush1.msra.mxu0 %v5866
    %6562 = vmatprep.subr.mxu0 0.0
    %6563 = vmatpush1.msra.mxu0 %v5869
    %6564 = vmatprep.subr.mxu0 0.0
    %6565 = vmatpush1.msra.mxu0 %v5872
    %6566 = vmatprep.subr.mxu0 0.0
    %6567 = vmatpush1.msra.mxu0 %v5875
    %6568 = vmatprep.subr.mxu0 0.0
    %6569 = vmatpush1.msra.mxu0 %v5878
    %6570 = vmatprep.subr.mxu0 0.0
    %6571 = vmatpush1.msra.mxu0 %v5881
    %6572 = vmatprep.subr.mxu0 0.0
    %6573 = vmatpush1.msra.mxu0 %v5884
    %6574 = vmatprep.subr.mxu0 0.0
    %6575 = vmatpush1.msra.mxu0 %v5887
    %6576 = vmatprep.subr.mxu0 0.0
    %6577 = vmatpush1.msra.mxu0 %v5890
    %6578 = vmatprep.subr.mxu0 0.0
    %6579 = vmatpush1.msra.mxu0 %v5893
    %6580 = vmatprep.subr.mxu0 0.0
    %6581 = vmatpush1.msra.mxu0 %v5896
    %6582 = vmatprep.subr.mxu0 0.0
    %6583 = vmatpush1.msra.mxu0 %v5899
    %6584 = vmatprep.subr.mxu0 0.0
    %6585 = vmatpush1.msra.mxu0 %v5902
    %6586 = vmatprep.subr.mxu0 0.0
    %6587 = vmatpush1.msra.mxu0 %v5905
    %6588 = vmatprep.subr.mxu0 0.0
    %6589 = vmatpush1.msra.mxu0 %v5908
    %6590 = vmatprep.subr.mxu0 0.0
    %6591 = vmatpush1.msra.mxu0 %v5911
    %6592 = vmatprep.subr.mxu0 0.0
    %6593 = vmatpush1.msra.mxu0 %v5914
    %6594 = vmatprep.subr.mxu0 0.0
    %6595 = vmatpush1.msra.mxu0 %v5917
    %6596 = vmatprep.subr.mxu0 0.0
    %6597 = vmatpush1.msra.mxu0 %v5920
    %6598 = vmatprep.mubr.f32.mxu0 %v5810
    %6599 = vmatmul.mubr.f32.gmra.mrb[0].mxu0 %v5809
    %v6600 = vpop.f32.mrb[0].mxu0
    %v6601 = vadd.f32 %v6222, %v6600
    %v6602 = vpop.f32.mrb[0].mxu0
    %6603 = vmatprep.mubr.f32.mxu0 %v5818
    %6604 = vmatmul.mubr.f32.gmra.mrb[0].mxu0 %v5817
    %v6605 = vpop.f32.mrb[0].mxu0
    %v6606 = vadd.f32 %v6222, %v6605
    %v6607 = vpop.f32.mrb[0].mxu0
    %6608 = vdwg.mxu0
    %6609 = vmatprep.subr.mxu0 0.0
    %6610 = vmatpush1.msra.mxu0 %v5923
    %6611 = vmatprep.subr.mxu0 0.0
    %6612 = vmatpush1.msra.mxu0 %v5926
    %6613 = vmatprep.subr.mxu0 0.0
    %6614 = vmatpush1.msra.mxu0 %v5929
    %6615 = vmatprep.subr.mxu0 0.0
    %6616 = vmatpush1.msra.mxu0 %v5932
    %6617 = vmatprep.subr.mxu0 0.0
    %6618 = vmatpush1.msra.mxu0 %v5935
    %6619 = vmatprep.subr.mxu0 0.0
    %6620 = vmatpush1.msra.mxu0 %v5938
    %6621 = vmatprep.subr.mxu0 0.0
    %6622 = vmatpush1.msra.mxu0 %v5941
    %6623 = vmatprep.subr.mxu0 0.0
    %6624 = vmatpush1.msra.mxu0 %v5944
    %6625 = vmatprep.subr.mxu0 0.0
    %6626 = vmatpush1.msra.mxu0 %v5947
    %6627 = vmatprep.subr.mxu0 0.0
    %6628 = vmatpush1.msra.mxu0 %v5950
    %6629 = vmatprep.subr.mxu0 0.0
    %6630 = vmatpush1.msra.mxu0 %v5953
    %6631 = vmatprep.subr.mxu0 0.0
    %6632 = vmatpush1.msra.mxu0 %v5956
    %6633 = vmatprep.subr.mxu0 0.0
    %6634 = vmatpush1.msra.mxu0 %v5959
    %6635 = vmatprep.subr.mxu0 0.0
    %6636 = vmatpush1.msra.mxu0 %v5962
    %6637 = vmatprep.subr.mxu0 0.0
    %6638 = vmatpush1.msra.mxu0 %v5965
    %6639 = vmatprep.subr.mxu0 0.0
    %6640 = vmatpush1.msra.mxu0 %v5968
    %6641 = vmatprep.subr.mxu0 0.0
    %6642 = vmatpush1.msra.mxu0 %v5971
    %6643 = vmatprep.subr.mxu0 0.0
    %6644 = vmatpush1.msra.mxu0 %v5974
    %6645 = vmatprep.subr.mxu0 0.0
    %6646 = vmatpush1.msra.mxu0 %v5977
    %6647 = vmatprep.subr.mxu0 0.0
    %6648 = vmatpush1.msra.mxu0 %v5980
    %6649 = vmatprep.subr.mxu0 0.0
    %6650 = vmatpush1.msra.mxu0 %v5983
    %6651 = vmatprep.subr.mxu0 0.0
    %6652 = vmatpush1.msra.mxu0 %v5986
    %6653 = vmatprep.subr.mxu0 0.0
    %6654 = vmatpush1.msra.mxu0 %v5989
    %6655 = vmatprep.subr.mxu0 0.0
    %6656 = vmatpush1.msra.mxu0 %v5992
    %6657 = vmatprep.subr.mxu0 0.0
    %6658 = vmatpush1.msra.mxu0 %v5995
    %6659 = vmatprep.subr.mxu0 0.0
    %6660 = vmatpush1.msra.mxu0 %v5998
    %6661 = vmatprep.subr.mxu0 0.0
    %6662 = vmatpush1.msra.mxu0 %v6001
    %6663 = vmatprep.subr.mxu0 0.0
    %6664 = vmatpush1.msra.mxu0 %v6004
    %6665 = vmatprep.subr.mxu0 0.0
    %6666 = vmatpush1.msra.mxu0 %v6007
    %6667 = vmatprep.subr.mxu0 0.0
    %6668 = vmatpush1.msra.mxu0 %v6010
    %6669 = vmatprep.subr.mxu0 0.0
    %6670 = vmatpush1.msra.mxu0 %v6013
    %6671 = vmatprep.subr.mxu0 0.0
    %6672 = vmatpush1.msra.mxu0 %v6016
    %6673 = vmatprep.mubr.f32.mxu0 %v5812
    %6674 = vmatmul.mubr.f32.gmra.mrb[0].mxu0 %v5811
    %v6675 = vpop.f32.mrb[0].mxu0
    %v6676 = vadd.f32 %v6601, %v6675
    %v6677 = vpop.f32.mrb[0].mxu0
    %6678 = vmatprep.mubr.f32.mxu0 %v5820
    %6679 = vmatmul.mubr.f32.gmra.mrb[0].mxu0 %v5819
    %v6680 = vpop.f32.mrb[0].mxu0
    %v6681 = vadd.f32 %v6606, %v6680
    %v6682 = vpop.f32.mrb[0].mxu0
    %6683 = vdwg.mxu0
    %6684 = vmatprep.subr.mxu0 0.0
    %6685 = vmatpush1.msra.mxu0 %v6019
    %6686 = vmatprep.subr.mxu0 0.0
    %6687 = vmatpush1.msra.mxu0 %v6022
    %6688 = vmatprep.subr.mxu0 0.0
    %6689 = vmatpush1.msra.mxu0 %v6025
    %6690 = vmatprep.subr.mxu0 0.0
    %6691 = vmatpush1.msra.mxu0 %v6028
    %6692 = vmatprep.subr.mxu0 0.0
    %6693 = vmatpush1.msra.mxu0 %v6031
    %6694 = vmatprep.subr.mxu0 0.0
    %6695 = vmatpush1.msra.mxu0 %v6034
    %6696 = vmatprep.subr.mxu0 0.0
    %6697 = vmatpush1.msra.mxu0 %v6037
    %6698 = vmatprep.subr.mxu0 0.0
    %6699 = vmatpush1.msra.mxu0 %v6040
    %6700 = vmatprep.subr.mxu0 0.0
    %6701 = vmatpush1.msra.mxu0 %v6043
    %6702 = vmatprep.subr.mxu0 0.0
    %6703 = vmatpush1.msra.mxu0 %v6046
    %6704 = vmatprep.subr.mxu0 0.0
    %6705 = vmatpush1.msra.mxu0 %v6049
    %6706 = vmatprep.subr.mxu0 0.0
    %6707 = vmatpush1.msra.mxu0 %v6052
    %6708 = vmatprep.subr.mxu0 0.0
    %6709 = vmatpush1.msra.mxu0 %v6055
    %6710 = vmatprep.subr.mxu0 0.0
    %6711 = vmatpush1.msra.mxu0 %v6058
    %6712 = vmatprep.subr.mxu0 0.0
    %6713 = vmatpush1.msra.mxu0 %v6061
    %6714 = vmatprep.subr.mxu0 0.0
    %6715 = vmatpush1.msra.mxu0 %v6064
    %6716 = vmatprep.subr.mxu0 0.0
    %6717 = vmatpush1.msra.mxu0 %v6067
    %6718 = vmatprep.subr.mxu0 0.0
    %6719 = vmatpush1.msra.mxu0 %v6070
    %6720 = vmatprep.subr.mxu0 0.0
    %6721 = vmatpush1.msra.mxu0 %v6073
    %6722 = vmatprep.subr.mxu0 0.0
    %6723 = vmatpush1.msra.mxu0 %v6076
    %6724 = vmatprep.subr.mxu0 0.0
    %6725 = vmatpush1.msra.mxu0 %v6079
    %6726 = vmatprep.subr.mxu0 0.0
    %6727 = vmatpush1.msra.mxu0 %v6082
    %6728 = vmatprep.subr.mxu0 0.0
    %6729 = vmatpush1.msra.mxu0 %v6085
    %6730 = vmatprep.subr.mxu0 0.0
    %6731 = vmatpush1.msra.mxu0 %v6088
    %6732 = vmatprep.subr.mxu0 0.0
    %6733 = vmatpush1.msra.mxu0 %v6091
    %6734 = vmatprep.subr.mxu0 0.0
    %6735 = vmatpush1.msra.mxu0 %v6094
    %6736 = vmatprep.subr.mxu0 0.0
    %6737 = vmatpush1.msra.mxu0 %v6097
    %6738 = vmatprep.subr.mxu0 0.0
    %6739 = vmatpush1.msra.mxu0 %v6100
    %6740 = vmatprep.subr.mxu0 0.0
    %6741 = vmatpush1.msra.mxu0 %v6103
    %6742 = vmatprep.subr.mxu0 0.0
    %6743 = vmatpush1.msra.mxu0 %v6106
    %6744 = vmatprep.subr.mxu0 0.0
    %6745 = vmatpush1.msra.mxu0 %v6109
    %6746 = vmatprep.subr.mxu0 0.0
    %6747 = vmatpush1.msra.mxu0 %v6112
    %6748 = vmatprep.mubr.f32.mxu0 %v5814
    %6749 = vmatmul.mubr.f32.gmra.mrb[0].mxu0 %v5813
    %v6750 = vpop.f32.mrb[0].mxu0
    %v6751 = vadd.f32 %v6676, %v6750
    %v6752 = vpop.f32.mrb[0].mxu0
    %6753 = vmatprep.mubr.f32.mxu0 %v5822
    %6754 = vmatmul.mubr.f32.gmra.mrb[0].mxu0 %v5821
    %v6755 = vpop.f32.mrb[0].mxu0
    %v6756 = vadd.f32 %v6681, %v6755
    %v6757 = vpop.f32.mrb[0].mxu0
    %6758 = vdwg.mxu0
    %6759 = vmatprep.subr.mxu0 0.0
    %6760 = vmatpush1.msra.mxu0 %v6115
    %6761 = vmatprep.subr.mxu0 0.0
    %6762 = vmatpush1.msra.mxu0 %v6118
    %6763 = vmatprep.subr.mxu0 0.0
    %6764 = vmatpush1.msra.mxu0 %v6121
    %6765 = vmatprep.subr.mxu0 0.0
    %6766 = vmatpush1.msra.mxu0 %v6124
    %6767 = vmatprep.subr.mxu0 0.0
    %6768 = vmatpush1.msra.mxu0 %v6127
    %6769 = vmatprep.subr.mxu0 0.0
    %6770 = vmatpush1.msra.mxu0 %v6130
    %6771 = vmatprep.subr.mxu0 0.0
    %6772 = vmatpush1.msra.mxu0 %v6133
    %6773 = vmatprep.subr.mxu0 0.0
    %6774 = vmatpush1.msra.mxu0 %v6136
    %6775 = vmatprep.subr.mxu0 0.0
    %6776 = vmatpush1.msra.mxu0 %v6139
    %6777 = vmatprep.subr.mxu0 0.0
    %6778 = vmatpush1.msra.mxu0 %v6142
    %6779 = vmatprep.subr.mxu0 0.0
    %6780 = vmatpush1.msra.mxu0 %v6145
    %6781 = vmatprep.subr.mxu0 0.0
    %6782 = vmatpush1.msra.mxu0 %v6148
    %6783 = vmatprep.subr.mxu0 0.0
    %6784 = vmatpush1.msra.mxu0 %v6151
    %6785 = vmatprep.subr.mxu0 0.0
    %6786 = vmatpush1.msra.mxu0 %v6154
    %6787 = vmatprep.subr.mxu0 0.0
    %6788 = vmatpush1.msra.mxu0 %v6157
    %6789 = vmatprep.subr.mxu0 0.0
    %6790 = vmatpush1.msra.mxu0 %v6160
    %6791 = vmatprep.subr.mxu0 0.0
    %6792 = vmatpush1.msra.mxu0 %v6163
    %6793 = vmatprep.subr.mxu0 0.0
    %6794 = vmatpush1.msra.mxu0 %v6166
    %6795 = vmatprep.subr.mxu0 0.0
    %6796 = vmatpush1.msra.mxu0 %v6169
    %6797 = vmatprep.subr.mxu0 0.0
    %6798 = vmatpush1.msra.mxu0 %v6172
    %6799 = vmatprep.subr.mxu0 0.0
    %6800 = vmatpush1.msra.mxu0 %v6175
    %6801 = vmatprep.subr.mxu0 0.0
    %6802 = vmatpush1.msra.mxu0 %v6178
    %6803 = vmatprep.subr.mxu0 0.0
    %6804 = vmatpush1.msra.mxu0 %v6181
    %6805 = vmatprep.subr.mxu0 0.0
    %6806 = vmatpush1.msra.mxu0 %v6184
    %6807 = vmatprep.subr.mxu0 0.0
    %6808 = vmatpush1.msra.mxu0 %v6187
    %6809 = vmatprep.subr.mxu0 0.0
    %6810 = vmatpush1.msra.mxu0 %v6190
    %6811 = vmatprep.subr.mxu0 0.0
    %6812 = vmatpush1.msra.mxu0 %v6193
    %6813 = vmatprep.subr.mxu0 0.0
    %6814 = vmatpush1.msra.mxu0 %v6196
    %6815 = vmatprep.subr.mxu0 0.0
    %6816 = vmatpush1.msra.mxu0 %v6199
    %6817 = vmatprep.subr.mxu0 0.0
    %6818 = vmatpush1.msra.mxu0 %v6202
    %6819 = vmatprep.subr.mxu0 0.0
    %6820 = vmatpush1.msra.mxu0 %v6205
    %6821 = vmatprep.subr.mxu0 0.0
    %6822 = vmatpush1.msra.mxu0 %v6208
    %6823 = vmatprep.mubr.f32.mxu0 %v5816
    %6824 = vmatmul.mubr.f32.gmra.mrb[0].mxu0 %v5815
    %v6825 = vpop.f32.mrb[0].mxu0
    %v6826 = vadd.f32 %v6751, %v6825
    %v6827 = vpop.f32.mrb[0].mxu0
    %6828 = vmatprep.mubr.f32.mxu0 %v5824
    %6829 = vmatmul.mubr.f32.gmra.mrb[0].mxu0 %v5823
    %v6830 = vpop.f32.mrb[0].mxu0
    %v6831 = vadd.f32 %v6756, %v6830
    %v6832 = vpop.f32.mrb[0].mxu0
    %6833 = vdwg.mxu0
    %6834 = vst [vmem:[%s9] sm:$0xff] %v6524
    %6835 = vst [vmem:[%s9 + $0x8] sm:$0xff] %v6526
    %6836 = vst [vmem:[%s9 + $0x10] sm:$0xff] %v6826
    %6837 = vst [vmem:[%s9 + $0x18] sm:$0xff] %v6530
    %6838 = vst [vmem:[%s9 + $0x20] sm:$0xff] %v6532
    %6839 = vst [vmem:[%s9 + $0x28] sm:$0xff] %v6831
    // Predicated region
    $region70: #{net_forward.1} parent=1 // pred_check
      _
    $region71: #{net_forward.1} parent=1 // pred_check_branch
      %6841 = sbr.rel (0) target = $region73
    $region72: #{net_forward.1} parent=1 // pred_region
      _
    $region73: #{net_forward.1} parent=1 // pred_fallthru
      _
    // Predicated region
    $region74: #{net_forward.1} parent=1 // pred_check
      _
    $region75: #{net_forward.1} parent=1 // pred_check_branch
      %6843 = sbr.rel (0) target = $region77
    $region76: #{net_forward.1} parent=1 // pred_region
      _
    $region77: #{net_forward.1} parent=1 // pred_fallthru
      _
    %6844 = vsyncpa [#allocation3], 1
    %6845 = vsyncpa [#allocation5], 1
    %6846 = vsyncpa [#allocation8], 1
    %6847 = vsyncpa [#allocation11], 1
    %6848 = vsyncpa [#allocation14], 1

</llo_original>
